<compile_context>
chip_gen: v7x
topology: tpu7x:2x2x1
jax: 0.10.0
libtpu: 0.0.40
codegen_flags: <defaults>
</compile_context>

<pallas_src>
import jax
import jax.numpy as jnp
from jax.experimental import pallas as pl
from jax.experimental.pallas import tpu as pltpu


# ----------------------------- fused Pallas kernel ---------------------------

def _make_fused_kernel(counts1, counts2):
    """Build the fused kernel for static per-sentence (W, Ns, No, Nt) counts."""

    def kernel(noun_ref, subjT_ref, objT_ref,
               w1_ref, vs1_ref, vo1_ref, vt1_ref,
               w2_ref, vs2_ref, vo2_ref, vt2_ref,
               out_ref):
        EP = noun_ref.shape[1]            # lane-padded embed dim (multiple of 128)

        def embed(counts, w_ref, vs_ref, vo_ref, vt_ref):
            W, Ns, No, Nt = counts

            # ---- word contribution: mean of the leftover-word noun vectors ----
            acc = jnp.zeros((1, EP), jnp.float32)
            for i in range(W):
                acc = acc + noun_ref[pl.ds(w_ref[i], 1), :]       # in-kernel gather
            if W > 0:
                emb = acc * (1.0 / W)
            else:
                # TODO(synk): torch .mean(dim=0) over an empty tensor is NaN;
                # we use a zero word contribution instead of reproducing NaN.
                emb = acc

            # ---- verb/argument pairs, same order as
            #      torch.cat((subj, obj, transsubj, transobj)) ----
            pairs = []
            for n in range(Ns):                       # 'subj'
                pairs.append((subjT_ref, vs_ref[n, 0], vs_ref[n, 1]))
            for n in range(No):                       # 'obj'
                pairs.append((objT_ref, vo_ref[n, 0], vo_ref[n, 1]))
            for n in range(Nt):                       # 'transsubj'
                pairs.append((subjT_ref, vt_ref[n, 0], vt_ref[n, 1]))
            for n in range(Nt):                       # 'transobj'
                pairs.append((objT_ref, vt_ref[n, 0], vt_ref[n, 2]))

            # TODO(synk): the torch forward references an undefined `verb_arg_sum`
            # (NameError in the original source); implemented the documented
            # intent:  output = word_mean + sum_n tanh(verb_mat_n @ arg_vec_n)
            for cube_ref, v_idx, a_idx in pairs:
                arg_row = noun_ref[pl.ds(a_idx, 1), :]            # (1, EP) gather
                mat_t = cube_ref[v_idx]                           # (EP, EP) gather (pre-transposed)
                va = jnp.dot(arg_row, mat_t,                      # == (mat @ arg)^T, on the MXU
                             precision=jax.lax.Precision.HIGHEST,
                             preferred_element_type=jnp.float32)
                emb = emb + jnp.tanh(va)
            return emb                                            # (1, EP)

        emb1 = embed(counts1, w1_ref, vs1_ref, vo1_ref, vt1_ref)
        emb2 = embed(counts2, w2_ref, vs2_ref, vo2_ref, vt2_ref)

        # cosine-style similarity (no epsilon — matches the torch module, so a
        # zero-norm embedding yields inf/NaN exactly like torch would).
        dot = jnp.sum(emb1 * emb2, keepdims=True)                 # (1, 1)
        n1 = jnp.sum(emb1 * emb1, keepdims=True)
        n2 = jnp.sum(emb2 * emb2, keepdims=True)
        sim = dot * jax.lax.rsqrt(n1 * n2)                        # EUP rsqrt

        # single unmasked, lane-dense (8, EP) store:
        #   row 0 = emb1, row 1 = emb2, rows 2..7 = broadcast similarity
        out_ref[...] = jnp.concatenate(
            [emb1, emb2, jnp.broadcast_to(sim, (6, EP))], axis=0)

    return kernel


# ------------------------------- JAX wrappers --------------------------------

def prepare_params(noun_matrix, subj_verb_cube, obj_verb_cube):
    """One-time parameter prep: f32 cast, verb-matrix transpose, pad embedding
    dim to a multiple of 128 lanes so all in-kernel tensors are lane-dense."""
    E = noun_matrix.shape[1]
    EP = ((E + 127) // 128) * 128

    noun_p = jnp.zeros((noun_matrix.shape[0], EP), jnp.float32)
    noun_p = noun_p.at[:, :E].set(noun_matrix.astype(jnp.float32))

    def cube_t_pad(cube):
        V = cube.shape[0]
        m = cube.astype(jnp.float32).reshape(V, E, E)
        m_t = jnp.swapaxes(m, 1, 2)     # pre-transpose: kernel does arg_row @ mat^T
        out = jnp.zeros((V, EP, EP), jnp.float32)
        return out.at[:, :E, :E].set(m_t)

    return noun_p, cube_t_pad(subj_verb_cube), cube_t_pad(obj_verb_cube)


def _prep_indices(X):
    words, vs, vo, vt = X
    if words.ndim == 2:                 # torch forward: take the first sample
        words, vs, vo, vt = words[0], vs[0], vo[0], vt[0]
    counts = (int(words.shape[0]), int(vs.shape[0]),
              int(vo.shape[0]), int(vt.shape[0]))

    def smem_safe(a, ncols):
        a = a.astype(jnp.int32)
        if a.shape[0] == 0:             # avoid zero-sized SMEM buffers; count==0 skips them
            shape = (1,) if ncols == 0 else (1, ncols)
            a = jnp.zeros(shape, jnp.int32)
        return a

    arrays = (smem_safe(words, 0), smem_safe(vs, 2),
              smem_safe(vo, 2), smem_safe(vt, 3))
    return counts, arrays


def sentence_embedder_similarity_dot(prepared_params, X_sentence1, X_sentence2):
    """Forward pass of SentenceEmbedderSimilarityDot. Returns shape (1,)."""
    noun_p, subjT_p, objT_p = prepared_params
    EP = noun_p.shape[1]

    counts1, idx1 = _prep_indices(X_sentence1)
    counts2, idx2 = _prep_indices(X_sentence2)

    vmem = pl.BlockSpec(memory_space=pltpu.MemorySpace.VMEM)
    smem = pl.BlockSpec(memory_space=pltpu.MemorySpace.SMEM)

    slab = pl.pallas_call(
        _make_fused_kernel(counts1, counts2),
        out_shape=jax.ShapeDtypeStruct((8, EP), jnp.float32),
        in_specs=[vmem, vmem, vmem] + [smem] * 8,
        out_specs=vmem,
    )(noun_p, subjT_p, objT_p, *idx1, *idx2)

    return slab[2, 0:1]                 # similarity, shape (1,)  (torch: scalar.unsqueeze(0))


# ---------------------------- pure-JAX reference -----------------------------

def _reference(params, X1, X2):
    noun, subj_cube, obj_cube, _modulator = params
    E = noun.shape[1]

    def embed(X):
        words, vs, vo, vt = X
        if words.ndim == 2:
            words, vs, vo, vt = words[0], vs[0], vo[0], vt[0]
        out = jnp.take(noun, words, axis=0).mean(axis=0)
        mats, vecs = [], []
        if vs.shape[0] > 0:
            mats.append(jnp.take(subj_cube, vs[:, 0], axis=0))
            vecs.append(jnp.take(noun, vs[:, 1], axis=0))
        if vo.shape[0] > 0:
            mats.append(jnp.take(obj_cube, vo[:, 0], axis=0))
            vecs.append(jnp.take(noun, vo[:, 1], axis=0))
        if vt.shape[0] > 0:
            mats.append(jnp.take(subj_cube, vt[:, 0], axis=0))
            vecs.append(jnp.take(noun, vt[:, 1], axis=0))
            mats.append(jnp.take(obj_cube, vt[:, 0], axis=0))
            vecs.append(jnp.take(noun, vt[:, 2], axis=0))
        if mats:
            m = jnp.concatenate(mats, axis=0).reshape(-1, E, E)
            a = jnp.concatenate(vecs, axis=0).reshape(-1, E)
            va = jnp.tanh(jnp.sum(m * a[:, None, :], axis=-1))   # exact f32 on VPU
            out = out + jnp.sum(va, axis=0)
        return out

    s1, s2 = embed(X1), embed(X2)
    dot = jnp.sum(s1 * s2)
    return (dot / (jnp.linalg.norm(s1) * jnp.linalg.norm(s2))).reshape(1)


# ----------------------------------- main ------------------------------------

if __name__ == "__main__":
    E = 32            # embedding dim (noun vectors); verb cube rows are E*E
    NUM_NOUNS = 50
    NUM_VERBS = 20
    HIDDEN = 16       # hidden_size: stored by the torch module but unused in forward

    key = jax.random.PRNGKey(0)
    k_noun, k_sc, k_oc, k_mod, k_idx = jax.random.split(key, 5)

    noun_matrix = jax.random.normal(k_noun, (NUM_NOUNS, E), dtype=jnp.float32)
    subj_verb_cube = 0.1 * jax.random.normal(k_sc, (NUM_VERBS, E * E), jnp.float32)
    obj_verb_cube = 0.1 * jax.random.normal(k_oc, (NUM_VERBS, E * E), jnp.float32)
    # Parameter `modulator` ~ U(-1, 1): unused by the module's forward pass.
    modulator = jax.random.uniform(k_mod, (1,), minval=-1.0, maxval=1.0)
    params = (noun_matrix, subj_verb_cube, obj_verb_cube, modulator)

    ks = jax.random.split(k_idx, 8)

    def sent(ki, kj, kk, kl, W=8, Ns=2, No=2, Nt=2):
        words = jax.random.randint(ki, (W,), 0, NUM_NOUNS, dtype=jnp.int32)
        vs = jnp.stack([jax.random.randint(kj, (Ns,), 0, NUM_VERBS, jnp.int32),
                        jax.random.randint(kj, (Ns,), 0, NUM_NOUNS, jnp.int32)], -1)
        vo = jnp.stack([jax.random.randint(kk, (No,), 0, NUM_VERBS, jnp.int32),
                        jax.random.randint(kk, (No,), 0, NUM_NOUNS, jnp.int32)], -1)
        vt = jnp.stack([jax.random.randint(kl, (Nt,), 0, NUM_VERBS, jnp.int32),
                        jax.random.randint(kl, (Nt,), 0, NUM_NOUNS, jnp.int32),
                        jax.random.randint(kl, (Nt,), 0, NUM_NOUNS, jnp.int32)], -1)
        return (words, vs, vo, vt)

    X1 = sent(ks[0], ks[1], ks[2], ks[3])
    X2 = sent(ks[4], ks[5], ks[6], ks[7])

    prepared = prepare_params(noun_matrix, subj_verb_cube, obj_verb_cube)

    out = sentence_embedder_similarity_dot(prepared, X1, X2)
    out = jax.block_until_ready(out)

    ref = _reference(params, X1, X2)
    assert out.shape == (1,), out.shape
    assert jnp.allclose(out, ref, rtol=1e-3, atol=1e-3), (out, ref)

    print("KERNEL_OK")
</pallas_src>

<mosaic_0001>
module attributes {stable_mosaic.version = 11 : i64} {
  func.func @kernel(%arg0: memref<50x128xf32, #tpu.memory_space<vmem>>, %arg1: memref<20x128x128xf32, #tpu.memory_space<vmem>>, %arg2: memref<20x128x128xf32, #tpu.memory_space<vmem>>, %arg3: memref<8xi32, #tpu.memory_space<smem>>, %arg4: memref<2x2xi32, #tpu.memory_space<smem>>, %arg5: memref<2x2xi32, #tpu.memory_space<smem>>, %arg6: memref<2x3xi32, #tpu.memory_space<smem>>, %arg7: memref<8xi32, #tpu.memory_space<smem>>, %arg8: memref<2x2xi32, #tpu.memory_space<smem>>, %arg9: memref<2x2xi32, #tpu.memory_space<smem>>, %arg10: memref<2x3xi32, #tpu.memory_space<smem>>, %arg11: memref<8x128xf32, #tpu.memory_space<vmem>>) attributes {dimension_semantics = [], scalar_prefetch = 0 : i64, scratch_operands = 0 : i64, tpu.core_type = #tpu.core_type<tc>} {
    %cst = arith.constant 0.000000e+00 : f32
    %0 = vector.broadcast %cst : f32 to vector<1x128xf32>
    %c0 = arith.constant 0 : index
    %1 = memref.load %arg3[%c0] : memref<8xi32, #tpu.memory_space<smem>>
    %2 = arith.index_cast %1 : i32 to index
    %c0_0 = arith.constant 0 : index
    %3 = vector.load %arg0[%2, %c0_0] : memref<50x128xf32, #tpu.memory_space<vmem>>, vector<1x128xf32>
    %4 = arith.addf %0, %3 : vector<1x128xf32>
    %c1 = arith.constant 1 : index
    %5 = memref.load %arg3[%c1] : memref<8xi32, #tpu.memory_space<smem>>
    %6 = arith.index_cast %5 : i32 to index
    %c0_1 = arith.constant 0 : index
    %7 = vector.load %arg0[%6, %c0_1] : memref<50x128xf32, #tpu.memory_space<vmem>>, vector<1x128xf32>
    %8 = arith.addf %4, %7 : vector<1x128xf32>
    %c2 = arith.constant 2 : index
    %9 = memref.load %arg3[%c2] : memref<8xi32, #tpu.memory_space<smem>>
    %10 = arith.index_cast %9 : i32 to index
    %c0_2 = arith.constant 0 : index
    %11 = vector.load %arg0[%10, %c0_2] : memref<50x128xf32, #tpu.memory_space<vmem>>, vector<1x128xf32>
    %12 = arith.addf %8, %11 : vector<1x128xf32>
    %c3 = arith.constant 3 : index
    %13 = memref.load %arg3[%c3] : memref<8xi32, #tpu.memory_space<smem>>
    %14 = arith.index_cast %13 : i32 to index
    %c0_3 = arith.constant 0 : index
    %15 = vector.load %arg0[%14, %c0_3] : memref<50x128xf32, #tpu.memory_space<vmem>>, vector<1x128xf32>
    %16 = arith.addf %12, %15 : vector<1x128xf32>
    %c4 = arith.constant 4 : index
    %17 = memref.load %arg3[%c4] : memref<8xi32, #tpu.memory_space<smem>>
    %18 = arith.index_cast %17 : i32 to index
    %c0_4 = arith.constant 0 : index
    %19 = vector.load %arg0[%18, %c0_4] : memref<50x128xf32, #tpu.memory_space<vmem>>, vector<1x128xf32>
    %20 = arith.addf %16, %19 : vector<1x128xf32>
    %c5 = arith.constant 5 : index
    %21 = memref.load %arg3[%c5] : memref<8xi32, #tpu.memory_space<smem>>
    %22 = arith.index_cast %21 : i32 to index
    %c0_5 = arith.constant 0 : index
    %23 = vector.load %arg0[%22, %c0_5] : memref<50x128xf32, #tpu.memory_space<vmem>>, vector<1x128xf32>
    %24 = arith.addf %20, %23 : vector<1x128xf32>
    %c6 = arith.constant 6 : index
    %25 = memref.load %arg3[%c6] : memref<8xi32, #tpu.memory_space<smem>>
    %26 = arith.index_cast %25 : i32 to index
    %c0_6 = arith.constant 0 : index
    %27 = vector.load %arg0[%26, %c0_6] : memref<50x128xf32, #tpu.memory_space<vmem>>, vector<1x128xf32>
    %28 = arith.addf %24, %27 : vector<1x128xf32>
    %c7 = arith.constant 7 : index
    %29 = memref.load %arg3[%c7] : memref<8xi32, #tpu.memory_space<smem>>
    %30 = arith.index_cast %29 : i32 to index
    %c0_7 = arith.constant 0 : index
    %31 = vector.load %arg0[%30, %c0_7] : memref<50x128xf32, #tpu.memory_space<vmem>>, vector<1x128xf32>
    %32 = arith.addf %28, %31 : vector<1x128xf32>
    %cst_8 = arith.constant 1.250000e-01 : f32
    %33 = vector.broadcast %cst_8 : f32 to vector<1x128xf32>
    %34 = arith.mulf %32, %33 : vector<1x128xf32>
    %c0_9 = arith.constant 0 : index
    %c0_10 = arith.constant 0 : index
    %35 = memref.load %arg4[%c0_9, %c0_10] : memref<2x2xi32, #tpu.memory_space<smem>>
    %c0_11 = arith.constant 0 : index
    %c1_12 = arith.constant 1 : index
    %36 = memref.load %arg4[%c0_11, %c1_12] : memref<2x2xi32, #tpu.memory_space<smem>>
    %c1_13 = arith.constant 1 : index
    %c0_14 = arith.constant 0 : index
    %37 = memref.load %arg4[%c1_13, %c0_14] : memref<2x2xi32, #tpu.memory_space<smem>>
    %c1_15 = arith.constant 1 : index
    %c1_16 = arith.constant 1 : index
    %38 = memref.load %arg4[%c1_15, %c1_16] : memref<2x2xi32, #tpu.memory_space<smem>>
    %c0_17 = arith.constant 0 : index
    %c0_18 = arith.constant 0 : index
    %39 = memref.load %arg5[%c0_17, %c0_18] : memref<2x2xi32, #tpu.memory_space<smem>>
    %c0_19 = arith.constant 0 : index
    %c1_20 = arith.constant 1 : index
    %40 = memref.load %arg5[%c0_19, %c1_20] : memref<2x2xi32, #tpu.memory_space<smem>>
    %c1_21 = arith.constant 1 : index
    %c0_22 = arith.constant 0 : index
    %41 = memref.load %arg5[%c1_21, %c0_22] : memref<2x2xi32, #tpu.memory_space<smem>>
    %c1_23 = arith.constant 1 : index
    %c1_24 = arith.constant 1 : index
    %42 = memref.load %arg5[%c1_23, %c1_24] : memref<2x2xi32, #tpu.memory_space<smem>>
    %c0_25 = arith.constant 0 : index
    %c0_26 = arith.constant 0 : index
    %43 = memref.load %arg6[%c0_25, %c0_26] : memref<2x3xi32, #tpu.memory_space<smem>>
    %c0_27 = arith.constant 0 : index
    %c1_28 = arith.constant 1 : index
    %44 = memref.load %arg6[%c0_27, %c1_28] : memref<2x3xi32, #tpu.memory_space<smem>>
    %c1_29 = arith.constant 1 : index
    %c0_30 = arith.constant 0 : index
    %45 = memref.load %arg6[%c1_29, %c0_30] : memref<2x3xi32, #tpu.memory_space<smem>>
    %c1_31 = arith.constant 1 : index
    %c1_32 = arith.constant 1 : index
    %46 = memref.load %arg6[%c1_31, %c1_32] : memref<2x3xi32, #tpu.memory_space<smem>>
    %c0_33 = arith.constant 0 : index
    %c0_34 = arith.constant 0 : index
    %47 = memref.load %arg6[%c0_33, %c0_34] : memref<2x3xi32, #tpu.memory_space<smem>>
    %c0_35 = arith.constant 0 : index
    %c2_36 = arith.constant 2 : index
    %48 = memref.load %arg6[%c0_35, %c2_36] : memref<2x3xi32, #tpu.memory_space<smem>>
    %c1_37 = arith.constant 1 : index
    %c0_38 = arith.constant 0 : index
    %49 = memref.load %arg6[%c1_37, %c0_38] : memref<2x3xi32, #tpu.memory_space<smem>>
    %c1_39 = arith.constant 1 : index
    %c2_40 = arith.constant 2 : index
    %50 = memref.load %arg6[%c1_39, %c2_40] : memref<2x3xi32, #tpu.memory_space<smem>>
    %51 = arith.index_cast %36 : i32 to index
    %c0_41 = arith.constant 0 : index
    %52 = vector.load %arg0[%51, %c0_41] : memref<50x128xf32, #tpu.memory_space<vmem>>, vector<1x128xf32>
    %53 = arith.index_cast %35 : i32 to index
    %c0_42 = arith.constant 0 : index
    %c0_43 = arith.constant 0 : index
    %54 = vector.load %arg1[%53, %c0_42, %c0_43] : memref<20x128x128xf32, #tpu.memory_space<vmem>>, vector<1x128x128xf32>
    %55 = vector.shape_cast %54 : vector<1x128x128xf32> to vector<128x128xf32>
    %cst_44 = arith.constant dense<0.000000e+00> : vector<1x128xf32>
    %56 = tpu.matmul %52, %55, %cst_44 {dimension_numbers = #tpu.dot_dimension_numbers<[1], [0], [0], [1], [0, 0, 1, 1], [], []>, precision = #tpu.contract_precision<fp32>} : vector<1x128xf32>, vector<128x128xf32>, vector<1x128xf32> -> vector<1x128xf32>
    %57 = math.tanh %56 : vector<1x128xf32>
    %58 = arith.addf %34, %57 : vector<1x128xf32>
    %59 = arith.index_cast %38 : i32 to index
    %c0_45 = arith.constant 0 : index
    %60 = vector.load %arg0[%59, %c0_45] : memref<50x128xf32, #tpu.memory_space<vmem>>, vector<1x128xf32>
    %61 = arith.index_cast %37 : i32 to index
    %c0_46 = arith.constant 0 : index
    %c0_47 = arith.constant 0 : index
    %62 = vector.load %arg1[%61, %c0_46, %c0_47] : memref<20x128x128xf32, #tpu.memory_space<vmem>>, vector<1x128x128xf32>
    %63 = vector.shape_cast %62 : vector<1x128x128xf32> to vector<128x128xf32>
    %cst_48 = arith.constant dense<0.000000e+00> : vector<1x128xf32>
    %64 = tpu.matmul %60, %63, %cst_48 {dimension_numbers = #tpu.dot_dimension_numbers<[1], [0], [0], [1], [0, 0, 1, 1], [], []>, precision = #tpu.contract_precision<fp32>} : vector<1x128xf32>, vector<128x128xf32>, vector<1x128xf32> -> vector<1x128xf32>
    %65 = math.tanh %64 : vector<1x128xf32>
    %66 = arith.addf %58, %65 : vector<1x128xf32>
    %67 = arith.index_cast %40 : i32 to index
    %c0_49 = arith.constant 0 : index
    %68 = vector.load %arg0[%67, %c0_49] : memref<50x128xf32, #tpu.memory_space<vmem>>, vector<1x128xf32>
    %69 = arith.index_cast %39 : i32 to index
    %c0_50 = arith.constant 0 : index
    %c0_51 = arith.constant 0 : index
    %70 = vector.load %arg2[%69, %c0_50, %c0_51] : memref<20x128x128xf32, #tpu.memory_space<vmem>>, vector<1x128x128xf32>
    %71 = vector.shape_cast %70 : vector<1x128x128xf32> to vector<128x128xf32>
    %cst_52 = arith.constant dense<0.000000e+00> : vector<1x128xf32>
    %72 = tpu.matmul %68, %71, %cst_52 {dimension_numbers = #tpu.dot_dimension_numbers<[1], [0], [0], [1], [0, 0, 1, 1], [], []>, precision = #tpu.contract_precision<fp32>} : vector<1x128xf32>, vector<128x128xf32>, vector<1x128xf32> -> vector<1x128xf32>
    %73 = math.tanh %72 : vector<1x128xf32>
    %74 = arith.addf %66, %73 : vector<1x128xf32>
    %75 = arith.index_cast %42 : i32 to index
    %c0_53 = arith.constant 0 : index
    %76 = vector.load %arg0[%75, %c0_53] : memref<50x128xf32, #tpu.memory_space<vmem>>, vector<1x128xf32>
    %77 = arith.index_cast %41 : i32 to index
    %c0_54 = arith.constant 0 : index
    %c0_55 = arith.constant 0 : index
    %78 = vector.load %arg2[%77, %c0_54, %c0_55] : memref<20x128x128xf32, #tpu.memory_space<vmem>>, vector<1x128x128xf32>
    %79 = vector.shape_cast %78 : vector<1x128x128xf32> to vector<128x128xf32>
    %cst_56 = arith.constant dense<0.000000e+00> : vector<1x128xf32>
    %80 = tpu.matmul %76, %79, %cst_56 {dimension_numbers = #tpu.dot_dimension_numbers<[1], [0], [0], [1], [0, 0, 1, 1], [], []>, precision = #tpu.contract_precision<fp32>} : vector<1x128xf32>, vector<128x128xf32>, vector<1x128xf32> -> vector<1x128xf32>
    %81 = math.tanh %80 : vector<1x128xf32>
    %82 = arith.addf %74, %81 : vector<1x128xf32>
    %83 = arith.index_cast %44 : i32 to index
    %c0_57 = arith.constant 0 : index
    %84 = vector.load %arg0[%83, %c0_57] : memref<50x128xf32, #tpu.memory_space<vmem>>, vector<1x128xf32>
    %85 = arith.index_cast %43 : i32 to index
    %c0_58 = arith.constant 0 : index
    %c0_59 = arith.constant 0 : index
    %86 = vector.load %arg1[%85, %c0_58, %c0_59] : memref<20x128x128xf32, #tpu.memory_space<vmem>>, vector<1x128x128xf32>
    %87 = vector.shape_cast %86 : vector<1x128x128xf32> to vector<128x128xf32>
    %cst_60 = arith.constant dense<0.000000e+00> : vector<1x128xf32>
    %88 = tpu.matmul %84, %87, %cst_60 {dimension_numbers = #tpu.dot_dimension_numbers<[1], [0], [0], [1], [0, 0, 1, 1], [], []>, precision = #tpu.contract_precision<fp32>} : vector<1x128xf32>, vector<128x128xf32>, vector<1x128xf32> -> vector<1x128xf32>
    %89 = math.tanh %88 : vector<1x128xf32>
    %90 = arith.addf %82, %89 : vector<1x128xf32>
    %91 = arith.index_cast %46 : i32 to index
    %c0_61 = arith.constant 0 : index
    %92 = vector.load %arg0[%91, %c0_61] : memref<50x128xf32, #tpu.memory_space<vmem>>, vector<1x128xf32>
    %93 = arith.index_cast %45 : i32 to index
    %c0_62 = arith.constant 0 : index
    %c0_63 = arith.constant 0 : index
    %94 = vector.load %arg1[%93, %c0_62, %c0_63] : memref<20x128x128xf32, #tpu.memory_space<vmem>>, vector<1x128x128xf32>
    %95 = vector.shape_cast %94 : vector<1x128x128xf32> to vector<128x128xf32>
    %cst_64 = arith.constant dense<0.000000e+00> : vector<1x128xf32>
    %96 = tpu.matmul %92, %95, %cst_64 {dimension_numbers = #tpu.dot_dimension_numbers<[1], [0], [0], [1], [0, 0, 1, 1], [], []>, precision = #tpu.contract_precision<fp32>} : vector<1x128xf32>, vector<128x128xf32>, vector<1x128xf32> -> vector<1x128xf32>
    %97 = math.tanh %96 : vector<1x128xf32>
    %98 = arith.addf %90, %97 : vector<1x128xf32>
    %99 = arith.index_cast %48 : i32 to index
    %c0_65 = arith.constant 0 : index
    %100 = vector.load %arg0[%99, %c0_65] : memref<50x128xf32, #tpu.memory_space<vmem>>, vector<1x128xf32>
    %101 = arith.index_cast %47 : i32 to index
    %c0_66 = arith.constant 0 : index
    %c0_67 = arith.constant 0 : index
    %102 = vector.load %arg2[%101, %c0_66, %c0_67] : memref<20x128x128xf32, #tpu.memory_space<vmem>>, vector<1x128x128xf32>
    %103 = vector.shape_cast %102 : vector<1x128x128xf32> to vector<128x128xf32>
    %cst_68 = arith.constant dense<0.000000e+00> : vector<1x128xf32>
    %104 = tpu.matmul %100, %103, %cst_68 {dimension_numbers = #tpu.dot_dimension_numbers<[1], [0], [0], [1], [0, 0, 1, 1], [], []>, precision = #tpu.contract_precision<fp32>} : vector<1x128xf32>, vector<128x128xf32>, vector<1x128xf32> -> vector<1x128xf32>
    %105 = math.tanh %104 : vector<1x128xf32>
    %106 = arith.addf %98, %105 : vector<1x128xf32>
    %107 = arith.index_cast %50 : i32 to index
    %c0_69 = arith.constant 0 : index
    %108 = vector.load %arg0[%107, %c0_69] : memref<50x128xf32, #tpu.memory_space<vmem>>, vector<1x128xf32>
    %109 = arith.index_cast %49 : i32 to index
    %c0_70 = arith.constant 0 : index
    %c0_71 = arith.constant 0 : index
    %110 = vector.load %arg2[%109, %c0_70, %c0_71] : memref<20x128x128xf32, #tpu.memory_space<vmem>>, vector<1x128x128xf32>
    %111 = vector.shape_cast %110 : vector<1x128x128xf32> to vector<128x128xf32>
    %cst_72 = arith.constant dense<0.000000e+00> : vector<1x128xf32>
    %112 = tpu.matmul %108, %111, %cst_72 {dimension_numbers = #tpu.dot_dimension_numbers<[1], [0], [0], [1], [0, 0, 1, 1], [], []>, precision = #tpu.contract_precision<fp32>} : vector<1x128xf32>, vector<128x128xf32>, vector<1x128xf32> -> vector<1x128xf32>
    %113 = math.tanh %112 : vector<1x128xf32>
    %114 = arith.addf %106, %113 : vector<1x128xf32>
    %cst_73 = arith.constant 0.000000e+00 : f32
    %115 = vector.broadcast %cst_73 : f32 to vector<1x128xf32>
    %c0_74 = arith.constant 0 : index
    %116 = memref.load %arg7[%c0_74] : memref<8xi32, #tpu.memory_space<smem>>
    %117 = arith.index_cast %116 : i32 to index
    %c0_75 = arith.constant 0 : index
    %118 = vector.load %arg0[%117, %c0_75] : memref<50x128xf32, #tpu.memory_space<vmem>>, vector<1x128xf32>
    %119 = arith.addf %115, %118 : vector<1x128xf32>
    %c1_76 = arith.constant 1 : index
    %120 = memref.load %arg7[%c1_76] : memref<8xi32, #tpu.memory_space<smem>>
    %121 = arith.index_cast %120 : i32 to index
    %c0_77 = arith.constant 0 : index
    %122 = vector.load %arg0[%121, %c0_77] : memref<50x128xf32, #tpu.memory_space<vmem>>, vector<1x128xf32>
    %123 = arith.addf %119, %122 : vector<1x128xf32>
    %c2_78 = arith.constant 2 : index
    %124 = memref.load %arg7[%c2_78] : memref<8xi32, #tpu.memory_space<smem>>
    %125 = arith.index_cast %124 : i32 to index
    %c0_79 = arith.constant 0 : index
    %126 = vector.load %arg0[%125, %c0_79] : memref<50x128xf32, #tpu.memory_space<vmem>>, vector<1x128xf32>
    %127 = arith.addf %123, %126 : vector<1x128xf32>
    %c3_80 = arith.constant 3 : index
    %128 = memref.load %arg7[%c3_80] : memref<8xi32, #tpu.memory_space<smem>>
    %129 = arith.index_cast %128 : i32 to index
    %c0_81 = arith.constant 0 : index
    %130 = vector.load %arg0[%129, %c0_81] : memref<50x128xf32, #tpu.memory_space<vmem>>, vector<1x128xf32>
    %131 = arith.addf %127, %130 : vector<1x128xf32>
    %c4_82 = arith.constant 4 : index
    %132 = memref.load %arg7[%c4_82] : memref<8xi32, #tpu.memory_space<smem>>
    %133 = arith.index_cast %132 : i32 to index
    %c0_83 = arith.constant 0 : index
    %134 = vector.load %arg0[%133, %c0_83] : memref<50x128xf32, #tpu.memory_space<vmem>>, vector<1x128xf32>
    %135 = arith.addf %131, %134 : vector<1x128xf32>
    %c5_84 = arith.constant 5 : index
    %136 = memref.load %arg7[%c5_84] : memref<8xi32, #tpu.memory_space<smem>>
    %137 = arith.index_cast %136 : i32 to index
    %c0_85 = arith.constant 0 : index
    %138 = vector.load %arg0[%137, %c0_85] : memref<50x128xf32, #tpu.memory_space<vmem>>, vector<1x128xf32>
    %139 = arith.addf %135, %138 : vector<1x128xf32>
    %c6_86 = arith.constant 6 : index
    %140 = memref.load %arg7[%c6_86] : memref<8xi32, #tpu.memory_space<smem>>
    %141 = arith.index_cast %140 : i32 to index
    %c0_87 = arith.constant 0 : index
    %142 = vector.load %arg0[%141, %c0_87] : memref<50x128xf32, #tpu.memory_space<vmem>>, vector<1x128xf32>
    %143 = arith.addf %139, %142 : vector<1x128xf32>
    %c7_88 = arith.constant 7 : index
    %144 = memref.load %arg7[%c7_88] : memref<8xi32, #tpu.memory_space<smem>>
    %145 = arith.index_cast %144 : i32 to index
    %c0_89 = arith.constant 0 : index
    %146 = vector.load %arg0[%145, %c0_89] : memref<50x128xf32, #tpu.memory_space<vmem>>, vector<1x128xf32>
    %147 = arith.addf %143, %146 : vector<1x128xf32>
    %cst_90 = arith.constant 1.250000e-01 : f32
    %148 = vector.broadcast %cst_90 : f32 to vector<1x128xf32>
    %149 = arith.mulf %147, %148 : vector<1x128xf32>
    %c0_91 = arith.constant 0 : index
    %c0_92 = arith.constant 0 : index
    %150 = memref.load %arg8[%c0_91, %c0_92] : memref<2x2xi32, #tpu.memory_space<smem>>
    %c0_93 = arith.constant 0 : index
    %c1_94 = arith.constant 1 : index
    %151 = memref.load %arg8[%c0_93, %c1_94] : memref<2x2xi32, #tpu.memory_space<smem>>
    %c1_95 = arith.constant 1 : index
    %c0_96 = arith.constant 0 : index
    %152 = memref.load %arg8[%c1_95, %c0_96] : memref<2x2xi32, #tpu.memory_space<smem>>
    %c1_97 = arith.constant 1 : index
    %c1_98 = arith.constant 1 : index
    %153 = memref.load %arg8[%c1_97, %c1_98] : memref<2x2xi32, #tpu.memory_space<smem>>
    %c0_99 = arith.constant 0 : index
    %c0_100 = arith.constant 0 : index
    %154 = memref.load %arg9[%c0_99, %c0_100] : memref<2x2xi32, #tpu.memory_space<smem>>
    %c0_101 = arith.constant 0 : index
    %c1_102 = arith.constant 1 : index
    %155 = memref.load %arg9[%c0_101, %c1_102] : memref<2x2xi32, #tpu.memory_space<smem>>
    %c1_103 = arith.constant 1 : index
    %c0_104 = arith.constant 0 : index
    %156 = memref.load %arg9[%c1_103, %c0_104] : memref<2x2xi32, #tpu.memory_space<smem>>
    %c1_105 = arith.constant 1 : index
    %c1_106 = arith.constant 1 : index
    %157 = memref.load %arg9[%c1_105, %c1_106] : memref<2x2xi32, #tpu.memory_space<smem>>
    %c0_107 = arith.constant 0 : index
    %c0_108 = arith.constant 0 : index
    %158 = memref.load %arg10[%c0_107, %c0_108] : memref<2x3xi32, #tpu.memory_space<smem>>
    %c0_109 = arith.constant 0 : index
    %c1_110 = arith.constant 1 : index
    %159 = memref.load %arg10[%c0_109, %c1_110] : memref<2x3xi32, #tpu.memory_space<smem>>
    %c1_111 = arith.constant 1 : index
    %c0_112 = arith.constant 0 : index
    %160 = memref.load %arg10[%c1_111, %c0_112] : memref<2x3xi32, #tpu.memory_space<smem>>
    %c1_113 = arith.constant 1 : index
    %c1_114 = arith.constant 1 : index
    %161 = memref.load %arg10[%c1_113, %c1_114] : memref<2x3xi32, #tpu.memory_space<smem>>
    %c0_115 = arith.constant 0 : index
    %c0_116 = arith.constant 0 : index
    %162 = memref.load %arg10[%c0_115, %c0_116] : memref<2x3xi32, #tpu.memory_space<smem>>
    %c0_117 = arith.constant 0 : index
    %c2_118 = arith.constant 2 : index
    %163 = memref.load %arg10[%c0_117, %c2_118] : memref<2x3xi32, #tpu.memory_space<smem>>
    %c1_119 = arith.constant 1 : index
    %c0_120 = arith.constant 0 : index
    %164 = memref.load %arg10[%c1_119, %c0_120] : memref<2x3xi32, #tpu.memory_space<smem>>
    %c1_121 = arith.constant 1 : index
    %c2_122 = arith.constant 2 : index
    %165 = memref.load %arg10[%c1_121, %c2_122] : memref<2x3xi32, #tpu.memory_space<smem>>
    %166 = arith.index_cast %151 : i32 to index
    %c0_123 = arith.constant 0 : index
    %167 = vector.load %arg0[%166, %c0_123] : memref<50x128xf32, #tpu.memory_space<vmem>>, vector<1x128xf32>
    %168 = arith.index_cast %150 : i32 to index
    %c0_124 = arith.constant 0 : index
    %c0_125 = arith.constant 0 : index
    %169 = vector.load %arg1[%168, %c0_124, %c0_125] : memref<20x128x128xf32, #tpu.memory_space<vmem>>, vector<1x128x128xf32>
    %170 = vector.shape_cast %169 : vector<1x128x128xf32> to vector<128x128xf32>
    %cst_126 = arith.constant dense<0.000000e+00> : vector<1x128xf32>
    %171 = tpu.matmul %167, %170, %cst_126 {dimension_numbers = #tpu.dot_dimension_numbers<[1], [0], [0], [1], [0, 0, 1, 1], [], []>, precision = #tpu.contract_precision<fp32>} : vector<1x128xf32>, vector<128x128xf32>, vector<1x128xf32> -> vector<1x128xf32>
    %172 = math.tanh %171 : vector<1x128xf32>
    %173 = arith.addf %149, %172 : vector<1x128xf32>
    %174 = arith.index_cast %153 : i32 to index
    %c0_127 = arith.constant 0 : index
    %175 = vector.load %arg0[%174, %c0_127] : memref<50x128xf32, #tpu.memory_space<vmem>>, vector<1x128xf32>
    %176 = arith.index_cast %152 : i32 to index
    %c0_128 = arith.constant 0 : index
    %c0_129 = arith.constant 0 : index
    %177 = vector.load %arg1[%176, %c0_128, %c0_129] : memref<20x128x128xf32, #tpu.memory_space<vmem>>, vector<1x128x128xf32>
    %178 = vector.shape_cast %177 : vector<1x128x128xf32> to vector<128x128xf32>
    %cst_130 = arith.constant dense<0.000000e+00> : vector<1x128xf32>
    %179 = tpu.matmul %175, %178, %cst_130 {dimension_numbers = #tpu.dot_dimension_numbers<[1], [0], [0], [1], [0, 0, 1, 1], [], []>, precision = #tpu.contract_precision<fp32>} : vector<1x128xf32>, vector<128x128xf32>, vector<1x128xf32> -> vector<1x128xf32>
    %180 = math.tanh %179 : vector<1x128xf32>
    %181 = arith.addf %173, %180 : vector<1x128xf32>
    %182 = arith.index_cast %155 : i32 to index
    %c0_131 = arith.constant 0 : index
    %183 = vector.load %arg0[%182, %c0_131] : memref<50x128xf32, #tpu.memory_space<vmem>>, vector<1x128xf32>
    %184 = arith.index_cast %154 : i32 to index
    %c0_132 = arith.constant 0 : index
    %c0_133 = arith.constant 0 : index
    %185 = vector.load %arg2[%184, %c0_132, %c0_133] : memref<20x128x128xf32, #tpu.memory_space<vmem>>, vector<1x128x128xf32>
    %186 = vector.shape_cast %185 : vector<1x128x128xf32> to vector<128x128xf32>
    %cst_134 = arith.constant dense<0.000000e+00> : vector<1x128xf32>
    %187 = tpu.matmul %183, %186, %cst_134 {dimension_numbers = #tpu.dot_dimension_numbers<[1], [0], [0], [1], [0, 0, 1, 1], [], []>, precision = #tpu.contract_precision<fp32>} : vector<1x128xf32>, vector<128x128xf32>, vector<1x128xf32> -> vector<1x128xf32>
    %188 = math.tanh %187 : vector<1x128xf32>
    %189 = arith.addf %181, %188 : vector<1x128xf32>
    %190 = arith.index_cast %157 : i32 to index
    %c0_135 = arith.constant 0 : index
    %191 = vector.load %arg0[%190, %c0_135] : memref<50x128xf32, #tpu.memory_space<vmem>>, vector<1x128xf32>
    %192 = arith.index_cast %156 : i32 to index
    %c0_136 = arith.constant 0 : index
    %c0_137 = arith.constant 0 : index
    %193 = vector.load %arg2[%192, %c0_136, %c0_137] : memref<20x128x128xf32, #tpu.memory_space<vmem>>, vector<1x128x128xf32>
    %194 = vector.shape_cast %193 : vector<1x128x128xf32> to vector<128x128xf32>
    %cst_138 = arith.constant dense<0.000000e+00> : vector<1x128xf32>
    %195 = tpu.matmul %191, %194, %cst_138 {dimension_numbers = #tpu.dot_dimension_numbers<[1], [0], [0], [1], [0, 0, 1, 1], [], []>, precision = #tpu.contract_precision<fp32>} : vector<1x128xf32>, vector<128x128xf32>, vector<1x128xf32> -> vector<1x128xf32>
    %196 = math.tanh %195 : vector<1x128xf32>
    %197 = arith.addf %189, %196 : vector<1x128xf32>
    %198 = arith.index_cast %159 : i32 to index
    %c0_139 = arith.constant 0 : index
    %199 = vector.load %arg0[%198, %c0_139] : memref<50x128xf32, #tpu.memory_space<vmem>>, vector<1x128xf32>
    %200 = arith.index_cast %158 : i32 to index
    %c0_140 = arith.constant 0 : index
    %c0_141 = arith.constant 0 : index
    %201 = vector.load %arg1[%200, %c0_140, %c0_141] : memref<20x128x128xf32, #tpu.memory_space<vmem>>, vector<1x128x128xf32>
    %202 = vector.shape_cast %201 : vector<1x128x128xf32> to vector<128x128xf32>
    %cst_142 = arith.constant dense<0.000000e+00> : vector<1x128xf32>
    %203 = tpu.matmul %199, %202, %cst_142 {dimension_numbers = #tpu.dot_dimension_numbers<[1], [0], [0], [1], [0, 0, 1, 1], [], []>, precision = #tpu.contract_precision<fp32>} : vector<1x128xf32>, vector<128x128xf32>, vector<1x128xf32> -> vector<1x128xf32>
    %204 = math.tanh %203 : vector<1x128xf32>
    %205 = arith.addf %197, %204 : vector<1x128xf32>
    %206 = arith.index_cast %161 : i32 to index
    %c0_143 = arith.constant 0 : index
    %207 = vector.load %arg0[%206, %c0_143] : memref<50x128xf32, #tpu.memory_space<vmem>>, vector<1x128xf32>
    %208 = arith.index_cast %160 : i32 to index
    %c0_144 = arith.constant 0 : index
    %c0_145 = arith.constant 0 : index
    %209 = vector.load %arg1[%208, %c0_144, %c0_145] : memref<20x128x128xf32, #tpu.memory_space<vmem>>, vector<1x128x128xf32>
    %210 = vector.shape_cast %209 : vector<1x128x128xf32> to vector<128x128xf32>
    %cst_146 = arith.constant dense<0.000000e+00> : vector<1x128xf32>
    %211 = tpu.matmul %207, %210, %cst_146 {dimension_numbers = #tpu.dot_dimension_numbers<[1], [0], [0], [1], [0, 0, 1, 1], [], []>, precision = #tpu.contract_precision<fp32>} : vector<1x128xf32>, vector<128x128xf32>, vector<1x128xf32> -> vector<1x128xf32>
    %212 = math.tanh %211 : vector<1x128xf32>
    %213 = arith.addf %205, %212 : vector<1x128xf32>
    %214 = arith.index_cast %163 : i32 to index
    %c0_147 = arith.constant 0 : index
    %215 = vector.load %arg0[%214, %c0_147] : memref<50x128xf32, #tpu.memory_space<vmem>>, vector<1x128xf32>
    %216 = arith.index_cast %162 : i32 to index
    %c0_148 = arith.constant 0 : index
    %c0_149 = arith.constant 0 : index
    %217 = vector.load %arg2[%216, %c0_148, %c0_149] : memref<20x128x128xf32, #tpu.memory_space<vmem>>, vector<1x128x128xf32>
    %218 = vector.shape_cast %217 : vector<1x128x128xf32> to vector<128x128xf32>
    %cst_150 = arith.constant dense<0.000000e+00> : vector<1x128xf32>
    %219 = tpu.matmul %215, %218, %cst_150 {dimension_numbers = #tpu.dot_dimension_numbers<[1], [0], [0], [1], [0, 0, 1, 1], [], []>, precision = #tpu.contract_precision<fp32>} : vector<1x128xf32>, vector<128x128xf32>, vector<1x128xf32> -> vector<1x128xf32>
    %220 = math.tanh %219 : vector<1x128xf32>
    %221 = arith.addf %213, %220 : vector<1x128xf32>
    %222 = arith.index_cast %165 : i32 to index
    %c0_151 = arith.constant 0 : index
    %223 = vector.load %arg0[%222, %c0_151] : memref<50x128xf32, #tpu.memory_space<vmem>>, vector<1x128xf32>
    %224 = arith.index_cast %164 : i32 to index
    %c0_152 = arith.constant 0 : index
    %c0_153 = arith.constant 0 : index
    %225 = vector.load %arg2[%224, %c0_152, %c0_153] : memref<20x128x128xf32, #tpu.memory_space<vmem>>, vector<1x128x128xf32>
    %226 = vector.shape_cast %225 : vector<1x128x128xf32> to vector<128x128xf32>
    %cst_154 = arith.constant dense<0.000000e+00> : vector<1x128xf32>
    %227 = tpu.matmul %223, %226, %cst_154 {dimension_numbers = #tpu.dot_dimension_numbers<[1], [0], [0], [1], [0, 0, 1, 1], [], []>, precision = #tpu.contract_precision<fp32>} : vector<1x128xf32>, vector<128x128xf32>, vector<1x128xf32> -> vector<1x128xf32>
    %228 = math.tanh %227 : vector<1x128xf32>
    %229 = arith.addf %221, %228 : vector<1x128xf32>
    %230 = arith.mulf %114, %229 : vector<1x128xf32>
    %231 = vector.shape_cast %230 : vector<1x128xf32> to vector<1x1x128xf32>
    %cst_155 = arith.constant dense<0.000000e+00> : vector<1xf32>
    %232 = vector.multi_reduction <add>, %231, %cst_155 [1, 2] : vector<1x1x128xf32> to vector<1xf32>
    %233 = vector.shape_cast %232 : vector<1xf32> to vector<1x1x1xf32>
    %234 = vector.extract %233[0, 0, 0] : f32 from vector<1x1x1xf32>
    %235 = vector.broadcast %234 : f32 to vector<1x1xf32>
    %236 = arith.mulf %114, %114 : vector<1x128xf32>
    %237 = vector.shape_cast %236 : vector<1x128xf32> to vector<1x1x128xf32>
    %cst_156 = arith.constant dense<0.000000e+00> : vector<1xf32>
    %238 = vector.multi_reduction <add>, %237, %cst_156 [1, 2] : vector<1x1x128xf32> to vector<1xf32>
    %239 = vector.shape_cast %238 : vector<1xf32> to vector<1x1x1xf32>
    %240 = vector.extract %239[0, 0, 0] : f32 from vector<1x1x1xf32>
    %241 = vector.broadcast %240 : f32 to vector<1x1xf32>
    %242 = arith.mulf %229, %229 : vector<1x128xf32>
    %243 = vector.shape_cast %242 : vector<1x128xf32> to vector<1x1x128xf32>
    %cst_157 = arith.constant dense<0.000000e+00> : vector<1xf32>
    %244 = vector.multi_reduction <add>, %243, %cst_157 [1, 2] : vector<1x1x128xf32> to vector<1xf32>
    %245 = vector.shape_cast %244 : vector<1xf32> to vector<1x1x1xf32>
    %246 = vector.extract %245[0, 0, 0] : f32 from vector<1x1x1xf32>
    %247 = vector.broadcast %246 : f32 to vector<1x1xf32>
    %248 = arith.mulf %241, %247 : vector<1x1xf32>
    %249 = math.rsqrt %248 : vector<1x1xf32>
    %250 = arith.mulf %235, %249 : vector<1x1xf32>
    %251 = vector.shape_cast %250 : vector<1x1xf32> to vector<1x1xf32>
    %252 = vector.broadcast %251 : vector<1x1xf32> to vector<6x128xf32>
    %253 = tpu.concatenate %114, %229, %252 in 0 : vector<1x128xf32>, vector<1x128xf32>, vector<6x128xf32> -> vector<8x128xf32>
    %c0_158 = arith.constant 0 : index
    %c0_159 = arith.constant 0 : index
    %254 = vector.load %arg11[%c0_158, %c0_159] : memref<8x128xf32, #tpu.memory_space<vmem>>, vector<8x128xf32>
    tpu.vector_store %arg11[%c0_158, %c0_159], %253 {strides = array<i32>} : memref<8x128xf32, #tpu.memory_space<vmem>>, vector<8x128xf32>,
    return
  }
}

</mosaic_0001>

<llo_original>
// kernel: tpu_custom_call.1
$region0: #{tpu_custom_call.1}
  #allocation0 [shape = 'u32[]', space=smem, size = 0x4, offset = 0x4, fixed_abs, tag = 'smem constant byte address 0x4 - core index']
  #allocation1 [shape = 'u32[144,128]{1,0:T(1,128)}', space=vmem, size = 0x12000, scoped, tag = 'internal scratch']
  %s0 = inlined_call_operand.hbm [shape: f32[50,128], index: 0, kind: input, shape index: {}]
  %s1 = inlined_call_operand.hbm [shape: f32[20,128,128], index: 1, kind: input, shape index: {}]
  %s2 = inlined_call_operand.hbm [shape: f32[20,128,128], index: 2, kind: input, shape index: {}]
  %s3 = inlined_call_operand.hbm [shape: s32[8], index: 3, kind: input, shape index: {}]
  %s4 = inlined_call_operand.hbm [shape: s32[2,2], index: 4, kind: input, shape index: {}]
  %s5 = inlined_call_operand.hbm [shape: s32[2,2], index: 5, kind: input, shape index: {}]
  %s6 = inlined_call_operand.hbm [shape: s32[2,3], index: 6, kind: input, shape index: {}]
  %s7 = inlined_call_operand.hbm [shape: s32[8], index: 7, kind: input, shape index: {}]
  %s8 = inlined_call_operand.hbm [shape: s32[2,2], index: 8, kind: input, shape index: {}]
  %s9 = inlined_call_operand.hbm [shape: s32[2,2], index: 9, kind: input, shape index: {}]
  %s10 = inlined_call_operand.hbm [shape: s32[2,3], index: 10, kind: input, shape index: {}]
  %s11 = inlined_call_operand.hbm [shape: f32[8,128], index: 11, kind: output, shape index: {}]
  %s12 = sld [smem:[#allocation0]]
  $region98: #{tpu_custom_call.1} parent=0
    _
  %s14 = ssub.s32 1, %s12
  %s15 = scalar_select 0, %s14, %s12
  $region1: #{tpu_custom_call.1} parent=0
    #allocation2 [shape = 'u8[28672]{0}', space=vmem, size = 0x7000, scoped, tag = 'input window, operand 0, single buffered']
    #allocation3 [shape = 's32[1]{0}', space=sflag, size = 0x4, scoped, tag = 'scoped memory for tpu_custom_call.1']
    #allocation4 [shape = 's32[1]{0}', space=sflag, size = 0x4, scoped, tag = 'scoped memory for tpu_custom_call.1']
    #allocation5 [shape = 's32[1]{0}', space=sflag, size = 0x4, scoped, tag = 'scoped memory for tpu_custom_call.1']
    #allocation6 [shape = 'u8[1310720]{0}', space=vmem, size = 0x140000, scoped, tag = 'input window, operand 1, single buffered']
    #allocation7 [shape = 's32[1]{0}', space=sflag, size = 0x4, scoped, tag = 'scoped memory for tpu_custom_call.1']
    #allocation8 [shape = 'u8[1310720]{0}', space=vmem, size = 0x140000, scoped, tag = 'input window, operand 2, single buffered']
    #allocation9 [shape = 'u8[512]{0}', space=smem, size = 0x200, scoped, tag = 'input window, operand 3, single buffered']
    #allocation10 [shape = 'u8[1024]{0}', space=smem, size = 0x400, scoped, tag = 'input window, operand 4, single buffered']
    #allocation11 [shape = 's32[1]{0}', space=sflag, size = 0x4, scoped, tag = 'scoped memory for tpu_custom_call.1']
    #allocation12 [shape = 'u8[1024]{0}', space=smem, size = 0x400, scoped, tag = 'input window, operand 5, single buffered']
    #allocation13 [shape = 'u8[1024]{0}', space=smem, size = 0x400, scoped, tag = 'input window, operand 6, single buffered']
    #allocation14 [shape = 's32[1]{0}', space=sflag, size = 0x4, scoped, tag = 'scoped memory for tpu_custom_call.1']
    #allocation15 [shape = 'u8[512]{0}', space=smem, size = 0x200, scoped, tag = 'input window, operand 7, single buffered']
    #allocation16 [shape = 'u8[1024]{0}', space=smem, size = 0x400, scoped, tag = 'input window, operand 8, single buffered']
    #allocation17 [shape = 's32[1]{0}', space=sflag, size = 0x4, scoped, tag = 'scoped memory for tpu_custom_call.1']
    #allocation18 [shape = 'u8[1024]{0}', space=smem, size = 0x400, scoped, tag = 'input window, operand 9, single buffered']
    #allocation19 [shape = 'u8[1024]{0}', space=smem, size = 0x400, scoped, tag = 'input window, operand 10, single buffered']
    #allocation20 [shape = 's32[1]{0}', space=sflag, size = 0x4, scoped, tag = 'scoped memory for tpu_custom_call.1']
    #allocation21 [shape = 'u8[4096]{0}', space=vmem, size = 0x1000, scoped, tag = 'output window, operand 0, single buffered']
    %16 = vsyncpa [#allocation3], 0
    %17 = vsyncpa [#allocation7], 0
    %18 = vsyncpa [#allocation5], 0
    %19 = vsyncpa [#allocation11], 0
    %20 = vsyncpa [#allocation14], 0
    %21 = vsyncpa [#allocation17], 0
    %22 = vsyncpa [#allocation20], 0
    %23 = vsyncpa [#allocation4], 0
    // Predicated region
    $region2: #{tpu_custom_call.1} parent=1 // pred_check
      _
    $region3: #{tpu_custom_call.1} parent=1 // pred_check_branch
      %25 = sbr.rel (0) target = $region5
    $region4: #{tpu_custom_call.1} parent=1 // pred_region
      %s27 = ssub.s32 896, 896
      %28 = vsyncadd [#allocation3], %s27
      %s29 = sshll.u32 [#allocation2], 4
      %s30 = int_to_ptr.vmem [resolvable:$true] %s29
      %35 = dma.hbm_to_vmem [thread:$0]  %s0, 896, %s30, [#allocation3], 128, 128, 8
    $region5: #{tpu_custom_call.1} parent=1 // pred_fallthru
      _
    // Predicated region
    $region6: #{tpu_custom_call.1} parent=1 // pred_check
      _
    $region7: #{tpu_custom_call.1} parent=1 // pred_check_branch
      %37 = sbr.rel (0) target = $region9
    $region8: #{tpu_custom_call.1} parent=1 // pred_region
      %s39 = ssub.s32 40960, 40960
      %40 = vsyncadd [#allocation7], %s39
      %s41 = sshll.u32 [#allocation6], 4
      %s42 = int_to_ptr.vmem [resolvable:$true] %s41
      %47 = dma.hbm_to_vmem [thread:$0]  %s1, 40960, %s42, [#allocation7], 128, 128, 8
    $region9: #{tpu_custom_call.1} parent=1 // pred_fallthru
      _
    // Predicated region
    $region10: #{tpu_custom_call.1} parent=1 // pred_check
      _
    $region11: #{tpu_custom_call.1} parent=1 // pred_check_branch
      %49 = sbr.rel (0) target = $region13
    $region12: #{tpu_custom_call.1} parent=1 // pred_region
      %s51 = ssub.s32 40960, 40960
      %52 = vsyncadd [#allocation7], %s51
      %s53 = sshll.u32 [#allocation8], 4
      %s54 = int_to_ptr.vmem [resolvable:$true] %s53
      %59 = dma.hbm_to_vmem [thread:$0]  %s2, 40960, %s54, [#allocation7], 128, 128, 8
    $region13: #{tpu_custom_call.1} parent=1 // pred_fallthru
      _
    // Predicated region
    $region14: #{tpu_custom_call.1} parent=1 // pred_check
      _
    $region15: #{tpu_custom_call.1} parent=1 // pred_check_branch
      %61 = sbr.rel (0) target = $region17
    $region16: #{tpu_custom_call.1} parent=1 // pred_region
      %s63 = ssub.s32 16, 16
      %64 = vsyncadd [#allocation5], %s63
      %67 = dma.hbm_to_smem %s3, 16, [#allocation9], [#allocation5]
    $region17: #{tpu_custom_call.1} parent=1 // pred_fallthru
      _
    // Predicated region
    $region18: #{tpu_custom_call.1} parent=1 // pred_check
      _
    $region19: #{tpu_custom_call.1} parent=1 // pred_check_branch
      %69 = sbr.rel (0) target = $region21
    $region20: #{tpu_custom_call.1} parent=1 // pred_region
      %s71 = ssub.s32 32, 32
      %72 = vsyncadd [#allocation11], %s71
      %75 = dma.hbm_to_smem %s4, 32, [#allocation10], [#allocation11]
    $region21: #{tpu_custom_call.1} parent=1 // pred_fallthru
      _
    // Predicated region
    $region22: #{tpu_custom_call.1} parent=1 // pred_check
      _
    $region23: #{tpu_custom_call.1} parent=1 // pred_check_branch
      %77 = sbr.rel (0) target = $region25
    $region24: #{tpu_custom_call.1} parent=1 // pred_region
      %s79 = ssub.s32 32, 32
      %80 = vsyncadd [#allocation11], %s79
      %83 = dma.hbm_to_smem %s5, 32, [#allocation12], [#allocation11]
    $region25: #{tpu_custom_call.1} parent=1 // pred_fallthru
      _
    // Predicated region
    $region26: #{tpu_custom_call.1} parent=1 // pred_check
      _
    $region27: #{tpu_custom_call.1} parent=1 // pred_check_branch
      %85 = sbr.rel (0) target = $region29
    $region28: #{tpu_custom_call.1} parent=1 // pred_region
      %s87 = ssub.s32 32, 32
      %88 = vsyncadd [#allocation14], %s87
      %91 = dma.hbm_to_smem %s6, 32, [#allocation13], [#allocation14]
    $region29: #{tpu_custom_call.1} parent=1 // pred_fallthru
      _
    // Predicated region
    $region30: #{tpu_custom_call.1} parent=1 // pred_check
      _
    $region31: #{tpu_custom_call.1} parent=1 // pred_check_branch
      %93 = sbr.rel (0) target = $region33
    $region32: #{tpu_custom_call.1} parent=1 // pred_region
      %s95 = ssub.s32 16, 16
      %96 = vsyncadd [#allocation14], %s95
      %99 = dma.hbm_to_smem %s7, 16, [#allocation15], [#allocation14]
    $region33: #{tpu_custom_call.1} parent=1 // pred_fallthru
      _
    // Predicated region
    $region34: #{tpu_custom_call.1} parent=1 // pred_check
      _
    $region35: #{tpu_custom_call.1} parent=1 // pred_check_branch
      %101 = sbr.rel (0) target = $region37
    $region36: #{tpu_custom_call.1} parent=1 // pred_region
      %s103 = ssub.s32 32, 32
      %104 = vsyncadd [#allocation17], %s103
      %107 = dma.hbm_to_smem %s8, 32, [#allocation16], [#allocation17]
    $region37: #{tpu_custom_call.1} parent=1 // pred_fallthru
      _
    // Predicated region
    $region38: #{tpu_custom_call.1} parent=1 // pred_check
      _
    $region39: #{tpu_custom_call.1} parent=1 // pred_check_branch
      %109 = sbr.rel (0) target = $region41
    $region40: #{tpu_custom_call.1} parent=1 // pred_region
      %s111 = ssub.s32 32, 32
      %112 = vsyncadd [#allocation17], %s111
      %115 = dma.hbm_to_smem %s9, 32, [#allocation18], [#allocation17]
    $region41: #{tpu_custom_call.1} parent=1 // pred_fallthru
      _
    // Predicated region
    $region42: #{tpu_custom_call.1} parent=1 // pred_check
      _
    $region43: #{tpu_custom_call.1} parent=1 // pred_check_branch
      %117 = sbr.rel (0) target = $region45
    $region44: #{tpu_custom_call.1} parent=1 // pred_region
      %s119 = ssub.s32 32, 32
      %120 = vsyncadd [#allocation20], %s119
      %123 = dma.hbm_to_smem %s10, 32, [#allocation19], [#allocation20]
    $region45: #{tpu_custom_call.1} parent=1 // pred_fallthru
      _
    // Predicated region
    $region46: #{tpu_custom_call.1} parent=1 // pred_check
      _
    $region47: #{tpu_custom_call.1} parent=1 // pred_check_branch
      %125 = sbr.rel (0) target = $region49
    $region48: #{tpu_custom_call.1} parent=1 // pred_region
      %126 = dma.done [#allocation3], 896
    $region49: #{tpu_custom_call.1} parent=1 // pred_fallthru
      _
    // Predicated region
    $region50: #{tpu_custom_call.1} parent=1 // pred_check
      _
    $region51: #{tpu_custom_call.1} parent=1 // pred_check_branch
      %128 = sbr.rel (0) target = $region53
    $region52: #{tpu_custom_call.1} parent=1 // pred_region
      %129 = dma.done [#allocation7], 40960
    $region53: #{tpu_custom_call.1} parent=1 // pred_fallthru
      _
    // Predicated region
    $region54: #{tpu_custom_call.1} parent=1 // pred_check
      _
    $region55: #{tpu_custom_call.1} parent=1 // pred_check_branch
      %131 = sbr.rel (0) target = $region57
    $region56: #{tpu_custom_call.1} parent=1 // pred_region
      %132 = dma.done [#allocation7], 40960
    $region57: #{tpu_custom_call.1} parent=1 // pred_fallthru
      _
    // Predicated region
    $region58: #{tpu_custom_call.1} parent=1 // pred_check
      _
    $region59: #{tpu_custom_call.1} parent=1 // pred_check_branch
      %134 = sbr.rel (0) target = $region61
    $region60: #{tpu_custom_call.1} parent=1 // pred_region
      %135 = dma.done [#allocation5], 16
    $region61: #{tpu_custom_call.1} parent=1 // pred_fallthru
      _
    // Predicated region
    $region62: #{tpu_custom_call.1} parent=1 // pred_check
      _
    $region63: #{tpu_custom_call.1} parent=1 // pred_check_branch
      %137 = sbr.rel (0) target = $region65
    $region64: #{tpu_custom_call.1} parent=1 // pred_region
      %138 = dma.done [#allocation11], 32
    $region65: #{tpu_custom_call.1} parent=1 // pred_fallthru
      _
    // Predicated region
    $region66: #{tpu_custom_call.1} parent=1 // pred_check
      _
    $region67: #{tpu_custom_call.1} parent=1 // pred_check_branch
      %140 = sbr.rel (0) target = $region69
    $region68: #{tpu_custom_call.1} parent=1 // pred_region
      %141 = dma.done [#allocation11], 32
    $region69: #{tpu_custom_call.1} parent=1 // pred_fallthru
      _
    // Predicated region
    $region70: #{tpu_custom_call.1} parent=1 // pred_check
      _
    $region71: #{tpu_custom_call.1} parent=1 // pred_check_branch
      %143 = sbr.rel (0) target = $region73
    $region72: #{tpu_custom_call.1} parent=1 // pred_region
      %144 = dma.done [#allocation14], 32
    $region73: #{tpu_custom_call.1} parent=1 // pred_fallthru
      _
    // Predicated region
    $region74: #{tpu_custom_call.1} parent=1 // pred_check
      _
    $region75: #{tpu_custom_call.1} parent=1 // pred_check_branch
      %146 = sbr.rel (0) target = $region77
    $region76: #{tpu_custom_call.1} parent=1 // pred_region
      %147 = dma.done [#allocation14], 16
    $region77: #{tpu_custom_call.1} parent=1 // pred_fallthru
      _
    // Predicated region
    $region78: #{tpu_custom_call.1} parent=1 // pred_check
      _
    $region79: #{tpu_custom_call.1} parent=1 // pred_check_branch
      %149 = sbr.rel (0) target = $region81
    $region80: #{tpu_custom_call.1} parent=1 // pred_region
      %150 = dma.done [#allocation17], 32
    $region81: #{tpu_custom_call.1} parent=1 // pred_fallthru
      _
    // Predicated region
    $region82: #{tpu_custom_call.1} parent=1 // pred_check
      _
    $region83: #{tpu_custom_call.1} parent=1 // pred_check_branch
      %152 = sbr.rel (0) target = $region85
    $region84: #{tpu_custom_call.1} parent=1 // pred_region
      %153 = dma.done [#allocation17], 32
    $region85: #{tpu_custom_call.1} parent=1 // pred_fallthru
      _
    // Predicated region
    $region86: #{tpu_custom_call.1} parent=1 // pred_check
      _
    $region87: #{tpu_custom_call.1} parent=1 // pred_check_branch
      %155 = sbr.rel (0) target = $region89
    $region88: #{tpu_custom_call.1} parent=1 // pred_region
      %156 = dma.done [#allocation20], 32
    $region89: #{tpu_custom_call.1} parent=1 // pred_fallthru
      _
    %157 = sfence
    %s158 = sld [smem:[#allocation9]]
    %s159 = scalar_lea.vmem [#allocation2], %s158
    %v160 = vld [vmem:[%s159] sm:$0x1]
    %v161 = vadd.f32 %v160, 0.0
    %s162 = sld [smem:[#allocation9 + $0x1]]
    %s163 = scalar_lea.vmem [#allocation2], %s162
    %v164 = vld [vmem:[%s163] sm:$0x1]
    %v165 = vadd.f32 %v161, %v164
    %s166 = sld [smem:[#allocation9 + $0x2]]
    %s167 = scalar_lea.vmem [#allocation2], %s166
    %v168 = vld [vmem:[%s167] sm:$0x1]
    %v169 = vadd.f32 %v165, %v168
    %s170 = sld [smem:[#allocation9 + $0x3]]
    %s171 = scalar_lea.vmem [#allocation2], %s170
    %v172 = vld [vmem:[%s171] sm:$0x1]
    %v173 = vadd.f32 %v169, %v172
    %s174 = sld [smem:[#allocation9 + $0x4]]
    %s175 = scalar_lea.vmem [#allocation2], %s174
    %v176 = vld [vmem:[%s175] sm:$0x1]
    %v177 = vadd.f32 %v173, %v176
    %s178 = sld [smem:[#allocation9 + $0x5]]
    %s179 = scalar_lea.vmem [#allocation2], %s178
    %v180 = vld [vmem:[%s179] sm:$0x1]
    %v181 = vadd.f32 %v177, %v180
    %s182 = sld [smem:[#allocation9 + $0x6]]
    %s183 = scalar_lea.vmem [#allocation2], %s182
    %v184 = vld [vmem:[%s183] sm:$0x1]
    %v185 = vadd.f32 %v181, %v184
    %s186 = sld [smem:[#allocation9 + $0x7]]
    %s187 = scalar_lea.vmem [#allocation2], %s186
    %v188 = vld [vmem:[%s187] sm:$0x1]
    %v189 = vadd.f32 %v185, %v188
    %v190 = vmul.f32 %v189, 0.125
    %s191 = sld [smem:[#allocation10]]
    %s192 = sld [smem:[#allocation10 + $0x1]]
    %s193 = sld [smem:[#allocation10 + $0x80]]
    %s194 = sld [smem:[#allocation10 + $0x81]]
    %s195 = sld [smem:[#allocation12]]
    %s196 = sld [smem:[#allocation12 + $0x1]]
    %s197 = sld [smem:[#allocation12 + $0x80]]
    %s198 = sld [smem:[#allocation12 + $0x81]]
    %s199 = sld [smem:[#allocation13]]
    %s200 = sld [smem:[#allocation13 + $0x1]]
    %s201 = sld [smem:[#allocation13 + $0x80]]
    %s202 = sld [smem:[#allocation13 + $0x81]]
    %s203 = sld [smem:[#allocation13 + $0x2]]
    %s204 = sld [smem:[#allocation13 + $0x82]]
    %s205 = scalar_lea.vmem [#allocation2], %s192
    %v206 = vld [vmem:[%s205] sm:$0x1]
    %s207 = smul.u32 %s191, 128
    %s208 = scalar_lea.vmem [#allocation6], %s207
    %v209 = vld [vmem:[%s208] sm:$0xff]
    %v210 = vld [vmem:[%s208 + $0x8] sm:$0xff]
    %v211 = vld [vmem:[%s208 + $0x10] sm:$0xff]
    %v212 = vld [vmem:[%s208 + $0x18] sm:$0xff]
    %v213 = vld [vmem:[%s208 + $0x20] sm:$0xff]
    %v214 = vld [vmem:[%s208 + $0x28] sm:$0xff]
    %v215 = vld [vmem:[%s208 + $0x30] sm:$0xff]
    %v216 = vld [vmem:[%s208 + $0x38] sm:$0xff]
    %v217 = vld [vmem:[%s208 + $0x40] sm:$0xff]
    %v218 = vld [vmem:[%s208 + $0x48] sm:$0xff]
    %v219 = vld [vmem:[%s208 + $0x50] sm:$0xff]
    %v220 = vld [vmem:[%s208 + $0x58] sm:$0xff]
    %v221 = vld [vmem:[%s208 + $0x60] sm:$0xff]
    %v222 = vld [vmem:[%s208 + $0x68] sm:$0xff]
    %v223 = vld [vmem:[%s208 + $0x70] sm:$0xff]
    %v224 = vld [vmem:[%s208 + $0x78] sm:$0xff]
    %225 = vmatprep.subr.mxu0 0.0
    %v226 = vand.u32 %v209, 4294901760
    %227 = vmatpush1.msra.mxu0 %v226
    %228 = vmatprep.subr.mxu0 0.0
    %v229 = vand.u32 %v210, 4294901760
    %230 = vmatpush1.msra.mxu0 %v229
    %231 = vmatprep.subr.mxu0 0.0
    %v232 = vand.u32 %v211, 4294901760
    %233 = vmatpush1.msra.mxu0 %v232
    %234 = vmatprep.subr.mxu0 0.0
    %v235 = vand.u32 %v212, 4294901760
    %236 = vmatpush1.msra.mxu0 %v235
    %237 = vmatprep.subr.mxu0 0.0
    %v238 = vand.u32 %v213, 4294901760
    %239 = vmatpush1.msra.mxu0 %v238
    %240 = vmatprep.subr.mxu0 0.0
    %v241 = vand.u32 %v214, 4294901760
    %242 = vmatpush1.msra.mxu0 %v241
    %243 = vmatprep.subr.mxu0 0.0
    %v244 = vand.u32 %v215, 4294901760
    %245 = vmatpush1.msra.mxu0 %v244
    %246 = vmatprep.subr.mxu0 0.0
    %v247 = vand.u32 %v216, 4294901760
    %248 = vmatpush1.msra.mxu0 %v247
    %249 = vmatprep.subr.mxu0 0.0
    %v250 = vand.u32 %v217, 4294901760
    %251 = vmatpush1.msra.mxu0 %v250
    %252 = vmatprep.subr.mxu0 0.0
    %v253 = vand.u32 %v218, 4294901760
    %254 = vmatpush1.msra.mxu0 %v253
    %255 = vmatprep.subr.mxu0 0.0
    %v256 = vand.u32 %v219, 4294901760
    %257 = vmatpush1.msra.mxu0 %v256
    %258 = vmatprep.subr.mxu0 0.0
    %v259 = vand.u32 %v220, 4294901760
    %260 = vmatpush1.msra.mxu0 %v259
    %261 = vmatprep.subr.mxu0 0.0
    %v262 = vand.u32 %v221, 4294901760
    %263 = vmatpush1.msra.mxu0 %v262
    %264 = vmatprep.subr.mxu0 0.0
    %v265 = vand.u32 %v222, 4294901760
    %266 = vmatpush1.msra.mxu0 %v265
    %267 = vmatprep.subr.mxu0 0.0
    %v268 = vand.u32 %v223, 4294901760
    %269 = vmatpush1.msra.mxu0 %v268
    %270 = vmatprep.subr.mxu0 0.0
    %v271 = vand.u32 %v224, 4294901760
    %272 = vmatpush1.msra.mxu0 %v271
    %273 = vmatprep.subr.mxu0 0.0
    %274 = vmatpush1.msra.mxu0 0.0
    %275 = vmatprep.subr.mxu0 0.0
    %276 = vmatpush1.msra.mxu0 0.0
    %277 = vmatprep.subr.mxu0 0.0
    %278 = vmatpush1.msra.mxu0 0.0
    %279 = vmatprep.subr.mxu0 0.0
    %280 = vmatpush1.msra.mxu0 0.0
    %281 = vmatprep.subr.mxu0 0.0
    %282 = vmatpush1.msra.mxu0 0.0
    %283 = vmatprep.subr.mxu0 0.0
    %284 = vmatpush1.msra.mxu0 0.0
    %285 = vmatprep.subr.mxu0 0.0
    %286 = vmatpush1.msra.mxu0 0.0
    %287 = vmatprep.subr.mxu0 0.0
    %288 = vmatpush1.msra.mxu0 0.0
    %289 = vmatprep.subr.mxu0 0.0
    %290 = vmatpush1.msra.mxu0 0.0
    %291 = vmatprep.subr.mxu0 0.0
    %292 = vmatpush1.msra.mxu0 0.0
    %293 = vmatprep.subr.mxu0 0.0
    %294 = vmatpush1.msra.mxu0 0.0
    %295 = vmatprep.subr.mxu0 0.0
    %296 = vmatpush1.msra.mxu0 0.0
    %297 = vmatprep.subr.mxu0 0.0
    %298 = vmatpush1.msra.mxu0 0.0
    %299 = vmatprep.subr.mxu0 0.0
    %300 = vmatpush1.msra.mxu0 0.0
    %301 = vmatprep.subr.mxu0 0.0
    %302 = vmatpush1.msra.mxu0 0.0
    %303 = vmatprep.subr.mxu0 0.0
    %304 = vmatpush1.msra.mxu0 0.0
    %305 = vmatprep.mubr.f32.mxu0 0.0
    %v306 = vand.u32 %v206, 4294901760
    %v307 = vsub.f32 %v206, %v306
    %v308 = vand.u32 %v307, 4294901760
    %v309 = vsub.f32 %v307, %v308
    %v310 = vand.u32 %v309, 4294901760
    %311 = vmatmul.mubr.f32.gmra.mrb[0].mxu0 %v310
    %v312 = vpop.f32.mrb[0].mxu0
    %v313 = vadd.f32 0.0, %v312
    %v314 = vpop.f32.mrb[0].mxu0
    %315 = vdwg.mxu0
    %316 = vmatprep.subr.mxu0 0.0
    %v317 = vand.u32 %v209, 4294901760
    %v318 = vsub.f32 %v209, %v317
    %v319 = vand.u32 %v318, 4294901760
    %v320 = vsub.f32 %v318, %v319
    %v321 = vand.u32 %v320, 4294901760
    %322 = vmatpush1.msra.mxu0 %v321
    %323 = vmatprep.subr.mxu0 0.0
    %v324 = vand.u32 %v210, 4294901760
    %v325 = vsub.f32 %v210, %v324
    %v326 = vand.u32 %v325, 4294901760
    %v327 = vsub.f32 %v325, %v326
    %v328 = vand.u32 %v327, 4294901760
    %329 = vmatpush1.msra.mxu0 %v328
    %330 = vmatprep.subr.mxu0 0.0
    %v331 = vand.u32 %v211, 4294901760
    %v332 = vsub.f32 %v211, %v331
    %v333 = vand.u32 %v332, 4294901760
    %v334 = vsub.f32 %v332, %v333
    %v335 = vand.u32 %v334, 4294901760
    %336 = vmatpush1.msra.mxu0 %v335
    %337 = vmatprep.subr.mxu0 0.0
    %v338 = vand.u32 %v212, 4294901760
    %v339 = vsub.f32 %v212, %v338
    %v340 = vand.u32 %v339, 4294901760
    %v341 = vsub.f32 %v339, %v340
    %v342 = vand.u32 %v341, 4294901760
    %343 = vmatpush1.msra.mxu0 %v342
    %344 = vmatprep.subr.mxu0 0.0
    %v345 = vand.u32 %v213, 4294901760
    %v346 = vsub.f32 %v213, %v345
    %v347 = vand.u32 %v346, 4294901760
    %v348 = vsub.f32 %v346, %v347
    %v349 = vand.u32 %v348, 4294901760
    %350 = vmatpush1.msra.mxu0 %v349
    %351 = vmatprep.subr.mxu0 0.0
    %v352 = vand.u32 %v214, 4294901760
    %v353 = vsub.f32 %v214, %v352
    %v354 = vand.u32 %v353, 4294901760
    %v355 = vsub.f32 %v353, %v354
    %v356 = vand.u32 %v355, 4294901760
    %357 = vmatpush1.msra.mxu0 %v356
    %358 = vmatprep.subr.mxu0 0.0
    %v359 = vand.u32 %v215, 4294901760
    %v360 = vsub.f32 %v215, %v359
    %v361 = vand.u32 %v360, 4294901760
    %v362 = vsub.f32 %v360, %v361
    %v363 = vand.u32 %v362, 4294901760
    %364 = vmatpush1.msra.mxu0 %v363
    %365 = vmatprep.subr.mxu0 0.0
    %v366 = vand.u32 %v216, 4294901760
    %v367 = vsub.f32 %v216, %v366
    %v368 = vand.u32 %v367, 4294901760
    %v369 = vsub.f32 %v367, %v368
    %v370 = vand.u32 %v369, 4294901760
    %371 = vmatpush1.msra.mxu0 %v370
    %372 = vmatprep.subr.mxu0 0.0
    %v373 = vand.u32 %v217, 4294901760
    %v374 = vsub.f32 %v217, %v373
    %v375 = vand.u32 %v374, 4294901760
    %v376 = vsub.f32 %v374, %v375
    %v377 = vand.u32 %v376, 4294901760
    %378 = vmatpush1.msra.mxu0 %v377
    %379 = vmatprep.subr.mxu0 0.0
    %v380 = vand.u32 %v218, 4294901760
    %v381 = vsub.f32 %v218, %v380
    %v382 = vand.u32 %v381, 4294901760
    %v383 = vsub.f32 %v381, %v382
    %v384 = vand.u32 %v383, 4294901760
    %385 = vmatpush1.msra.mxu0 %v384
    %386 = vmatprep.subr.mxu0 0.0
    %v387 = vand.u32 %v219, 4294901760
    %v388 = vsub.f32 %v219, %v387
    %v389 = vand.u32 %v388, 4294901760
    %v390 = vsub.f32 %v388, %v389
    %v391 = vand.u32 %v390, 4294901760
    %392 = vmatpush1.msra.mxu0 %v391
    %393 = vmatprep.subr.mxu0 0.0
    %v394 = vand.u32 %v220, 4294901760
    %v395 = vsub.f32 %v220, %v394
    %v396 = vand.u32 %v395, 4294901760
    %v397 = vsub.f32 %v395, %v396
    %v398 = vand.u32 %v397, 4294901760
    %399 = vmatpush1.msra.mxu0 %v398
    %400 = vmatprep.subr.mxu0 0.0
    %v401 = vand.u32 %v221, 4294901760
    %v402 = vsub.f32 %v221, %v401
    %v403 = vand.u32 %v402, 4294901760
    %v404 = vsub.f32 %v402, %v403
    %v405 = vand.u32 %v404, 4294901760
    %406 = vmatpush1.msra.mxu0 %v405
    %407 = vmatprep.subr.mxu0 0.0
    %v408 = vand.u32 %v222, 4294901760
    %v409 = vsub.f32 %v222, %v408
    %v410 = vand.u32 %v409, 4294901760
    %v411 = vsub.f32 %v409, %v410
    %v412 = vand.u32 %v411, 4294901760
    %413 = vmatpush1.msra.mxu0 %v412
    %414 = vmatprep.subr.mxu0 0.0
    %v415 = vand.u32 %v223, 4294901760
    %v416 = vsub.f32 %v223, %v415
    %v417 = vand.u32 %v416, 4294901760
    %v418 = vsub.f32 %v416, %v417
    %v419 = vand.u32 %v418, 4294901760
    %420 = vmatpush1.msra.mxu0 %v419
    %421 = vmatprep.subr.mxu0 0.0
    %v422 = vand.u32 %v224, 4294901760
    %v423 = vsub.f32 %v224, %v422
    %v424 = vand.u32 %v423, 4294901760
    %v425 = vsub.f32 %v423, %v424
    %v426 = vand.u32 %v425, 4294901760
    %427 = vmatpush1.msra.mxu0 %v426
    %428 = vmatprep.subr.mxu0 0.0
    %429 = vmatpush1.msra.mxu0 0.0
    %430 = vmatprep.subr.mxu0 0.0
    %431 = vmatpush1.msra.mxu0 0.0
    %432 = vmatprep.subr.mxu0 0.0
    %433 = vmatpush1.msra.mxu0 0.0
    %434 = vmatprep.subr.mxu0 0.0
    %435 = vmatpush1.msra.mxu0 0.0
    %436 = vmatprep.subr.mxu0 0.0
    %437 = vmatpush1.msra.mxu0 0.0
    %438 = vmatprep.subr.mxu0 0.0
    %439 = vmatpush1.msra.mxu0 0.0
    %440 = vmatprep.subr.mxu0 0.0
    %441 = vmatpush1.msra.mxu0 0.0
    %442 = vmatprep.subr.mxu0 0.0
    %443 = vmatpush1.msra.mxu0 0.0
    %444 = vmatprep.subr.mxu0 0.0
    %445 = vmatpush1.msra.mxu0 0.0
    %446 = vmatprep.subr.mxu0 0.0
    %447 = vmatpush1.msra.mxu0 0.0
    %448 = vmatprep.subr.mxu0 0.0
    %449 = vmatpush1.msra.mxu0 0.0
    %450 = vmatprep.subr.mxu0 0.0
    %451 = vmatpush1.msra.mxu0 0.0
    %452 = vmatprep.subr.mxu0 0.0
    %453 = vmatpush1.msra.mxu0 0.0
    %454 = vmatprep.subr.mxu0 0.0
    %455 = vmatpush1.msra.mxu0 0.0
    %456 = vmatprep.subr.mxu0 0.0
    %457 = vmatpush1.msra.mxu0 0.0
    %458 = vmatprep.subr.mxu0 0.0
    %459 = vmatpush1.msra.mxu0 0.0
    %460 = vmatprep.mubr.f32.mxu0 0.0
    %v461 = vand.u32 %v206, 4294901760
    %462 = vmatmul.mubr.f32.gmra.mrb[0].mxu0 %v461
    %v463 = vpop.f32.mrb[0].mxu0
    %v464 = vadd.f32 %v313, %v463
    %v465 = vpop.f32.mrb[0].mxu0
    %466 = vdwg.mxu0
    %467 = vmatprep.subr.mxu0 0.0
    %v468 = vand.u32 %v209, 4294901760
    %v469 = vsub.f32 %v209, %v468
    %470 = vmatpush1.msra.mxu0 %v469
    %471 = vmatprep.subr.mxu0 0.0
    %v472 = vand.u32 %v210, 4294901760
    %v473 = vsub.f32 %v210, %v472
    %474 = vmatpush1.msra.mxu0 %v473
    %475 = vmatprep.subr.mxu0 0.0
    %v476 = vand.u32 %v211, 4294901760
    %v477 = vsub.f32 %v211, %v476
    %478 = vmatpush1.msra.mxu0 %v477
    %479 = vmatprep.subr.mxu0 0.0
    %v480 = vand.u32 %v212, 4294901760
    %v481 = vsub.f32 %v212, %v480
    %482 = vmatpush1.msra.mxu0 %v481
    %483 = vmatprep.subr.mxu0 0.0
    %v484 = vand.u32 %v213, 4294901760
    %v485 = vsub.f32 %v213, %v484
    %486 = vmatpush1.msra.mxu0 %v485
    %487 = vmatprep.subr.mxu0 0.0
    %v488 = vand.u32 %v214, 4294901760
    %v489 = vsub.f32 %v214, %v488
    %490 = vmatpush1.msra.mxu0 %v489
    %491 = vmatprep.subr.mxu0 0.0
    %v492 = vand.u32 %v215, 4294901760
    %v493 = vsub.f32 %v215, %v492
    %494 = vmatpush1.msra.mxu0 %v493
    %495 = vmatprep.subr.mxu0 0.0
    %v496 = vand.u32 %v216, 4294901760
    %v497 = vsub.f32 %v216, %v496
    %498 = vmatpush1.msra.mxu0 %v497
    %499 = vmatprep.subr.mxu0 0.0
    %v500 = vand.u32 %v217, 4294901760
    %v501 = vsub.f32 %v217, %v500
    %502 = vmatpush1.msra.mxu0 %v501
    %503 = vmatprep.subr.mxu0 0.0
    %v504 = vand.u32 %v218, 4294901760
    %v505 = vsub.f32 %v218, %v504
    %506 = vmatpush1.msra.mxu0 %v505
    %507 = vmatprep.subr.mxu0 0.0
    %v508 = vand.u32 %v219, 4294901760
    %v509 = vsub.f32 %v219, %v508
    %510 = vmatpush1.msra.mxu0 %v509
    %511 = vmatprep.subr.mxu0 0.0
    %v512 = vand.u32 %v220, 4294901760
    %v513 = vsub.f32 %v220, %v512
    %514 = vmatpush1.msra.mxu0 %v513
    %515 = vmatprep.subr.mxu0 0.0
    %v516 = vand.u32 %v221, 4294901760
    %v517 = vsub.f32 %v221, %v516
    %518 = vmatpush1.msra.mxu0 %v517
    %519 = vmatprep.subr.mxu0 0.0
    %v520 = vand.u32 %v222, 4294901760
    %v521 = vsub.f32 %v222, %v520
    %522 = vmatpush1.msra.mxu0 %v521
    %523 = vmatprep.subr.mxu0 0.0
    %v524 = vand.u32 %v223, 4294901760
    %v525 = vsub.f32 %v223, %v524
    %526 = vmatpush1.msra.mxu0 %v525
    %527 = vmatprep.subr.mxu0 0.0
    %v528 = vand.u32 %v224, 4294901760
    %v529 = vsub.f32 %v224, %v528
    %530 = vmatpush1.msra.mxu0 %v529
    %531 = vmatprep.subr.mxu0 0.0
    %532 = vmatpush1.msra.mxu0 0.0
    %533 = vmatprep.subr.mxu0 0.0
    %534 = vmatpush1.msra.mxu0 0.0
    %535 = vmatprep.subr.mxu0 0.0
    %536 = vmatpush1.msra.mxu0 0.0
    %537 = vmatprep.subr.mxu0 0.0
    %538 = vmatpush1.msra.mxu0 0.0
    %539 = vmatprep.subr.mxu0 0.0
    %540 = vmatpush1.msra.mxu0 0.0
    %541 = vmatprep.subr.mxu0 0.0
    %542 = vmatpush1.msra.mxu0 0.0
    %543 = vmatprep.subr.mxu0 0.0
    %544 = vmatpush1.msra.mxu0 0.0
    %545 = vmatprep.subr.mxu0 0.0
    %546 = vmatpush1.msra.mxu0 0.0
    %547 = vmatprep.subr.mxu0 0.0
    %548 = vmatpush1.msra.mxu0 0.0
    %549 = vmatprep.subr.mxu0 0.0
    %550 = vmatpush1.msra.mxu0 0.0
    %551 = vmatprep.subr.mxu0 0.0
    %552 = vmatpush1.msra.mxu0 0.0
    %553 = vmatprep.subr.mxu0 0.0
    %554 = vmatpush1.msra.mxu0 0.0
    %555 = vmatprep.subr.mxu0 0.0
    %556 = vmatpush1.msra.mxu0 0.0
    %557 = vmatprep.subr.mxu0 0.0
    %558 = vmatpush1.msra.mxu0 0.0
    %559 = vmatprep.subr.mxu0 0.0
    %560 = vmatpush1.msra.mxu0 0.0
    %561 = vmatprep.subr.mxu0 0.0
    %562 = vmatpush1.msra.mxu0 0.0
    %563 = vmatprep.mubr.f32.mxu0 0.0
    %v564 = vand.u32 %v206, 4294901760
    %v565 = vsub.f32 %v206, %v564
    %566 = vmatmul.mubr.f32.gmra.mrb[0].mxu0 %v565
    %v567 = vpop.f32.mrb[0].mxu0
    %v568 = vadd.f32 %v464, %v567
    %v569 = vpop.f32.mrb[0].mxu0
    %570 = vdwg.mxu0
    %571 = vmatprep.subr.mxu0 0.0
    %v572 = vand.u32 %v209, 4294901760
    %573 = vmatpush1.msra.mxu0 %v572
    %574 = vmatprep.subr.mxu0 0.0
    %v575 = vand.u32 %v210, 4294901760
    %576 = vmatpush1.msra.mxu0 %v575
    %577 = vmatprep.subr.mxu0 0.0
    %v578 = vand.u32 %v211, 4294901760
    %579 = vmatpush1.msra.mxu0 %v578
    %580 = vmatprep.subr.mxu0 0.0
    %v581 = vand.u32 %v212, 4294901760
    %582 = vmatpush1.msra.mxu0 %v581
    %583 = vmatprep.subr.mxu0 0.0
    %v584 = vand.u32 %v213, 4294901760
    %585 = vmatpush1.msra.mxu0 %v584
    %586 = vmatprep.subr.mxu0 0.0
    %v587 = vand.u32 %v214, 4294901760
    %588 = vmatpush1.msra.mxu0 %v587
    %589 = vmatprep.subr.mxu0 0.0
    %v590 = vand.u32 %v215, 4294901760
    %591 = vmatpush1.msra.mxu0 %v590
    %592 = vmatprep.subr.mxu0 0.0
    %v593 = vand.u32 %v216, 4294901760
    %594 = vmatpush1.msra.mxu0 %v593
    %595 = vmatprep.subr.mxu0 0.0
    %v596 = vand.u32 %v217, 4294901760
    %597 = vmatpush1.msra.mxu0 %v596
    %598 = vmatprep.subr.mxu0 0.0
    %v599 = vand.u32 %v218, 4294901760
    %600 = vmatpush1.msra.mxu0 %v599
    %601 = vmatprep.subr.mxu0 0.0
    %v602 = vand.u32 %v219, 4294901760
    %603 = vmatpush1.msra.mxu0 %v602
    %604 = vmatprep.subr.mxu0 0.0
    %v605 = vand.u32 %v220, 4294901760
    %606 = vmatpush1.msra.mxu0 %v605
    %607 = vmatprep.subr.mxu0 0.0
    %v608 = vand.u32 %v221, 4294901760
    %609 = vmatpush1.msra.mxu0 %v608
    %610 = vmatprep.subr.mxu0 0.0
    %v611 = vand.u32 %v222, 4294901760
    %612 = vmatpush1.msra.mxu0 %v611
    %613 = vmatprep.subr.mxu0 0.0
    %v614 = vand.u32 %v223, 4294901760
    %615 = vmatpush1.msra.mxu0 %v614
    %616 = vmatprep.subr.mxu0 0.0
    %v617 = vand.u32 %v224, 4294901760
    %618 = vmatpush1.msra.mxu0 %v617
    %619 = vmatprep.subr.mxu0 0.0
    %620 = vmatpush1.msra.mxu0 0.0
    %621 = vmatprep.subr.mxu0 0.0
    %622 = vmatpush1.msra.mxu0 0.0
    %623 = vmatprep.subr.mxu0 0.0
    %624 = vmatpush1.msra.mxu0 0.0
    %625 = vmatprep.subr.mxu0 0.0
    %626 = vmatpush1.msra.mxu0 0.0
    %627 = vmatprep.subr.mxu0 0.0
    %628 = vmatpush1.msra.mxu0 0.0
    %629 = vmatprep.subr.mxu0 0.0
    %630 = vmatpush1.msra.mxu0 0.0
    %631 = vmatprep.subr.mxu0 0.0
    %632 = vmatpush1.msra.mxu0 0.0
    %633 = vmatprep.subr.mxu0 0.0
    %634 = vmatpush1.msra.mxu0 0.0
    %635 = vmatprep.subr.mxu0 0.0
    %636 = vmatpush1.msra.mxu0 0.0
    %637 = vmatprep.subr.mxu0 0.0
    %638 = vmatpush1.msra.mxu0 0.0
    %639 = vmatprep.subr.mxu0 0.0
    %640 = vmatpush1.msra.mxu0 0.0
    %641 = vmatprep.subr.mxu0 0.0
    %642 = vmatpush1.msra.mxu0 0.0
    %643 = vmatprep.subr.mxu0 0.0
    %644 = vmatpush1.msra.mxu0 0.0
    %645 = vmatprep.subr.mxu0 0.0
    %646 = vmatpush1.msra.mxu0 0.0
    %647 = vmatprep.subr.mxu0 0.0
    %648 = vmatpush1.msra.mxu0 0.0
    %649 = vmatprep.subr.mxu0 0.0
    %650 = vmatpush1.msra.mxu0 0.0
    %651 = vmatprep.mubr.f32.mxu0 0.0
    %v652 = vand.u32 %v206, 4294901760
    %v653 = vsub.f32 %v206, %v652
    %v654 = vand.u32 %v653, 4294901760
    %655 = vmatmul.mubr.f32.gmra.mrb[0].mxu0 %v654
    %v656 = vpop.f32.mrb[0].mxu0
    %v657 = vadd.f32 %v568, %v656
    %v658 = vpop.f32.mrb[0].mxu0
    %659 = vdwg.mxu0
    %660 = vmatprep.subr.mxu0 0.0
    %v661 = vand.u32 %v209, 4294901760
    %v662 = vsub.f32 %v209, %v661
    %v663 = vand.u32 %v662, 4294901760
    %664 = vmatpush1.msra.mxu0 %v663
    %665 = vmatprep.subr.mxu0 0.0
    %v666 = vand.u32 %v210, 4294901760
    %v667 = vsub.f32 %v210, %v666
    %v668 = vand.u32 %v667, 4294901760
    %669 = vmatpush1.msra.mxu0 %v668
    %670 = vmatprep.subr.mxu0 0.0
    %v671 = vand.u32 %v211, 4294901760
    %v672 = vsub.f32 %v211, %v671
    %v673 = vand.u32 %v672, 4294901760
    %674 = vmatpush1.msra.mxu0 %v673
    %675 = vmatprep.subr.mxu0 0.0
    %v676 = vand.u32 %v212, 4294901760
    %v677 = vsub.f32 %v212, %v676
    %v678 = vand.u32 %v677, 4294901760
    %679 = vmatpush1.msra.mxu0 %v678
    %680 = vmatprep.subr.mxu0 0.0
    %v681 = vand.u32 %v213, 4294901760
    %v682 = vsub.f32 %v213, %v681
    %v683 = vand.u32 %v682, 4294901760
    %684 = vmatpush1.msra.mxu0 %v683
    %685 = vmatprep.subr.mxu0 0.0
    %v686 = vand.u32 %v214, 4294901760
    %v687 = vsub.f32 %v214, %v686
    %v688 = vand.u32 %v687, 4294901760
    %689 = vmatpush1.msra.mxu0 %v688
    %690 = vmatprep.subr.mxu0 0.0
    %v691 = vand.u32 %v215, 4294901760
    %v692 = vsub.f32 %v215, %v691
    %v693 = vand.u32 %v692, 4294901760
    %694 = vmatpush1.msra.mxu0 %v693
    %695 = vmatprep.subr.mxu0 0.0
    %v696 = vand.u32 %v216, 4294901760
    %v697 = vsub.f32 %v216, %v696
    %v698 = vand.u32 %v697, 4294901760
    %699 = vmatpush1.msra.mxu0 %v698
    %700 = vmatprep.subr.mxu0 0.0
    %v701 = vand.u32 %v217, 4294901760
    %v702 = vsub.f32 %v217, %v701
    %v703 = vand.u32 %v702, 4294901760
    %704 = vmatpush1.msra.mxu0 %v703
    %705 = vmatprep.subr.mxu0 0.0
    %v706 = vand.u32 %v218, 4294901760
    %v707 = vsub.f32 %v218, %v706
    %v708 = vand.u32 %v707, 4294901760
    %709 = vmatpush1.msra.mxu0 %v708
    %710 = vmatprep.subr.mxu0 0.0
    %v711 = vand.u32 %v219, 4294901760
    %v712 = vsub.f32 %v219, %v711
    %v713 = vand.u32 %v712, 4294901760
    %714 = vmatpush1.msra.mxu0 %v713
    %715 = vmatprep.subr.mxu0 0.0
    %v716 = vand.u32 %v220, 4294901760
    %v717 = vsub.f32 %v220, %v716
    %v718 = vand.u32 %v717, 4294901760
    %719 = vmatpush1.msra.mxu0 %v718
    %720 = vmatprep.subr.mxu0 0.0
    %v721 = vand.u32 %v221, 4294901760
    %v722 = vsub.f32 %v221, %v721
    %v723 = vand.u32 %v722, 4294901760
    %724 = vmatpush1.msra.mxu0 %v723
    %725 = vmatprep.subr.mxu0 0.0
    %v726 = vand.u32 %v222, 4294901760
    %v727 = vsub.f32 %v222, %v726
    %v728 = vand.u32 %v727, 4294901760
    %729 = vmatpush1.msra.mxu0 %v728
    %730 = vmatprep.subr.mxu0 0.0
    %v731 = vand.u32 %v223, 4294901760
    %v732 = vsub.f32 %v223, %v731
    %v733 = vand.u32 %v732, 4294901760
    %734 = vmatpush1.msra.mxu0 %v733
    %735 = vmatprep.subr.mxu0 0.0
    %v736 = vand.u32 %v224, 4294901760
    %v737 = vsub.f32 %v224, %v736
    %v738 = vand.u32 %v737, 4294901760
    %739 = vmatpush1.msra.mxu0 %v738
    %740 = vmatprep.subr.mxu0 0.0
    %741 = vmatpush1.msra.mxu0 0.0
    %742 = vmatprep.subr.mxu0 0.0
    %743 = vmatpush1.msra.mxu0 0.0
    %744 = vmatprep.subr.mxu0 0.0
    %745 = vmatpush1.msra.mxu0 0.0
    %746 = vmatprep.subr.mxu0 0.0
    %747 = vmatpush1.msra.mxu0 0.0
    %748 = vmatprep.subr.mxu0 0.0
    %749 = vmatpush1.msra.mxu0 0.0
    %750 = vmatprep.subr.mxu0 0.0
    %751 = vmatpush1.msra.mxu0 0.0
    %752 = vmatprep.subr.mxu0 0.0
    %753 = vmatpush1.msra.mxu0 0.0
    %754 = vmatprep.subr.mxu0 0.0
    %755 = vmatpush1.msra.mxu0 0.0
    %756 = vmatprep.subr.mxu0 0.0
    %757 = vmatpush1.msra.mxu0 0.0
    %758 = vmatprep.subr.mxu0 0.0
    %759 = vmatpush1.msra.mxu0 0.0
    %760 = vmatprep.subr.mxu0 0.0
    %761 = vmatpush1.msra.mxu0 0.0
    %762 = vmatprep.subr.mxu0 0.0
    %763 = vmatpush1.msra.mxu0 0.0
    %764 = vmatprep.subr.mxu0 0.0
    %765 = vmatpush1.msra.mxu0 0.0
    %766 = vmatprep.subr.mxu0 0.0
    %767 = vmatpush1.msra.mxu0 0.0
    %768 = vmatprep.subr.mxu0 0.0
    %769 = vmatpush1.msra.mxu0 0.0
    %770 = vmatprep.subr.mxu0 0.0
    %771 = vmatpush1.msra.mxu0 0.0
    %772 = vmatprep.mubr.f32.mxu0 0.0
    %v773 = vand.u32 %v206, 4294901760
    %774 = vmatmul.mubr.f32.gmra.mrb[0].mxu0 %v773
    %v775 = vpop.f32.mrb[0].mxu0
    %v776 = vadd.f32 %v657, %v775
    %v777 = vpop.f32.mrb[0].mxu0
    %778 = vdwg.mxu0
    %779 = vmatprep.subr.mxu0 0.0
    %v780 = vand.u32 %v209, 4294901760
    %781 = vmatpush1.msra.mxu0 %v780
    %782 = vmatprep.subr.mxu0 0.0
    %v783 = vand.u32 %v210, 4294901760
    %784 = vmatpush1.msra.mxu0 %v783
    %785 = vmatprep.subr.mxu0 0.0
    %v786 = vand.u32 %v211, 4294901760
    %787 = vmatpush1.msra.mxu0 %v786
    %788 = vmatprep.subr.mxu0 0.0
    %v789 = vand.u32 %v212, 4294901760
    %790 = vmatpush1.msra.mxu0 %v789
    %791 = vmatprep.subr.mxu0 0.0
    %v792 = vand.u32 %v213, 4294901760
    %793 = vmatpush1.msra.mxu0 %v792
    %794 = vmatprep.subr.mxu0 0.0
    %v795 = vand.u32 %v214, 4294901760
    %796 = vmatpush1.msra.mxu0 %v795
    %797 = vmatprep.subr.mxu0 0.0
    %v798 = vand.u32 %v215, 4294901760
    %799 = vmatpush1.msra.mxu0 %v798
    %800 = vmatprep.subr.mxu0 0.0
    %v801 = vand.u32 %v216, 4294901760
    %802 = vmatpush1.msra.mxu0 %v801
    %803 = vmatprep.subr.mxu0 0.0
    %v804 = vand.u32 %v217, 4294901760
    %805 = vmatpush1.msra.mxu0 %v804
    %806 = vmatprep.subr.mxu0 0.0
    %v807 = vand.u32 %v218, 4294901760
    %808 = vmatpush1.msra.mxu0 %v807
    %809 = vmatprep.subr.mxu0 0.0
    %v810 = vand.u32 %v219, 4294901760
    %811 = vmatpush1.msra.mxu0 %v810
    %812 = vmatprep.subr.mxu0 0.0
    %v813 = vand.u32 %v220, 4294901760
    %814 = vmatpush1.msra.mxu0 %v813
    %815 = vmatprep.subr.mxu0 0.0
    %v816 = vand.u32 %v221, 4294901760
    %817 = vmatpush1.msra.mxu0 %v816
    %818 = vmatprep.subr.mxu0 0.0
    %v819 = vand.u32 %v222, 4294901760
    %820 = vmatpush1.msra.mxu0 %v819
    %821 = vmatprep.subr.mxu0 0.0
    %v822 = vand.u32 %v223, 4294901760
    %823 = vmatpush1.msra.mxu0 %v822
    %824 = vmatprep.subr.mxu0 0.0
    %v825 = vand.u32 %v224, 4294901760
    %826 = vmatpush1.msra.mxu0 %v825
    %827 = vmatprep.subr.mxu0 0.0
    %828 = vmatpush1.msra.mxu0 0.0
    %829 = vmatprep.subr.mxu0 0.0
    %830 = vmatpush1.msra.mxu0 0.0
    %831 = vmatprep.subr.mxu0 0.0
    %832 = vmatpush1.msra.mxu0 0.0
    %833 = vmatprep.subr.mxu0 0.0
    %834 = vmatpush1.msra.mxu0 0.0
    %835 = vmatprep.subr.mxu0 0.0
    %836 = vmatpush1.msra.mxu0 0.0
    %837 = vmatprep.subr.mxu0 0.0
    %838 = vmatpush1.msra.mxu0 0.0
    %839 = vmatprep.subr.mxu0 0.0
    %840 = vmatpush1.msra.mxu0 0.0
    %841 = vmatprep.subr.mxu0 0.0
    %842 = vmatpush1.msra.mxu0 0.0
    %843 = vmatprep.subr.mxu0 0.0
    %844 = vmatpush1.msra.mxu0 0.0
    %845 = vmatprep.subr.mxu0 0.0
    %846 = vmatpush1.msra.mxu0 0.0
    %847 = vmatprep.subr.mxu0 0.0
    %848 = vmatpush1.msra.mxu0 0.0
    %849 = vmatprep.subr.mxu0 0.0
    %850 = vmatpush1.msra.mxu0 0.0
    %851 = vmatprep.subr.mxu0 0.0
    %852 = vmatpush1.msra.mxu0 0.0
    %853 = vmatprep.subr.mxu0 0.0
    %854 = vmatpush1.msra.mxu0 0.0
    %855 = vmatprep.subr.mxu0 0.0
    %856 = vmatpush1.msra.mxu0 0.0
    %857 = vmatprep.subr.mxu0 0.0
    %858 = vmatpush1.msra.mxu0 0.0
    %859 = vmatprep.mubr.f32.mxu0 0.0
    %v860 = vand.u32 %v206, 4294901760
    %861 = vmatmul.mubr.f32.gmra.mrb[0].mxu0 %v860
    %v862 = vpop.f32.mrb[0].mxu0
    %v863 = vadd.f32 %v776, %v862
    %v864 = vpop.f32.mrb[0].mxu0
    %865 = vdwg.mxu0
    %v866 = vtanh.pop %v863
    %v867 = vadd.f32 %v190, %v866
    %s868 = scalar_lea.vmem [#allocation2], %s194
    %v869 = vld [vmem:[%s868] sm:$0x1]
    %s870 = smul.u32 %s193, 128
    %s871 = scalar_lea.vmem [#allocation6], %s870
    %v872 = vld [vmem:[%s871] sm:$0xff]
    %v873 = vld [vmem:[%s871 + $0x8] sm:$0xff]
    %v874 = vld [vmem:[%s871 + $0x10] sm:$0xff]
    %v875 = vld [vmem:[%s871 + $0x18] sm:$0xff]
    %v876 = vld [vmem:[%s871 + $0x20] sm:$0xff]
    %v877 = vld [vmem:[%s871 + $0x28] sm:$0xff]
    %v878 = vld [vmem:[%s871 + $0x30] sm:$0xff]
    %v879 = vld [vmem:[%s871 + $0x38] sm:$0xff]
    %v880 = vld [vmem:[%s871 + $0x40] sm:$0xff]
    %v881 = vld [vmem:[%s871 + $0x48] sm:$0xff]
    %v882 = vld [vmem:[%s871 + $0x50] sm:$0xff]
    %v883 = vld [vmem:[%s871 + $0x58] sm:$0xff]
    %v884 = vld [vmem:[%s871 + $0x60] sm:$0xff]
    %v885 = vld [vmem:[%s871 + $0x68] sm:$0xff]
    %v886 = vld [vmem:[%s871 + $0x70] sm:$0xff]
    %v887 = vld [vmem:[%s871 + $0x78] sm:$0xff]
    %888 = vmatprep.subr.mxu0 0.0
    %v889 = vand.u32 %v872, 4294901760
    %890 = vmatpush1.msra.mxu0 %v889
    %891 = vmatprep.subr.mxu0 0.0
    %v892 = vand.u32 %v873, 4294901760
    %893 = vmatpush1.msra.mxu0 %v892
    %894 = vmatprep.subr.mxu0 0.0
    %v895 = vand.u32 %v874, 4294901760
    %896 = vmatpush1.msra.mxu0 %v895
    %897 = vmatprep.subr.mxu0 0.0
    %v898 = vand.u32 %v875, 4294901760
    %899 = vmatpush1.msra.mxu0 %v898
    %900 = vmatprep.subr.mxu0 0.0
    %v901 = vand.u32 %v876, 4294901760
    %902 = vmatpush1.msra.mxu0 %v901
    %903 = vmatprep.subr.mxu0 0.0
    %v904 = vand.u32 %v877, 4294901760
    %905 = vmatpush1.msra.mxu0 %v904
    %906 = vmatprep.subr.mxu0 0.0
    %v907 = vand.u32 %v878, 4294901760
    %908 = vmatpush1.msra.mxu0 %v907
    %909 = vmatprep.subr.mxu0 0.0
    %v910 = vand.u32 %v879, 4294901760
    %911 = vmatpush1.msra.mxu0 %v910
    %912 = vmatprep.subr.mxu0 0.0
    %v913 = vand.u32 %v880, 4294901760
    %914 = vmatpush1.msra.mxu0 %v913
    %915 = vmatprep.subr.mxu0 0.0
    %v916 = vand.u32 %v881, 4294901760
    %917 = vmatpush1.msra.mxu0 %v916
    %918 = vmatprep.subr.mxu0 0.0
    %v919 = vand.u32 %v882, 4294901760
    %920 = vmatpush1.msra.mxu0 %v919
    %921 = vmatprep.subr.mxu0 0.0
    %v922 = vand.u32 %v883, 4294901760
    %923 = vmatpush1.msra.mxu0 %v922
    %924 = vmatprep.subr.mxu0 0.0
    %v925 = vand.u32 %v884, 4294901760
    %926 = vmatpush1.msra.mxu0 %v925
    %927 = vmatprep.subr.mxu0 0.0
    %v928 = vand.u32 %v885, 4294901760
    %929 = vmatpush1.msra.mxu0 %v928
    %930 = vmatprep.subr.mxu0 0.0
    %v931 = vand.u32 %v886, 4294901760
    %932 = vmatpush1.msra.mxu0 %v931
    %933 = vmatprep.subr.mxu0 0.0
    %v934 = vand.u32 %v887, 4294901760
    %935 = vmatpush1.msra.mxu0 %v934
    %936 = vmatprep.subr.mxu0 0.0
    %937 = vmatpush1.msra.mxu0 0.0
    %938 = vmatprep.subr.mxu0 0.0
    %939 = vmatpush1.msra.mxu0 0.0
    %940 = vmatprep.subr.mxu0 0.0
    %941 = vmatpush1.msra.mxu0 0.0
    %942 = vmatprep.subr.mxu0 0.0
    %943 = vmatpush1.msra.mxu0 0.0
    %944 = vmatprep.subr.mxu0 0.0
    %945 = vmatpush1.msra.mxu0 0.0
    %946 = vmatprep.subr.mxu0 0.0
    %947 = vmatpush1.msra.mxu0 0.0
    %948 = vmatprep.subr.mxu0 0.0
    %949 = vmatpush1.msra.mxu0 0.0
    %950 = vmatprep.subr.mxu0 0.0
    %951 = vmatpush1.msra.mxu0 0.0
    %952 = vmatprep.subr.mxu0 0.0
    %953 = vmatpush1.msra.mxu0 0.0
    %954 = vmatprep.subr.mxu0 0.0
    %955 = vmatpush1.msra.mxu0 0.0
    %956 = vmatprep.subr.mxu0 0.0
    %957 = vmatpush1.msra.mxu0 0.0
    %958 = vmatprep.subr.mxu0 0.0
    %959 = vmatpush1.msra.mxu0 0.0
    %960 = vmatprep.subr.mxu0 0.0
    %961 = vmatpush1.msra.mxu0 0.0
    %962 = vmatprep.subr.mxu0 0.0
    %963 = vmatpush1.msra.mxu0 0.0
    %964 = vmatprep.subr.mxu0 0.0
    %965 = vmatpush1.msra.mxu0 0.0
    %966 = vmatprep.subr.mxu0 0.0
    %967 = vmatpush1.msra.mxu0 0.0
    %968 = vmatprep.mubr.f32.mxu0 0.0
    %v969 = vand.u32 %v869, 4294901760
    %v970 = vsub.f32 %v869, %v969
    %v971 = vand.u32 %v970, 4294901760
    %v972 = vsub.f32 %v970, %v971
    %v973 = vand.u32 %v972, 4294901760
    %974 = vmatmul.mubr.f32.gmra.mrb[0].mxu0 %v973
    %v975 = vpop.f32.mrb[0].mxu0
    %v976 = vadd.f32 0.0, %v975
    %v977 = vpop.f32.mrb[0].mxu0
    %978 = vdwg.mxu0
    %979 = vmatprep.subr.mxu0 0.0
    %v980 = vand.u32 %v872, 4294901760
    %v981 = vsub.f32 %v872, %v980
    %v982 = vand.u32 %v981, 4294901760
    %v983 = vsub.f32 %v981, %v982
    %v984 = vand.u32 %v983, 4294901760
    %985 = vmatpush1.msra.mxu0 %v984
    %986 = vmatprep.subr.mxu0 0.0
    %v987 = vand.u32 %v873, 4294901760
    %v988 = vsub.f32 %v873, %v987
    %v989 = vand.u32 %v988, 4294901760
    %v990 = vsub.f32 %v988, %v989
    %v991 = vand.u32 %v990, 4294901760
    %992 = vmatpush1.msra.mxu0 %v991
    %993 = vmatprep.subr.mxu0 0.0
    %v994 = vand.u32 %v874, 4294901760
    %v995 = vsub.f32 %v874, %v994
    %v996 = vand.u32 %v995, 4294901760
    %v997 = vsub.f32 %v995, %v996
    %v998 = vand.u32 %v997, 4294901760
    %999 = vmatpush1.msra.mxu0 %v998
    %1000 = vmatprep.subr.mxu0 0.0
    %v1001 = vand.u32 %v875, 4294901760
    %v1002 = vsub.f32 %v875, %v1001
    %v1003 = vand.u32 %v1002, 4294901760
    %v1004 = vsub.f32 %v1002, %v1003
    %v1005 = vand.u32 %v1004, 4294901760
    %1006 = vmatpush1.msra.mxu0 %v1005
    %1007 = vmatprep.subr.mxu0 0.0
    %v1008 = vand.u32 %v876, 4294901760
    %v1009 = vsub.f32 %v876, %v1008
    %v1010 = vand.u32 %v1009, 4294901760
    %v1011 = vsub.f32 %v1009, %v1010
    %v1012 = vand.u32 %v1011, 4294901760
    %1013 = vmatpush1.msra.mxu0 %v1012
    %1014 = vmatprep.subr.mxu0 0.0
    %v1015 = vand.u32 %v877, 4294901760
    %v1016 = vsub.f32 %v877, %v1015
    %v1017 = vand.u32 %v1016, 4294901760
    %v1018 = vsub.f32 %v1016, %v1017
    %v1019 = vand.u32 %v1018, 4294901760
    %1020 = vmatpush1.msra.mxu0 %v1019
    %1021 = vmatprep.subr.mxu0 0.0
    %v1022 = vand.u32 %v878, 4294901760
    %v1023 = vsub.f32 %v878, %v1022
    %v1024 = vand.u32 %v1023, 4294901760
    %v1025 = vsub.f32 %v1023, %v1024
    %v1026 = vand.u32 %v1025, 4294901760
    %1027 = vmatpush1.msra.mxu0 %v1026
    %1028 = vmatprep.subr.mxu0 0.0
    %v1029 = vand.u32 %v879, 4294901760
    %v1030 = vsub.f32 %v879, %v1029
    %v1031 = vand.u32 %v1030, 4294901760
    %v1032 = vsub.f32 %v1030, %v1031
    %v1033 = vand.u32 %v1032, 4294901760
    %1034 = vmatpush1.msra.mxu0 %v1033
    %1035 = vmatprep.subr.mxu0 0.0
    %v1036 = vand.u32 %v880, 4294901760
    %v1037 = vsub.f32 %v880, %v1036
    %v1038 = vand.u32 %v1037, 4294901760
    %v1039 = vsub.f32 %v1037, %v1038
    %v1040 = vand.u32 %v1039, 4294901760
    %1041 = vmatpush1.msra.mxu0 %v1040
    %1042 = vmatprep.subr.mxu0 0.0
    %v1043 = vand.u32 %v881, 4294901760
    %v1044 = vsub.f32 %v881, %v1043
    %v1045 = vand.u32 %v1044, 4294901760
    %v1046 = vsub.f32 %v1044, %v1045
    %v1047 = vand.u32 %v1046, 4294901760
    %1048 = vmatpush1.msra.mxu0 %v1047
    %1049 = vmatprep.subr.mxu0 0.0
    %v1050 = vand.u32 %v882, 4294901760
    %v1051 = vsub.f32 %v882, %v1050
    %v1052 = vand.u32 %v1051, 4294901760
    %v1053 = vsub.f32 %v1051, %v1052
    %v1054 = vand.u32 %v1053, 4294901760
    %1055 = vmatpush1.msra.mxu0 %v1054
    %1056 = vmatprep.subr.mxu0 0.0
    %v1057 = vand.u32 %v883, 4294901760
    %v1058 = vsub.f32 %v883, %v1057
    %v1059 = vand.u32 %v1058, 4294901760
    %v1060 = vsub.f32 %v1058, %v1059
    %v1061 = vand.u32 %v1060, 4294901760
    %1062 = vmatpush1.msra.mxu0 %v1061
    %1063 = vmatprep.subr.mxu0 0.0
    %v1064 = vand.u32 %v884, 4294901760
    %v1065 = vsub.f32 %v884, %v1064
    %v1066 = vand.u32 %v1065, 4294901760
    %v1067 = vsub.f32 %v1065, %v1066
    %v1068 = vand.u32 %v1067, 4294901760
    %1069 = vmatpush1.msra.mxu0 %v1068
    %1070 = vmatprep.subr.mxu0 0.0
    %v1071 = vand.u32 %v885, 4294901760
    %v1072 = vsub.f32 %v885, %v1071
    %v1073 = vand.u32 %v1072, 4294901760
    %v1074 = vsub.f32 %v1072, %v1073
    %v1075 = vand.u32 %v1074, 4294901760
    %1076 = vmatpush1.msra.mxu0 %v1075
    %1077 = vmatprep.subr.mxu0 0.0
    %v1078 = vand.u32 %v886, 4294901760
    %v1079 = vsub.f32 %v886, %v1078
    %v1080 = vand.u32 %v1079, 4294901760
    %v1081 = vsub.f32 %v1079, %v1080
    %v1082 = vand.u32 %v1081, 4294901760
    %1083 = vmatpush1.msra.mxu0 %v1082
    %1084 = vmatprep.subr.mxu0 0.0
    %v1085 = vand.u32 %v887, 4294901760
    %v1086 = vsub.f32 %v887, %v1085
    %v1087 = vand.u32 %v1086, 4294901760
    %v1088 = vsub.f32 %v1086, %v1087
    %v1089 = vand.u32 %v1088, 4294901760
    %1090 = vmatpush1.msra.mxu0 %v1089
    %1091 = vmatprep.subr.mxu0 0.0
    %1092 = vmatpush1.msra.mxu0 0.0
    %1093 = vmatprep.subr.mxu0 0.0
    %1094 = vmatpush1.msra.mxu0 0.0
    %1095 = vmatprep.subr.mxu0 0.0
    %1096 = vmatpush1.msra.mxu0 0.0
    %1097 = vmatprep.subr.mxu0 0.0
    %1098 = vmatpush1.msra.mxu0 0.0
    %1099 = vmatprep.subr.mxu0 0.0
    %1100 = vmatpush1.msra.mxu0 0.0
    %1101 = vmatprep.subr.mxu0 0.0
    %1102 = vmatpush1.msra.mxu0 0.0
    %1103 = vmatprep.subr.mxu0 0.0
    %1104 = vmatpush1.msra.mxu0 0.0
    %1105 = vmatprep.subr.mxu0 0.0
    %1106 = vmatpush1.msra.mxu0 0.0
    %1107 = vmatprep.subr.mxu0 0.0
    %1108 = vmatpush1.msra.mxu0 0.0
    %1109 = vmatprep.subr.mxu0 0.0
    %1110 = vmatpush1.msra.mxu0 0.0
    %1111 = vmatprep.subr.mxu0 0.0
    %1112 = vmatpush1.msra.mxu0 0.0
    %1113 = vmatprep.subr.mxu0 0.0
    %1114 = vmatpush1.msra.mxu0 0.0
    %1115 = vmatprep.subr.mxu0 0.0
    %1116 = vmatpush1.msra.mxu0 0.0
    %1117 = vmatprep.subr.mxu0 0.0
    %1118 = vmatpush1.msra.mxu0 0.0
    %1119 = vmatprep.subr.mxu0 0.0
    %1120 = vmatpush1.msra.mxu0 0.0
    %1121 = vmatprep.subr.mxu0 0.0
    %1122 = vmatpush1.msra.mxu0 0.0
    %1123 = vmatprep.mubr.f32.mxu0 0.0
    %v1124 = vand.u32 %v869, 4294901760
    %1125 = vmatmul.mubr.f32.gmra.mrb[0].mxu0 %v1124
    %v1126 = vpop.f32.mrb[0].mxu0
    %v1127 = vadd.f32 %v976, %v1126
    %v1128 = vpop.f32.mrb[0].mxu0
    %1129 = vdwg.mxu0
    %1130 = vmatprep.subr.mxu0 0.0
    %v1131 = vand.u32 %v872, 4294901760
    %v1132 = vsub.f32 %v872, %v1131
    %1133 = vmatpush1.msra.mxu0 %v1132
    %1134 = vmatprep.subr.mxu0 0.0
    %v1135 = vand.u32 %v873, 4294901760
    %v1136 = vsub.f32 %v873, %v1135
    %1137 = vmatpush1.msra.mxu0 %v1136
    %1138 = vmatprep.subr.mxu0 0.0
    %v1139 = vand.u32 %v874, 4294901760
    %v1140 = vsub.f32 %v874, %v1139
    %1141 = vmatpush1.msra.mxu0 %v1140
    %1142 = vmatprep.subr.mxu0 0.0
    %v1143 = vand.u32 %v875, 4294901760
    %v1144 = vsub.f32 %v875, %v1143
    %1145 = vmatpush1.msra.mxu0 %v1144
    %1146 = vmatprep.subr.mxu0 0.0
    %v1147 = vand.u32 %v876, 4294901760
    %v1148 = vsub.f32 %v876, %v1147
    %1149 = vmatpush1.msra.mxu0 %v1148
    %1150 = vmatprep.subr.mxu0 0.0
    %v1151 = vand.u32 %v877, 4294901760
    %v1152 = vsub.f32 %v877, %v1151
    %1153 = vmatpush1.msra.mxu0 %v1152
    %1154 = vmatprep.subr.mxu0 0.0
    %v1155 = vand.u32 %v878, 4294901760
    %v1156 = vsub.f32 %v878, %v1155
    %1157 = vmatpush1.msra.mxu0 %v1156
    %1158 = vmatprep.subr.mxu0 0.0
    %v1159 = vand.u32 %v879, 4294901760
    %v1160 = vsub.f32 %v879, %v1159
    %1161 = vmatpush1.msra.mxu0 %v1160
    %1162 = vmatprep.subr.mxu0 0.0
    %v1163 = vand.u32 %v880, 4294901760
    %v1164 = vsub.f32 %v880, %v1163
    %1165 = vmatpush1.msra.mxu0 %v1164
    %1166 = vmatprep.subr.mxu0 0.0
    %v1167 = vand.u32 %v881, 4294901760
    %v1168 = vsub.f32 %v881, %v1167
    %1169 = vmatpush1.msra.mxu0 %v1168
    %1170 = vmatprep.subr.mxu0 0.0
    %v1171 = vand.u32 %v882, 4294901760
    %v1172 = vsub.f32 %v882, %v1171
    %1173 = vmatpush1.msra.mxu0 %v1172
    %1174 = vmatprep.subr.mxu0 0.0
    %v1175 = vand.u32 %v883, 4294901760
    %v1176 = vsub.f32 %v883, %v1175
    %1177 = vmatpush1.msra.mxu0 %v1176
    %1178 = vmatprep.subr.mxu0 0.0
    %v1179 = vand.u32 %v884, 4294901760
    %v1180 = vsub.f32 %v884, %v1179
    %1181 = vmatpush1.msra.mxu0 %v1180
    %1182 = vmatprep.subr.mxu0 0.0
    %v1183 = vand.u32 %v885, 4294901760
    %v1184 = vsub.f32 %v885, %v1183
    %1185 = vmatpush1.msra.mxu0 %v1184
    %1186 = vmatprep.subr.mxu0 0.0
    %v1187 = vand.u32 %v886, 4294901760
    %v1188 = vsub.f32 %v886, %v1187
    %1189 = vmatpush1.msra.mxu0 %v1188
    %1190 = vmatprep.subr.mxu0 0.0
    %v1191 = vand.u32 %v887, 4294901760
    %v1192 = vsub.f32 %v887, %v1191
    %1193 = vmatpush1.msra.mxu0 %v1192
    %1194 = vmatprep.subr.mxu0 0.0
    %1195 = vmatpush1.msra.mxu0 0.0
    %1196 = vmatprep.subr.mxu0 0.0
    %1197 = vmatpush1.msra.mxu0 0.0
    %1198 = vmatprep.subr.mxu0 0.0
    %1199 = vmatpush1.msra.mxu0 0.0
    %1200 = vmatprep.subr.mxu0 0.0
    %1201 = vmatpush1.msra.mxu0 0.0
    %1202 = vmatprep.subr.mxu0 0.0
    %1203 = vmatpush1.msra.mxu0 0.0
    %1204 = vmatprep.subr.mxu0 0.0
    %1205 = vmatpush1.msra.mxu0 0.0
    %1206 = vmatprep.subr.mxu0 0.0
    %1207 = vmatpush1.msra.mxu0 0.0
    %1208 = vmatprep.subr.mxu0 0.0
    %1209 = vmatpush1.msra.mxu0 0.0
    %1210 = vmatprep.subr.mxu0 0.0
    %1211 = vmatpush1.msra.mxu0 0.0
    %1212 = vmatprep.subr.mxu0 0.0
    %1213 = vmatpush1.msra.mxu0 0.0
    %1214 = vmatprep.subr.mxu0 0.0
    %1215 = vmatpush1.msra.mxu0 0.0
    %1216 = vmatprep.subr.mxu0 0.0
    %1217 = vmatpush1.msra.mxu0 0.0
    %1218 = vmatprep.subr.mxu0 0.0
    %1219 = vmatpush1.msra.mxu0 0.0
    %1220 = vmatprep.subr.mxu0 0.0
    %1221 = vmatpush1.msra.mxu0 0.0
    %1222 = vmatprep.subr.mxu0 0.0
    %1223 = vmatpush1.msra.mxu0 0.0
    %1224 = vmatprep.subr.mxu0 0.0
    %1225 = vmatpush1.msra.mxu0 0.0
    %1226 = vmatprep.mubr.f32.mxu0 0.0
    %v1227 = vand.u32 %v869, 4294901760
    %v1228 = vsub.f32 %v869, %v1227
    %1229 = vmatmul.mubr.f32.gmra.mrb[0].mxu0 %v1228
    %v1230 = vpop.f32.mrb[0].mxu0
    %v1231 = vadd.f32 %v1127, %v1230
    %v1232 = vpop.f32.mrb[0].mxu0
    %1233 = vdwg.mxu0
    %1234 = vmatprep.subr.mxu0 0.0
    %v1235 = vand.u32 %v872, 4294901760
    %1236 = vmatpush1.msra.mxu0 %v1235
    %1237 = vmatprep.subr.mxu0 0.0
    %v1238 = vand.u32 %v873, 4294901760
    %1239 = vmatpush1.msra.mxu0 %v1238
    %1240 = vmatprep.subr.mxu0 0.0
    %v1241 = vand.u32 %v874, 4294901760
    %1242 = vmatpush1.msra.mxu0 %v1241
    %1243 = vmatprep.subr.mxu0 0.0
    %v1244 = vand.u32 %v875, 4294901760
    %1245 = vmatpush1.msra.mxu0 %v1244
    %1246 = vmatprep.subr.mxu0 0.0
    %v1247 = vand.u32 %v876, 4294901760
    %1248 = vmatpush1.msra.mxu0 %v1247
    %1249 = vmatprep.subr.mxu0 0.0
    %v1250 = vand.u32 %v877, 4294901760
    %1251 = vmatpush1.msra.mxu0 %v1250
    %1252 = vmatprep.subr.mxu0 0.0
    %v1253 = vand.u32 %v878, 4294901760
    %1254 = vmatpush1.msra.mxu0 %v1253
    %1255 = vmatprep.subr.mxu0 0.0
    %v1256 = vand.u32 %v879, 4294901760
    %1257 = vmatpush1.msra.mxu0 %v1256
    %1258 = vmatprep.subr.mxu0 0.0
    %v1259 = vand.u32 %v880, 4294901760
    %1260 = vmatpush1.msra.mxu0 %v1259
    %1261 = vmatprep.subr.mxu0 0.0
    %v1262 = vand.u32 %v881, 4294901760
    %1263 = vmatpush1.msra.mxu0 %v1262
    %1264 = vmatprep.subr.mxu0 0.0
    %v1265 = vand.u32 %v882, 4294901760
    %1266 = vmatpush1.msra.mxu0 %v1265
    %1267 = vmatprep.subr.mxu0 0.0
    %v1268 = vand.u32 %v883, 4294901760
    %1269 = vmatpush1.msra.mxu0 %v1268
    %1270 = vmatprep.subr.mxu0 0.0
    %v1271 = vand.u32 %v884, 4294901760
    %1272 = vmatpush1.msra.mxu0 %v1271
    %1273 = vmatprep.subr.mxu0 0.0
    %v1274 = vand.u32 %v885, 4294901760
    %1275 = vmatpush1.msra.mxu0 %v1274
    %1276 = vmatprep.subr.mxu0 0.0
    %v1277 = vand.u32 %v886, 4294901760
    %1278 = vmatpush1.msra.mxu0 %v1277
    %1279 = vmatprep.subr.mxu0 0.0
    %v1280 = vand.u32 %v887, 4294901760
    %1281 = vmatpush1.msra.mxu0 %v1280
    %1282 = vmatprep.subr.mxu0 0.0
    %1283 = vmatpush1.msra.mxu0 0.0
    %1284 = vmatprep.subr.mxu0 0.0
    %1285 = vmatpush1.msra.mxu0 0.0
    %1286 = vmatprep.subr.mxu0 0.0
    %1287 = vmatpush1.msra.mxu0 0.0
    %1288 = vmatprep.subr.mxu0 0.0
    %1289 = vmatpush1.msra.mxu0 0.0
    %1290 = vmatprep.subr.mxu0 0.0
    %1291 = vmatpush1.msra.mxu0 0.0
    %1292 = vmatprep.subr.mxu0 0.0
    %1293 = vmatpush1.msra.mxu0 0.0
    %1294 = vmatprep.subr.mxu0 0.0
    %1295 = vmatpush1.msra.mxu0 0.0
    %1296 = vmatprep.subr.mxu0 0.0
    %1297 = vmatpush1.msra.mxu0 0.0
    %1298 = vmatprep.subr.mxu0 0.0
    %1299 = vmatpush1.msra.mxu0 0.0
    %1300 = vmatprep.subr.mxu0 0.0
    %1301 = vmatpush1.msra.mxu0 0.0
    %1302 = vmatprep.subr.mxu0 0.0
    %1303 = vmatpush1.msra.mxu0 0.0
    %1304 = vmatprep.subr.mxu0 0.0
    %1305 = vmatpush1.msra.mxu0 0.0
    %1306 = vmatprep.subr.mxu0 0.0
    %1307 = vmatpush1.msra.mxu0 0.0
    %1308 = vmatprep.subr.mxu0 0.0
    %1309 = vmatpush1.msra.mxu0 0.0
    %1310 = vmatprep.subr.mxu0 0.0
    %1311 = vmatpush1.msra.mxu0 0.0
    %1312 = vmatprep.subr.mxu0 0.0
    %1313 = vmatpush1.msra.mxu0 0.0
    %1314 = vmatprep.mubr.f32.mxu0 0.0
    %v1315 = vand.u32 %v869, 4294901760
    %v1316 = vsub.f32 %v869, %v1315
    %v1317 = vand.u32 %v1316, 4294901760
    %1318 = vmatmul.mubr.f32.gmra.mrb[0].mxu0 %v1317
    %v1319 = vpop.f32.mrb[0].mxu0
    %v1320 = vadd.f32 %v1231, %v1319
    %v1321 = vpop.f32.mrb[0].mxu0
    %1322 = vdwg.mxu0
    %1323 = vmatprep.subr.mxu0 0.0
    %v1324 = vand.u32 %v872, 4294901760
    %v1325 = vsub.f32 %v872, %v1324
    %v1326 = vand.u32 %v1325, 4294901760
    %1327 = vmatpush1.msra.mxu0 %v1326
    %1328 = vmatprep.subr.mxu0 0.0
    %v1329 = vand.u32 %v873, 4294901760
    %v1330 = vsub.f32 %v873, %v1329
    %v1331 = vand.u32 %v1330, 4294901760
    %1332 = vmatpush1.msra.mxu0 %v1331
    %1333 = vmatprep.subr.mxu0 0.0
    %v1334 = vand.u32 %v874, 4294901760
    %v1335 = vsub.f32 %v874, %v1334
    %v1336 = vand.u32 %v1335, 4294901760
    %1337 = vmatpush1.msra.mxu0 %v1336
    %1338 = vmatprep.subr.mxu0 0.0
    %v1339 = vand.u32 %v875, 4294901760
    %v1340 = vsub.f32 %v875, %v1339
    %v1341 = vand.u32 %v1340, 4294901760
    %1342 = vmatpush1.msra.mxu0 %v1341
    %1343 = vmatprep.subr.mxu0 0.0
    %v1344 = vand.u32 %v876, 4294901760
    %v1345 = vsub.f32 %v876, %v1344
    %v1346 = vand.u32 %v1345, 4294901760
    %1347 = vmatpush1.msra.mxu0 %v1346
    %1348 = vmatprep.subr.mxu0 0.0
    %v1349 = vand.u32 %v877, 4294901760
    %v1350 = vsub.f32 %v877, %v1349
    %v1351 = vand.u32 %v1350, 4294901760
    %1352 = vmatpush1.msra.mxu0 %v1351
    %1353 = vmatprep.subr.mxu0 0.0
    %v1354 = vand.u32 %v878, 4294901760
    %v1355 = vsub.f32 %v878, %v1354
    %v1356 = vand.u32 %v1355, 4294901760
    %1357 = vmatpush1.msra.mxu0 %v1356
    %1358 = vmatprep.subr.mxu0 0.0
    %v1359 = vand.u32 %v879, 4294901760
    %v1360 = vsub.f32 %v879, %v1359
    %v1361 = vand.u32 %v1360, 4294901760
    %1362 = vmatpush1.msra.mxu0 %v1361
    %1363 = vmatprep.subr.mxu0 0.0
    %v1364 = vand.u32 %v880, 4294901760
    %v1365 = vsub.f32 %v880, %v1364
    %v1366 = vand.u32 %v1365, 4294901760
    %1367 = vmatpush1.msra.mxu0 %v1366
    %1368 = vmatprep.subr.mxu0 0.0
    %v1369 = vand.u32 %v881, 4294901760
    %v1370 = vsub.f32 %v881, %v1369
    %v1371 = vand.u32 %v1370, 4294901760
    %1372 = vmatpush1.msra.mxu0 %v1371
    %1373 = vmatprep.subr.mxu0 0.0
    %v1374 = vand.u32 %v882, 4294901760
    %v1375 = vsub.f32 %v882, %v1374
    %v1376 = vand.u32 %v1375, 4294901760
    %1377 = vmatpush1.msra.mxu0 %v1376
    %1378 = vmatprep.subr.mxu0 0.0
    %v1379 = vand.u32 %v883, 4294901760
    %v1380 = vsub.f32 %v883, %v1379
    %v1381 = vand.u32 %v1380, 4294901760
    %1382 = vmatpush1.msra.mxu0 %v1381
    %1383 = vmatprep.subr.mxu0 0.0
    %v1384 = vand.u32 %v884, 4294901760
    %v1385 = vsub.f32 %v884, %v1384
    %v1386 = vand.u32 %v1385, 4294901760
    %1387 = vmatpush1.msra.mxu0 %v1386
    %1388 = vmatprep.subr.mxu0 0.0
    %v1389 = vand.u32 %v885, 4294901760
    %v1390 = vsub.f32 %v885, %v1389
    %v1391 = vand.u32 %v1390, 4294901760
    %1392 = vmatpush1.msra.mxu0 %v1391
    %1393 = vmatprep.subr.mxu0 0.0
    %v1394 = vand.u32 %v886, 4294901760
    %v1395 = vsub.f32 %v886, %v1394
    %v1396 = vand.u32 %v1395, 4294901760
    %1397 = vmatpush1.msra.mxu0 %v1396
    %1398 = vmatprep.subr.mxu0 0.0
    %v1399 = vand.u32 %v887, 4294901760
    %v1400 = vsub.f32 %v887, %v1399
    %v1401 = vand.u32 %v1400, 4294901760
    %1402 = vmatpush1.msra.mxu0 %v1401
    %1403 = vmatprep.subr.mxu0 0.0
    %1404 = vmatpush1.msra.mxu0 0.0
    %1405 = vmatprep.subr.mxu0 0.0
    %1406 = vmatpush1.msra.mxu0 0.0
    %1407 = vmatprep.subr.mxu0 0.0
    %1408 = vmatpush1.msra.mxu0 0.0
    %1409 = vmatprep.subr.mxu0 0.0
    %1410 = vmatpush1.msra.mxu0 0.0
    %1411 = vmatprep.subr.mxu0 0.0
    %1412 = vmatpush1.msra.mxu0 0.0
    %1413 = vmatprep.subr.mxu0 0.0
    %1414 = vmatpush1.msra.mxu0 0.0
    %1415 = vmatprep.subr.mxu0 0.0
    %1416 = vmatpush1.msra.mxu0 0.0
    %1417 = vmatprep.subr.mxu0 0.0
    %1418 = vmatpush1.msra.mxu0 0.0
    %1419 = vmatprep.subr.mxu0 0.0
    %1420 = vmatpush1.msra.mxu0 0.0
    %1421 = vmatprep.subr.mxu0 0.0
    %1422 = vmatpush1.msra.mxu0 0.0
    %1423 = vmatprep.subr.mxu0 0.0
    %1424 = vmatpush1.msra.mxu0 0.0
    %1425 = vmatprep.subr.mxu0 0.0
    %1426 = vmatpush1.msra.mxu0 0.0
    %1427 = vmatprep.subr.mxu0 0.0
    %1428 = vmatpush1.msra.mxu0 0.0
    %1429 = vmatprep.subr.mxu0 0.0
    %1430 = vmatpush1.msra.mxu0 0.0
    %1431 = vmatprep.subr.mxu0 0.0
    %1432 = vmatpush1.msra.mxu0 0.0
    %1433 = vmatprep.subr.mxu0 0.0
    %1434 = vmatpush1.msra.mxu0 0.0
    %1435 = vmatprep.mubr.f32.mxu0 0.0
    %v1436 = vand.u32 %v869, 4294901760
    %1437 = vmatmul.mubr.f32.gmra.mrb[0].mxu0 %v1436
    %v1438 = vpop.f32.mrb[0].mxu0
    %v1439 = vadd.f32 %v1320, %v1438
    %v1440 = vpop.f32.mrb[0].mxu0
    %1441 = vdwg.mxu0
    %1442 = vmatprep.subr.mxu0 0.0
    %v1443 = vand.u32 %v872, 4294901760
    %1444 = vmatpush1.msra.mxu0 %v1443
    %1445 = vmatprep.subr.mxu0 0.0
    %v1446 = vand.u32 %v873, 4294901760
    %1447 = vmatpush1.msra.mxu0 %v1446
    %1448 = vmatprep.subr.mxu0 0.0
    %v1449 = vand.u32 %v874, 4294901760
    %1450 = vmatpush1.msra.mxu0 %v1449
    %1451 = vmatprep.subr.mxu0 0.0
    %v1452 = vand.u32 %v875, 4294901760
    %1453 = vmatpush1.msra.mxu0 %v1452
    %1454 = vmatprep.subr.mxu0 0.0
    %v1455 = vand.u32 %v876, 4294901760
    %1456 = vmatpush1.msra.mxu0 %v1455
    %1457 = vmatprep.subr.mxu0 0.0
    %v1458 = vand.u32 %v877, 4294901760
    %1459 = vmatpush1.msra.mxu0 %v1458
    %1460 = vmatprep.subr.mxu0 0.0
    %v1461 = vand.u32 %v878, 4294901760
    %1462 = vmatpush1.msra.mxu0 %v1461
    %1463 = vmatprep.subr.mxu0 0.0
    %v1464 = vand.u32 %v879, 4294901760
    %1465 = vmatpush1.msra.mxu0 %v1464
    %1466 = vmatprep.subr.mxu0 0.0
    %v1467 = vand.u32 %v880, 4294901760
    %1468 = vmatpush1.msra.mxu0 %v1467
    %1469 = vmatprep.subr.mxu0 0.0
    %v1470 = vand.u32 %v881, 4294901760
    %1471 = vmatpush1.msra.mxu0 %v1470
    %1472 = vmatprep.subr.mxu0 0.0
    %v1473 = vand.u32 %v882, 4294901760
    %1474 = vmatpush1.msra.mxu0 %v1473
    %1475 = vmatprep.subr.mxu0 0.0
    %v1476 = vand.u32 %v883, 4294901760
    %1477 = vmatpush1.msra.mxu0 %v1476
    %1478 = vmatprep.subr.mxu0 0.0
    %v1479 = vand.u32 %v884, 4294901760
    %1480 = vmatpush1.msra.mxu0 %v1479
    %1481 = vmatprep.subr.mxu0 0.0
    %v1482 = vand.u32 %v885, 4294901760
    %1483 = vmatpush1.msra.mxu0 %v1482
    %1484 = vmatprep.subr.mxu0 0.0
    %v1485 = vand.u32 %v886, 4294901760
    %1486 = vmatpush1.msra.mxu0 %v1485
    %1487 = vmatprep.subr.mxu0 0.0
    %v1488 = vand.u32 %v887, 4294901760
    %1489 = vmatpush1.msra.mxu0 %v1488
    %1490 = vmatprep.subr.mxu0 0.0
    %1491 = vmatpush1.msra.mxu0 0.0
    %1492 = vmatprep.subr.mxu0 0.0
    %1493 = vmatpush1.msra.mxu0 0.0
    %1494 = vmatprep.subr.mxu0 0.0
    %1495 = vmatpush1.msra.mxu0 0.0
    %1496 = vmatprep.subr.mxu0 0.0
    %1497 = vmatpush1.msra.mxu0 0.0
    %1498 = vmatprep.subr.mxu0 0.0
    %1499 = vmatpush1.msra.mxu0 0.0
    %1500 = vmatprep.subr.mxu0 0.0
    %1501 = vmatpush1.msra.mxu0 0.0
    %1502 = vmatprep.subr.mxu0 0.0
    %1503 = vmatpush1.msra.mxu0 0.0
    %1504 = vmatprep.subr.mxu0 0.0
    %1505 = vmatpush1.msra.mxu0 0.0
    %1506 = vmatprep.subr.mxu0 0.0
    %1507 = vmatpush1.msra.mxu0 0.0
    %1508 = vmatprep.subr.mxu0 0.0
    %1509 = vmatpush1.msra.mxu0 0.0
    %1510 = vmatprep.subr.mxu0 0.0
    %1511 = vmatpush1.msra.mxu0 0.0
    %1512 = vmatprep.subr.mxu0 0.0
    %1513 = vmatpush1.msra.mxu0 0.0
    %1514 = vmatprep.subr.mxu0 0.0
    %1515 = vmatpush1.msra.mxu0 0.0
    %1516 = vmatprep.subr.mxu0 0.0
    %1517 = vmatpush1.msra.mxu0 0.0
    %1518 = vmatprep.subr.mxu0 0.0
    %1519 = vmatpush1.msra.mxu0 0.0
    %1520 = vmatprep.subr.mxu0 0.0
    %1521 = vmatpush1.msra.mxu0 0.0
    %1522 = vmatprep.mubr.f32.mxu0 0.0
    %v1523 = vand.u32 %v869, 4294901760
    %1524 = vmatmul.mubr.f32.gmra.mrb[0].mxu0 %v1523
    %v1525 = vpop.f32.mrb[0].mxu0
    %v1526 = vadd.f32 %v1439, %v1525
    %v1527 = vpop.f32.mrb[0].mxu0
    %1528 = vdwg.mxu0
    %v1529 = vtanh.pop %v1526
    %v1530 = vadd.f32 %v867, %v1529
    %s1531 = scalar_lea.vmem [#allocation2], %s196
    %v1532 = vld [vmem:[%s1531] sm:$0x1]
    %s1533 = smul.u32 %s195, 128
    %s1534 = scalar_lea.vmem [#allocation8], %s1533
    %v1535 = vld [vmem:[%s1534] sm:$0xff]
    %v1536 = vld [vmem:[%s1534 + $0x8] sm:$0xff]
    %v1537 = vld [vmem:[%s1534 + $0x10] sm:$0xff]
    %v1538 = vld [vmem:[%s1534 + $0x18] sm:$0xff]
    %v1539 = vld [vmem:[%s1534 + $0x20] sm:$0xff]
    %v1540 = vld [vmem:[%s1534 + $0x28] sm:$0xff]
    %v1541 = vld [vmem:[%s1534 + $0x30] sm:$0xff]
    %v1542 = vld [vmem:[%s1534 + $0x38] sm:$0xff]
    %v1543 = vld [vmem:[%s1534 + $0x40] sm:$0xff]
    %v1544 = vld [vmem:[%s1534 + $0x48] sm:$0xff]
    %v1545 = vld [vmem:[%s1534 + $0x50] sm:$0xff]
    %v1546 = vld [vmem:[%s1534 + $0x58] sm:$0xff]
    %v1547 = vld [vmem:[%s1534 + $0x60] sm:$0xff]
    %v1548 = vld [vmem:[%s1534 + $0x68] sm:$0xff]
    %v1549 = vld [vmem:[%s1534 + $0x70] sm:$0xff]
    %v1550 = vld [vmem:[%s1534 + $0x78] sm:$0xff]
    %1551 = vmatprep.subr.mxu0 0.0
    %v1552 = vand.u32 %v1535, 4294901760
    %1553 = vmatpush1.msra.mxu0 %v1552
    %1554 = vmatprep.subr.mxu0 0.0
    %v1555 = vand.u32 %v1536, 4294901760
    %1556 = vmatpush1.msra.mxu0 %v1555
    %1557 = vmatprep.subr.mxu0 0.0
    %v1558 = vand.u32 %v1537, 4294901760
    %1559 = vmatpush1.msra.mxu0 %v1558
    %1560 = vmatprep.subr.mxu0 0.0
    %v1561 = vand.u32 %v1538, 4294901760
    %1562 = vmatpush1.msra.mxu0 %v1561
    %1563 = vmatprep.subr.mxu0 0.0
    %v1564 = vand.u32 %v1539, 4294901760
    %1565 = vmatpush1.msra.mxu0 %v1564
    %1566 = vmatprep.subr.mxu0 0.0
    %v1567 = vand.u32 %v1540, 4294901760
    %1568 = vmatpush1.msra.mxu0 %v1567
    %1569 = vmatprep.subr.mxu0 0.0
    %v1570 = vand.u32 %v1541, 4294901760
    %1571 = vmatpush1.msra.mxu0 %v1570
    %1572 = vmatprep.subr.mxu0 0.0
    %v1573 = vand.u32 %v1542, 4294901760
    %1574 = vmatpush1.msra.mxu0 %v1573
    %1575 = vmatprep.subr.mxu0 0.0
    %v1576 = vand.u32 %v1543, 4294901760
    %1577 = vmatpush1.msra.mxu0 %v1576
    %1578 = vmatprep.subr.mxu0 0.0
    %v1579 = vand.u32 %v1544, 4294901760
    %1580 = vmatpush1.msra.mxu0 %v1579
    %1581 = vmatprep.subr.mxu0 0.0
    %v1582 = vand.u32 %v1545, 4294901760
    %1583 = vmatpush1.msra.mxu0 %v1582
    %1584 = vmatprep.subr.mxu0 0.0
    %v1585 = vand.u32 %v1546, 4294901760
    %1586 = vmatpush1.msra.mxu0 %v1585
    %1587 = vmatprep.subr.mxu0 0.0
    %v1588 = vand.u32 %v1547, 4294901760
    %1589 = vmatpush1.msra.mxu0 %v1588
    %1590 = vmatprep.subr.mxu0 0.0
    %v1591 = vand.u32 %v1548, 4294901760
    %1592 = vmatpush1.msra.mxu0 %v1591
    %1593 = vmatprep.subr.mxu0 0.0
    %v1594 = vand.u32 %v1549, 4294901760
    %1595 = vmatpush1.msra.mxu0 %v1594
    %1596 = vmatprep.subr.mxu0 0.0
    %v1597 = vand.u32 %v1550, 4294901760
    %1598 = vmatpush1.msra.mxu0 %v1597
    %1599 = vmatprep.subr.mxu0 0.0
    %1600 = vmatpush1.msra.mxu0 0.0
    %1601 = vmatprep.subr.mxu0 0.0
    %1602 = vmatpush1.msra.mxu0 0.0
    %1603 = vmatprep.subr.mxu0 0.0
    %1604 = vmatpush1.msra.mxu0 0.0
    %1605 = vmatprep.subr.mxu0 0.0
    %1606 = vmatpush1.msra.mxu0 0.0
    %1607 = vmatprep.subr.mxu0 0.0
    %1608 = vmatpush1.msra.mxu0 0.0
    %1609 = vmatprep.subr.mxu0 0.0
    %1610 = vmatpush1.msra.mxu0 0.0
    %1611 = vmatprep.subr.mxu0 0.0
    %1612 = vmatpush1.msra.mxu0 0.0
    %1613 = vmatprep.subr.mxu0 0.0
    %1614 = vmatpush1.msra.mxu0 0.0
    %1615 = vmatprep.subr.mxu0 0.0
    %1616 = vmatpush1.msra.mxu0 0.0
    %1617 = vmatprep.subr.mxu0 0.0
    %1618 = vmatpush1.msra.mxu0 0.0
    %1619 = vmatprep.subr.mxu0 0.0
    %1620 = vmatpush1.msra.mxu0 0.0
    %1621 = vmatprep.subr.mxu0 0.0
    %1622 = vmatpush1.msra.mxu0 0.0
    %1623 = vmatprep.subr.mxu0 0.0
    %1624 = vmatpush1.msra.mxu0 0.0
    %1625 = vmatprep.subr.mxu0 0.0
    %1626 = vmatpush1.msra.mxu0 0.0
    %1627 = vmatprep.subr.mxu0 0.0
    %1628 = vmatpush1.msra.mxu0 0.0
    %1629 = vmatprep.subr.mxu0 0.0
    %1630 = vmatpush1.msra.mxu0 0.0
    %1631 = vmatprep.mubr.f32.mxu0 0.0
    %v1632 = vand.u32 %v1532, 4294901760
    %v1633 = vsub.f32 %v1532, %v1632
    %v1634 = vand.u32 %v1633, 4294901760
    %v1635 = vsub.f32 %v1633, %v1634
    %v1636 = vand.u32 %v1635, 4294901760
    %1637 = vmatmul.mubr.f32.gmra.mrb[0].mxu0 %v1636
    %v1638 = vpop.f32.mrb[0].mxu0
    %v1639 = vadd.f32 0.0, %v1638
    %v1640 = vpop.f32.mrb[0].mxu0
    %1641 = vdwg.mxu0
    %1642 = vmatprep.subr.mxu0 0.0
    %v1643 = vand.u32 %v1535, 4294901760
    %v1644 = vsub.f32 %v1535, %v1643
    %v1645 = vand.u32 %v1644, 4294901760
    %v1646 = vsub.f32 %v1644, %v1645
    %v1647 = vand.u32 %v1646, 4294901760
    %1648 = vmatpush1.msra.mxu0 %v1647
    %1649 = vmatprep.subr.mxu0 0.0
    %v1650 = vand.u32 %v1536, 4294901760
    %v1651 = vsub.f32 %v1536, %v1650
    %v1652 = vand.u32 %v1651, 4294901760
    %v1653 = vsub.f32 %v1651, %v1652
    %v1654 = vand.u32 %v1653, 4294901760
    %1655 = vmatpush1.msra.mxu0 %v1654
    %1656 = vmatprep.subr.mxu0 0.0
    %v1657 = vand.u32 %v1537, 4294901760
    %v1658 = vsub.f32 %v1537, %v1657
    %v1659 = vand.u32 %v1658, 4294901760
    %v1660 = vsub.f32 %v1658, %v1659
    %v1661 = vand.u32 %v1660, 4294901760
    %1662 = vmatpush1.msra.mxu0 %v1661
    %1663 = vmatprep.subr.mxu0 0.0
    %v1664 = vand.u32 %v1538, 4294901760
    %v1665 = vsub.f32 %v1538, %v1664
    %v1666 = vand.u32 %v1665, 4294901760
    %v1667 = vsub.f32 %v1665, %v1666
    %v1668 = vand.u32 %v1667, 4294901760
    %1669 = vmatpush1.msra.mxu0 %v1668
    %1670 = vmatprep.subr.mxu0 0.0
    %v1671 = vand.u32 %v1539, 4294901760
    %v1672 = vsub.f32 %v1539, %v1671
    %v1673 = vand.u32 %v1672, 4294901760
    %v1674 = vsub.f32 %v1672, %v1673
    %v1675 = vand.u32 %v1674, 4294901760
    %1676 = vmatpush1.msra.mxu0 %v1675
    %1677 = vmatprep.subr.mxu0 0.0
    %v1678 = vand.u32 %v1540, 4294901760
    %v1679 = vsub.f32 %v1540, %v1678
    %v1680 = vand.u32 %v1679, 4294901760
    %v1681 = vsub.f32 %v1679, %v1680
    %v1682 = vand.u32 %v1681, 4294901760
    %1683 = vmatpush1.msra.mxu0 %v1682
    %1684 = vmatprep.subr.mxu0 0.0
    %v1685 = vand.u32 %v1541, 4294901760
    %v1686 = vsub.f32 %v1541, %v1685
    %v1687 = vand.u32 %v1686, 4294901760
    %v1688 = vsub.f32 %v1686, %v1687
    %v1689 = vand.u32 %v1688, 4294901760
    %1690 = vmatpush1.msra.mxu0 %v1689
    %1691 = vmatprep.subr.mxu0 0.0
    %v1692 = vand.u32 %v1542, 4294901760
    %v1693 = vsub.f32 %v1542, %v1692
    %v1694 = vand.u32 %v1693, 4294901760
    %v1695 = vsub.f32 %v1693, %v1694
    %v1696 = vand.u32 %v1695, 4294901760
    %1697 = vmatpush1.msra.mxu0 %v1696
    %1698 = vmatprep.subr.mxu0 0.0
    %v1699 = vand.u32 %v1543, 4294901760
    %v1700 = vsub.f32 %v1543, %v1699
    %v1701 = vand.u32 %v1700, 4294901760
    %v1702 = vsub.f32 %v1700, %v1701
    %v1703 = vand.u32 %v1702, 4294901760
    %1704 = vmatpush1.msra.mxu0 %v1703
    %1705 = vmatprep.subr.mxu0 0.0
    %v1706 = vand.u32 %v1544, 4294901760
    %v1707 = vsub.f32 %v1544, %v1706
    %v1708 = vand.u32 %v1707, 4294901760
    %v1709 = vsub.f32 %v1707, %v1708
    %v1710 = vand.u32 %v1709, 4294901760
    %1711 = vmatpush1.msra.mxu0 %v1710
    %1712 = vmatprep.subr.mxu0 0.0
    %v1713 = vand.u32 %v1545, 4294901760
    %v1714 = vsub.f32 %v1545, %v1713
    %v1715 = vand.u32 %v1714, 4294901760
    %v1716 = vsub.f32 %v1714, %v1715
    %v1717 = vand.u32 %v1716, 4294901760
    %1718 = vmatpush1.msra.mxu0 %v1717
    %1719 = vmatprep.subr.mxu0 0.0
    %v1720 = vand.u32 %v1546, 4294901760
    %v1721 = vsub.f32 %v1546, %v1720
    %v1722 = vand.u32 %v1721, 4294901760
    %v1723 = vsub.f32 %v1721, %v1722
    %v1724 = vand.u32 %v1723, 4294901760
    %1725 = vmatpush1.msra.mxu0 %v1724
    %1726 = vmatprep.subr.mxu0 0.0
    %v1727 = vand.u32 %v1547, 4294901760
    %v1728 = vsub.f32 %v1547, %v1727
    %v1729 = vand.u32 %v1728, 4294901760
    %v1730 = vsub.f32 %v1728, %v1729
    %v1731 = vand.u32 %v1730, 4294901760
    %1732 = vmatpush1.msra.mxu0 %v1731
    %1733 = vmatprep.subr.mxu0 0.0
    %v1734 = vand.u32 %v1548, 4294901760
    %v1735 = vsub.f32 %v1548, %v1734
    %v1736 = vand.u32 %v1735, 4294901760
    %v1737 = vsub.f32 %v1735, %v1736
    %v1738 = vand.u32 %v1737, 4294901760
    %1739 = vmatpush1.msra.mxu0 %v1738
    %1740 = vmatprep.subr.mxu0 0.0
    %v1741 = vand.u32 %v1549, 4294901760
    %v1742 = vsub.f32 %v1549, %v1741
    %v1743 = vand.u32 %v1742, 4294901760
    %v1744 = vsub.f32 %v1742, %v1743
    %v1745 = vand.u32 %v1744, 4294901760
    %1746 = vmatpush1.msra.mxu0 %v1745
    %1747 = vmatprep.subr.mxu0 0.0
    %v1748 = vand.u32 %v1550, 4294901760
    %v1749 = vsub.f32 %v1550, %v1748
    %v1750 = vand.u32 %v1749, 4294901760
    %v1751 = vsub.f32 %v1749, %v1750
    %v1752 = vand.u32 %v1751, 4294901760
    %1753 = vmatpush1.msra.mxu0 %v1752
    %1754 = vmatprep.subr.mxu0 0.0
    %1755 = vmatpush1.msra.mxu0 0.0
    %1756 = vmatprep.subr.mxu0 0.0
    %1757 = vmatpush1.msra.mxu0 0.0
    %1758 = vmatprep.subr.mxu0 0.0
    %1759 = vmatpush1.msra.mxu0 0.0
    %1760 = vmatprep.subr.mxu0 0.0
    %1761 = vmatpush1.msra.mxu0 0.0
    %1762 = vmatprep.subr.mxu0 0.0
    %1763 = vmatpush1.msra.mxu0 0.0
    %1764 = vmatprep.subr.mxu0 0.0
    %1765 = vmatpush1.msra.mxu0 0.0
    %1766 = vmatprep.subr.mxu0 0.0
    %1767 = vmatpush1.msra.mxu0 0.0
    %1768 = vmatprep.subr.mxu0 0.0
    %1769 = vmatpush1.msra.mxu0 0.0
    %1770 = vmatprep.subr.mxu0 0.0
    %1771 = vmatpush1.msra.mxu0 0.0
    %1772 = vmatprep.subr.mxu0 0.0
    %1773 = vmatpush1.msra.mxu0 0.0
    %1774 = vmatprep.subr.mxu0 0.0
    %1775 = vmatpush1.msra.mxu0 0.0
    %1776 = vmatprep.subr.mxu0 0.0
    %1777 = vmatpush1.msra.mxu0 0.0
    %1778 = vmatprep.subr.mxu0 0.0
    %1779 = vmatpush1.msra.mxu0 0.0
    %1780 = vmatprep.subr.mxu0 0.0
    %1781 = vmatpush1.msra.mxu0 0.0
    %1782 = vmatprep.subr.mxu0 0.0
    %1783 = vmatpush1.msra.mxu0 0.0
    %1784 = vmatprep.subr.mxu0 0.0
    %1785 = vmatpush1.msra.mxu0 0.0
    %1786 = vmatprep.mubr.f32.mxu0 0.0
    %v1787 = vand.u32 %v1532, 4294901760
    %1788 = vmatmul.mubr.f32.gmra.mrb[0].mxu0 %v1787
    %v1789 = vpop.f32.mrb[0].mxu0
    %v1790 = vadd.f32 %v1639, %v1789
    %v1791 = vpop.f32.mrb[0].mxu0
    %1792 = vdwg.mxu0
    %1793 = vmatprep.subr.mxu0 0.0
    %v1794 = vand.u32 %v1535, 4294901760
    %v1795 = vsub.f32 %v1535, %v1794
    %1796 = vmatpush1.msra.mxu0 %v1795
    %1797 = vmatprep.subr.mxu0 0.0
    %v1798 = vand.u32 %v1536, 4294901760
    %v1799 = vsub.f32 %v1536, %v1798
    %1800 = vmatpush1.msra.mxu0 %v1799
    %1801 = vmatprep.subr.mxu0 0.0
    %v1802 = vand.u32 %v1537, 4294901760
    %v1803 = vsub.f32 %v1537, %v1802
    %1804 = vmatpush1.msra.mxu0 %v1803
    %1805 = vmatprep.subr.mxu0 0.0
    %v1806 = vand.u32 %v1538, 4294901760
    %v1807 = vsub.f32 %v1538, %v1806
    %1808 = vmatpush1.msra.mxu0 %v1807
    %1809 = vmatprep.subr.mxu0 0.0
    %v1810 = vand.u32 %v1539, 4294901760
    %v1811 = vsub.f32 %v1539, %v1810
    %1812 = vmatpush1.msra.mxu0 %v1811
    %1813 = vmatprep.subr.mxu0 0.0
    %v1814 = vand.u32 %v1540, 4294901760
    %v1815 = vsub.f32 %v1540, %v1814
    %1816 = vmatpush1.msra.mxu0 %v1815
    %1817 = vmatprep.subr.mxu0 0.0
    %v1818 = vand.u32 %v1541, 4294901760
    %v1819 = vsub.f32 %v1541, %v1818
    %1820 = vmatpush1.msra.mxu0 %v1819
    %1821 = vmatprep.subr.mxu0 0.0
    %v1822 = vand.u32 %v1542, 4294901760
    %v1823 = vsub.f32 %v1542, %v1822
    %1824 = vmatpush1.msra.mxu0 %v1823
    %1825 = vmatprep.subr.mxu0 0.0
    %v1826 = vand.u32 %v1543, 4294901760
    %v1827 = vsub.f32 %v1543, %v1826
    %1828 = vmatpush1.msra.mxu0 %v1827
    %1829 = vmatprep.subr.mxu0 0.0
    %v1830 = vand.u32 %v1544, 4294901760
    %v1831 = vsub.f32 %v1544, %v1830
    %1832 = vmatpush1.msra.mxu0 %v1831
    %1833 = vmatprep.subr.mxu0 0.0
    %v1834 = vand.u32 %v1545, 4294901760
    %v1835 = vsub.f32 %v1545, %v1834
    %1836 = vmatpush1.msra.mxu0 %v1835
    %1837 = vmatprep.subr.mxu0 0.0
    %v1838 = vand.u32 %v1546, 4294901760
    %v1839 = vsub.f32 %v1546, %v1838
    %1840 = vmatpush1.msra.mxu0 %v1839
    %1841 = vmatprep.subr.mxu0 0.0
    %v1842 = vand.u32 %v1547, 4294901760
    %v1843 = vsub.f32 %v1547, %v1842
    %1844 = vmatpush1.msra.mxu0 %v1843
    %1845 = vmatprep.subr.mxu0 0.0
    %v1846 = vand.u32 %v1548, 4294901760
    %v1847 = vsub.f32 %v1548, %v1846
    %1848 = vmatpush1.msra.mxu0 %v1847
    %1849 = vmatprep.subr.mxu0 0.0
    %v1850 = vand.u32 %v1549, 4294901760
    %v1851 = vsub.f32 %v1549, %v1850
    %1852 = vmatpush1.msra.mxu0 %v1851
    %1853 = vmatprep.subr.mxu0 0.0
    %v1854 = vand.u32 %v1550, 4294901760
    %v1855 = vsub.f32 %v1550, %v1854
    %1856 = vmatpush1.msra.mxu0 %v1855
    %1857 = vmatprep.subr.mxu0 0.0
    %1858 = vmatpush1.msra.mxu0 0.0
    %1859 = vmatprep.subr.mxu0 0.0
    %1860 = vmatpush1.msra.mxu0 0.0
    %1861 = vmatprep.subr.mxu0 0.0
    %1862 = vmatpush1.msra.mxu0 0.0
    %1863 = vmatprep.subr.mxu0 0.0
    %1864 = vmatpush1.msra.mxu0 0.0
    %1865 = vmatprep.subr.mxu0 0.0
    %1866 = vmatpush1.msra.mxu0 0.0
    %1867 = vmatprep.subr.mxu0 0.0
    %1868 = vmatpush1.msra.mxu0 0.0
    %1869 = vmatprep.subr.mxu0 0.0
    %1870 = vmatpush1.msra.mxu0 0.0
    %1871 = vmatprep.subr.mxu0 0.0
    %1872 = vmatpush1.msra.mxu0 0.0
    %1873 = vmatprep.subr.mxu0 0.0
    %1874 = vmatpush1.msra.mxu0 0.0
    %1875 = vmatprep.subr.mxu0 0.0
    %1876 = vmatpush1.msra.mxu0 0.0
    %1877 = vmatprep.subr.mxu0 0.0
    %1878 = vmatpush1.msra.mxu0 0.0
    %1879 = vmatprep.subr.mxu0 0.0
    %1880 = vmatpush1.msra.mxu0 0.0
    %1881 = vmatprep.subr.mxu0 0.0
    %1882 = vmatpush1.msra.mxu0 0.0
    %1883 = vmatprep.subr.mxu0 0.0
    %1884 = vmatpush1.msra.mxu0 0.0
    %1885 = vmatprep.subr.mxu0 0.0
    %1886 = vmatpush1.msra.mxu0 0.0
    %1887 = vmatprep.subr.mxu0 0.0
    %1888 = vmatpush1.msra.mxu0 0.0
    %1889 = vmatprep.mubr.f32.mxu0 0.0
    %v1890 = vand.u32 %v1532, 4294901760
    %v1891 = vsub.f32 %v1532, %v1890
    %1892 = vmatmul.mubr.f32.gmra.mrb[0].mxu0 %v1891
    %v1893 = vpop.f32.mrb[0].mxu0
    %v1894 = vadd.f32 %v1790, %v1893
    %v1895 = vpop.f32.mrb[0].mxu0
    %1896 = vdwg.mxu0
    %1897 = vmatprep.subr.mxu0 0.0
    %v1898 = vand.u32 %v1535, 4294901760
    %1899 = vmatpush1.msra.mxu0 %v1898
    %1900 = vmatprep.subr.mxu0 0.0
    %v1901 = vand.u32 %v1536, 4294901760
    %1902 = vmatpush1.msra.mxu0 %v1901
    %1903 = vmatprep.subr.mxu0 0.0
    %v1904 = vand.u32 %v1537, 4294901760
    %1905 = vmatpush1.msra.mxu0 %v1904
    %1906 = vmatprep.subr.mxu0 0.0
    %v1907 = vand.u32 %v1538, 4294901760
    %1908 = vmatpush1.msra.mxu0 %v1907
    %1909 = vmatprep.subr.mxu0 0.0
    %v1910 = vand.u32 %v1539, 4294901760
    %1911 = vmatpush1.msra.mxu0 %v1910
    %1912 = vmatprep.subr.mxu0 0.0
    %v1913 = vand.u32 %v1540, 4294901760
    %1914 = vmatpush1.msra.mxu0 %v1913
    %1915 = vmatprep.subr.mxu0 0.0
    %v1916 = vand.u32 %v1541, 4294901760
    %1917 = vmatpush1.msra.mxu0 %v1916
    %1918 = vmatprep.subr.mxu0 0.0
    %v1919 = vand.u32 %v1542, 4294901760
    %1920 = vmatpush1.msra.mxu0 %v1919
    %1921 = vmatprep.subr.mxu0 0.0
    %v1922 = vand.u32 %v1543, 4294901760
    %1923 = vmatpush1.msra.mxu0 %v1922
    %1924 = vmatprep.subr.mxu0 0.0
    %v1925 = vand.u32 %v1544, 4294901760
    %1926 = vmatpush1.msra.mxu0 %v1925
    %1927 = vmatprep.subr.mxu0 0.0
    %v1928 = vand.u32 %v1545, 4294901760
    %1929 = vmatpush1.msra.mxu0 %v1928
    %1930 = vmatprep.subr.mxu0 0.0
    %v1931 = vand.u32 %v1546, 4294901760
    %1932 = vmatpush1.msra.mxu0 %v1931
    %1933 = vmatprep.subr.mxu0 0.0
    %v1934 = vand.u32 %v1547, 4294901760
    %1935 = vmatpush1.msra.mxu0 %v1934
    %1936 = vmatprep.subr.mxu0 0.0
    %v1937 = vand.u32 %v1548, 4294901760
    %1938 = vmatpush1.msra.mxu0 %v1937
    %1939 = vmatprep.subr.mxu0 0.0
    %v1940 = vand.u32 %v1549, 4294901760
    %1941 = vmatpush1.msra.mxu0 %v1940
    %1942 = vmatprep.subr.mxu0 0.0
    %v1943 = vand.u32 %v1550, 4294901760
    %1944 = vmatpush1.msra.mxu0 %v1943
    %1945 = vmatprep.subr.mxu0 0.0
    %1946 = vmatpush1.msra.mxu0 0.0
    %1947 = vmatprep.subr.mxu0 0.0
    %1948 = vmatpush1.msra.mxu0 0.0
    %1949 = vmatprep.subr.mxu0 0.0
    %1950 = vmatpush1.msra.mxu0 0.0
    %1951 = vmatprep.subr.mxu0 0.0
    %1952 = vmatpush1.msra.mxu0 0.0
    %1953 = vmatprep.subr.mxu0 0.0
    %1954 = vmatpush1.msra.mxu0 0.0
    %1955 = vmatprep.subr.mxu0 0.0
    %1956 = vmatpush1.msra.mxu0 0.0
    %1957 = vmatprep.subr.mxu0 0.0
    %1958 = vmatpush1.msra.mxu0 0.0
    %1959 = vmatprep.subr.mxu0 0.0
    %1960 = vmatpush1.msra.mxu0 0.0
    %1961 = vmatprep.subr.mxu0 0.0
    %1962 = vmatpush1.msra.mxu0 0.0
    %1963 = vmatprep.subr.mxu0 0.0
    %1964 = vmatpush1.msra.mxu0 0.0
    %1965 = vmatprep.subr.mxu0 0.0
    %1966 = vmatpush1.msra.mxu0 0.0
    %1967 = vmatprep.subr.mxu0 0.0
    %1968 = vmatpush1.msra.mxu0 0.0
    %1969 = vmatprep.subr.mxu0 0.0
    %1970 = vmatpush1.msra.mxu0 0.0
    %1971 = vmatprep.subr.mxu0 0.0
    %1972 = vmatpush1.msra.mxu0 0.0
    %1973 = vmatprep.subr.mxu0 0.0
    %1974 = vmatpush1.msra.mxu0 0.0
    %1975 = vmatprep.subr.mxu0 0.0
    %1976 = vmatpush1.msra.mxu0 0.0
    %1977 = vmatprep.mubr.f32.mxu0 0.0
    %v1978 = vand.u32 %v1532, 4294901760
    %v1979 = vsub.f32 %v1532, %v1978
    %v1980 = vand.u32 %v1979, 4294901760
    %1981 = vmatmul.mubr.f32.gmra.mrb[0].mxu0 %v1980
    %v1982 = vpop.f32.mrb[0].mxu0
    %v1983 = vadd.f32 %v1894, %v1982
    %v1984 = vpop.f32.mrb[0].mxu0
    %1985 = vdwg.mxu0
    %1986 = vmatprep.subr.mxu0 0.0
    %v1987 = vand.u32 %v1535, 4294901760
    %v1988 = vsub.f32 %v1535, %v1987
    %v1989 = vand.u32 %v1988, 4294901760
    %1990 = vmatpush1.msra.mxu0 %v1989
    %1991 = vmatprep.subr.mxu0 0.0
    %v1992 = vand.u32 %v1536, 4294901760
    %v1993 = vsub.f32 %v1536, %v1992
    %v1994 = vand.u32 %v1993, 4294901760
    %1995 = vmatpush1.msra.mxu0 %v1994
    %1996 = vmatprep.subr.mxu0 0.0
    %v1997 = vand.u32 %v1537, 4294901760
    %v1998 = vsub.f32 %v1537, %v1997
    %v1999 = vand.u32 %v1998, 4294901760
    %2000 = vmatpush1.msra.mxu0 %v1999
    %2001 = vmatprep.subr.mxu0 0.0
    %v2002 = vand.u32 %v1538, 4294901760
    %v2003 = vsub.f32 %v1538, %v2002
    %v2004 = vand.u32 %v2003, 4294901760
    %2005 = vmatpush1.msra.mxu0 %v2004
    %2006 = vmatprep.subr.mxu0 0.0
    %v2007 = vand.u32 %v1539, 4294901760
    %v2008 = vsub.f32 %v1539, %v2007
    %v2009 = vand.u32 %v2008, 4294901760
    %2010 = vmatpush1.msra.mxu0 %v2009
    %2011 = vmatprep.subr.mxu0 0.0
    %v2012 = vand.u32 %v1540, 4294901760
    %v2013 = vsub.f32 %v1540, %v2012
    %v2014 = vand.u32 %v2013, 4294901760
    %2015 = vmatpush1.msra.mxu0 %v2014
    %2016 = vmatprep.subr.mxu0 0.0
    %v2017 = vand.u32 %v1541, 4294901760
    %v2018 = vsub.f32 %v1541, %v2017
    %v2019 = vand.u32 %v2018, 4294901760
    %2020 = vmatpush1.msra.mxu0 %v2019
    %2021 = vmatprep.subr.mxu0 0.0
    %v2022 = vand.u32 %v1542, 4294901760
    %v2023 = vsub.f32 %v1542, %v2022
    %v2024 = vand.u32 %v2023, 4294901760
    %2025 = vmatpush1.msra.mxu0 %v2024
    %2026 = vmatprep.subr.mxu0 0.0
    %v2027 = vand.u32 %v1543, 4294901760
    %v2028 = vsub.f32 %v1543, %v2027
    %v2029 = vand.u32 %v2028, 4294901760
    %2030 = vmatpush1.msra.mxu0 %v2029
    %2031 = vmatprep.subr.mxu0 0.0
    %v2032 = vand.u32 %v1544, 4294901760
    %v2033 = vsub.f32 %v1544, %v2032
    %v2034 = vand.u32 %v2033, 4294901760
    %2035 = vmatpush1.msra.mxu0 %v2034
    %2036 = vmatprep.subr.mxu0 0.0
    %v2037 = vand.u32 %v1545, 4294901760
    %v2038 = vsub.f32 %v1545, %v2037
    %v2039 = vand.u32 %v2038, 4294901760
    %2040 = vmatpush1.msra.mxu0 %v2039
    %2041 = vmatprep.subr.mxu0 0.0
    %v2042 = vand.u32 %v1546, 4294901760
    %v2043 = vsub.f32 %v1546, %v2042
    %v2044 = vand.u32 %v2043, 4294901760
    %2045 = vmatpush1.msra.mxu0 %v2044
    %2046 = vmatprep.subr.mxu0 0.0
    %v2047 = vand.u32 %v1547, 4294901760
    %v2048 = vsub.f32 %v1547, %v2047
    %v2049 = vand.u32 %v2048, 4294901760
    %2050 = vmatpush1.msra.mxu0 %v2049
    %2051 = vmatprep.subr.mxu0 0.0
    %v2052 = vand.u32 %v1548, 4294901760
    %v2053 = vsub.f32 %v1548, %v2052
    %v2054 = vand.u32 %v2053, 4294901760
    %2055 = vmatpush1.msra.mxu0 %v2054
    %2056 = vmatprep.subr.mxu0 0.0
    %v2057 = vand.u32 %v1549, 4294901760
    %v2058 = vsub.f32 %v1549, %v2057
    %v2059 = vand.u32 %v2058, 4294901760
    %2060 = vmatpush1.msra.mxu0 %v2059
    %2061 = vmatprep.subr.mxu0 0.0
    %v2062 = vand.u32 %v1550, 4294901760
    %v2063 = vsub.f32 %v1550, %v2062
    %v2064 = vand.u32 %v2063, 4294901760
    %2065 = vmatpush1.msra.mxu0 %v2064
    %2066 = vmatprep.subr.mxu0 0.0
    %2067 = vmatpush1.msra.mxu0 0.0
    %2068 = vmatprep.subr.mxu0 0.0
    %2069 = vmatpush1.msra.mxu0 0.0
    %2070 = vmatprep.subr.mxu0 0.0
    %2071 = vmatpush1.msra.mxu0 0.0
    %2072 = vmatprep.subr.mxu0 0.0
    %2073 = vmatpush1.msra.mxu0 0.0
    %2074 = vmatprep.subr.mxu0 0.0
    %2075 = vmatpush1.msra.mxu0 0.0
    %2076 = vmatprep.subr.mxu0 0.0
    %2077 = vmatpush1.msra.mxu0 0.0
    %2078 = vmatprep.subr.mxu0 0.0
    %2079 = vmatpush1.msra.mxu0 0.0
    %2080 = vmatprep.subr.mxu0 0.0
    %2081 = vmatpush1.msra.mxu0 0.0
    %2082 = vmatprep.subr.mxu0 0.0
    %2083 = vmatpush1.msra.mxu0 0.0
    %2084 = vmatprep.subr.mxu0 0.0
    %2085 = vmatpush1.msra.mxu0 0.0
    %2086 = vmatprep.subr.mxu0 0.0
    %2087 = vmatpush1.msra.mxu0 0.0
    %2088 = vmatprep.subr.mxu0 0.0
    %2089 = vmatpush1.msra.mxu0 0.0
    %2090 = vmatprep.subr.mxu0 0.0
    %2091 = vmatpush1.msra.mxu0 0.0
    %2092 = vmatprep.subr.mxu0 0.0
    %2093 = vmatpush1.msra.mxu0 0.0
    %2094 = vmatprep.subr.mxu0 0.0
    %2095 = vmatpush1.msra.mxu0 0.0
    %2096 = vmatprep.subr.mxu0 0.0
    %2097 = vmatpush1.msra.mxu0 0.0
    %2098 = vmatprep.mubr.f32.mxu0 0.0
    %v2099 = vand.u32 %v1532, 4294901760
    %2100 = vmatmul.mubr.f32.gmra.mrb[0].mxu0 %v2099
    %v2101 = vpop.f32.mrb[0].mxu0
    %v2102 = vadd.f32 %v1983, %v2101
    %v2103 = vpop.f32.mrb[0].mxu0
    %2104 = vdwg.mxu0
    %2105 = vmatprep.subr.mxu0 0.0
    %v2106 = vand.u32 %v1535, 4294901760
    %2107 = vmatpush1.msra.mxu0 %v2106
    %2108 = vmatprep.subr.mxu0 0.0
    %v2109 = vand.u32 %v1536, 4294901760
    %2110 = vmatpush1.msra.mxu0 %v2109
    %2111 = vmatprep.subr.mxu0 0.0
    %v2112 = vand.u32 %v1537, 4294901760
    %2113 = vmatpush1.msra.mxu0 %v2112
    %2114 = vmatprep.subr.mxu0 0.0
    %v2115 = vand.u32 %v1538, 4294901760
    %2116 = vmatpush1.msra.mxu0 %v2115
    %2117 = vmatprep.subr.mxu0 0.0
    %v2118 = vand.u32 %v1539, 4294901760
    %2119 = vmatpush1.msra.mxu0 %v2118
    %2120 = vmatprep.subr.mxu0 0.0
    %v2121 = vand.u32 %v1540, 4294901760
    %2122 = vmatpush1.msra.mxu0 %v2121
    %2123 = vmatprep.subr.mxu0 0.0
    %v2124 = vand.u32 %v1541, 4294901760
    %2125 = vmatpush1.msra.mxu0 %v2124
    %2126 = vmatprep.subr.mxu0 0.0
    %v2127 = vand.u32 %v1542, 4294901760
    %2128 = vmatpush1.msra.mxu0 %v2127
    %2129 = vmatprep.subr.mxu0 0.0
    %v2130 = vand.u32 %v1543, 4294901760
    %2131 = vmatpush1.msra.mxu0 %v2130
    %2132 = vmatprep.subr.mxu0 0.0
    %v2133 = vand.u32 %v1544, 4294901760
    %2134 = vmatpush1.msra.mxu0 %v2133
    %2135 = vmatprep.subr.mxu0 0.0
    %v2136 = vand.u32 %v1545, 4294901760
    %2137 = vmatpush1.msra.mxu0 %v2136
    %2138 = vmatprep.subr.mxu0 0.0
    %v2139 = vand.u32 %v1546, 4294901760
    %2140 = vmatpush1.msra.mxu0 %v2139
    %2141 = vmatprep.subr.mxu0 0.0
    %v2142 = vand.u32 %v1547, 4294901760
    %2143 = vmatpush1.msra.mxu0 %v2142
    %2144 = vmatprep.subr.mxu0 0.0
    %v2145 = vand.u32 %v1548, 4294901760
    %2146 = vmatpush1.msra.mxu0 %v2145
    %2147 = vmatprep.subr.mxu0 0.0
    %v2148 = vand.u32 %v1549, 4294901760
    %2149 = vmatpush1.msra.mxu0 %v2148
    %2150 = vmatprep.subr.mxu0 0.0
    %v2151 = vand.u32 %v1550, 4294901760
    %2152 = vmatpush1.msra.mxu0 %v2151
    %2153 = vmatprep.subr.mxu0 0.0
    %2154 = vmatpush1.msra.mxu0 0.0
    %2155 = vmatprep.subr.mxu0 0.0
    %2156 = vmatpush1.msra.mxu0 0.0
    %2157 = vmatprep.subr.mxu0 0.0
    %2158 = vmatpush1.msra.mxu0 0.0
    %2159 = vmatprep.subr.mxu0 0.0
    %2160 = vmatpush1.msra.mxu0 0.0
    %2161 = vmatprep.subr.mxu0 0.0
    %2162 = vmatpush1.msra.mxu0 0.0
    %2163 = vmatprep.subr.mxu0 0.0
    %2164 = vmatpush1.msra.mxu0 0.0
    %2165 = vmatprep.subr.mxu0 0.0
    %2166 = vmatpush1.msra.mxu0 0.0
    %2167 = vmatprep.subr.mxu0 0.0
    %2168 = vmatpush1.msra.mxu0 0.0
    %2169 = vmatprep.subr.mxu0 0.0
    %2170 = vmatpush1.msra.mxu0 0.0
    %2171 = vmatprep.subr.mxu0 0.0
    %2172 = vmatpush1.msra.mxu0 0.0
    %2173 = vmatprep.subr.mxu0 0.0
    %2174 = vmatpush1.msra.mxu0 0.0
    %2175 = vmatprep.subr.mxu0 0.0
    %2176 = vmatpush1.msra.mxu0 0.0
    %2177 = vmatprep.subr.mxu0 0.0
    %2178 = vmatpush1.msra.mxu0 0.0
    %2179 = vmatprep.subr.mxu0 0.0
    %2180 = vmatpush1.msra.mxu0 0.0
    %2181 = vmatprep.subr.mxu0 0.0
    %2182 = vmatpush1.msra.mxu0 0.0
    %2183 = vmatprep.subr.mxu0 0.0
    %2184 = vmatpush1.msra.mxu0 0.0
    %2185 = vmatprep.mubr.f32.mxu0 0.0
    %v2186 = vand.u32 %v1532, 4294901760
    %2187 = vmatmul.mubr.f32.gmra.mrb[0].mxu0 %v2186
    %v2188 = vpop.f32.mrb[0].mxu0
    %v2189 = vadd.f32 %v2102, %v2188
    %v2190 = vpop.f32.mrb[0].mxu0
    %2191 = vdwg.mxu0
    %v2192 = vtanh.pop %v2189
    %v2193 = vadd.f32 %v1530, %v2192
    %s2194 = scalar_lea.vmem [#allocation2], %s198
    %v2195 = vld [vmem:[%s2194] sm:$0x1]
    %s2196 = smul.u32 %s197, 128
    %s2197 = scalar_lea.vmem [#allocation8], %s2196
    %v2198 = vld [vmem:[%s2197] sm:$0xff]
    %v2199 = vld [vmem:[%s2197 + $0x8] sm:$0xff]
    %v2200 = vld [vmem:[%s2197 + $0x10] sm:$0xff]
    %v2201 = vld [vmem:[%s2197 + $0x18] sm:$0xff]
    %v2202 = vld [vmem:[%s2197 + $0x20] sm:$0xff]
    %v2203 = vld [vmem:[%s2197 + $0x28] sm:$0xff]
    %v2204 = vld [vmem:[%s2197 + $0x30] sm:$0xff]
    %v2205 = vld [vmem:[%s2197 + $0x38] sm:$0xff]
    %v2206 = vld [vmem:[%s2197 + $0x40] sm:$0xff]
    %v2207 = vld [vmem:[%s2197 + $0x48] sm:$0xff]
    %v2208 = vld [vmem:[%s2197 + $0x50] sm:$0xff]
    %v2209 = vld [vmem:[%s2197 + $0x58] sm:$0xff]
    %v2210 = vld [vmem:[%s2197 + $0x60] sm:$0xff]
    %v2211 = vld [vmem:[%s2197 + $0x68] sm:$0xff]
    %v2212 = vld [vmem:[%s2197 + $0x70] sm:$0xff]
    %v2213 = vld [vmem:[%s2197 + $0x78] sm:$0xff]
    %2214 = vmatprep.subr.mxu0 0.0
    %v2215 = vand.u32 %v2198, 4294901760
    %2216 = vmatpush1.msra.mxu0 %v2215
    %2217 = vmatprep.subr.mxu0 0.0
    %v2218 = vand.u32 %v2199, 4294901760
    %2219 = vmatpush1.msra.mxu0 %v2218
    %2220 = vmatprep.subr.mxu0 0.0
    %v2221 = vand.u32 %v2200, 4294901760
    %2222 = vmatpush1.msra.mxu0 %v2221
    %2223 = vmatprep.subr.mxu0 0.0
    %v2224 = vand.u32 %v2201, 4294901760
    %2225 = vmatpush1.msra.mxu0 %v2224
    %2226 = vmatprep.subr.mxu0 0.0
    %v2227 = vand.u32 %v2202, 4294901760
    %2228 = vmatpush1.msra.mxu0 %v2227
    %2229 = vmatprep.subr.mxu0 0.0
    %v2230 = vand.u32 %v2203, 4294901760
    %2231 = vmatpush1.msra.mxu0 %v2230
    %2232 = vmatprep.subr.mxu0 0.0
    %v2233 = vand.u32 %v2204, 4294901760
    %2234 = vmatpush1.msra.mxu0 %v2233
    %2235 = vmatprep.subr.mxu0 0.0
    %v2236 = vand.u32 %v2205, 4294901760
    %2237 = vmatpush1.msra.mxu0 %v2236
    %2238 = vmatprep.subr.mxu0 0.0
    %v2239 = vand.u32 %v2206, 4294901760
    %2240 = vmatpush1.msra.mxu0 %v2239
    %2241 = vmatprep.subr.mxu0 0.0
    %v2242 = vand.u32 %v2207, 4294901760
    %2243 = vmatpush1.msra.mxu0 %v2242
    %2244 = vmatprep.subr.mxu0 0.0
    %v2245 = vand.u32 %v2208, 4294901760
    %2246 = vmatpush1.msra.mxu0 %v2245
    %2247 = vmatprep.subr.mxu0 0.0
    %v2248 = vand.u32 %v2209, 4294901760
    %2249 = vmatpush1.msra.mxu0 %v2248
    %2250 = vmatprep.subr.mxu0 0.0
    %v2251 = vand.u32 %v2210, 4294901760
    %2252 = vmatpush1.msra.mxu0 %v2251
    %2253 = vmatprep.subr.mxu0 0.0
    %v2254 = vand.u32 %v2211, 4294901760
    %2255 = vmatpush1.msra.mxu0 %v2254
    %2256 = vmatprep.subr.mxu0 0.0
    %v2257 = vand.u32 %v2212, 4294901760
    %2258 = vmatpush1.msra.mxu0 %v2257
    %2259 = vmatprep.subr.mxu0 0.0
    %v2260 = vand.u32 %v2213, 4294901760
    %2261 = vmatpush1.msra.mxu0 %v2260
    %2262 = vmatprep.subr.mxu0 0.0
    %2263 = vmatpush1.msra.mxu0 0.0
    %2264 = vmatprep.subr.mxu0 0.0
    %2265 = vmatpush1.msra.mxu0 0.0
    %2266 = vmatprep.subr.mxu0 0.0
    %2267 = vmatpush1.msra.mxu0 0.0
    %2268 = vmatprep.subr.mxu0 0.0
    %2269 = vmatpush1.msra.mxu0 0.0
    %2270 = vmatprep.subr.mxu0 0.0
    %2271 = vmatpush1.msra.mxu0 0.0
    %2272 = vmatprep.subr.mxu0 0.0
    %2273 = vmatpush1.msra.mxu0 0.0
    %2274 = vmatprep.subr.mxu0 0.0
    %2275 = vmatpush1.msra.mxu0 0.0
    %2276 = vmatprep.subr.mxu0 0.0
    %2277 = vmatpush1.msra.mxu0 0.0
    %2278 = vmatprep.subr.mxu0 0.0
    %2279 = vmatpush1.msra.mxu0 0.0
    %2280 = vmatprep.subr.mxu0 0.0
    %2281 = vmatpush1.msra.mxu0 0.0
    %2282 = vmatprep.subr.mxu0 0.0
    %2283 = vmatpush1.msra.mxu0 0.0
    %2284 = vmatprep.subr.mxu0 0.0
    %2285 = vmatpush1.msra.mxu0 0.0
    %2286 = vmatprep.subr.mxu0 0.0
    %2287 = vmatpush1.msra.mxu0 0.0
    %2288 = vmatprep.subr.mxu0 0.0
    %2289 = vmatpush1.msra.mxu0 0.0
    %2290 = vmatprep.subr.mxu0 0.0
    %2291 = vmatpush1.msra.mxu0 0.0
    %2292 = vmatprep.subr.mxu0 0.0
    %2293 = vmatpush1.msra.mxu0 0.0
    %2294 = vmatprep.mubr.f32.mxu0 0.0
    %v2295 = vand.u32 %v2195, 4294901760
    %v2296 = vsub.f32 %v2195, %v2295
    %v2297 = vand.u32 %v2296, 4294901760
    %v2298 = vsub.f32 %v2296, %v2297
    %v2299 = vand.u32 %v2298, 4294901760
    %2300 = vmatmul.mubr.f32.gmra.mrb[0].mxu0 %v2299
    %v2301 = vpop.f32.mrb[0].mxu0
    %v2302 = vadd.f32 0.0, %v2301
    %v2303 = vpop.f32.mrb[0].mxu0
    %2304 = vdwg.mxu0
    %2305 = vmatprep.subr.mxu0 0.0
    %v2306 = vand.u32 %v2198, 4294901760
    %v2307 = vsub.f32 %v2198, %v2306
    %v2308 = vand.u32 %v2307, 4294901760
    %v2309 = vsub.f32 %v2307, %v2308
    %v2310 = vand.u32 %v2309, 4294901760
    %2311 = vmatpush1.msra.mxu0 %v2310
    %2312 = vmatprep.subr.mxu0 0.0
    %v2313 = vand.u32 %v2199, 4294901760
    %v2314 = vsub.f32 %v2199, %v2313
    %v2315 = vand.u32 %v2314, 4294901760
    %v2316 = vsub.f32 %v2314, %v2315
    %v2317 = vand.u32 %v2316, 4294901760
    %2318 = vmatpush1.msra.mxu0 %v2317
    %2319 = vmatprep.subr.mxu0 0.0
    %v2320 = vand.u32 %v2200, 4294901760
    %v2321 = vsub.f32 %v2200, %v2320
    %v2322 = vand.u32 %v2321, 4294901760
    %v2323 = vsub.f32 %v2321, %v2322
    %v2324 = vand.u32 %v2323, 4294901760
    %2325 = vmatpush1.msra.mxu0 %v2324
    %2326 = vmatprep.subr.mxu0 0.0
    %v2327 = vand.u32 %v2201, 4294901760
    %v2328 = vsub.f32 %v2201, %v2327
    %v2329 = vand.u32 %v2328, 4294901760
    %v2330 = vsub.f32 %v2328, %v2329
    %v2331 = vand.u32 %v2330, 4294901760
    %2332 = vmatpush1.msra.mxu0 %v2331
    %2333 = vmatprep.subr.mxu0 0.0
    %v2334 = vand.u32 %v2202, 4294901760
    %v2335 = vsub.f32 %v2202, %v2334
    %v2336 = vand.u32 %v2335, 4294901760
    %v2337 = vsub.f32 %v2335, %v2336
    %v2338 = vand.u32 %v2337, 4294901760
    %2339 = vmatpush1.msra.mxu0 %v2338
    %2340 = vmatprep.subr.mxu0 0.0
    %v2341 = vand.u32 %v2203, 4294901760
    %v2342 = vsub.f32 %v2203, %v2341
    %v2343 = vand.u32 %v2342, 4294901760
    %v2344 = vsub.f32 %v2342, %v2343
    %v2345 = vand.u32 %v2344, 4294901760
    %2346 = vmatpush1.msra.mxu0 %v2345
    %2347 = vmatprep.subr.mxu0 0.0
    %v2348 = vand.u32 %v2204, 4294901760
    %v2349 = vsub.f32 %v2204, %v2348
    %v2350 = vand.u32 %v2349, 4294901760
    %v2351 = vsub.f32 %v2349, %v2350
    %v2352 = vand.u32 %v2351, 4294901760
    %2353 = vmatpush1.msra.mxu0 %v2352
    %2354 = vmatprep.subr.mxu0 0.0
    %v2355 = vand.u32 %v2205, 4294901760
    %v2356 = vsub.f32 %v2205, %v2355
    %v2357 = vand.u32 %v2356, 4294901760
    %v2358 = vsub.f32 %v2356, %v2357
    %v2359 = vand.u32 %v2358, 4294901760
    %2360 = vmatpush1.msra.mxu0 %v2359
    %2361 = vmatprep.subr.mxu0 0.0
    %v2362 = vand.u32 %v2206, 4294901760
    %v2363 = vsub.f32 %v2206, %v2362
    %v2364 = vand.u32 %v2363, 4294901760
    %v2365 = vsub.f32 %v2363, %v2364
    %v2366 = vand.u32 %v2365, 4294901760
    %2367 = vmatpush1.msra.mxu0 %v2366
    %2368 = vmatprep.subr.mxu0 0.0
    %v2369 = vand.u32 %v2207, 4294901760
    %v2370 = vsub.f32 %v2207, %v2369
    %v2371 = vand.u32 %v2370, 4294901760
    %v2372 = vsub.f32 %v2370, %v2371
    %v2373 = vand.u32 %v2372, 4294901760
    %2374 = vmatpush1.msra.mxu0 %v2373
    %2375 = vmatprep.subr.mxu0 0.0
    %v2376 = vand.u32 %v2208, 4294901760
    %v2377 = vsub.f32 %v2208, %v2376
    %v2378 = vand.u32 %v2377, 4294901760
    %v2379 = vsub.f32 %v2377, %v2378
    %v2380 = vand.u32 %v2379, 4294901760
    %2381 = vmatpush1.msra.mxu0 %v2380
    %2382 = vmatprep.subr.mxu0 0.0
    %v2383 = vand.u32 %v2209, 4294901760
    %v2384 = vsub.f32 %v2209, %v2383
    %v2385 = vand.u32 %v2384, 4294901760
    %v2386 = vsub.f32 %v2384, %v2385
    %v2387 = vand.u32 %v2386, 4294901760
    %2388 = vmatpush1.msra.mxu0 %v2387
    %2389 = vmatprep.subr.mxu0 0.0
    %v2390 = vand.u32 %v2210, 4294901760
    %v2391 = vsub.f32 %v2210, %v2390
    %v2392 = vand.u32 %v2391, 4294901760
    %v2393 = vsub.f32 %v2391, %v2392
    %v2394 = vand.u32 %v2393, 4294901760
    %2395 = vmatpush1.msra.mxu0 %v2394
    %2396 = vmatprep.subr.mxu0 0.0
    %v2397 = vand.u32 %v2211, 4294901760
    %v2398 = vsub.f32 %v2211, %v2397
    %v2399 = vand.u32 %v2398, 4294901760
    %v2400 = vsub.f32 %v2398, %v2399
    %v2401 = vand.u32 %v2400, 4294901760
    %2402 = vmatpush1.msra.mxu0 %v2401
    %2403 = vmatprep.subr.mxu0 0.0
    %v2404 = vand.u32 %v2212, 4294901760
    %v2405 = vsub.f32 %v2212, %v2404
    %v2406 = vand.u32 %v2405, 4294901760
    %v2407 = vsub.f32 %v2405, %v2406
    %v2408 = vand.u32 %v2407, 4294901760
    %2409 = vmatpush1.msra.mxu0 %v2408
    %2410 = vmatprep.subr.mxu0 0.0
    %v2411 = vand.u32 %v2213, 4294901760
    %v2412 = vsub.f32 %v2213, %v2411
    %v2413 = vand.u32 %v2412, 4294901760
    %v2414 = vsub.f32 %v2412, %v2413
    %v2415 = vand.u32 %v2414, 4294901760
    %2416 = vmatpush1.msra.mxu0 %v2415
    %2417 = vmatprep.subr.mxu0 0.0
    %2418 = vmatpush1.msra.mxu0 0.0
    %2419 = vmatprep.subr.mxu0 0.0
    %2420 = vmatpush1.msra.mxu0 0.0
    %2421 = vmatprep.subr.mxu0 0.0
    %2422 = vmatpush1.msra.mxu0 0.0
    %2423 = vmatprep.subr.mxu0 0.0
    %2424 = vmatpush1.msra.mxu0 0.0
    %2425 = vmatprep.subr.mxu0 0.0
    %2426 = vmatpush1.msra.mxu0 0.0
    %2427 = vmatprep.subr.mxu0 0.0
    %2428 = vmatpush1.msra.mxu0 0.0
    %2429 = vmatprep.subr.mxu0 0.0
    %2430 = vmatpush1.msra.mxu0 0.0
    %2431 = vmatprep.subr.mxu0 0.0
    %2432 = vmatpush1.msra.mxu0 0.0
    %2433 = vmatprep.subr.mxu0 0.0
    %2434 = vmatpush1.msra.mxu0 0.0
    %2435 = vmatprep.subr.mxu0 0.0
    %2436 = vmatpush1.msra.mxu0 0.0
    %2437 = vmatprep.subr.mxu0 0.0
    %2438 = vmatpush1.msra.mxu0 0.0
    %2439 = vmatprep.subr.mxu0 0.0
    %2440 = vmatpush1.msra.mxu0 0.0
    %2441 = vmatprep.subr.mxu0 0.0
    %2442 = vmatpush1.msra.mxu0 0.0
    %2443 = vmatprep.subr.mxu0 0.0
    %2444 = vmatpush1.msra.mxu0 0.0
    %2445 = vmatprep.subr.mxu0 0.0
    %2446 = vmatpush1.msra.mxu0 0.0
    %2447 = vmatprep.subr.mxu0 0.0
    %2448 = vmatpush1.msra.mxu0 0.0
    %2449 = vmatprep.mubr.f32.mxu0 0.0
    %v2450 = vand.u32 %v2195, 4294901760
    %2451 = vmatmul.mubr.f32.gmra.mrb[0].mxu0 %v2450
    %v2452 = vpop.f32.mrb[0].mxu0
    %v2453 = vadd.f32 %v2302, %v2452
    %v2454 = vpop.f32.mrb[0].mxu0
    %2455 = vdwg.mxu0
    %2456 = vmatprep.subr.mxu0 0.0
    %v2457 = vand.u32 %v2198, 4294901760
    %v2458 = vsub.f32 %v2198, %v2457
    %2459 = vmatpush1.msra.mxu0 %v2458
    %2460 = vmatprep.subr.mxu0 0.0
    %v2461 = vand.u32 %v2199, 4294901760
    %v2462 = vsub.f32 %v2199, %v2461
    %2463 = vmatpush1.msra.mxu0 %v2462
    %2464 = vmatprep.subr.mxu0 0.0
    %v2465 = vand.u32 %v2200, 4294901760
    %v2466 = vsub.f32 %v2200, %v2465
    %2467 = vmatpush1.msra.mxu0 %v2466
    %2468 = vmatprep.subr.mxu0 0.0
    %v2469 = vand.u32 %v2201, 4294901760
    %v2470 = vsub.f32 %v2201, %v2469
    %2471 = vmatpush1.msra.mxu0 %v2470
    %2472 = vmatprep.subr.mxu0 0.0
    %v2473 = vand.u32 %v2202, 4294901760
    %v2474 = vsub.f32 %v2202, %v2473
    %2475 = vmatpush1.msra.mxu0 %v2474
    %2476 = vmatprep.subr.mxu0 0.0
    %v2477 = vand.u32 %v2203, 4294901760
    %v2478 = vsub.f32 %v2203, %v2477
    %2479 = vmatpush1.msra.mxu0 %v2478
    %2480 = vmatprep.subr.mxu0 0.0
    %v2481 = vand.u32 %v2204, 4294901760
    %v2482 = vsub.f32 %v2204, %v2481
    %2483 = vmatpush1.msra.mxu0 %v2482
    %2484 = vmatprep.subr.mxu0 0.0
    %v2485 = vand.u32 %v2205, 4294901760
    %v2486 = vsub.f32 %v2205, %v2485
    %2487 = vmatpush1.msra.mxu0 %v2486
    %2488 = vmatprep.subr.mxu0 0.0
    %v2489 = vand.u32 %v2206, 4294901760
    %v2490 = vsub.f32 %v2206, %v2489
    %2491 = vmatpush1.msra.mxu0 %v2490
    %2492 = vmatprep.subr.mxu0 0.0
    %v2493 = vand.u32 %v2207, 4294901760
    %v2494 = vsub.f32 %v2207, %v2493
    %2495 = vmatpush1.msra.mxu0 %v2494
    %2496 = vmatprep.subr.mxu0 0.0
    %v2497 = vand.u32 %v2208, 4294901760
    %v2498 = vsub.f32 %v2208, %v2497
    %2499 = vmatpush1.msra.mxu0 %v2498
    %2500 = vmatprep.subr.mxu0 0.0
    %v2501 = vand.u32 %v2209, 4294901760
    %v2502 = vsub.f32 %v2209, %v2501
    %2503 = vmatpush1.msra.mxu0 %v2502
    %2504 = vmatprep.subr.mxu0 0.0
    %v2505 = vand.u32 %v2210, 4294901760
    %v2506 = vsub.f32 %v2210, %v2505
    %2507 = vmatpush1.msra.mxu0 %v2506
    %2508 = vmatprep.subr.mxu0 0.0
    %v2509 = vand.u32 %v2211, 4294901760
    %v2510 = vsub.f32 %v2211, %v2509
    %2511 = vmatpush1.msra.mxu0 %v2510
    %2512 = vmatprep.subr.mxu0 0.0
    %v2513 = vand.u32 %v2212, 4294901760
    %v2514 = vsub.f32 %v2212, %v2513
    %2515 = vmatpush1.msra.mxu0 %v2514
    %2516 = vmatprep.subr.mxu0 0.0
    %v2517 = vand.u32 %v2213, 4294901760
    %v2518 = vsub.f32 %v2213, %v2517
    %2519 = vmatpush1.msra.mxu0 %v2518
    %2520 = vmatprep.subr.mxu0 0.0
    %2521 = vmatpush1.msra.mxu0 0.0
    %2522 = vmatprep.subr.mxu0 0.0
    %2523 = vmatpush1.msra.mxu0 0.0
    %2524 = vmatprep.subr.mxu0 0.0
    %2525 = vmatpush1.msra.mxu0 0.0
    %2526 = vmatprep.subr.mxu0 0.0
    %2527 = vmatpush1.msra.mxu0 0.0
    %2528 = vmatprep.subr.mxu0 0.0
    %2529 = vmatpush1.msra.mxu0 0.0
    %2530 = vmatprep.subr.mxu0 0.0
    %2531 = vmatpush1.msra.mxu0 0.0
    %2532 = vmatprep.subr.mxu0 0.0
    %2533 = vmatpush1.msra.mxu0 0.0
    %2534 = vmatprep.subr.mxu0 0.0
    %2535 = vmatpush1.msra.mxu0 0.0
    %2536 = vmatprep.subr.mxu0 0.0
    %2537 = vmatpush1.msra.mxu0 0.0
    %2538 = vmatprep.subr.mxu0 0.0
    %2539 = vmatpush1.msra.mxu0 0.0
    %2540 = vmatprep.subr.mxu0 0.0
    %2541 = vmatpush1.msra.mxu0 0.0
    %2542 = vmatprep.subr.mxu0 0.0
    %2543 = vmatpush1.msra.mxu0 0.0
    %2544 = vmatprep.subr.mxu0 0.0
    %2545 = vmatpush1.msra.mxu0 0.0
    %2546 = vmatprep.subr.mxu0 0.0
    %2547 = vmatpush1.msra.mxu0 0.0
    %2548 = vmatprep.subr.mxu0 0.0
    %2549 = vmatpush1.msra.mxu0 0.0
    %2550 = vmatprep.subr.mxu0 0.0
    %2551 = vmatpush1.msra.mxu0 0.0
    %2552 = vmatprep.mubr.f32.mxu0 0.0
    %v2553 = vand.u32 %v2195, 4294901760
    %v2554 = vsub.f32 %v2195, %v2553
    %2555 = vmatmul.mubr.f32.gmra.mrb[0].mxu0 %v2554
    %v2556 = vpop.f32.mrb[0].mxu0
    %v2557 = vadd.f32 %v2453, %v2556
    %v2558 = vpop.f32.mrb[0].mxu0
    %2559 = vdwg.mxu0
    %2560 = vmatprep.subr.mxu0 0.0
    %v2561 = vand.u32 %v2198, 4294901760
    %2562 = vmatpush1.msra.mxu0 %v2561
    %2563 = vmatprep.subr.mxu0 0.0
    %v2564 = vand.u32 %v2199, 4294901760
    %2565 = vmatpush1.msra.mxu0 %v2564
    %2566 = vmatprep.subr.mxu0 0.0
    %v2567 = vand.u32 %v2200, 4294901760
    %2568 = vmatpush1.msra.mxu0 %v2567
    %2569 = vmatprep.subr.mxu0 0.0
    %v2570 = vand.u32 %v2201, 4294901760
    %2571 = vmatpush1.msra.mxu0 %v2570
    %2572 = vmatprep.subr.mxu0 0.0
    %v2573 = vand.u32 %v2202, 4294901760
    %2574 = vmatpush1.msra.mxu0 %v2573
    %2575 = vmatprep.subr.mxu0 0.0
    %v2576 = vand.u32 %v2203, 4294901760
    %2577 = vmatpush1.msra.mxu0 %v2576
    %2578 = vmatprep.subr.mxu0 0.0
    %v2579 = vand.u32 %v2204, 4294901760
    %2580 = vmatpush1.msra.mxu0 %v2579
    %2581 = vmatprep.subr.mxu0 0.0
    %v2582 = vand.u32 %v2205, 4294901760
    %2583 = vmatpush1.msra.mxu0 %v2582
    %2584 = vmatprep.subr.mxu0 0.0
    %v2585 = vand.u32 %v2206, 4294901760
    %2586 = vmatpush1.msra.mxu0 %v2585
    %2587 = vmatprep.subr.mxu0 0.0
    %v2588 = vand.u32 %v2207, 4294901760
    %2589 = vmatpush1.msra.mxu0 %v2588
    %2590 = vmatprep.subr.mxu0 0.0
    %v2591 = vand.u32 %v2208, 4294901760
    %2592 = vmatpush1.msra.mxu0 %v2591
    %2593 = vmatprep.subr.mxu0 0.0
    %v2594 = vand.u32 %v2209, 4294901760
    %2595 = vmatpush1.msra.mxu0 %v2594
    %2596 = vmatprep.subr.mxu0 0.0
    %v2597 = vand.u32 %v2210, 4294901760
    %2598 = vmatpush1.msra.mxu0 %v2597
    %2599 = vmatprep.subr.mxu0 0.0
    %v2600 = vand.u32 %v2211, 4294901760
    %2601 = vmatpush1.msra.mxu0 %v2600
    %2602 = vmatprep.subr.mxu0 0.0
    %v2603 = vand.u32 %v2212, 4294901760
    %2604 = vmatpush1.msra.mxu0 %v2603
    %2605 = vmatprep.subr.mxu0 0.0
    %v2606 = vand.u32 %v2213, 4294901760
    %2607 = vmatpush1.msra.mxu0 %v2606
    %2608 = vmatprep.subr.mxu0 0.0
    %2609 = vmatpush1.msra.mxu0 0.0
    %2610 = vmatprep.subr.mxu0 0.0
    %2611 = vmatpush1.msra.mxu0 0.0
    %2612 = vmatprep.subr.mxu0 0.0
    %2613 = vmatpush1.msra.mxu0 0.0
    %2614 = vmatprep.subr.mxu0 0.0
    %2615 = vmatpush1.msra.mxu0 0.0
    %2616 = vmatprep.subr.mxu0 0.0
    %2617 = vmatpush1.msra.mxu0 0.0
    %2618 = vmatprep.subr.mxu0 0.0
    %2619 = vmatpush1.msra.mxu0 0.0
    %2620 = vmatprep.subr.mxu0 0.0
    %2621 = vmatpush1.msra.mxu0 0.0
    %2622 = vmatprep.subr.mxu0 0.0
    %2623 = vmatpush1.msra.mxu0 0.0
    %2624 = vmatprep.subr.mxu0 0.0
    %2625 = vmatpush1.msra.mxu0 0.0
    %2626 = vmatprep.subr.mxu0 0.0
    %2627 = vmatpush1.msra.mxu0 0.0
    %2628 = vmatprep.subr.mxu0 0.0
    %2629 = vmatpush1.msra.mxu0 0.0
    %2630 = vmatprep.subr.mxu0 0.0
    %2631 = vmatpush1.msra.mxu0 0.0
    %2632 = vmatprep.subr.mxu0 0.0
    %2633 = vmatpush1.msra.mxu0 0.0
    %2634 = vmatprep.subr.mxu0 0.0
    %2635 = vmatpush1.msra.mxu0 0.0
    %2636 = vmatprep.subr.mxu0 0.0
    %2637 = vmatpush1.msra.mxu0 0.0
    %2638 = vmatprep.subr.mxu0 0.0
    %2639 = vmatpush1.msra.mxu0 0.0
    %2640 = vmatprep.mubr.f32.mxu0 0.0
    %v2641 = vand.u32 %v2195, 4294901760
    %v2642 = vsub.f32 %v2195, %v2641
    %v2643 = vand.u32 %v2642, 4294901760
    %2644 = vmatmul.mubr.f32.gmra.mrb[0].mxu0 %v2643
    %v2645 = vpop.f32.mrb[0].mxu0
    %v2646 = vadd.f32 %v2557, %v2645
    %v2647 = vpop.f32.mrb[0].mxu0
    %2648 = vdwg.mxu0
    %2649 = vmatprep.subr.mxu0 0.0
    %v2650 = vand.u32 %v2198, 4294901760
    %v2651 = vsub.f32 %v2198, %v2650
    %v2652 = vand.u32 %v2651, 4294901760
    %2653 = vmatpush1.msra.mxu0 %v2652
    %2654 = vmatprep.subr.mxu0 0.0
    %v2655 = vand.u32 %v2199, 4294901760
    %v2656 = vsub.f32 %v2199, %v2655
    %v2657 = vand.u32 %v2656, 4294901760
    %2658 = vmatpush1.msra.mxu0 %v2657
    %2659 = vmatprep.subr.mxu0 0.0
    %v2660 = vand.u32 %v2200, 4294901760
    %v2661 = vsub.f32 %v2200, %v2660
    %v2662 = vand.u32 %v2661, 4294901760
    %2663 = vmatpush1.msra.mxu0 %v2662
    %2664 = vmatprep.subr.mxu0 0.0
    %v2665 = vand.u32 %v2201, 4294901760
    %v2666 = vsub.f32 %v2201, %v2665
    %v2667 = vand.u32 %v2666, 4294901760
    %2668 = vmatpush1.msra.mxu0 %v2667
    %2669 = vmatprep.subr.mxu0 0.0
    %v2670 = vand.u32 %v2202, 4294901760
    %v2671 = vsub.f32 %v2202, %v2670
    %v2672 = vand.u32 %v2671, 4294901760
    %2673 = vmatpush1.msra.mxu0 %v2672
    %2674 = vmatprep.subr.mxu0 0.0
    %v2675 = vand.u32 %v2203, 4294901760
    %v2676 = vsub.f32 %v2203, %v2675
    %v2677 = vand.u32 %v2676, 4294901760
    %2678 = vmatpush1.msra.mxu0 %v2677
    %2679 = vmatprep.subr.mxu0 0.0
    %v2680 = vand.u32 %v2204, 4294901760
    %v2681 = vsub.f32 %v2204, %v2680
    %v2682 = vand.u32 %v2681, 4294901760
    %2683 = vmatpush1.msra.mxu0 %v2682
    %2684 = vmatprep.subr.mxu0 0.0
    %v2685 = vand.u32 %v2205, 4294901760
    %v2686 = vsub.f32 %v2205, %v2685
    %v2687 = vand.u32 %v2686, 4294901760
    %2688 = vmatpush1.msra.mxu0 %v2687
    %2689 = vmatprep.subr.mxu0 0.0
    %v2690 = vand.u32 %v2206, 4294901760
    %v2691 = vsub.f32 %v2206, %v2690
    %v2692 = vand.u32 %v2691, 4294901760
    %2693 = vmatpush1.msra.mxu0 %v2692
    %2694 = vmatprep.subr.mxu0 0.0
    %v2695 = vand.u32 %v2207, 4294901760
    %v2696 = vsub.f32 %v2207, %v2695
    %v2697 = vand.u32 %v2696, 4294901760
    %2698 = vmatpush1.msra.mxu0 %v2697
    %2699 = vmatprep.subr.mxu0 0.0
    %v2700 = vand.u32 %v2208, 4294901760
    %v2701 = vsub.f32 %v2208, %v2700
    %v2702 = vand.u32 %v2701, 4294901760
    %2703 = vmatpush1.msra.mxu0 %v2702
    %2704 = vmatprep.subr.mxu0 0.0
    %v2705 = vand.u32 %v2209, 4294901760
    %v2706 = vsub.f32 %v2209, %v2705
    %v2707 = vand.u32 %v2706, 4294901760
    %2708 = vmatpush1.msra.mxu0 %v2707
    %2709 = vmatprep.subr.mxu0 0.0
    %v2710 = vand.u32 %v2210, 4294901760
    %v2711 = vsub.f32 %v2210, %v2710
    %v2712 = vand.u32 %v2711, 4294901760
    %2713 = vmatpush1.msra.mxu0 %v2712
    %2714 = vmatprep.subr.mxu0 0.0
    %v2715 = vand.u32 %v2211, 4294901760
    %v2716 = vsub.f32 %v2211, %v2715
    %v2717 = vand.u32 %v2716, 4294901760
    %2718 = vmatpush1.msra.mxu0 %v2717
    %2719 = vmatprep.subr.mxu0 0.0
    %v2720 = vand.u32 %v2212, 4294901760
    %v2721 = vsub.f32 %v2212, %v2720
    %v2722 = vand.u32 %v2721, 4294901760
    %2723 = vmatpush1.msra.mxu0 %v2722
    %2724 = vmatprep.subr.mxu0 0.0
    %v2725 = vand.u32 %v2213, 4294901760
    %v2726 = vsub.f32 %v2213, %v2725
    %v2727 = vand.u32 %v2726, 4294901760
    %2728 = vmatpush1.msra.mxu0 %v2727
    %2729 = vmatprep.subr.mxu0 0.0
    %2730 = vmatpush1.msra.mxu0 0.0
    %2731 = vmatprep.subr.mxu0 0.0
    %2732 = vmatpush1.msra.mxu0 0.0
    %2733 = vmatprep.subr.mxu0 0.0
    %2734 = vmatpush1.msra.mxu0 0.0
    %2735 = vmatprep.subr.mxu0 0.0
    %2736 = vmatpush1.msra.mxu0 0.0
    %2737 = vmatprep.subr.mxu0 0.0
    %2738 = vmatpush1.msra.mxu0 0.0
    %2739 = vmatprep.subr.mxu0 0.0
    %2740 = vmatpush1.msra.mxu0 0.0
    %2741 = vmatprep.subr.mxu0 0.0
    %2742 = vmatpush1.msra.mxu0 0.0
    %2743 = vmatprep.subr.mxu0 0.0
    %2744 = vmatpush1.msra.mxu0 0.0
    %2745 = vmatprep.subr.mxu0 0.0
    %2746 = vmatpush1.msra.mxu0 0.0
    %2747 = vmatprep.subr.mxu0 0.0
    %2748 = vmatpush1.msra.mxu0 0.0
    %2749 = vmatprep.subr.mxu0 0.0
    %2750 = vmatpush1.msra.mxu0 0.0
    %2751 = vmatprep.subr.mxu0 0.0
    %2752 = vmatpush1.msra.mxu0 0.0
    %2753 = vmatprep.subr.mxu0 0.0
    %2754 = vmatpush1.msra.mxu0 0.0
    %2755 = vmatprep.subr.mxu0 0.0
    %2756 = vmatpush1.msra.mxu0 0.0
    %2757 = vmatprep.subr.mxu0 0.0
    %2758 = vmatpush1.msra.mxu0 0.0
    %2759 = vmatprep.subr.mxu0 0.0
    %2760 = vmatpush1.msra.mxu0 0.0
    %2761 = vmatprep.mubr.f32.mxu0 0.0
    %v2762 = vand.u32 %v2195, 4294901760
    %2763 = vmatmul.mubr.f32.gmra.mrb[0].mxu0 %v2762
    %v2764 = vpop.f32.mrb[0].mxu0
    %v2765 = vadd.f32 %v2646, %v2764
    %v2766 = vpop.f32.mrb[0].mxu0
    %2767 = vdwg.mxu0
    %2768 = vmatprep.subr.mxu0 0.0
    %v2769 = vand.u32 %v2198, 4294901760
    %2770 = vmatpush1.msra.mxu0 %v2769
    %2771 = vmatprep.subr.mxu0 0.0
    %v2772 = vand.u32 %v2199, 4294901760
    %2773 = vmatpush1.msra.mxu0 %v2772
    %2774 = vmatprep.subr.mxu0 0.0
    %v2775 = vand.u32 %v2200, 4294901760
    %2776 = vmatpush1.msra.mxu0 %v2775
    %2777 = vmatprep.subr.mxu0 0.0
    %v2778 = vand.u32 %v2201, 4294901760
    %2779 = vmatpush1.msra.mxu0 %v2778
    %2780 = vmatprep.subr.mxu0 0.0
    %v2781 = vand.u32 %v2202, 4294901760
    %2782 = vmatpush1.msra.mxu0 %v2781
    %2783 = vmatprep.subr.mxu0 0.0
    %v2784 = vand.u32 %v2203, 4294901760
    %2785 = vmatpush1.msra.mxu0 %v2784
    %2786 = vmatprep.subr.mxu0 0.0
    %v2787 = vand.u32 %v2204, 4294901760
    %2788 = vmatpush1.msra.mxu0 %v2787
    %2789 = vmatprep.subr.mxu0 0.0
    %v2790 = vand.u32 %v2205, 4294901760
    %2791 = vmatpush1.msra.mxu0 %v2790
    %2792 = vmatprep.subr.mxu0 0.0
    %v2793 = vand.u32 %v2206, 4294901760
    %2794 = vmatpush1.msra.mxu0 %v2793
    %2795 = vmatprep.subr.mxu0 0.0
    %v2796 = vand.u32 %v2207, 4294901760
    %2797 = vmatpush1.msra.mxu0 %v2796
    %2798 = vmatprep.subr.mxu0 0.0
    %v2799 = vand.u32 %v2208, 4294901760
    %2800 = vmatpush1.msra.mxu0 %v2799
    %2801 = vmatprep.subr.mxu0 0.0
    %v2802 = vand.u32 %v2209, 4294901760
    %2803 = vmatpush1.msra.mxu0 %v2802
    %2804 = vmatprep.subr.mxu0 0.0
    %v2805 = vand.u32 %v2210, 4294901760
    %2806 = vmatpush1.msra.mxu0 %v2805
    %2807 = vmatprep.subr.mxu0 0.0
    %v2808 = vand.u32 %v2211, 4294901760
    %2809 = vmatpush1.msra.mxu0 %v2808
    %2810 = vmatprep.subr.mxu0 0.0
    %v2811 = vand.u32 %v2212, 4294901760
    %2812 = vmatpush1.msra.mxu0 %v2811
    %2813 = vmatprep.subr.mxu0 0.0
    %v2814 = vand.u32 %v2213, 4294901760
    %2815 = vmatpush1.msra.mxu0 %v2814
    %2816 = vmatprep.subr.mxu0 0.0
    %2817 = vmatpush1.msra.mxu0 0.0
    %2818 = vmatprep.subr.mxu0 0.0
    %2819 = vmatpush1.msra.mxu0 0.0
    %2820 = vmatprep.subr.mxu0 0.0
    %2821 = vmatpush1.msra.mxu0 0.0
    %2822 = vmatprep.subr.mxu0 0.0
    %2823 = vmatpush1.msra.mxu0 0.0
    %2824 = vmatprep.subr.mxu0 0.0
    %2825 = vmatpush1.msra.mxu0 0.0
    %2826 = vmatprep.subr.mxu0 0.0
    %2827 = vmatpush1.msra.mxu0 0.0
    %2828 = vmatprep.subr.mxu0 0.0
    %2829 = vmatpush1.msra.mxu0 0.0
    %2830 = vmatprep.subr.mxu0 0.0
    %2831 = vmatpush1.msra.mxu0 0.0
    %2832 = vmatprep.subr.mxu0 0.0
    %2833 = vmatpush1.msra.mxu0 0.0
    %2834 = vmatprep.subr.mxu0 0.0
    %2835 = vmatpush1.msra.mxu0 0.0
    %2836 = vmatprep.subr.mxu0 0.0
    %2837 = vmatpush1.msra.mxu0 0.0
    %2838 = vmatprep.subr.mxu0 0.0
    %2839 = vmatpush1.msra.mxu0 0.0
    %2840 = vmatprep.subr.mxu0 0.0
    %2841 = vmatpush1.msra.mxu0 0.0
    %2842 = vmatprep.subr.mxu0 0.0
    %2843 = vmatpush1.msra.mxu0 0.0
    %2844 = vmatprep.subr.mxu0 0.0
    %2845 = vmatpush1.msra.mxu0 0.0
    %2846 = vmatprep.subr.mxu0 0.0
    %2847 = vmatpush1.msra.mxu0 0.0
    %2848 = vmatprep.mubr.f32.mxu0 0.0
    %v2849 = vand.u32 %v2195, 4294901760
    %2850 = vmatmul.mubr.f32.gmra.mrb[0].mxu0 %v2849
    %v2851 = vpop.f32.mrb[0].mxu0
    %v2852 = vadd.f32 %v2765, %v2851
    %v2853 = vpop.f32.mrb[0].mxu0
    %2854 = vdwg.mxu0
    %v2855 = vtanh.pop %v2852
    %v2856 = vadd.f32 %v2193, %v2855
    %s2857 = scalar_lea.vmem [#allocation2], %s200
    %v2858 = vld [vmem:[%s2857] sm:$0x1]
    %s2859 = smul.u32 %s199, 128
    %s2860 = scalar_lea.vmem [#allocation6], %s2859
    %v2861 = vld [vmem:[%s2860] sm:$0xff]
    %v2862 = vld [vmem:[%s2860 + $0x8] sm:$0xff]
    %v2863 = vld [vmem:[%s2860 + $0x10] sm:$0xff]
    %v2864 = vld [vmem:[%s2860 + $0x18] sm:$0xff]
    %v2865 = vld [vmem:[%s2860 + $0x20] sm:$0xff]
    %v2866 = vld [vmem:[%s2860 + $0x28] sm:$0xff]
    %v2867 = vld [vmem:[%s2860 + $0x30] sm:$0xff]
    %v2868 = vld [vmem:[%s2860 + $0x38] sm:$0xff]
    %v2869 = vld [vmem:[%s2860 + $0x40] sm:$0xff]
    %v2870 = vld [vmem:[%s2860 + $0x48] sm:$0xff]
    %v2871 = vld [vmem:[%s2860 + $0x50] sm:$0xff]
    %v2872 = vld [vmem:[%s2860 + $0x58] sm:$0xff]
    %v2873 = vld [vmem:[%s2860 + $0x60] sm:$0xff]
    %v2874 = vld [vmem:[%s2860 + $0x68] sm:$0xff]
    %v2875 = vld [vmem:[%s2860 + $0x70] sm:$0xff]
    %v2876 = vld [vmem:[%s2860 + $0x78] sm:$0xff]
    %2877 = vmatprep.subr.mxu0 0.0
    %v2878 = vand.u32 %v2861, 4294901760
    %2879 = vmatpush1.msra.mxu0 %v2878
    %2880 = vmatprep.subr.mxu0 0.0
    %v2881 = vand.u32 %v2862, 4294901760
    %2882 = vmatpush1.msra.mxu0 %v2881
    %2883 = vmatprep.subr.mxu0 0.0
    %v2884 = vand.u32 %v2863, 4294901760
    %2885 = vmatpush1.msra.mxu0 %v2884
    %2886 = vmatprep.subr.mxu0 0.0
    %v2887 = vand.u32 %v2864, 4294901760
    %2888 = vmatpush1.msra.mxu0 %v2887
    %2889 = vmatprep.subr.mxu0 0.0
    %v2890 = vand.u32 %v2865, 4294901760
    %2891 = vmatpush1.msra.mxu0 %v2890
    %2892 = vmatprep.subr.mxu0 0.0
    %v2893 = vand.u32 %v2866, 4294901760
    %2894 = vmatpush1.msra.mxu0 %v2893
    %2895 = vmatprep.subr.mxu0 0.0
    %v2896 = vand.u32 %v2867, 4294901760
    %2897 = vmatpush1.msra.mxu0 %v2896
    %2898 = vmatprep.subr.mxu0 0.0
    %v2899 = vand.u32 %v2868, 4294901760
    %2900 = vmatpush1.msra.mxu0 %v2899
    %2901 = vmatprep.subr.mxu0 0.0
    %v2902 = vand.u32 %v2869, 4294901760
    %2903 = vmatpush1.msra.mxu0 %v2902
    %2904 = vmatprep.subr.mxu0 0.0
    %v2905 = vand.u32 %v2870, 4294901760
    %2906 = vmatpush1.msra.mxu0 %v2905
    %2907 = vmatprep.subr.mxu0 0.0
    %v2908 = vand.u32 %v2871, 4294901760
    %2909 = vmatpush1.msra.mxu0 %v2908
    %2910 = vmatprep.subr.mxu0 0.0
    %v2911 = vand.u32 %v2872, 4294901760
    %2912 = vmatpush1.msra.mxu0 %v2911
    %2913 = vmatprep.subr.mxu0 0.0
    %v2914 = vand.u32 %v2873, 4294901760
    %2915 = vmatpush1.msra.mxu0 %v2914
    %2916 = vmatprep.subr.mxu0 0.0
    %v2917 = vand.u32 %v2874, 4294901760
    %2918 = vmatpush1.msra.mxu0 %v2917
    %2919 = vmatprep.subr.mxu0 0.0
    %v2920 = vand.u32 %v2875, 4294901760
    %2921 = vmatpush1.msra.mxu0 %v2920
    %2922 = vmatprep.subr.mxu0 0.0
    %v2923 = vand.u32 %v2876, 4294901760
    %2924 = vmatpush1.msra.mxu0 %v2923
    %2925 = vmatprep.subr.mxu0 0.0
    %2926 = vmatpush1.msra.mxu0 0.0
    %2927 = vmatprep.subr.mxu0 0.0
    %2928 = vmatpush1.msra.mxu0 0.0
    %2929 = vmatprep.subr.mxu0 0.0
    %2930 = vmatpush1.msra.mxu0 0.0
    %2931 = vmatprep.subr.mxu0 0.0
    %2932 = vmatpush1.msra.mxu0 0.0
    %2933 = vmatprep.subr.mxu0 0.0
    %2934 = vmatpush1.msra.mxu0 0.0
    %2935 = vmatprep.subr.mxu0 0.0
    %2936 = vmatpush1.msra.mxu0 0.0
    %2937 = vmatprep.subr.mxu0 0.0
    %2938 = vmatpush1.msra.mxu0 0.0
    %2939 = vmatprep.subr.mxu0 0.0
    %2940 = vmatpush1.msra.mxu0 0.0
    %2941 = vmatprep.subr.mxu0 0.0
    %2942 = vmatpush1.msra.mxu0 0.0
    %2943 = vmatprep.subr.mxu0 0.0
    %2944 = vmatpush1.msra.mxu0 0.0
    %2945 = vmatprep.subr.mxu0 0.0
    %2946 = vmatpush1.msra.mxu0 0.0
    %2947 = vmatprep.subr.mxu0 0.0
    %2948 = vmatpush1.msra.mxu0 0.0
    %2949 = vmatprep.subr.mxu0 0.0
    %2950 = vmatpush1.msra.mxu0 0.0
    %2951 = vmatprep.subr.mxu0 0.0
    %2952 = vmatpush1.msra.mxu0 0.0
    %2953 = vmatprep.subr.mxu0 0.0
    %2954 = vmatpush1.msra.mxu0 0.0
    %2955 = vmatprep.subr.mxu0 0.0
    %2956 = vmatpush1.msra.mxu0 0.0
    %2957 = vmatprep.mubr.f32.mxu0 0.0
    %v2958 = vand.u32 %v2858, 4294901760
    %v2959 = vsub.f32 %v2858, %v2958
    %v2960 = vand.u32 %v2959, 4294901760
    %v2961 = vsub.f32 %v2959, %v2960
    %v2962 = vand.u32 %v2961, 4294901760
    %2963 = vmatmul.mubr.f32.gmra.mrb[0].mxu0 %v2962
    %v2964 = vpop.f32.mrb[0].mxu0
    %v2965 = vadd.f32 0.0, %v2964
    %v2966 = vpop.f32.mrb[0].mxu0
    %2967 = vdwg.mxu0
    %2968 = vmatprep.subr.mxu0 0.0
    %v2969 = vand.u32 %v2861, 4294901760
    %v2970 = vsub.f32 %v2861, %v2969
    %v2971 = vand.u32 %v2970, 4294901760
    %v2972 = vsub.f32 %v2970, %v2971
    %v2973 = vand.u32 %v2972, 4294901760
    %2974 = vmatpush1.msra.mxu0 %v2973
    %2975 = vmatprep.subr.mxu0 0.0
    %v2976 = vand.u32 %v2862, 4294901760
    %v2977 = vsub.f32 %v2862, %v2976
    %v2978 = vand.u32 %v2977, 4294901760
    %v2979 = vsub.f32 %v2977, %v2978
    %v2980 = vand.u32 %v2979, 4294901760
    %2981 = vmatpush1.msra.mxu0 %v2980
    %2982 = vmatprep.subr.mxu0 0.0
    %v2983 = vand.u32 %v2863, 4294901760
    %v2984 = vsub.f32 %v2863, %v2983
    %v2985 = vand.u32 %v2984, 4294901760
    %v2986 = vsub.f32 %v2984, %v2985
    %v2987 = vand.u32 %v2986, 4294901760
    %2988 = vmatpush1.msra.mxu0 %v2987
    %2989 = vmatprep.subr.mxu0 0.0
    %v2990 = vand.u32 %v2864, 4294901760
    %v2991 = vsub.f32 %v2864, %v2990
    %v2992 = vand.u32 %v2991, 4294901760
    %v2993 = vsub.f32 %v2991, %v2992
    %v2994 = vand.u32 %v2993, 4294901760
    %2995 = vmatpush1.msra.mxu0 %v2994
    %2996 = vmatprep.subr.mxu0 0.0
    %v2997 = vand.u32 %v2865, 4294901760
    %v2998 = vsub.f32 %v2865, %v2997
    %v2999 = vand.u32 %v2998, 4294901760
    %v3000 = vsub.f32 %v2998, %v2999
    %v3001 = vand.u32 %v3000, 4294901760
    %3002 = vmatpush1.msra.mxu0 %v3001
    %3003 = vmatprep.subr.mxu0 0.0
    %v3004 = vand.u32 %v2866, 4294901760
    %v3005 = vsub.f32 %v2866, %v3004
    %v3006 = vand.u32 %v3005, 4294901760
    %v3007 = vsub.f32 %v3005, %v3006
    %v3008 = vand.u32 %v3007, 4294901760
    %3009 = vmatpush1.msra.mxu0 %v3008
    %3010 = vmatprep.subr.mxu0 0.0
    %v3011 = vand.u32 %v2867, 4294901760
    %v3012 = vsub.f32 %v2867, %v3011
    %v3013 = vand.u32 %v3012, 4294901760
    %v3014 = vsub.f32 %v3012, %v3013
    %v3015 = vand.u32 %v3014, 4294901760
    %3016 = vmatpush1.msra.mxu0 %v3015
    %3017 = vmatprep.subr.mxu0 0.0
    %v3018 = vand.u32 %v2868, 4294901760
    %v3019 = vsub.f32 %v2868, %v3018
    %v3020 = vand.u32 %v3019, 4294901760
    %v3021 = vsub.f32 %v3019, %v3020
    %v3022 = vand.u32 %v3021, 4294901760
    %3023 = vmatpush1.msra.mxu0 %v3022
    %3024 = vmatprep.subr.mxu0 0.0
    %v3025 = vand.u32 %v2869, 4294901760
    %v3026 = vsub.f32 %v2869, %v3025
    %v3027 = vand.u32 %v3026, 4294901760
    %v3028 = vsub.f32 %v3026, %v3027
    %v3029 = vand.u32 %v3028, 4294901760
    %3030 = vmatpush1.msra.mxu0 %v3029
    %3031 = vmatprep.subr.mxu0 0.0
    %v3032 = vand.u32 %v2870, 4294901760
    %v3033 = vsub.f32 %v2870, %v3032
    %v3034 = vand.u32 %v3033, 4294901760
    %v3035 = vsub.f32 %v3033, %v3034
    %v3036 = vand.u32 %v3035, 4294901760
    %3037 = vmatpush1.msra.mxu0 %v3036
    %3038 = vmatprep.subr.mxu0 0.0
    %v3039 = vand.u32 %v2871, 4294901760
    %v3040 = vsub.f32 %v2871, %v3039
    %v3041 = vand.u32 %v3040, 4294901760
    %v3042 = vsub.f32 %v3040, %v3041
    %v3043 = vand.u32 %v3042, 4294901760
    %3044 = vmatpush1.msra.mxu0 %v3043
    %3045 = vmatprep.subr.mxu0 0.0
    %v3046 = vand.u32 %v2872, 4294901760
    %v3047 = vsub.f32 %v2872, %v3046
    %v3048 = vand.u32 %v3047, 4294901760
    %v3049 = vsub.f32 %v3047, %v3048
    %v3050 = vand.u32 %v3049, 4294901760
    %3051 = vmatpush1.msra.mxu0 %v3050
    %3052 = vmatprep.subr.mxu0 0.0
    %v3053 = vand.u32 %v2873, 4294901760
    %v3054 = vsub.f32 %v2873, %v3053
    %v3055 = vand.u32 %v3054, 4294901760
    %v3056 = vsub.f32 %v3054, %v3055
    %v3057 = vand.u32 %v3056, 4294901760
    %3058 = vmatpush1.msra.mxu0 %v3057
    %3059 = vmatprep.subr.mxu0 0.0
    %v3060 = vand.u32 %v2874, 4294901760
    %v3061 = vsub.f32 %v2874, %v3060
    %v3062 = vand.u32 %v3061, 4294901760
    %v3063 = vsub.f32 %v3061, %v3062
    %v3064 = vand.u32 %v3063, 4294901760
    %3065 = vmatpush1.msra.mxu0 %v3064
    %3066 = vmatprep.subr.mxu0 0.0
    %v3067 = vand.u32 %v2875, 4294901760
    %v3068 = vsub.f32 %v2875, %v3067
    %v3069 = vand.u32 %v3068, 4294901760
    %v3070 = vsub.f32 %v3068, %v3069
    %v3071 = vand.u32 %v3070, 4294901760
    %3072 = vmatpush1.msra.mxu0 %v3071
    %3073 = vmatprep.subr.mxu0 0.0
    %v3074 = vand.u32 %v2876, 4294901760
    %v3075 = vsub.f32 %v2876, %v3074
    %v3076 = vand.u32 %v3075, 4294901760
    %v3077 = vsub.f32 %v3075, %v3076
    %v3078 = vand.u32 %v3077, 4294901760
    %3079 = vmatpush1.msra.mxu0 %v3078
    %3080 = vmatprep.subr.mxu0 0.0
    %3081 = vmatpush1.msra.mxu0 0.0
    %3082 = vmatprep.subr.mxu0 0.0
    %3083 = vmatpush1.msra.mxu0 0.0
    %3084 = vmatprep.subr.mxu0 0.0
    %3085 = vmatpush1.msra.mxu0 0.0
    %3086 = vmatprep.subr.mxu0 0.0
    %3087 = vmatpush1.msra.mxu0 0.0
    %3088 = vmatprep.subr.mxu0 0.0
    %3089 = vmatpush1.msra.mxu0 0.0
    %3090 = vmatprep.subr.mxu0 0.0
    %3091 = vmatpush1.msra.mxu0 0.0
    %3092 = vmatprep.subr.mxu0 0.0
    %3093 = vmatpush1.msra.mxu0 0.0
    %3094 = vmatprep.subr.mxu0 0.0
    %3095 = vmatpush1.msra.mxu0 0.0
    %3096 = vmatprep.subr.mxu0 0.0
    %3097 = vmatpush1.msra.mxu0 0.0
    %3098 = vmatprep.subr.mxu0 0.0
    %3099 = vmatpush1.msra.mxu0 0.0
    %3100 = vmatprep.subr.mxu0 0.0
    %3101 = vmatpush1.msra.mxu0 0.0
    %3102 = vmatprep.subr.mxu0 0.0
    %3103 = vmatpush1.msra.mxu0 0.0
    %3104 = vmatprep.subr.mxu0 0.0
    %3105 = vmatpush1.msra.mxu0 0.0
    %3106 = vmatprep.subr.mxu0 0.0
    %3107 = vmatpush1.msra.mxu0 0.0
    %3108 = vmatprep.subr.mxu0 0.0
    %3109 = vmatpush1.msra.mxu0 0.0
    %3110 = vmatprep.subr.mxu0 0.0
    %3111 = vmatpush1.msra.mxu0 0.0
    %3112 = vmatprep.mubr.f32.mxu0 0.0
    %v3113 = vand.u32 %v2858, 4294901760
    %3114 = vmatmul.mubr.f32.gmra.mrb[0].mxu0 %v3113
    %v3115 = vpop.f32.mrb[0].mxu0
    %v3116 = vadd.f32 %v2965, %v3115
    %v3117 = vpop.f32.mrb[0].mxu0
    %3118 = vdwg.mxu0
    %3119 = vmatprep.subr.mxu0 0.0
    %v3120 = vand.u32 %v2861, 4294901760
    %v3121 = vsub.f32 %v2861, %v3120
    %3122 = vmatpush1.msra.mxu0 %v3121
    %3123 = vmatprep.subr.mxu0 0.0
    %v3124 = vand.u32 %v2862, 4294901760
    %v3125 = vsub.f32 %v2862, %v3124
    %3126 = vmatpush1.msra.mxu0 %v3125
    %3127 = vmatprep.subr.mxu0 0.0
    %v3128 = vand.u32 %v2863, 4294901760
    %v3129 = vsub.f32 %v2863, %v3128
    %3130 = vmatpush1.msra.mxu0 %v3129
    %3131 = vmatprep.subr.mxu0 0.0
    %v3132 = vand.u32 %v2864, 4294901760
    %v3133 = vsub.f32 %v2864, %v3132
    %3134 = vmatpush1.msra.mxu0 %v3133
    %3135 = vmatprep.subr.mxu0 0.0
    %v3136 = vand.u32 %v2865, 4294901760
    %v3137 = vsub.f32 %v2865, %v3136
    %3138 = vmatpush1.msra.mxu0 %v3137
    %3139 = vmatprep.subr.mxu0 0.0
    %v3140 = vand.u32 %v2866, 4294901760
    %v3141 = vsub.f32 %v2866, %v3140
    %3142 = vmatpush1.msra.mxu0 %v3141
    %3143 = vmatprep.subr.mxu0 0.0
    %v3144 = vand.u32 %v2867, 4294901760
    %v3145 = vsub.f32 %v2867, %v3144
    %3146 = vmatpush1.msra.mxu0 %v3145
    %3147 = vmatprep.subr.mxu0 0.0
    %v3148 = vand.u32 %v2868, 4294901760
    %v3149 = vsub.f32 %v2868, %v3148
    %3150 = vmatpush1.msra.mxu0 %v3149
    %3151 = vmatprep.subr.mxu0 0.0
    %v3152 = vand.u32 %v2869, 4294901760
    %v3153 = vsub.f32 %v2869, %v3152
    %3154 = vmatpush1.msra.mxu0 %v3153
    %3155 = vmatprep.subr.mxu0 0.0
    %v3156 = vand.u32 %v2870, 4294901760
    %v3157 = vsub.f32 %v2870, %v3156
    %3158 = vmatpush1.msra.mxu0 %v3157
    %3159 = vmatprep.subr.mxu0 0.0
    %v3160 = vand.u32 %v2871, 4294901760
    %v3161 = vsub.f32 %v2871, %v3160
    %3162 = vmatpush1.msra.mxu0 %v3161
    %3163 = vmatprep.subr.mxu0 0.0
    %v3164 = vand.u32 %v2872, 4294901760
    %v3165 = vsub.f32 %v2872, %v3164
    %3166 = vmatpush1.msra.mxu0 %v3165
    %3167 = vmatprep.subr.mxu0 0.0
    %v3168 = vand.u32 %v2873, 4294901760
    %v3169 = vsub.f32 %v2873, %v3168
    %3170 = vmatpush1.msra.mxu0 %v3169
    %3171 = vmatprep.subr.mxu0 0.0
    %v3172 = vand.u32 %v2874, 4294901760
    %v3173 = vsub.f32 %v2874, %v3172
    %3174 = vmatpush1.msra.mxu0 %v3173
    %3175 = vmatprep.subr.mxu0 0.0
    %v3176 = vand.u32 %v2875, 4294901760
    %v3177 = vsub.f32 %v2875, %v3176
    %3178 = vmatpush1.msra.mxu0 %v3177
    %3179 = vmatprep.subr.mxu0 0.0
    %v3180 = vand.u32 %v2876, 4294901760
    %v3181 = vsub.f32 %v2876, %v3180
    %3182 = vmatpush1.msra.mxu0 %v3181
    %3183 = vmatprep.subr.mxu0 0.0
    %3184 = vmatpush1.msra.mxu0 0.0
    %3185 = vmatprep.subr.mxu0 0.0
    %3186 = vmatpush1.msra.mxu0 0.0
    %3187 = vmatprep.subr.mxu0 0.0
    %3188 = vmatpush1.msra.mxu0 0.0
    %3189 = vmatprep.subr.mxu0 0.0
    %3190 = vmatpush1.msra.mxu0 0.0
    %3191 = vmatprep.subr.mxu0 0.0
    %3192 = vmatpush1.msra.mxu0 0.0
    %3193 = vmatprep.subr.mxu0 0.0
    %3194 = vmatpush1.msra.mxu0 0.0
    %3195 = vmatprep.subr.mxu0 0.0
    %3196 = vmatpush1.msra.mxu0 0.0
    %3197 = vmatprep.subr.mxu0 0.0
    %3198 = vmatpush1.msra.mxu0 0.0
    %3199 = vmatprep.subr.mxu0 0.0
    %3200 = vmatpush1.msra.mxu0 0.0
    %3201 = vmatprep.subr.mxu0 0.0
    %3202 = vmatpush1.msra.mxu0 0.0
    %3203 = vmatprep.subr.mxu0 0.0
    %3204 = vmatpush1.msra.mxu0 0.0
    %3205 = vmatprep.subr.mxu0 0.0
    %3206 = vmatpush1.msra.mxu0 0.0
    %3207 = vmatprep.subr.mxu0 0.0
    %3208 = vmatpush1.msra.mxu0 0.0
    %3209 = vmatprep.subr.mxu0 0.0
    %3210 = vmatpush1.msra.mxu0 0.0
    %3211 = vmatprep.subr.mxu0 0.0
    %3212 = vmatpush1.msra.mxu0 0.0
    %3213 = vmatprep.subr.mxu0 0.0
    %3214 = vmatpush1.msra.mxu0 0.0
    %3215 = vmatprep.mubr.f32.mxu0 0.0
    %v3216 = vand.u32 %v2858, 4294901760
    %v3217 = vsub.f32 %v2858, %v3216
    %3218 = vmatmul.mubr.f32.gmra.mrb[0].mxu0 %v3217
    %v3219 = vpop.f32.mrb[0].mxu0
    %v3220 = vadd.f32 %v3116, %v3219
    %v3221 = vpop.f32.mrb[0].mxu0
    %3222 = vdwg.mxu0
    %3223 = vmatprep.subr.mxu0 0.0
    %v3224 = vand.u32 %v2861, 4294901760
    %3225 = vmatpush1.msra.mxu0 %v3224
    %3226 = vmatprep.subr.mxu0 0.0
    %v3227 = vand.u32 %v2862, 4294901760
    %3228 = vmatpush1.msra.mxu0 %v3227
    %3229 = vmatprep.subr.mxu0 0.0
    %v3230 = vand.u32 %v2863, 4294901760
    %3231 = vmatpush1.msra.mxu0 %v3230
    %3232 = vmatprep.subr.mxu0 0.0
    %v3233 = vand.u32 %v2864, 4294901760
    %3234 = vmatpush1.msra.mxu0 %v3233
    %3235 = vmatprep.subr.mxu0 0.0
    %v3236 = vand.u32 %v2865, 4294901760
    %3237 = vmatpush1.msra.mxu0 %v3236
    %3238 = vmatprep.subr.mxu0 0.0
    %v3239 = vand.u32 %v2866, 4294901760
    %3240 = vmatpush1.msra.mxu0 %v3239
    %3241 = vmatprep.subr.mxu0 0.0
    %v3242 = vand.u32 %v2867, 4294901760
    %3243 = vmatpush1.msra.mxu0 %v3242
    %3244 = vmatprep.subr.mxu0 0.0
    %v3245 = vand.u32 %v2868, 4294901760
    %3246 = vmatpush1.msra.mxu0 %v3245
    %3247 = vmatprep.subr.mxu0 0.0
    %v3248 = vand.u32 %v2869, 4294901760
    %3249 = vmatpush1.msra.mxu0 %v3248
    %3250 = vmatprep.subr.mxu0 0.0
    %v3251 = vand.u32 %v2870, 4294901760
    %3252 = vmatpush1.msra.mxu0 %v3251
    %3253 = vmatprep.subr.mxu0 0.0
    %v3254 = vand.u32 %v2871, 4294901760
    %3255 = vmatpush1.msra.mxu0 %v3254
    %3256 = vmatprep.subr.mxu0 0.0
    %v3257 = vand.u32 %v2872, 4294901760
    %3258 = vmatpush1.msra.mxu0 %v3257
    %3259 = vmatprep.subr.mxu0 0.0
    %v3260 = vand.u32 %v2873, 4294901760
    %3261 = vmatpush1.msra.mxu0 %v3260
    %3262 = vmatprep.subr.mxu0 0.0
    %v3263 = vand.u32 %v2874, 4294901760
    %3264 = vmatpush1.msra.mxu0 %v3263
    %3265 = vmatprep.subr.mxu0 0.0
    %v3266 = vand.u32 %v2875, 4294901760
    %3267 = vmatpush1.msra.mxu0 %v3266
    %3268 = vmatprep.subr.mxu0 0.0
    %v3269 = vand.u32 %v2876, 4294901760
    %3270 = vmatpush1.msra.mxu0 %v3269
    %3271 = vmatprep.subr.mxu0 0.0
    %3272 = vmatpush1.msra.mxu0 0.0
    %3273 = vmatprep.subr.mxu0 0.0
    %3274 = vmatpush1.msra.mxu0 0.0
    %3275 = vmatprep.subr.mxu0 0.0
    %3276 = vmatpush1.msra.mxu0 0.0
    %3277 = vmatprep.subr.mxu0 0.0
    %3278 = vmatpush1.msra.mxu0 0.0
    %3279 = vmatprep.subr.mxu0 0.0
    %3280 = vmatpush1.msra.mxu0 0.0
    %3281 = vmatprep.subr.mxu0 0.0
    %3282 = vmatpush1.msra.mxu0 0.0
    %3283 = vmatprep.subr.mxu0 0.0
    %3284 = vmatpush1.msra.mxu0 0.0
    %3285 = vmatprep.subr.mxu0 0.0
    %3286 = vmatpush1.msra.mxu0 0.0
    %3287 = vmatprep.subr.mxu0 0.0
    %3288 = vmatpush1.msra.mxu0 0.0
    %3289 = vmatprep.subr.mxu0 0.0
    %3290 = vmatpush1.msra.mxu0 0.0
    %3291 = vmatprep.subr.mxu0 0.0
    %3292 = vmatpush1.msra.mxu0 0.0
    %3293 = vmatprep.subr.mxu0 0.0
    %3294 = vmatpush1.msra.mxu0 0.0
    %3295 = vmatprep.subr.mxu0 0.0
    %3296 = vmatpush1.msra.mxu0 0.0
    %3297 = vmatprep.subr.mxu0 0.0
    %3298 = vmatpush1.msra.mxu0 0.0
    %3299 = vmatprep.subr.mxu0 0.0
    %3300 = vmatpush1.msra.mxu0 0.0
    %3301 = vmatprep.subr.mxu0 0.0
    %3302 = vmatpush1.msra.mxu0 0.0
    %3303 = vmatprep.mubr.f32.mxu0 0.0
    %v3304 = vand.u32 %v2858, 4294901760
    %v3305 = vsub.f32 %v2858, %v3304
    %v3306 = vand.u32 %v3305, 4294901760
    %3307 = vmatmul.mubr.f32.gmra.mrb[0].mxu0 %v3306
    %v3308 = vpop.f32.mrb[0].mxu0
    %v3309 = vadd.f32 %v3220, %v3308
    %v3310 = vpop.f32.mrb[0].mxu0
    %3311 = vdwg.mxu0
    %3312 = vmatprep.subr.mxu0 0.0
    %v3313 = vand.u32 %v2861, 4294901760
    %v3314 = vsub.f32 %v2861, %v3313
    %v3315 = vand.u32 %v3314, 4294901760
    %3316 = vmatpush1.msra.mxu0 %v3315
    %3317 = vmatprep.subr.mxu0 0.0
    %v3318 = vand.u32 %v2862, 4294901760
    %v3319 = vsub.f32 %v2862, %v3318
    %v3320 = vand.u32 %v3319, 4294901760
    %3321 = vmatpush1.msra.mxu0 %v3320
    %3322 = vmatprep.subr.mxu0 0.0
    %v3323 = vand.u32 %v2863, 4294901760
    %v3324 = vsub.f32 %v2863, %v3323
    %v3325 = vand.u32 %v3324, 4294901760
    %3326 = vmatpush1.msra.mxu0 %v3325
    %3327 = vmatprep.subr.mxu0 0.0
    %v3328 = vand.u32 %v2864, 4294901760
    %v3329 = vsub.f32 %v2864, %v3328
    %v3330 = vand.u32 %v3329, 4294901760
    %3331 = vmatpush1.msra.mxu0 %v3330
    %3332 = vmatprep.subr.mxu0 0.0
    %v3333 = vand.u32 %v2865, 4294901760
    %v3334 = vsub.f32 %v2865, %v3333
    %v3335 = vand.u32 %v3334, 4294901760
    %3336 = vmatpush1.msra.mxu0 %v3335
    %3337 = vmatprep.subr.mxu0 0.0
    %v3338 = vand.u32 %v2866, 4294901760
    %v3339 = vsub.f32 %v2866, %v3338
    %v3340 = vand.u32 %v3339, 4294901760
    %3341 = vmatpush1.msra.mxu0 %v3340
    %3342 = vmatprep.subr.mxu0 0.0
    %v3343 = vand.u32 %v2867, 4294901760
    %v3344 = vsub.f32 %v2867, %v3343
    %v3345 = vand.u32 %v3344, 4294901760
    %3346 = vmatpush1.msra.mxu0 %v3345
    %3347 = vmatprep.subr.mxu0 0.0
    %v3348 = vand.u32 %v2868, 4294901760
    %v3349 = vsub.f32 %v2868, %v3348
    %v3350 = vand.u32 %v3349, 4294901760
    %3351 = vmatpush1.msra.mxu0 %v3350
    %3352 = vmatprep.subr.mxu0 0.0
    %v3353 = vand.u32 %v2869, 4294901760
    %v3354 = vsub.f32 %v2869, %v3353
    %v3355 = vand.u32 %v3354, 4294901760
    %3356 = vmatpush1.msra.mxu0 %v3355
    %3357 = vmatprep.subr.mxu0 0.0
    %v3358 = vand.u32 %v2870, 4294901760
    %v3359 = vsub.f32 %v2870, %v3358
    %v3360 = vand.u32 %v3359, 4294901760
    %3361 = vmatpush1.msra.mxu0 %v3360
    %3362 = vmatprep.subr.mxu0 0.0
    %v3363 = vand.u32 %v2871, 4294901760
    %v3364 = vsub.f32 %v2871, %v3363
    %v3365 = vand.u32 %v3364, 4294901760
    %3366 = vmatpush1.msra.mxu0 %v3365
    %3367 = vmatprep.subr.mxu0 0.0
    %v3368 = vand.u32 %v2872, 4294901760
    %v3369 = vsub.f32 %v2872, %v3368
    %v3370 = vand.u32 %v3369, 4294901760
    %3371 = vmatpush1.msra.mxu0 %v3370
    %3372 = vmatprep.subr.mxu0 0.0
    %v3373 = vand.u32 %v2873, 4294901760
    %v3374 = vsub.f32 %v2873, %v3373
    %v3375 = vand.u32 %v3374, 4294901760
    %3376 = vmatpush1.msra.mxu0 %v3375
    %3377 = vmatprep.subr.mxu0 0.0
    %v3378 = vand.u32 %v2874, 4294901760
    %v3379 = vsub.f32 %v2874, %v3378
    %v3380 = vand.u32 %v3379, 4294901760
    %3381 = vmatpush1.msra.mxu0 %v3380
    %3382 = vmatprep.subr.mxu0 0.0
    %v3383 = vand.u32 %v2875, 4294901760
    %v3384 = vsub.f32 %v2875, %v3383
    %v3385 = vand.u32 %v3384, 4294901760
    %3386 = vmatpush1.msra.mxu0 %v3385
    %3387 = vmatprep.subr.mxu0 0.0
    %v3388 = vand.u32 %v2876, 4294901760
    %v3389 = vsub.f32 %v2876, %v3388
    %v3390 = vand.u32 %v3389, 4294901760
    %3391 = vmatpush1.msra.mxu0 %v3390
    %3392 = vmatprep.subr.mxu0 0.0
    %3393 = vmatpush1.msra.mxu0 0.0
    %3394 = vmatprep.subr.mxu0 0.0
    %3395 = vmatpush1.msra.mxu0 0.0
    %3396 = vmatprep.subr.mxu0 0.0
    %3397 = vmatpush1.msra.mxu0 0.0
    %3398 = vmatprep.subr.mxu0 0.0
    %3399 = vmatpush1.msra.mxu0 0.0
    %3400 = vmatprep.subr.mxu0 0.0
    %3401 = vmatpush1.msra.mxu0 0.0
    %3402 = vmatprep.subr.mxu0 0.0
    %3403 = vmatpush1.msra.mxu0 0.0
    %3404 = vmatprep.subr.mxu0 0.0
    %3405 = vmatpush1.msra.mxu0 0.0
    %3406 = vmatprep.subr.mxu0 0.0
    %3407 = vmatpush1.msra.mxu0 0.0
    %3408 = vmatprep.subr.mxu0 0.0
    %3409 = vmatpush1.msra.mxu0 0.0
    %3410 = vmatprep.subr.mxu0 0.0
    %3411 = vmatpush1.msra.mxu0 0.0
    %3412 = vmatprep.subr.mxu0 0.0
    %3413 = vmatpush1.msra.mxu0 0.0
    %3414 = vmatprep.subr.mxu0 0.0
    %3415 = vmatpush1.msra.mxu0 0.0
    %3416 = vmatprep.subr.mxu0 0.0
    %3417 = vmatpush1.msra.mxu0 0.0
    %3418 = vmatprep.subr.mxu0 0.0
    %3419 = vmatpush1.msra.mxu0 0.0
    %3420 = vmatprep.subr.mxu0 0.0
    %3421 = vmatpush1.msra.mxu0 0.0
    %3422 = vmatprep.subr.mxu0 0.0
    %3423 = vmatpush1.msra.mxu0 0.0
    %3424 = vmatprep.mubr.f32.mxu0 0.0
    %v3425 = vand.u32 %v2858, 4294901760
    %3426 = vmatmul.mubr.f32.gmra.mrb[0].mxu0 %v3425
    %v3427 = vpop.f32.mrb[0].mxu0
    %v3428 = vadd.f32 %v3309, %v3427
    %v3429 = vpop.f32.mrb[0].mxu0
    %3430 = vdwg.mxu0
    %3431 = vmatprep.subr.mxu0 0.0
    %v3432 = vand.u32 %v2861, 4294901760
    %3433 = vmatpush1.msra.mxu0 %v3432
    %3434 = vmatprep.subr.mxu0 0.0
    %v3435 = vand.u32 %v2862, 4294901760
    %3436 = vmatpush1.msra.mxu0 %v3435
    %3437 = vmatprep.subr.mxu0 0.0
    %v3438 = vand.u32 %v2863, 4294901760
    %3439 = vmatpush1.msra.mxu0 %v3438
    %3440 = vmatprep.subr.mxu0 0.0
    %v3441 = vand.u32 %v2864, 4294901760
    %3442 = vmatpush1.msra.mxu0 %v3441
    %3443 = vmatprep.subr.mxu0 0.0
    %v3444 = vand.u32 %v2865, 4294901760
    %3445 = vmatpush1.msra.mxu0 %v3444
    %3446 = vmatprep.subr.mxu0 0.0
    %v3447 = vand.u32 %v2866, 4294901760
    %3448 = vmatpush1.msra.mxu0 %v3447
    %3449 = vmatprep.subr.mxu0 0.0
    %v3450 = vand.u32 %v2867, 4294901760
    %3451 = vmatpush1.msra.mxu0 %v3450
    %3452 = vmatprep.subr.mxu0 0.0
    %v3453 = vand.u32 %v2868, 4294901760
    %3454 = vmatpush1.msra.mxu0 %v3453
    %3455 = vmatprep.subr.mxu0 0.0
    %v3456 = vand.u32 %v2869, 4294901760
    %3457 = vmatpush1.msra.mxu0 %v3456
    %3458 = vmatprep.subr.mxu0 0.0
    %v3459 = vand.u32 %v2870, 4294901760
    %3460 = vmatpush1.msra.mxu0 %v3459
    %3461 = vmatprep.subr.mxu0 0.0
    %v3462 = vand.u32 %v2871, 4294901760
    %3463 = vmatpush1.msra.mxu0 %v3462
    %3464 = vmatprep.subr.mxu0 0.0
    %v3465 = vand.u32 %v2872, 4294901760
    %3466 = vmatpush1.msra.mxu0 %v3465
    %3467 = vmatprep.subr.mxu0 0.0
    %v3468 = vand.u32 %v2873, 4294901760
    %3469 = vmatpush1.msra.mxu0 %v3468
    %3470 = vmatprep.subr.mxu0 0.0
    %v3471 = vand.u32 %v2874, 4294901760
    %3472 = vmatpush1.msra.mxu0 %v3471
    %3473 = vmatprep.subr.mxu0 0.0
    %v3474 = vand.u32 %v2875, 4294901760
    %3475 = vmatpush1.msra.mxu0 %v3474
    %3476 = vmatprep.subr.mxu0 0.0
    %v3477 = vand.u32 %v2876, 4294901760
    %3478 = vmatpush1.msra.mxu0 %v3477
    %3479 = vmatprep.subr.mxu0 0.0
    %3480 = vmatpush1.msra.mxu0 0.0
    %3481 = vmatprep.subr.mxu0 0.0
    %3482 = vmatpush1.msra.mxu0 0.0
    %3483 = vmatprep.subr.mxu0 0.0
    %3484 = vmatpush1.msra.mxu0 0.0
    %3485 = vmatprep.subr.mxu0 0.0
    %3486 = vmatpush1.msra.mxu0 0.0
    %3487 = vmatprep.subr.mxu0 0.0
    %3488 = vmatpush1.msra.mxu0 0.0
    %3489 = vmatprep.subr.mxu0 0.0
    %3490 = vmatpush1.msra.mxu0 0.0
    %3491 = vmatprep.subr.mxu0 0.0
    %3492 = vmatpush1.msra.mxu0 0.0
    %3493 = vmatprep.subr.mxu0 0.0
    %3494 = vmatpush1.msra.mxu0 0.0
    %3495 = vmatprep.subr.mxu0 0.0
    %3496 = vmatpush1.msra.mxu0 0.0
    %3497 = vmatprep.subr.mxu0 0.0
    %3498 = vmatpush1.msra.mxu0 0.0
    %3499 = vmatprep.subr.mxu0 0.0
    %3500 = vmatpush1.msra.mxu0 0.0
    %3501 = vmatprep.subr.mxu0 0.0
    %3502 = vmatpush1.msra.mxu0 0.0
    %3503 = vmatprep.subr.mxu0 0.0
    %3504 = vmatpush1.msra.mxu0 0.0
    %3505 = vmatprep.subr.mxu0 0.0
    %3506 = vmatpush1.msra.mxu0 0.0
    %3507 = vmatprep.subr.mxu0 0.0
    %3508 = vmatpush1.msra.mxu0 0.0
    %3509 = vmatprep.subr.mxu0 0.0
    %3510 = vmatpush1.msra.mxu0 0.0
    %3511 = vmatprep.mubr.f32.mxu0 0.0
    %v3512 = vand.u32 %v2858, 4294901760
    %3513 = vmatmul.mubr.f32.gmra.mrb[0].mxu0 %v3512
    %v3514 = vpop.f32.mrb[0].mxu0
    %v3515 = vadd.f32 %v3428, %v3514
    %v3516 = vpop.f32.mrb[0].mxu0
    %3517 = vdwg.mxu0
    %v3518 = vtanh.pop %v3515
    %v3519 = vadd.f32 %v2856, %v3518
    %s3520 = scalar_lea.vmem [#allocation2], %s202
    %v3521 = vld [vmem:[%s3520] sm:$0x1]
    %s3522 = smul.u32 %s201, 128
    %s3523 = scalar_lea.vmem [#allocation6], %s3522
    %v3524 = vld [vmem:[%s3523] sm:$0xff]
    %v3525 = vld [vmem:[%s3523 + $0x8] sm:$0xff]
    %v3526 = vld [vmem:[%s3523 + $0x10] sm:$0xff]
    %v3527 = vld [vmem:[%s3523 + $0x18] sm:$0xff]
    %v3528 = vld [vmem:[%s3523 + $0x20] sm:$0xff]
    %v3529 = vld [vmem:[%s3523 + $0x28] sm:$0xff]
    %v3530 = vld [vmem:[%s3523 + $0x30] sm:$0xff]
    %v3531 = vld [vmem:[%s3523 + $0x38] sm:$0xff]
    %v3532 = vld [vmem:[%s3523 + $0x40] sm:$0xff]
    %v3533 = vld [vmem:[%s3523 + $0x48] sm:$0xff]
    %v3534 = vld [vmem:[%s3523 + $0x50] sm:$0xff]
    %v3535 = vld [vmem:[%s3523 + $0x58] sm:$0xff]
    %v3536 = vld [vmem:[%s3523 + $0x60] sm:$0xff]
    %v3537 = vld [vmem:[%s3523 + $0x68] sm:$0xff]
    %v3538 = vld [vmem:[%s3523 + $0x70] sm:$0xff]
    %v3539 = vld [vmem:[%s3523 + $0x78] sm:$0xff]
    %3540 = vmatprep.subr.mxu0 0.0
    %v3541 = vand.u32 %v3524, 4294901760
    %3542 = vmatpush1.msra.mxu0 %v3541
    %3543 = vmatprep.subr.mxu0 0.0
    %v3544 = vand.u32 %v3525, 4294901760
    %3545 = vmatpush1.msra.mxu0 %v3544
    %3546 = vmatprep.subr.mxu0 0.0
    %v3547 = vand.u32 %v3526, 4294901760
    %3548 = vmatpush1.msra.mxu0 %v3547
    %3549 = vmatprep.subr.mxu0 0.0
    %v3550 = vand.u32 %v3527, 4294901760
    %3551 = vmatpush1.msra.mxu0 %v3550
    %3552 = vmatprep.subr.mxu0 0.0
    %v3553 = vand.u32 %v3528, 4294901760
    %3554 = vmatpush1.msra.mxu0 %v3553
    %3555 = vmatprep.subr.mxu0 0.0
    %v3556 = vand.u32 %v3529, 4294901760
    %3557 = vmatpush1.msra.mxu0 %v3556
    %3558 = vmatprep.subr.mxu0 0.0
    %v3559 = vand.u32 %v3530, 4294901760
    %3560 = vmatpush1.msra.mxu0 %v3559
    %3561 = vmatprep.subr.mxu0 0.0
    %v3562 = vand.u32 %v3531, 4294901760
    %3563 = vmatpush1.msra.mxu0 %v3562
    %3564 = vmatprep.subr.mxu0 0.0
    %v3565 = vand.u32 %v3532, 4294901760
    %3566 = vmatpush1.msra.mxu0 %v3565
    %3567 = vmatprep.subr.mxu0 0.0
    %v3568 = vand.u32 %v3533, 4294901760
    %3569 = vmatpush1.msra.mxu0 %v3568
    %3570 = vmatprep.subr.mxu0 0.0
    %v3571 = vand.u32 %v3534, 4294901760
    %3572 = vmatpush1.msra.mxu0 %v3571
    %3573 = vmatprep.subr.mxu0 0.0
    %v3574 = vand.u32 %v3535, 4294901760
    %3575 = vmatpush1.msra.mxu0 %v3574
    %3576 = vmatprep.subr.mxu0 0.0
    %v3577 = vand.u32 %v3536, 4294901760
    %3578 = vmatpush1.msra.mxu0 %v3577
    %3579 = vmatprep.subr.mxu0 0.0
    %v3580 = vand.u32 %v3537, 4294901760
    %3581 = vmatpush1.msra.mxu0 %v3580
    %3582 = vmatprep.subr.mxu0 0.0
    %v3583 = vand.u32 %v3538, 4294901760
    %3584 = vmatpush1.msra.mxu0 %v3583
    %3585 = vmatprep.subr.mxu0 0.0
    %v3586 = vand.u32 %v3539, 4294901760
    %3587 = vmatpush1.msra.mxu0 %v3586
    %3588 = vmatprep.subr.mxu0 0.0
    %3589 = vmatpush1.msra.mxu0 0.0
    %3590 = vmatprep.subr.mxu0 0.0
    %3591 = vmatpush1.msra.mxu0 0.0
    %3592 = vmatprep.subr.mxu0 0.0
    %3593 = vmatpush1.msra.mxu0 0.0
    %3594 = vmatprep.subr.mxu0 0.0
    %3595 = vmatpush1.msra.mxu0 0.0
    %3596 = vmatprep.subr.mxu0 0.0
    %3597 = vmatpush1.msra.mxu0 0.0
    %3598 = vmatprep.subr.mxu0 0.0
    %3599 = vmatpush1.msra.mxu0 0.0
    %3600 = vmatprep.subr.mxu0 0.0
    %3601 = vmatpush1.msra.mxu0 0.0
    %3602 = vmatprep.subr.mxu0 0.0
    %3603 = vmatpush1.msra.mxu0 0.0
    %3604 = vmatprep.subr.mxu0 0.0
    %3605 = vmatpush1.msra.mxu0 0.0
    %3606 = vmatprep.subr.mxu0 0.0
    %3607 = vmatpush1.msra.mxu0 0.0
    %3608 = vmatprep.subr.mxu0 0.0
    %3609 = vmatpush1.msra.mxu0 0.0
    %3610 = vmatprep.subr.mxu0 0.0
    %3611 = vmatpush1.msra.mxu0 0.0
    %3612 = vmatprep.subr.mxu0 0.0
    %3613 = vmatpush1.msra.mxu0 0.0
    %3614 = vmatprep.subr.mxu0 0.0
    %3615 = vmatpush1.msra.mxu0 0.0
    %3616 = vmatprep.subr.mxu0 0.0
    %3617 = vmatpush1.msra.mxu0 0.0
    %3618 = vmatprep.subr.mxu0 0.0
    %3619 = vmatpush1.msra.mxu0 0.0
    %3620 = vmatprep.mubr.f32.mxu0 0.0
    %v3621 = vand.u32 %v3521, 4294901760
    %v3622 = vsub.f32 %v3521, %v3621
    %v3623 = vand.u32 %v3622, 4294901760
    %v3624 = vsub.f32 %v3622, %v3623
    %v3625 = vand.u32 %v3624, 4294901760
    %3626 = vmatmul.mubr.f32.gmra.mrb[0].mxu0 %v3625
    %v3627 = vpop.f32.mrb[0].mxu0
    %v3628 = vadd.f32 0.0, %v3627
    %v3629 = vpop.f32.mrb[0].mxu0
    %3630 = vdwg.mxu0
    %3631 = vmatprep.subr.mxu0 0.0
    %v3632 = vand.u32 %v3524, 4294901760
    %v3633 = vsub.f32 %v3524, %v3632
    %v3634 = vand.u32 %v3633, 4294901760
    %v3635 = vsub.f32 %v3633, %v3634
    %v3636 = vand.u32 %v3635, 4294901760
    %3637 = vmatpush1.msra.mxu0 %v3636
    %3638 = vmatprep.subr.mxu0 0.0
    %v3639 = vand.u32 %v3525, 4294901760
    %v3640 = vsub.f32 %v3525, %v3639
    %v3641 = vand.u32 %v3640, 4294901760
    %v3642 = vsub.f32 %v3640, %v3641
    %v3643 = vand.u32 %v3642, 4294901760
    %3644 = vmatpush1.msra.mxu0 %v3643
    %3645 = vmatprep.subr.mxu0 0.0
    %v3646 = vand.u32 %v3526, 4294901760
    %v3647 = vsub.f32 %v3526, %v3646
    %v3648 = vand.u32 %v3647, 4294901760
    %v3649 = vsub.f32 %v3647, %v3648
    %v3650 = vand.u32 %v3649, 4294901760
    %3651 = vmatpush1.msra.mxu0 %v3650
    %3652 = vmatprep.subr.mxu0 0.0
    %v3653 = vand.u32 %v3527, 4294901760
    %v3654 = vsub.f32 %v3527, %v3653
    %v3655 = vand.u32 %v3654, 4294901760
    %v3656 = vsub.f32 %v3654, %v3655
    %v3657 = vand.u32 %v3656, 4294901760
    %3658 = vmatpush1.msra.mxu0 %v3657
    %3659 = vmatprep.subr.mxu0 0.0
    %v3660 = vand.u32 %v3528, 4294901760
    %v3661 = vsub.f32 %v3528, %v3660
    %v3662 = vand.u32 %v3661, 4294901760
    %v3663 = vsub.f32 %v3661, %v3662
    %v3664 = vand.u32 %v3663, 4294901760
    %3665 = vmatpush1.msra.mxu0 %v3664
    %3666 = vmatprep.subr.mxu0 0.0
    %v3667 = vand.u32 %v3529, 4294901760
    %v3668 = vsub.f32 %v3529, %v3667
    %v3669 = vand.u32 %v3668, 4294901760
    %v3670 = vsub.f32 %v3668, %v3669
    %v3671 = vand.u32 %v3670, 4294901760
    %3672 = vmatpush1.msra.mxu0 %v3671
    %3673 = vmatprep.subr.mxu0 0.0
    %v3674 = vand.u32 %v3530, 4294901760
    %v3675 = vsub.f32 %v3530, %v3674
    %v3676 = vand.u32 %v3675, 4294901760
    %v3677 = vsub.f32 %v3675, %v3676
    %v3678 = vand.u32 %v3677, 4294901760
    %3679 = vmatpush1.msra.mxu0 %v3678
    %3680 = vmatprep.subr.mxu0 0.0
    %v3681 = vand.u32 %v3531, 4294901760
    %v3682 = vsub.f32 %v3531, %v3681
    %v3683 = vand.u32 %v3682, 4294901760
    %v3684 = vsub.f32 %v3682, %v3683
    %v3685 = vand.u32 %v3684, 4294901760
    %3686 = vmatpush1.msra.mxu0 %v3685
    %3687 = vmatprep.subr.mxu0 0.0
    %v3688 = vand.u32 %v3532, 4294901760
    %v3689 = vsub.f32 %v3532, %v3688
    %v3690 = vand.u32 %v3689, 4294901760
    %v3691 = vsub.f32 %v3689, %v3690
    %v3692 = vand.u32 %v3691, 4294901760
    %3693 = vmatpush1.msra.mxu0 %v3692
    %3694 = vmatprep.subr.mxu0 0.0
    %v3695 = vand.u32 %v3533, 4294901760
    %v3696 = vsub.f32 %v3533, %v3695
    %v3697 = vand.u32 %v3696, 4294901760
    %v3698 = vsub.f32 %v3696, %v3697
    %v3699 = vand.u32 %v3698, 4294901760
    %3700 = vmatpush1.msra.mxu0 %v3699
    %3701 = vmatprep.subr.mxu0 0.0
    %v3702 = vand.u32 %v3534, 4294901760
    %v3703 = vsub.f32 %v3534, %v3702
    %v3704 = vand.u32 %v3703, 4294901760
    %v3705 = vsub.f32 %v3703, %v3704
    %v3706 = vand.u32 %v3705, 4294901760
    %3707 = vmatpush1.msra.mxu0 %v3706
    %3708 = vmatprep.subr.mxu0 0.0
    %v3709 = vand.u32 %v3535, 4294901760
    %v3710 = vsub.f32 %v3535, %v3709
    %v3711 = vand.u32 %v3710, 4294901760
    %v3712 = vsub.f32 %v3710, %v3711
    %v3713 = vand.u32 %v3712, 4294901760
    %3714 = vmatpush1.msra.mxu0 %v3713
    %3715 = vmatprep.subr.mxu0 0.0
    %v3716 = vand.u32 %v3536, 4294901760
    %v3717 = vsub.f32 %v3536, %v3716
    %v3718 = vand.u32 %v3717, 4294901760
    %v3719 = vsub.f32 %v3717, %v3718
    %v3720 = vand.u32 %v3719, 4294901760
    %3721 = vmatpush1.msra.mxu0 %v3720
    %3722 = vmatprep.subr.mxu0 0.0
    %v3723 = vand.u32 %v3537, 4294901760
    %v3724 = vsub.f32 %v3537, %v3723
    %v3725 = vand.u32 %v3724, 4294901760
    %v3726 = vsub.f32 %v3724, %v3725
    %v3727 = vand.u32 %v3726, 4294901760
    %3728 = vmatpush1.msra.mxu0 %v3727
    %3729 = vmatprep.subr.mxu0 0.0
    %v3730 = vand.u32 %v3538, 4294901760
    %v3731 = vsub.f32 %v3538, %v3730
    %v3732 = vand.u32 %v3731, 4294901760
    %v3733 = vsub.f32 %v3731, %v3732
    %v3734 = vand.u32 %v3733, 4294901760
    %3735 = vmatpush1.msra.mxu0 %v3734
    %3736 = vmatprep.subr.mxu0 0.0
    %v3737 = vand.u32 %v3539, 4294901760
    %v3738 = vsub.f32 %v3539, %v3737
    %v3739 = vand.u32 %v3738, 4294901760
    %v3740 = vsub.f32 %v3738, %v3739
    %v3741 = vand.u32 %v3740, 4294901760
    %3742 = vmatpush1.msra.mxu0 %v3741
    %3743 = vmatprep.subr.mxu0 0.0
    %3744 = vmatpush1.msra.mxu0 0.0
    %3745 = vmatprep.subr.mxu0 0.0
    %3746 = vmatpush1.msra.mxu0 0.0
    %3747 = vmatprep.subr.mxu0 0.0
    %3748 = vmatpush1.msra.mxu0 0.0
    %3749 = vmatprep.subr.mxu0 0.0
    %3750 = vmatpush1.msra.mxu0 0.0
    %3751 = vmatprep.subr.mxu0 0.0
    %3752 = vmatpush1.msra.mxu0 0.0
    %3753 = vmatprep.subr.mxu0 0.0
    %3754 = vmatpush1.msra.mxu0 0.0
    %3755 = vmatprep.subr.mxu0 0.0
    %3756 = vmatpush1.msra.mxu0 0.0
    %3757 = vmatprep.subr.mxu0 0.0
    %3758 = vmatpush1.msra.mxu0 0.0
    %3759 = vmatprep.subr.mxu0 0.0
    %3760 = vmatpush1.msra.mxu0 0.0
    %3761 = vmatprep.subr.mxu0 0.0
    %3762 = vmatpush1.msra.mxu0 0.0
    %3763 = vmatprep.subr.mxu0 0.0
    %3764 = vmatpush1.msra.mxu0 0.0
    %3765 = vmatprep.subr.mxu0 0.0
    %3766 = vmatpush1.msra.mxu0 0.0
    %3767 = vmatprep.subr.mxu0 0.0
    %3768 = vmatpush1.msra.mxu0 0.0
    %3769 = vmatprep.subr.mxu0 0.0
    %3770 = vmatpush1.msra.mxu0 0.0
    %3771 = vmatprep.subr.mxu0 0.0
    %3772 = vmatpush1.msra.mxu0 0.0
    %3773 = vmatprep.subr.mxu0 0.0
    %3774 = vmatpush1.msra.mxu0 0.0
    %3775 = vmatprep.mubr.f32.mxu0 0.0
    %v3776 = vand.u32 %v3521, 4294901760
    %3777 = vmatmul.mubr.f32.gmra.mrb[0].mxu0 %v3776
    %v3778 = vpop.f32.mrb[0].mxu0
    %v3779 = vadd.f32 %v3628, %v3778
    %v3780 = vpop.f32.mrb[0].mxu0
    %3781 = vdwg.mxu0
    %3782 = vmatprep.subr.mxu0 0.0
    %v3783 = vand.u32 %v3524, 4294901760
    %v3784 = vsub.f32 %v3524, %v3783
    %3785 = vmatpush1.msra.mxu0 %v3784
    %3786 = vmatprep.subr.mxu0 0.0
    %v3787 = vand.u32 %v3525, 4294901760
    %v3788 = vsub.f32 %v3525, %v3787
    %3789 = vmatpush1.msra.mxu0 %v3788
    %3790 = vmatprep.subr.mxu0 0.0
    %v3791 = vand.u32 %v3526, 4294901760
    %v3792 = vsub.f32 %v3526, %v3791
    %3793 = vmatpush1.msra.mxu0 %v3792
    %3794 = vmatprep.subr.mxu0 0.0
    %v3795 = vand.u32 %v3527, 4294901760
    %v3796 = vsub.f32 %v3527, %v3795
    %3797 = vmatpush1.msra.mxu0 %v3796
    %3798 = vmatprep.subr.mxu0 0.0
    %v3799 = vand.u32 %v3528, 4294901760
    %v3800 = vsub.f32 %v3528, %v3799
    %3801 = vmatpush1.msra.mxu0 %v3800
    %3802 = vmatprep.subr.mxu0 0.0
    %v3803 = vand.u32 %v3529, 4294901760
    %v3804 = vsub.f32 %v3529, %v3803
    %3805 = vmatpush1.msra.mxu0 %v3804
    %3806 = vmatprep.subr.mxu0 0.0
    %v3807 = vand.u32 %v3530, 4294901760
    %v3808 = vsub.f32 %v3530, %v3807
    %3809 = vmatpush1.msra.mxu0 %v3808
    %3810 = vmatprep.subr.mxu0 0.0
    %v3811 = vand.u32 %v3531, 4294901760
    %v3812 = vsub.f32 %v3531, %v3811
    %3813 = vmatpush1.msra.mxu0 %v3812
    %3814 = vmatprep.subr.mxu0 0.0
    %v3815 = vand.u32 %v3532, 4294901760
    %v3816 = vsub.f32 %v3532, %v3815
    %3817 = vmatpush1.msra.mxu0 %v3816
    %3818 = vmatprep.subr.mxu0 0.0
    %v3819 = vand.u32 %v3533, 4294901760
    %v3820 = vsub.f32 %v3533, %v3819
    %3821 = vmatpush1.msra.mxu0 %v3820
    %3822 = vmatprep.subr.mxu0 0.0
    %v3823 = vand.u32 %v3534, 4294901760
    %v3824 = vsub.f32 %v3534, %v3823
    %3825 = vmatpush1.msra.mxu0 %v3824
    %3826 = vmatprep.subr.mxu0 0.0
    %v3827 = vand.u32 %v3535, 4294901760
    %v3828 = vsub.f32 %v3535, %v3827
    %3829 = vmatpush1.msra.mxu0 %v3828
    %3830 = vmatprep.subr.mxu0 0.0
    %v3831 = vand.u32 %v3536, 4294901760
    %v3832 = vsub.f32 %v3536, %v3831
    %3833 = vmatpush1.msra.mxu0 %v3832
    %3834 = vmatprep.subr.mxu0 0.0
    %v3835 = vand.u32 %v3537, 4294901760
    %v3836 = vsub.f32 %v3537, %v3835
    %3837 = vmatpush1.msra.mxu0 %v3836
    %3838 = vmatprep.subr.mxu0 0.0
    %v3839 = vand.u32 %v3538, 4294901760
    %v3840 = vsub.f32 %v3538, %v3839
    %3841 = vmatpush1.msra.mxu0 %v3840
    %3842 = vmatprep.subr.mxu0 0.0
    %v3843 = vand.u32 %v3539, 4294901760
    %v3844 = vsub.f32 %v3539, %v3843
    %3845 = vmatpush1.msra.mxu0 %v3844
    %3846 = vmatprep.subr.mxu0 0.0
    %3847 = vmatpush1.msra.mxu0 0.0
    %3848 = vmatprep.subr.mxu0 0.0
    %3849 = vmatpush1.msra.mxu0 0.0
    %3850 = vmatprep.subr.mxu0 0.0
    %3851 = vmatpush1.msra.mxu0 0.0
    %3852 = vmatprep.subr.mxu0 0.0
    %3853 = vmatpush1.msra.mxu0 0.0
    %3854 = vmatprep.subr.mxu0 0.0
    %3855 = vmatpush1.msra.mxu0 0.0
    %3856 = vmatprep.subr.mxu0 0.0
    %3857 = vmatpush1.msra.mxu0 0.0
    %3858 = vmatprep.subr.mxu0 0.0
    %3859 = vmatpush1.msra.mxu0 0.0
    %3860 = vmatprep.subr.mxu0 0.0
    %3861 = vmatpush1.msra.mxu0 0.0
    %3862 = vmatprep.subr.mxu0 0.0
    %3863 = vmatpush1.msra.mxu0 0.0
    %3864 = vmatprep.subr.mxu0 0.0
    %3865 = vmatpush1.msra.mxu0 0.0
    %3866 = vmatprep.subr.mxu0 0.0
    %3867 = vmatpush1.msra.mxu0 0.0
    %3868 = vmatprep.subr.mxu0 0.0
    %3869 = vmatpush1.msra.mxu0 0.0
    %3870 = vmatprep.subr.mxu0 0.0
    %3871 = vmatpush1.msra.mxu0 0.0
    %3872 = vmatprep.subr.mxu0 0.0
    %3873 = vmatpush1.msra.mxu0 0.0
    %3874 = vmatprep.subr.mxu0 0.0
    %3875 = vmatpush1.msra.mxu0 0.0
    %3876 = vmatprep.subr.mxu0 0.0
    %3877 = vmatpush1.msra.mxu0 0.0
    %3878 = vmatprep.mubr.f32.mxu0 0.0
    %v3879 = vand.u32 %v3521, 4294901760
    %v3880 = vsub.f32 %v3521, %v3879
    %3881 = vmatmul.mubr.f32.gmra.mrb[0].mxu0 %v3880
    %v3882 = vpop.f32.mrb[0].mxu0
    %v3883 = vadd.f32 %v3779, %v3882
    %v3884 = vpop.f32.mrb[0].mxu0
    %3885 = vdwg.mxu0
    %3886 = vmatprep.subr.mxu0 0.0
    %v3887 = vand.u32 %v3524, 4294901760
    %3888 = vmatpush1.msra.mxu0 %v3887
    %3889 = vmatprep.subr.mxu0 0.0
    %v3890 = vand.u32 %v3525, 4294901760
    %3891 = vmatpush1.msra.mxu0 %v3890
    %3892 = vmatprep.subr.mxu0 0.0
    %v3893 = vand.u32 %v3526, 4294901760
    %3894 = vmatpush1.msra.mxu0 %v3893
    %3895 = vmatprep.subr.mxu0 0.0
    %v3896 = vand.u32 %v3527, 4294901760
    %3897 = vmatpush1.msra.mxu0 %v3896
    %3898 = vmatprep.subr.mxu0 0.0
    %v3899 = vand.u32 %v3528, 4294901760
    %3900 = vmatpush1.msra.mxu0 %v3899
    %3901 = vmatprep.subr.mxu0 0.0
    %v3902 = vand.u32 %v3529, 4294901760
    %3903 = vmatpush1.msra.mxu0 %v3902
    %3904 = vmatprep.subr.mxu0 0.0
    %v3905 = vand.u32 %v3530, 4294901760
    %3906 = vmatpush1.msra.mxu0 %v3905
    %3907 = vmatprep.subr.mxu0 0.0
    %v3908 = vand.u32 %v3531, 4294901760
    %3909 = vmatpush1.msra.mxu0 %v3908
    %3910 = vmatprep.subr.mxu0 0.0
    %v3911 = vand.u32 %v3532, 4294901760
    %3912 = vmatpush1.msra.mxu0 %v3911
    %3913 = vmatprep.subr.mxu0 0.0
    %v3914 = vand.u32 %v3533, 4294901760
    %3915 = vmatpush1.msra.mxu0 %v3914
    %3916 = vmatprep.subr.mxu0 0.0
    %v3917 = vand.u32 %v3534, 4294901760
    %3918 = vmatpush1.msra.mxu0 %v3917
    %3919 = vmatprep.subr.mxu0 0.0
    %v3920 = vand.u32 %v3535, 4294901760
    %3921 = vmatpush1.msra.mxu0 %v3920
    %3922 = vmatprep.subr.mxu0 0.0
    %v3923 = vand.u32 %v3536, 4294901760
    %3924 = vmatpush1.msra.mxu0 %v3923
    %3925 = vmatprep.subr.mxu0 0.0
    %v3926 = vand.u32 %v3537, 4294901760
    %3927 = vmatpush1.msra.mxu0 %v3926
    %3928 = vmatprep.subr.mxu0 0.0
    %v3929 = vand.u32 %v3538, 4294901760
    %3930 = vmatpush1.msra.mxu0 %v3929
    %3931 = vmatprep.subr.mxu0 0.0
    %v3932 = vand.u32 %v3539, 4294901760
    %3933 = vmatpush1.msra.mxu0 %v3932
    %3934 = vmatprep.subr.mxu0 0.0
    %3935 = vmatpush1.msra.mxu0 0.0
    %3936 = vmatprep.subr.mxu0 0.0
    %3937 = vmatpush1.msra.mxu0 0.0
    %3938 = vmatprep.subr.mxu0 0.0
    %3939 = vmatpush1.msra.mxu0 0.0
    %3940 = vmatprep.subr.mxu0 0.0
    %3941 = vmatpush1.msra.mxu0 0.0
    %3942 = vmatprep.subr.mxu0 0.0
    %3943 = vmatpush1.msra.mxu0 0.0
    %3944 = vmatprep.subr.mxu0 0.0
    %3945 = vmatpush1.msra.mxu0 0.0
    %3946 = vmatprep.subr.mxu0 0.0
    %3947 = vmatpush1.msra.mxu0 0.0
    %3948 = vmatprep.subr.mxu0 0.0
    %3949 = vmatpush1.msra.mxu0 0.0
    %3950 = vmatprep.subr.mxu0 0.0
    %3951 = vmatpush1.msra.mxu0 0.0
    %3952 = vmatprep.subr.mxu0 0.0
    %3953 = vmatpush1.msra.mxu0 0.0
    %3954 = vmatprep.subr.mxu0 0.0
    %3955 = vmatpush1.msra.mxu0 0.0
    %3956 = vmatprep.subr.mxu0 0.0
    %3957 = vmatpush1.msra.mxu0 0.0
    %3958 = vmatprep.subr.mxu0 0.0
    %3959 = vmatpush1.msra.mxu0 0.0
    %3960 = vmatprep.subr.mxu0 0.0
    %3961 = vmatpush1.msra.mxu0 0.0
    %3962 = vmatprep.subr.mxu0 0.0
    %3963 = vmatpush1.msra.mxu0 0.0
    %3964 = vmatprep.subr.mxu0 0.0
    %3965 = vmatpush1.msra.mxu0 0.0
    %3966 = vmatprep.mubr.f32.mxu0 0.0
    %v3967 = vand.u32 %v3521, 4294901760
    %v3968 = vsub.f32 %v3521, %v3967
    %v3969 = vand.u32 %v3968, 4294901760
    %3970 = vmatmul.mubr.f32.gmra.mrb[0].mxu0 %v3969
    %v3971 = vpop.f32.mrb[0].mxu0
    %v3972 = vadd.f32 %v3883, %v3971
    %v3973 = vpop.f32.mrb[0].mxu0
    %3974 = vdwg.mxu0
    %3975 = vmatprep.subr.mxu0 0.0
    %v3976 = vand.u32 %v3524, 4294901760
    %v3977 = vsub.f32 %v3524, %v3976
    %v3978 = vand.u32 %v3977, 4294901760
    %3979 = vmatpush1.msra.mxu0 %v3978
    %3980 = vmatprep.subr.mxu0 0.0
    %v3981 = vand.u32 %v3525, 4294901760
    %v3982 = vsub.f32 %v3525, %v3981
    %v3983 = vand.u32 %v3982, 4294901760
    %3984 = vmatpush1.msra.mxu0 %v3983
    %3985 = vmatprep.subr.mxu0 0.0
    %v3986 = vand.u32 %v3526, 4294901760
    %v3987 = vsub.f32 %v3526, %v3986
    %v3988 = vand.u32 %v3987, 4294901760
    %3989 = vmatpush1.msra.mxu0 %v3988
    %3990 = vmatprep.subr.mxu0 0.0
    %v3991 = vand.u32 %v3527, 4294901760
    %v3992 = vsub.f32 %v3527, %v3991
    %v3993 = vand.u32 %v3992, 4294901760
    %3994 = vmatpush1.msra.mxu0 %v3993
    %3995 = vmatprep.subr.mxu0 0.0
    %v3996 = vand.u32 %v3528, 4294901760
    %v3997 = vsub.f32 %v3528, %v3996
    %v3998 = vand.u32 %v3997, 4294901760
    %3999 = vmatpush1.msra.mxu0 %v3998
    %4000 = vmatprep.subr.mxu0 0.0
    %v4001 = vand.u32 %v3529, 4294901760
    %v4002 = vsub.f32 %v3529, %v4001
    %v4003 = vand.u32 %v4002, 4294901760
    %4004 = vmatpush1.msra.mxu0 %v4003
    %4005 = vmatprep.subr.mxu0 0.0
    %v4006 = vand.u32 %v3530, 4294901760
    %v4007 = vsub.f32 %v3530, %v4006
    %v4008 = vand.u32 %v4007, 4294901760
    %4009 = vmatpush1.msra.mxu0 %v4008
    %4010 = vmatprep.subr.mxu0 0.0
    %v4011 = vand.u32 %v3531, 4294901760
    %v4012 = vsub.f32 %v3531, %v4011
    %v4013 = vand.u32 %v4012, 4294901760
    %4014 = vmatpush1.msra.mxu0 %v4013
    %4015 = vmatprep.subr.mxu0 0.0
    %v4016 = vand.u32 %v3532, 4294901760
    %v4017 = vsub.f32 %v3532, %v4016
    %v4018 = vand.u32 %v4017, 4294901760
    %4019 = vmatpush1.msra.mxu0 %v4018
    %4020 = vmatprep.subr.mxu0 0.0
    %v4021 = vand.u32 %v3533, 4294901760
    %v4022 = vsub.f32 %v3533, %v4021
    %v4023 = vand.u32 %v4022, 4294901760
    %4024 = vmatpush1.msra.mxu0 %v4023
    %4025 = vmatprep.subr.mxu0 0.0
    %v4026 = vand.u32 %v3534, 4294901760
    %v4027 = vsub.f32 %v3534, %v4026
    %v4028 = vand.u32 %v4027, 4294901760
    %4029 = vmatpush1.msra.mxu0 %v4028
    %4030 = vmatprep.subr.mxu0 0.0
    %v4031 = vand.u32 %v3535, 4294901760
    %v4032 = vsub.f32 %v3535, %v4031
    %v4033 = vand.u32 %v4032, 4294901760
    %4034 = vmatpush1.msra.mxu0 %v4033
    %4035 = vmatprep.subr.mxu0 0.0
    %v4036 = vand.u32 %v3536, 4294901760
    %v4037 = vsub.f32 %v3536, %v4036
    %v4038 = vand.u32 %v4037, 4294901760
    %4039 = vmatpush1.msra.mxu0 %v4038
    %4040 = vmatprep.subr.mxu0 0.0
    %v4041 = vand.u32 %v3537, 4294901760
    %v4042 = vsub.f32 %v3537, %v4041
    %v4043 = vand.u32 %v4042, 4294901760
    %4044 = vmatpush1.msra.mxu0 %v4043
    %4045 = vmatprep.subr.mxu0 0.0
    %v4046 = vand.u32 %v3538, 4294901760
    %v4047 = vsub.f32 %v3538, %v4046
    %v4048 = vand.u32 %v4047, 4294901760
    %4049 = vmatpush1.msra.mxu0 %v4048
    %4050 = vmatprep.subr.mxu0 0.0
    %v4051 = vand.u32 %v3539, 4294901760
    %v4052 = vsub.f32 %v3539, %v4051
    %v4053 = vand.u32 %v4052, 4294901760
    %4054 = vmatpush1.msra.mxu0 %v4053
    %4055 = vmatprep.subr.mxu0 0.0
    %4056 = vmatpush1.msra.mxu0 0.0
    %4057 = vmatprep.subr.mxu0 0.0
    %4058 = vmatpush1.msra.mxu0 0.0
    %4059 = vmatprep.subr.mxu0 0.0
    %4060 = vmatpush1.msra.mxu0 0.0
    %4061 = vmatprep.subr.mxu0 0.0
    %4062 = vmatpush1.msra.mxu0 0.0
    %4063 = vmatprep.subr.mxu0 0.0
    %4064 = vmatpush1.msra.mxu0 0.0
    %4065 = vmatprep.subr.mxu0 0.0
    %4066 = vmatpush1.msra.mxu0 0.0
    %4067 = vmatprep.subr.mxu0 0.0
    %4068 = vmatpush1.msra.mxu0 0.0
    %4069 = vmatprep.subr.mxu0 0.0
    %4070 = vmatpush1.msra.mxu0 0.0
    %4071 = vmatprep.subr.mxu0 0.0
    %4072 = vmatpush1.msra.mxu0 0.0
    %4073 = vmatprep.subr.mxu0 0.0
    %4074 = vmatpush1.msra.mxu0 0.0
    %4075 = vmatprep.subr.mxu0 0.0
    %4076 = vmatpush1.msra.mxu0 0.0
    %4077 = vmatprep.subr.mxu0 0.0
    %4078 = vmatpush1.msra.mxu0 0.0
    %4079 = vmatprep.subr.mxu0 0.0
    %4080 = vmatpush1.msra.mxu0 0.0
    %4081 = vmatprep.subr.mxu0 0.0
    %4082 = vmatpush1.msra.mxu0 0.0
    %4083 = vmatprep.subr.mxu0 0.0
    %4084 = vmatpush1.msra.mxu0 0.0
    %4085 = vmatprep.subr.mxu0 0.0
    %4086 = vmatpush1.msra.mxu0 0.0
    %4087 = vmatprep.mubr.f32.mxu0 0.0
    %v4088 = vand.u32 %v3521, 4294901760
    %4089 = vmatmul.mubr.f32.gmra.mrb[0].mxu0 %v4088
    %v4090 = vpop.f32.mrb[0].mxu0
    %v4091 = vadd.f32 %v3972, %v4090
    %v4092 = vpop.f32.mrb[0].mxu0
    %4093 = vdwg.mxu0
    %4094 = vmatprep.subr.mxu0 0.0
    %v4095 = vand.u32 %v3524, 4294901760
    %4096 = vmatpush1.msra.mxu0 %v4095
    %4097 = vmatprep.subr.mxu0 0.0
    %v4098 = vand.u32 %v3525, 4294901760
    %4099 = vmatpush1.msra.mxu0 %v4098
    %4100 = vmatprep.subr.mxu0 0.0
    %v4101 = vand.u32 %v3526, 4294901760
    %4102 = vmatpush1.msra.mxu0 %v4101
    %4103 = vmatprep.subr.mxu0 0.0
    %v4104 = vand.u32 %v3527, 4294901760
    %4105 = vmatpush1.msra.mxu0 %v4104
    %4106 = vmatprep.subr.mxu0 0.0
    %v4107 = vand.u32 %v3528, 4294901760
    %4108 = vmatpush1.msra.mxu0 %v4107
    %4109 = vmatprep.subr.mxu0 0.0
    %v4110 = vand.u32 %v3529, 4294901760
    %4111 = vmatpush1.msra.mxu0 %v4110
    %4112 = vmatprep.subr.mxu0 0.0
    %v4113 = vand.u32 %v3530, 4294901760
    %4114 = vmatpush1.msra.mxu0 %v4113
    %4115 = vmatprep.subr.mxu0 0.0
    %v4116 = vand.u32 %v3531, 4294901760
    %4117 = vmatpush1.msra.mxu0 %v4116
    %4118 = vmatprep.subr.mxu0 0.0
    %v4119 = vand.u32 %v3532, 4294901760
    %4120 = vmatpush1.msra.mxu0 %v4119
    %4121 = vmatprep.subr.mxu0 0.0
    %v4122 = vand.u32 %v3533, 4294901760
    %4123 = vmatpush1.msra.mxu0 %v4122
    %4124 = vmatprep.subr.mxu0 0.0
    %v4125 = vand.u32 %v3534, 4294901760
    %4126 = vmatpush1.msra.mxu0 %v4125
    %4127 = vmatprep.subr.mxu0 0.0
    %v4128 = vand.u32 %v3535, 4294901760
    %4129 = vmatpush1.msra.mxu0 %v4128
    %4130 = vmatprep.subr.mxu0 0.0
    %v4131 = vand.u32 %v3536, 4294901760
    %4132 = vmatpush1.msra.mxu0 %v4131
    %4133 = vmatprep.subr.mxu0 0.0
    %v4134 = vand.u32 %v3537, 4294901760
    %4135 = vmatpush1.msra.mxu0 %v4134
    %4136 = vmatprep.subr.mxu0 0.0
    %v4137 = vand.u32 %v3538, 4294901760
    %4138 = vmatpush1.msra.mxu0 %v4137
    %4139 = vmatprep.subr.mxu0 0.0
    %v4140 = vand.u32 %v3539, 4294901760
    %4141 = vmatpush1.msra.mxu0 %v4140
    %4142 = vmatprep.subr.mxu0 0.0
    %4143 = vmatpush1.msra.mxu0 0.0
    %4144 = vmatprep.subr.mxu0 0.0
    %4145 = vmatpush1.msra.mxu0 0.0
    %4146 = vmatprep.subr.mxu0 0.0
    %4147 = vmatpush1.msra.mxu0 0.0
    %4148 = vmatprep.subr.mxu0 0.0
    %4149 = vmatpush1.msra.mxu0 0.0
    %4150 = vmatprep.subr.mxu0 0.0
    %4151 = vmatpush1.msra.mxu0 0.0
    %4152 = vmatprep.subr.mxu0 0.0
    %4153 = vmatpush1.msra.mxu0 0.0
    %4154 = vmatprep.subr.mxu0 0.0
    %4155 = vmatpush1.msra.mxu0 0.0
    %4156 = vmatprep.subr.mxu0 0.0
    %4157 = vmatpush1.msra.mxu0 0.0
    %4158 = vmatprep.subr.mxu0 0.0
    %4159 = vmatpush1.msra.mxu0 0.0
    %4160 = vmatprep.subr.mxu0 0.0
    %4161 = vmatpush1.msra.mxu0 0.0
    %4162 = vmatprep.subr.mxu0 0.0
    %4163 = vmatpush1.msra.mxu0 0.0
    %4164 = vmatprep.subr.mxu0 0.0
    %4165 = vmatpush1.msra.mxu0 0.0
    %4166 = vmatprep.subr.mxu0 0.0
    %4167 = vmatpush1.msra.mxu0 0.0
    %4168 = vmatprep.subr.mxu0 0.0
    %4169 = vmatpush1.msra.mxu0 0.0
    %4170 = vmatprep.subr.mxu0 0.0
    %4171 = vmatpush1.msra.mxu0 0.0
    %4172 = vmatprep.subr.mxu0 0.0
    %4173 = vmatpush1.msra.mxu0 0.0
    %4174 = vmatprep.mubr.f32.mxu0 0.0
    %v4175 = vand.u32 %v3521, 4294901760
    %4176 = vmatmul.mubr.f32.gmra.mrb[0].mxu0 %v4175
    %v4177 = vpop.f32.mrb[0].mxu0
    %v4178 = vadd.f32 %v4091, %v4177
    %v4179 = vpop.f32.mrb[0].mxu0
    %4180 = vdwg.mxu0
    %v4181 = vtanh.pop %v4178
    %v4182 = vadd.f32 %v3519, %v4181
    %s4183 = scalar_lea.vmem [#allocation2], %s203
    %v4184 = vld [vmem:[%s4183] sm:$0x1]
    %s4185 = scalar_lea.vmem [#allocation8], %s2859
    %v4186 = vld [vmem:[%s4185] sm:$0xff]
    %v4187 = vld [vmem:[%s4185 + $0x8] sm:$0xff]
    %v4188 = vld [vmem:[%s4185 + $0x10] sm:$0xff]
    %v4189 = vld [vmem:[%s4185 + $0x18] sm:$0xff]
    %v4190 = vld [vmem:[%s4185 + $0x20] sm:$0xff]
    %v4191 = vld [vmem:[%s4185 + $0x28] sm:$0xff]
    %v4192 = vld [vmem:[%s4185 + $0x30] sm:$0xff]
    %v4193 = vld [vmem:[%s4185 + $0x38] sm:$0xff]
    %v4194 = vld [vmem:[%s4185 + $0x40] sm:$0xff]
    %v4195 = vld [vmem:[%s4185 + $0x48] sm:$0xff]
    %v4196 = vld [vmem:[%s4185 + $0x50] sm:$0xff]
    %v4197 = vld [vmem:[%s4185 + $0x58] sm:$0xff]
    %v4198 = vld [vmem:[%s4185 + $0x60] sm:$0xff]
    %v4199 = vld [vmem:[%s4185 + $0x68] sm:$0xff]
    %v4200 = vld [vmem:[%s4185 + $0x70] sm:$0xff]
    %v4201 = vld [vmem:[%s4185 + $0x78] sm:$0xff]
    %4202 = vmatprep.subr.mxu0 0.0
    %v4203 = vand.u32 %v4186, 4294901760
    %4204 = vmatpush1.msra.mxu0 %v4203
    %4205 = vmatprep.subr.mxu0 0.0
    %v4206 = vand.u32 %v4187, 4294901760
    %4207 = vmatpush1.msra.mxu0 %v4206
    %4208 = vmatprep.subr.mxu0 0.0
    %v4209 = vand.u32 %v4188, 4294901760
    %4210 = vmatpush1.msra.mxu0 %v4209
    %4211 = vmatprep.subr.mxu0 0.0
    %v4212 = vand.u32 %v4189, 4294901760
    %4213 = vmatpush1.msra.mxu0 %v4212
    %4214 = vmatprep.subr.mxu0 0.0
    %v4215 = vand.u32 %v4190, 4294901760
    %4216 = vmatpush1.msra.mxu0 %v4215
    %4217 = vmatprep.subr.mxu0 0.0
    %v4218 = vand.u32 %v4191, 4294901760
    %4219 = vmatpush1.msra.mxu0 %v4218
    %4220 = vmatprep.subr.mxu0 0.0
    %v4221 = vand.u32 %v4192, 4294901760
    %4222 = vmatpush1.msra.mxu0 %v4221
    %4223 = vmatprep.subr.mxu0 0.0
    %v4224 = vand.u32 %v4193, 4294901760
    %4225 = vmatpush1.msra.mxu0 %v4224
    %4226 = vmatprep.subr.mxu0 0.0
    %v4227 = vand.u32 %v4194, 4294901760
    %4228 = vmatpush1.msra.mxu0 %v4227
    %4229 = vmatprep.subr.mxu0 0.0
    %v4230 = vand.u32 %v4195, 4294901760
    %4231 = vmatpush1.msra.mxu0 %v4230
    %4232 = vmatprep.subr.mxu0 0.0
    %v4233 = vand.u32 %v4196, 4294901760
    %4234 = vmatpush1.msra.mxu0 %v4233
    %4235 = vmatprep.subr.mxu0 0.0
    %v4236 = vand.u32 %v4197, 4294901760
    %4237 = vmatpush1.msra.mxu0 %v4236
    %4238 = vmatprep.subr.mxu0 0.0
    %v4239 = vand.u32 %v4198, 4294901760
    %4240 = vmatpush1.msra.mxu0 %v4239
    %4241 = vmatprep.subr.mxu0 0.0
    %v4242 = vand.u32 %v4199, 4294901760
    %4243 = vmatpush1.msra.mxu0 %v4242
    %4244 = vmatprep.subr.mxu0 0.0
    %v4245 = vand.u32 %v4200, 4294901760
    %4246 = vmatpush1.msra.mxu0 %v4245
    %4247 = vmatprep.subr.mxu0 0.0
    %v4248 = vand.u32 %v4201, 4294901760
    %4249 = vmatpush1.msra.mxu0 %v4248
    %4250 = vmatprep.subr.mxu0 0.0
    %4251 = vmatpush1.msra.mxu0 0.0
    %4252 = vmatprep.subr.mxu0 0.0
    %4253 = vmatpush1.msra.mxu0 0.0
    %4254 = vmatprep.subr.mxu0 0.0
    %4255 = vmatpush1.msra.mxu0 0.0
    %4256 = vmatprep.subr.mxu0 0.0
    %4257 = vmatpush1.msra.mxu0 0.0
    %4258 = vmatprep.subr.mxu0 0.0
    %4259 = vmatpush1.msra.mxu0 0.0
    %4260 = vmatprep.subr.mxu0 0.0
    %4261 = vmatpush1.msra.mxu0 0.0
    %4262 = vmatprep.subr.mxu0 0.0
    %4263 = vmatpush1.msra.mxu0 0.0
    %4264 = vmatprep.subr.mxu0 0.0
    %4265 = vmatpush1.msra.mxu0 0.0
    %4266 = vmatprep.subr.mxu0 0.0
    %4267 = vmatpush1.msra.mxu0 0.0
    %4268 = vmatprep.subr.mxu0 0.0
    %4269 = vmatpush1.msra.mxu0 0.0
    %4270 = vmatprep.subr.mxu0 0.0
    %4271 = vmatpush1.msra.mxu0 0.0
    %4272 = vmatprep.subr.mxu0 0.0
    %4273 = vmatpush1.msra.mxu0 0.0
    %4274 = vmatprep.subr.mxu0 0.0
    %4275 = vmatpush1.msra.mxu0 0.0
    %4276 = vmatprep.subr.mxu0 0.0
    %4277 = vmatpush1.msra.mxu0 0.0
    %4278 = vmatprep.subr.mxu0 0.0
    %4279 = vmatpush1.msra.mxu0 0.0
    %4280 = vmatprep.subr.mxu0 0.0
    %4281 = vmatpush1.msra.mxu0 0.0
    %4282 = vmatprep.mubr.f32.mxu0 0.0
    %v4283 = vand.u32 %v4184, 4294901760
    %v4284 = vsub.f32 %v4184, %v4283
    %v4285 = vand.u32 %v4284, 4294901760
    %v4286 = vsub.f32 %v4284, %v4285
    %v4287 = vand.u32 %v4286, 4294901760
    %4288 = vmatmul.mubr.f32.gmra.mrb[0].mxu0 %v4287
    %v4289 = vpop.f32.mrb[0].mxu0
    %v4290 = vadd.f32 0.0, %v4289
    %v4291 = vpop.f32.mrb[0].mxu0
    %4292 = vdwg.mxu0
    %4293 = vmatprep.subr.mxu0 0.0
    %v4294 = vand.u32 %v4186, 4294901760
    %v4295 = vsub.f32 %v4186, %v4294
    %v4296 = vand.u32 %v4295, 4294901760
    %v4297 = vsub.f32 %v4295, %v4296
    %v4298 = vand.u32 %v4297, 4294901760
    %4299 = vmatpush1.msra.mxu0 %v4298
    %4300 = vmatprep.subr.mxu0 0.0
    %v4301 = vand.u32 %v4187, 4294901760
    %v4302 = vsub.f32 %v4187, %v4301
    %v4303 = vand.u32 %v4302, 4294901760
    %v4304 = vsub.f32 %v4302, %v4303
    %v4305 = vand.u32 %v4304, 4294901760
    %4306 = vmatpush1.msra.mxu0 %v4305
    %4307 = vmatprep.subr.mxu0 0.0
    %v4308 = vand.u32 %v4188, 4294901760
    %v4309 = vsub.f32 %v4188, %v4308
    %v4310 = vand.u32 %v4309, 4294901760
    %v4311 = vsub.f32 %v4309, %v4310
    %v4312 = vand.u32 %v4311, 4294901760
    %4313 = vmatpush1.msra.mxu0 %v4312
    %4314 = vmatprep.subr.mxu0 0.0
    %v4315 = vand.u32 %v4189, 4294901760
    %v4316 = vsub.f32 %v4189, %v4315
    %v4317 = vand.u32 %v4316, 4294901760
    %v4318 = vsub.f32 %v4316, %v4317
    %v4319 = vand.u32 %v4318, 4294901760
    %4320 = vmatpush1.msra.mxu0 %v4319
    %4321 = vmatprep.subr.mxu0 0.0
    %v4322 = vand.u32 %v4190, 4294901760
    %v4323 = vsub.f32 %v4190, %v4322
    %v4324 = vand.u32 %v4323, 4294901760
    %v4325 = vsub.f32 %v4323, %v4324
    %v4326 = vand.u32 %v4325, 4294901760
    %4327 = vmatpush1.msra.mxu0 %v4326
    %4328 = vmatprep.subr.mxu0 0.0
    %v4329 = vand.u32 %v4191, 4294901760
    %v4330 = vsub.f32 %v4191, %v4329
    %v4331 = vand.u32 %v4330, 4294901760
    %v4332 = vsub.f32 %v4330, %v4331
    %v4333 = vand.u32 %v4332, 4294901760
    %4334 = vmatpush1.msra.mxu0 %v4333
    %4335 = vmatprep.subr.mxu0 0.0
    %v4336 = vand.u32 %v4192, 4294901760
    %v4337 = vsub.f32 %v4192, %v4336
    %v4338 = vand.u32 %v4337, 4294901760
    %v4339 = vsub.f32 %v4337, %v4338
    %v4340 = vand.u32 %v4339, 4294901760
    %4341 = vmatpush1.msra.mxu0 %v4340
    %4342 = vmatprep.subr.mxu0 0.0
    %v4343 = vand.u32 %v4193, 4294901760
    %v4344 = vsub.f32 %v4193, %v4343
    %v4345 = vand.u32 %v4344, 4294901760
    %v4346 = vsub.f32 %v4344, %v4345
    %v4347 = vand.u32 %v4346, 4294901760
    %4348 = vmatpush1.msra.mxu0 %v4347
    %4349 = vmatprep.subr.mxu0 0.0
    %v4350 = vand.u32 %v4194, 4294901760
    %v4351 = vsub.f32 %v4194, %v4350
    %v4352 = vand.u32 %v4351, 4294901760
    %v4353 = vsub.f32 %v4351, %v4352
    %v4354 = vand.u32 %v4353, 4294901760
    %4355 = vmatpush1.msra.mxu0 %v4354
    %4356 = vmatprep.subr.mxu0 0.0
    %v4357 = vand.u32 %v4195, 4294901760
    %v4358 = vsub.f32 %v4195, %v4357
    %v4359 = vand.u32 %v4358, 4294901760
    %v4360 = vsub.f32 %v4358, %v4359
    %v4361 = vand.u32 %v4360, 4294901760
    %4362 = vmatpush1.msra.mxu0 %v4361
    %4363 = vmatprep.subr.mxu0 0.0
    %v4364 = vand.u32 %v4196, 4294901760
    %v4365 = vsub.f32 %v4196, %v4364
    %v4366 = vand.u32 %v4365, 4294901760
    %v4367 = vsub.f32 %v4365, %v4366
    %v4368 = vand.u32 %v4367, 4294901760
    %4369 = vmatpush1.msra.mxu0 %v4368
    %4370 = vmatprep.subr.mxu0 0.0
    %v4371 = vand.u32 %v4197, 4294901760
    %v4372 = vsub.f32 %v4197, %v4371
    %v4373 = vand.u32 %v4372, 4294901760
    %v4374 = vsub.f32 %v4372, %v4373
    %v4375 = vand.u32 %v4374, 4294901760
    %4376 = vmatpush1.msra.mxu0 %v4375
    %4377 = vmatprep.subr.mxu0 0.0
    %v4378 = vand.u32 %v4198, 4294901760
    %v4379 = vsub.f32 %v4198, %v4378
    %v4380 = vand.u32 %v4379, 4294901760
    %v4381 = vsub.f32 %v4379, %v4380
    %v4382 = vand.u32 %v4381, 4294901760
    %4383 = vmatpush1.msra.mxu0 %v4382
    %4384 = vmatprep.subr.mxu0 0.0
    %v4385 = vand.u32 %v4199, 4294901760
    %v4386 = vsub.f32 %v4199, %v4385
    %v4387 = vand.u32 %v4386, 4294901760
    %v4388 = vsub.f32 %v4386, %v4387
    %v4389 = vand.u32 %v4388, 4294901760
    %4390 = vmatpush1.msra.mxu0 %v4389
    %4391 = vmatprep.subr.mxu0 0.0
    %v4392 = vand.u32 %v4200, 4294901760
    %v4393 = vsub.f32 %v4200, %v4392
    %v4394 = vand.u32 %v4393, 4294901760
    %v4395 = vsub.f32 %v4393, %v4394
    %v4396 = vand.u32 %v4395, 4294901760
    %4397 = vmatpush1.msra.mxu0 %v4396
    %4398 = vmatprep.subr.mxu0 0.0
    %v4399 = vand.u32 %v4201, 4294901760
    %v4400 = vsub.f32 %v4201, %v4399
    %v4401 = vand.u32 %v4400, 4294901760
    %v4402 = vsub.f32 %v4400, %v4401
    %v4403 = vand.u32 %v4402, 4294901760
    %4404 = vmatpush1.msra.mxu0 %v4403
    %4405 = vmatprep.subr.mxu0 0.0
    %4406 = vmatpush1.msra.mxu0 0.0
    %4407 = vmatprep.subr.mxu0 0.0
    %4408 = vmatpush1.msra.mxu0 0.0
    %4409 = vmatprep.subr.mxu0 0.0
    %4410 = vmatpush1.msra.mxu0 0.0
    %4411 = vmatprep.subr.mxu0 0.0
    %4412 = vmatpush1.msra.mxu0 0.0
    %4413 = vmatprep.subr.mxu0 0.0
    %4414 = vmatpush1.msra.mxu0 0.0
    %4415 = vmatprep.subr.mxu0 0.0
    %4416 = vmatpush1.msra.mxu0 0.0
    %4417 = vmatprep.subr.mxu0 0.0
    %4418 = vmatpush1.msra.mxu0 0.0
    %4419 = vmatprep.subr.mxu0 0.0
    %4420 = vmatpush1.msra.mxu0 0.0
    %4421 = vmatprep.subr.mxu0 0.0
    %4422 = vmatpush1.msra.mxu0 0.0
    %4423 = vmatprep.subr.mxu0 0.0
    %4424 = vmatpush1.msra.mxu0 0.0
    %4425 = vmatprep.subr.mxu0 0.0
    %4426 = vmatpush1.msra.mxu0 0.0
    %4427 = vmatprep.subr.mxu0 0.0
    %4428 = vmatpush1.msra.mxu0 0.0
    %4429 = vmatprep.subr.mxu0 0.0
    %4430 = vmatpush1.msra.mxu0 0.0
    %4431 = vmatprep.subr.mxu0 0.0
    %4432 = vmatpush1.msra.mxu0 0.0
    %4433 = vmatprep.subr.mxu0 0.0
    %4434 = vmatpush1.msra.mxu0 0.0
    %4435 = vmatprep.subr.mxu0 0.0
    %4436 = vmatpush1.msra.mxu0 0.0
    %4437 = vmatprep.mubr.f32.mxu0 0.0
    %v4438 = vand.u32 %v4184, 4294901760
    %4439 = vmatmul.mubr.f32.gmra.mrb[0].mxu0 %v4438
    %v4440 = vpop.f32.mrb[0].mxu0
    %v4441 = vadd.f32 %v4290, %v4440
    %v4442 = vpop.f32.mrb[0].mxu0
    %4443 = vdwg.mxu0
    %4444 = vmatprep.subr.mxu0 0.0
    %v4445 = vand.u32 %v4186, 4294901760
    %v4446 = vsub.f32 %v4186, %v4445
    %4447 = vmatpush1.msra.mxu0 %v4446
    %4448 = vmatprep.subr.mxu0 0.0
    %v4449 = vand.u32 %v4187, 4294901760
    %v4450 = vsub.f32 %v4187, %v4449
    %4451 = vmatpush1.msra.mxu0 %v4450
    %4452 = vmatprep.subr.mxu0 0.0
    %v4453 = vand.u32 %v4188, 4294901760
    %v4454 = vsub.f32 %v4188, %v4453
    %4455 = vmatpush1.msra.mxu0 %v4454
    %4456 = vmatprep.subr.mxu0 0.0
    %v4457 = vand.u32 %v4189, 4294901760
    %v4458 = vsub.f32 %v4189, %v4457
    %4459 = vmatpush1.msra.mxu0 %v4458
    %4460 = vmatprep.subr.mxu0 0.0
    %v4461 = vand.u32 %v4190, 4294901760
    %v4462 = vsub.f32 %v4190, %v4461
    %4463 = vmatpush1.msra.mxu0 %v4462
    %4464 = vmatprep.subr.mxu0 0.0
    %v4465 = vand.u32 %v4191, 4294901760
    %v4466 = vsub.f32 %v4191, %v4465
    %4467 = vmatpush1.msra.mxu0 %v4466
    %4468 = vmatprep.subr.mxu0 0.0
    %v4469 = vand.u32 %v4192, 4294901760
    %v4470 = vsub.f32 %v4192, %v4469
    %4471 = vmatpush1.msra.mxu0 %v4470
    %4472 = vmatprep.subr.mxu0 0.0
    %v4473 = vand.u32 %v4193, 4294901760
    %v4474 = vsub.f32 %v4193, %v4473
    %4475 = vmatpush1.msra.mxu0 %v4474
    %4476 = vmatprep.subr.mxu0 0.0
    %v4477 = vand.u32 %v4194, 4294901760
    %v4478 = vsub.f32 %v4194, %v4477
    %4479 = vmatpush1.msra.mxu0 %v4478
    %4480 = vmatprep.subr.mxu0 0.0
    %v4481 = vand.u32 %v4195, 4294901760
    %v4482 = vsub.f32 %v4195, %v4481
    %4483 = vmatpush1.msra.mxu0 %v4482
    %4484 = vmatprep.subr.mxu0 0.0
    %v4485 = vand.u32 %v4196, 4294901760
    %v4486 = vsub.f32 %v4196, %v4485
    %4487 = vmatpush1.msra.mxu0 %v4486
    %4488 = vmatprep.subr.mxu0 0.0
    %v4489 = vand.u32 %v4197, 4294901760
    %v4490 = vsub.f32 %v4197, %v4489
    %4491 = vmatpush1.msra.mxu0 %v4490
    %4492 = vmatprep.subr.mxu0 0.0
    %v4493 = vand.u32 %v4198, 4294901760
    %v4494 = vsub.f32 %v4198, %v4493
    %4495 = vmatpush1.msra.mxu0 %v4494
    %4496 = vmatprep.subr.mxu0 0.0
    %v4497 = vand.u32 %v4199, 4294901760
    %v4498 = vsub.f32 %v4199, %v4497
    %4499 = vmatpush1.msra.mxu0 %v4498
    %4500 = vmatprep.subr.mxu0 0.0
    %v4501 = vand.u32 %v4200, 4294901760
    %v4502 = vsub.f32 %v4200, %v4501
    %4503 = vmatpush1.msra.mxu0 %v4502
    %4504 = vmatprep.subr.mxu0 0.0
    %v4505 = vand.u32 %v4201, 4294901760
    %v4506 = vsub.f32 %v4201, %v4505
    %4507 = vmatpush1.msra.mxu0 %v4506
    %4508 = vmatprep.subr.mxu0 0.0
    %4509 = vmatpush1.msra.mxu0 0.0
    %4510 = vmatprep.subr.mxu0 0.0
    %4511 = vmatpush1.msra.mxu0 0.0
    %4512 = vmatprep.subr.mxu0 0.0
    %4513 = vmatpush1.msra.mxu0 0.0
    %4514 = vmatprep.subr.mxu0 0.0
    %4515 = vmatpush1.msra.mxu0 0.0
    %4516 = vmatprep.subr.mxu0 0.0
    %4517 = vmatpush1.msra.mxu0 0.0
    %4518 = vmatprep.subr.mxu0 0.0
    %4519 = vmatpush1.msra.mxu0 0.0
    %4520 = vmatprep.subr.mxu0 0.0
    %4521 = vmatpush1.msra.mxu0 0.0
    %4522 = vmatprep.subr.mxu0 0.0
    %4523 = vmatpush1.msra.mxu0 0.0
    %4524 = vmatprep.subr.mxu0 0.0
    %4525 = vmatpush1.msra.mxu0 0.0
    %4526 = vmatprep.subr.mxu0 0.0
    %4527 = vmatpush1.msra.mxu0 0.0
    %4528 = vmatprep.subr.mxu0 0.0
    %4529 = vmatpush1.msra.mxu0 0.0
    %4530 = vmatprep.subr.mxu0 0.0
    %4531 = vmatpush1.msra.mxu0 0.0
    %4532 = vmatprep.subr.mxu0 0.0
    %4533 = vmatpush1.msra.mxu0 0.0
    %4534 = vmatprep.subr.mxu0 0.0
    %4535 = vmatpush1.msra.mxu0 0.0
    %4536 = vmatprep.subr.mxu0 0.0
    %4537 = vmatpush1.msra.mxu0 0.0
    %4538 = vmatprep.subr.mxu0 0.0
    %4539 = vmatpush1.msra.mxu0 0.0
    %4540 = vmatprep.mubr.f32.mxu0 0.0
    %v4541 = vand.u32 %v4184, 4294901760
    %v4542 = vsub.f32 %v4184, %v4541
    %4543 = vmatmul.mubr.f32.gmra.mrb[0].mxu0 %v4542
    %v4544 = vpop.f32.mrb[0].mxu0
    %v4545 = vadd.f32 %v4441, %v4544
    %v4546 = vpop.f32.mrb[0].mxu0
    %4547 = vdwg.mxu0
    %4548 = vmatprep.subr.mxu0 0.0
    %v4549 = vand.u32 %v4186, 4294901760
    %4550 = vmatpush1.msra.mxu0 %v4549
    %4551 = vmatprep.subr.mxu0 0.0
    %v4552 = vand.u32 %v4187, 4294901760
    %4553 = vmatpush1.msra.mxu0 %v4552
    %4554 = vmatprep.subr.mxu0 0.0
    %v4555 = vand.u32 %v4188, 4294901760
    %4556 = vmatpush1.msra.mxu0 %v4555
    %4557 = vmatprep.subr.mxu0 0.0
    %v4558 = vand.u32 %v4189, 4294901760
    %4559 = vmatpush1.msra.mxu0 %v4558
    %4560 = vmatprep.subr.mxu0 0.0
    %v4561 = vand.u32 %v4190, 4294901760
    %4562 = vmatpush1.msra.mxu0 %v4561
    %4563 = vmatprep.subr.mxu0 0.0
    %v4564 = vand.u32 %v4191, 4294901760
    %4565 = vmatpush1.msra.mxu0 %v4564
    %4566 = vmatprep.subr.mxu0 0.0
    %v4567 = vand.u32 %v4192, 4294901760
    %4568 = vmatpush1.msra.mxu0 %v4567
    %4569 = vmatprep.subr.mxu0 0.0
    %v4570 = vand.u32 %v4193, 4294901760
    %4571 = vmatpush1.msra.mxu0 %v4570
    %4572 = vmatprep.subr.mxu0 0.0
    %v4573 = vand.u32 %v4194, 4294901760
    %4574 = vmatpush1.msra.mxu0 %v4573
    %4575 = vmatprep.subr.mxu0 0.0
    %v4576 = vand.u32 %v4195, 4294901760
    %4577 = vmatpush1.msra.mxu0 %v4576
    %4578 = vmatprep.subr.mxu0 0.0
    %v4579 = vand.u32 %v4196, 4294901760
    %4580 = vmatpush1.msra.mxu0 %v4579
    %4581 = vmatprep.subr.mxu0 0.0
    %v4582 = vand.u32 %v4197, 4294901760
    %4583 = vmatpush1.msra.mxu0 %v4582
    %4584 = vmatprep.subr.mxu0 0.0
    %v4585 = vand.u32 %v4198, 4294901760
    %4586 = vmatpush1.msra.mxu0 %v4585
    %4587 = vmatprep.subr.mxu0 0.0
    %v4588 = vand.u32 %v4199, 4294901760
    %4589 = vmatpush1.msra.mxu0 %v4588
    %4590 = vmatprep.subr.mxu0 0.0
    %v4591 = vand.u32 %v4200, 4294901760
    %4592 = vmatpush1.msra.mxu0 %v4591
    %4593 = vmatprep.subr.mxu0 0.0
    %v4594 = vand.u32 %v4201, 4294901760
    %4595 = vmatpush1.msra.mxu0 %v4594
    %4596 = vmatprep.subr.mxu0 0.0
    %4597 = vmatpush1.msra.mxu0 0.0
    %4598 = vmatprep.subr.mxu0 0.0
    %4599 = vmatpush1.msra.mxu0 0.0
    %4600 = vmatprep.subr.mxu0 0.0
    %4601 = vmatpush1.msra.mxu0 0.0
    %4602 = vmatprep.subr.mxu0 0.0
    %4603 = vmatpush1.msra.mxu0 0.0
    %4604 = vmatprep.subr.mxu0 0.0
    %4605 = vmatpush1.msra.mxu0 0.0
    %4606 = vmatprep.subr.mxu0 0.0
    %4607 = vmatpush1.msra.mxu0 0.0
    %4608 = vmatprep.subr.mxu0 0.0
    %4609 = vmatpush1.msra.mxu0 0.0
    %4610 = vmatprep.subr.mxu0 0.0
    %4611 = vmatpush1.msra.mxu0 0.0
    %4612 = vmatprep.subr.mxu0 0.0
    %4613 = vmatpush1.msra.mxu0 0.0
    %4614 = vmatprep.subr.mxu0 0.0
    %4615 = vmatpush1.msra.mxu0 0.0
    %4616 = vmatprep.subr.mxu0 0.0
    %4617 = vmatpush1.msra.mxu0 0.0
    %4618 = vmatprep.subr.mxu0 0.0
    %4619 = vmatpush1.msra.mxu0 0.0
    %4620 = vmatprep.subr.mxu0 0.0
    %4621 = vmatpush1.msra.mxu0 0.0
    %4622 = vmatprep.subr.mxu0 0.0
    %4623 = vmatpush1.msra.mxu0 0.0
    %4624 = vmatprep.subr.mxu0 0.0
    %4625 = vmatpush1.msra.mxu0 0.0
    %4626 = vmatprep.subr.mxu0 0.0
    %4627 = vmatpush1.msra.mxu0 0.0
    %4628 = vmatprep.mubr.f32.mxu0 0.0
    %v4629 = vand.u32 %v4184, 4294901760
    %v4630 = vsub.f32 %v4184, %v4629
    %v4631 = vand.u32 %v4630, 4294901760
    %4632 = vmatmul.mubr.f32.gmra.mrb[0].mxu0 %v4631
    %v4633 = vpop.f32.mrb[0].mxu0
    %v4634 = vadd.f32 %v4545, %v4633
    %v4635 = vpop.f32.mrb[0].mxu0
    %4636 = vdwg.mxu0
    %4637 = vmatprep.subr.mxu0 0.0
    %v4638 = vand.u32 %v4186, 4294901760
    %v4639 = vsub.f32 %v4186, %v4638
    %v4640 = vand.u32 %v4639, 4294901760
    %4641 = vmatpush1.msra.mxu0 %v4640
    %4642 = vmatprep.subr.mxu0 0.0
    %v4643 = vand.u32 %v4187, 4294901760
    %v4644 = vsub.f32 %v4187, %v4643
    %v4645 = vand.u32 %v4644, 4294901760
    %4646 = vmatpush1.msra.mxu0 %v4645
    %4647 = vmatprep.subr.mxu0 0.0
    %v4648 = vand.u32 %v4188, 4294901760
    %v4649 = vsub.f32 %v4188, %v4648
    %v4650 = vand.u32 %v4649, 4294901760
    %4651 = vmatpush1.msra.mxu0 %v4650
    %4652 = vmatprep.subr.mxu0 0.0
    %v4653 = vand.u32 %v4189, 4294901760
    %v4654 = vsub.f32 %v4189, %v4653
    %v4655 = vand.u32 %v4654, 4294901760
    %4656 = vmatpush1.msra.mxu0 %v4655
    %4657 = vmatprep.subr.mxu0 0.0
    %v4658 = vand.u32 %v4190, 4294901760
    %v4659 = vsub.f32 %v4190, %v4658
    %v4660 = vand.u32 %v4659, 4294901760
    %4661 = vmatpush1.msra.mxu0 %v4660
    %4662 = vmatprep.subr.mxu0 0.0
    %v4663 = vand.u32 %v4191, 4294901760
    %v4664 = vsub.f32 %v4191, %v4663
    %v4665 = vand.u32 %v4664, 4294901760
    %4666 = vmatpush1.msra.mxu0 %v4665
    %4667 = vmatprep.subr.mxu0 0.0
    %v4668 = vand.u32 %v4192, 4294901760
    %v4669 = vsub.f32 %v4192, %v4668
    %v4670 = vand.u32 %v4669, 4294901760
    %4671 = vmatpush1.msra.mxu0 %v4670
    %4672 = vmatprep.subr.mxu0 0.0
    %v4673 = vand.u32 %v4193, 4294901760
    %v4674 = vsub.f32 %v4193, %v4673
    %v4675 = vand.u32 %v4674, 4294901760
    %4676 = vmatpush1.msra.mxu0 %v4675
    %4677 = vmatprep.subr.mxu0 0.0
    %v4678 = vand.u32 %v4194, 4294901760
    %v4679 = vsub.f32 %v4194, %v4678
    %v4680 = vand.u32 %v4679, 4294901760
    %4681 = vmatpush1.msra.mxu0 %v4680
    %4682 = vmatprep.subr.mxu0 0.0
    %v4683 = vand.u32 %v4195, 4294901760
    %v4684 = vsub.f32 %v4195, %v4683
    %v4685 = vand.u32 %v4684, 4294901760
    %4686 = vmatpush1.msra.mxu0 %v4685
    %4687 = vmatprep.subr.mxu0 0.0
    %v4688 = vand.u32 %v4196, 4294901760
    %v4689 = vsub.f32 %v4196, %v4688
    %v4690 = vand.u32 %v4689, 4294901760
    %4691 = vmatpush1.msra.mxu0 %v4690
    %4692 = vmatprep.subr.mxu0 0.0
    %v4693 = vand.u32 %v4197, 4294901760
    %v4694 = vsub.f32 %v4197, %v4693
    %v4695 = vand.u32 %v4694, 4294901760
    %4696 = vmatpush1.msra.mxu0 %v4695
    %4697 = vmatprep.subr.mxu0 0.0
    %v4698 = vand.u32 %v4198, 4294901760
    %v4699 = vsub.f32 %v4198, %v4698
    %v4700 = vand.u32 %v4699, 4294901760
    %4701 = vmatpush1.msra.mxu0 %v4700
    %4702 = vmatprep.subr.mxu0 0.0
    %v4703 = vand.u32 %v4199, 4294901760
    %v4704 = vsub.f32 %v4199, %v4703
    %v4705 = vand.u32 %v4704, 4294901760
    %4706 = vmatpush1.msra.mxu0 %v4705
    %4707 = vmatprep.subr.mxu0 0.0
    %v4708 = vand.u32 %v4200, 4294901760
    %v4709 = vsub.f32 %v4200, %v4708
    %v4710 = vand.u32 %v4709, 4294901760
    %4711 = vmatpush1.msra.mxu0 %v4710
    %4712 = vmatprep.subr.mxu0 0.0
    %v4713 = vand.u32 %v4201, 4294901760
    %v4714 = vsub.f32 %v4201, %v4713
    %v4715 = vand.u32 %v4714, 4294901760
    %4716 = vmatpush1.msra.mxu0 %v4715
    %4717 = vmatprep.subr.mxu0 0.0
    %4718 = vmatpush1.msra.mxu0 0.0
    %4719 = vmatprep.subr.mxu0 0.0
    %4720 = vmatpush1.msra.mxu0 0.0
    %4721 = vmatprep.subr.mxu0 0.0
    %4722 = vmatpush1.msra.mxu0 0.0
    %4723 = vmatprep.subr.mxu0 0.0
    %4724 = vmatpush1.msra.mxu0 0.0
    %4725 = vmatprep.subr.mxu0 0.0
    %4726 = vmatpush1.msra.mxu0 0.0
    %4727 = vmatprep.subr.mxu0 0.0
    %4728 = vmatpush1.msra.mxu0 0.0
    %4729 = vmatprep.subr.mxu0 0.0
    %4730 = vmatpush1.msra.mxu0 0.0
    %4731 = vmatprep.subr.mxu0 0.0
    %4732 = vmatpush1.msra.mxu0 0.0
    %4733 = vmatprep.subr.mxu0 0.0
    %4734 = vmatpush1.msra.mxu0 0.0
    %4735 = vmatprep.subr.mxu0 0.0
    %4736 = vmatpush1.msra.mxu0 0.0
    %4737 = vmatprep.subr.mxu0 0.0
    %4738 = vmatpush1.msra.mxu0 0.0
    %4739 = vmatprep.subr.mxu0 0.0
    %4740 = vmatpush1.msra.mxu0 0.0
    %4741 = vmatprep.subr.mxu0 0.0
    %4742 = vmatpush1.msra.mxu0 0.0
    %4743 = vmatprep.subr.mxu0 0.0
    %4744 = vmatpush1.msra.mxu0 0.0
    %4745 = vmatprep.subr.mxu0 0.0
    %4746 = vmatpush1.msra.mxu0 0.0
    %4747 = vmatprep.subr.mxu0 0.0
    %4748 = vmatpush1.msra.mxu0 0.0
    %4749 = vmatprep.mubr.f32.mxu0 0.0
    %v4750 = vand.u32 %v4184, 4294901760
    %4751 = vmatmul.mubr.f32.gmra.mrb[0].mxu0 %v4750
    %v4752 = vpop.f32.mrb[0].mxu0
    %v4753 = vadd.f32 %v4634, %v4752
    %v4754 = vpop.f32.mrb[0].mxu0
    %4755 = vdwg.mxu0
    %4756 = vmatprep.subr.mxu0 0.0
    %v4757 = vand.u32 %v4186, 4294901760
    %4758 = vmatpush1.msra.mxu0 %v4757
    %4759 = vmatprep.subr.mxu0 0.0
    %v4760 = vand.u32 %v4187, 4294901760
    %4761 = vmatpush1.msra.mxu0 %v4760
    %4762 = vmatprep.subr.mxu0 0.0
    %v4763 = vand.u32 %v4188, 4294901760
    %4764 = vmatpush1.msra.mxu0 %v4763
    %4765 = vmatprep.subr.mxu0 0.0
    %v4766 = vand.u32 %v4189, 4294901760
    %4767 = vmatpush1.msra.mxu0 %v4766
    %4768 = vmatprep.subr.mxu0 0.0
    %v4769 = vand.u32 %v4190, 4294901760
    %4770 = vmatpush1.msra.mxu0 %v4769
    %4771 = vmatprep.subr.mxu0 0.0
    %v4772 = vand.u32 %v4191, 4294901760
    %4773 = vmatpush1.msra.mxu0 %v4772
    %4774 = vmatprep.subr.mxu0 0.0
    %v4775 = vand.u32 %v4192, 4294901760
    %4776 = vmatpush1.msra.mxu0 %v4775
    %4777 = vmatprep.subr.mxu0 0.0
    %v4778 = vand.u32 %v4193, 4294901760
    %4779 = vmatpush1.msra.mxu0 %v4778
    %4780 = vmatprep.subr.mxu0 0.0
    %v4781 = vand.u32 %v4194, 4294901760
    %4782 = vmatpush1.msra.mxu0 %v4781
    %4783 = vmatprep.subr.mxu0 0.0
    %v4784 = vand.u32 %v4195, 4294901760
    %4785 = vmatpush1.msra.mxu0 %v4784
    %4786 = vmatprep.subr.mxu0 0.0
    %v4787 = vand.u32 %v4196, 4294901760
    %4788 = vmatpush1.msra.mxu0 %v4787
    %4789 = vmatprep.subr.mxu0 0.0
    %v4790 = vand.u32 %v4197, 4294901760
    %4791 = vmatpush1.msra.mxu0 %v4790
    %4792 = vmatprep.subr.mxu0 0.0
    %v4793 = vand.u32 %v4198, 4294901760
    %4794 = vmatpush1.msra.mxu0 %v4793
    %4795 = vmatprep.subr.mxu0 0.0
    %v4796 = vand.u32 %v4199, 4294901760
    %4797 = vmatpush1.msra.mxu0 %v4796
    %4798 = vmatprep.subr.mxu0 0.0
    %v4799 = vand.u32 %v4200, 4294901760
    %4800 = vmatpush1.msra.mxu0 %v4799
    %4801 = vmatprep.subr.mxu0 0.0
    %v4802 = vand.u32 %v4201, 4294901760
    %4803 = vmatpush1.msra.mxu0 %v4802
    %4804 = vmatprep.subr.mxu0 0.0
    %4805 = vmatpush1.msra.mxu0 0.0
    %4806 = vmatprep.subr.mxu0 0.0
    %4807 = vmatpush1.msra.mxu0 0.0
    %4808 = vmatprep.subr.mxu0 0.0
    %4809 = vmatpush1.msra.mxu0 0.0
    %4810 = vmatprep.subr.mxu0 0.0
    %4811 = vmatpush1.msra.mxu0 0.0
    %4812 = vmatprep.subr.mxu0 0.0
    %4813 = vmatpush1.msra.mxu0 0.0
    %4814 = vmatprep.subr.mxu0 0.0
    %4815 = vmatpush1.msra.mxu0 0.0
    %4816 = vmatprep.subr.mxu0 0.0
    %4817 = vmatpush1.msra.mxu0 0.0
    %4818 = vmatprep.subr.mxu0 0.0
    %4819 = vmatpush1.msra.mxu0 0.0
    %4820 = vmatprep.subr.mxu0 0.0
    %4821 = vmatpush1.msra.mxu0 0.0
    %4822 = vmatprep.subr.mxu0 0.0
    %4823 = vmatpush1.msra.mxu0 0.0
    %4824 = vmatprep.subr.mxu0 0.0
    %4825 = vmatpush1.msra.mxu0 0.0
    %4826 = vmatprep.subr.mxu0 0.0
    %4827 = vmatpush1.msra.mxu0 0.0
    %4828 = vmatprep.subr.mxu0 0.0
    %4829 = vmatpush1.msra.mxu0 0.0
    %4830 = vmatprep.subr.mxu0 0.0
    %4831 = vmatpush1.msra.mxu0 0.0
    %4832 = vmatprep.subr.mxu0 0.0
    %4833 = vmatpush1.msra.mxu0 0.0
    %4834 = vmatprep.subr.mxu0 0.0
    %4835 = vmatpush1.msra.mxu0 0.0
    %4836 = vmatprep.mubr.f32.mxu0 0.0
    %v4837 = vand.u32 %v4184, 4294901760
    %4838 = vmatmul.mubr.f32.gmra.mrb[0].mxu0 %v4837
    %v4839 = vpop.f32.mrb[0].mxu0
    %v4840 = vadd.f32 %v4753, %v4839
    %v4841 = vpop.f32.mrb[0].mxu0
    %4842 = vdwg.mxu0
    %v4843 = vtanh.pop %v4840
    %v4844 = vadd.f32 %v4182, %v4843
    %s4845 = scalar_lea.vmem [#allocation2], %s204
    %v4846 = vld [vmem:[%s4845] sm:$0x1]
    %s4847 = scalar_lea.vmem [#allocation8], %s3522
    %v4848 = vld [vmem:[%s4847] sm:$0xff]
    %v4849 = vld [vmem:[%s4847 + $0x8] sm:$0xff]
    %v4850 = vld [vmem:[%s4847 + $0x10] sm:$0xff]
    %v4851 = vld [vmem:[%s4847 + $0x18] sm:$0xff]
    %v4852 = vld [vmem:[%s4847 + $0x20] sm:$0xff]
    %v4853 = vld [vmem:[%s4847 + $0x28] sm:$0xff]
    %v4854 = vld [vmem:[%s4847 + $0x30] sm:$0xff]
    %v4855 = vld [vmem:[%s4847 + $0x38] sm:$0xff]
    %v4856 = vld [vmem:[%s4847 + $0x40] sm:$0xff]
    %v4857 = vld [vmem:[%s4847 + $0x48] sm:$0xff]
    %v4858 = vld [vmem:[%s4847 + $0x50] sm:$0xff]
    %v4859 = vld [vmem:[%s4847 + $0x58] sm:$0xff]
    %v4860 = vld [vmem:[%s4847 + $0x60] sm:$0xff]
    %v4861 = vld [vmem:[%s4847 + $0x68] sm:$0xff]
    %v4862 = vld [vmem:[%s4847 + $0x70] sm:$0xff]
    %v4863 = vld [vmem:[%s4847 + $0x78] sm:$0xff]
    %4864 = vmatprep.subr.mxu0 0.0
    %v4865 = vand.u32 %v4848, 4294901760
    %4866 = vmatpush1.msra.mxu0 %v4865
    %4867 = vmatprep.subr.mxu0 0.0
    %v4868 = vand.u32 %v4849, 4294901760
    %4869 = vmatpush1.msra.mxu0 %v4868
    %4870 = vmatprep.subr.mxu0 0.0
    %v4871 = vand.u32 %v4850, 4294901760
    %4872 = vmatpush1.msra.mxu0 %v4871
    %4873 = vmatprep.subr.mxu0 0.0
    %v4874 = vand.u32 %v4851, 4294901760
    %4875 = vmatpush1.msra.mxu0 %v4874
    %4876 = vmatprep.subr.mxu0 0.0
    %v4877 = vand.u32 %v4852, 4294901760
    %4878 = vmatpush1.msra.mxu0 %v4877
    %4879 = vmatprep.subr.mxu0 0.0
    %v4880 = vand.u32 %v4853, 4294901760
    %4881 = vmatpush1.msra.mxu0 %v4880
    %4882 = vmatprep.subr.mxu0 0.0
    %v4883 = vand.u32 %v4854, 4294901760
    %4884 = vmatpush1.msra.mxu0 %v4883
    %4885 = vmatprep.subr.mxu0 0.0
    %v4886 = vand.u32 %v4855, 4294901760
    %4887 = vmatpush1.msra.mxu0 %v4886
    %4888 = vmatprep.subr.mxu0 0.0
    %v4889 = vand.u32 %v4856, 4294901760
    %4890 = vmatpush1.msra.mxu0 %v4889
    %4891 = vmatprep.subr.mxu0 0.0
    %v4892 = vand.u32 %v4857, 4294901760
    %4893 = vmatpush1.msra.mxu0 %v4892
    %4894 = vmatprep.subr.mxu0 0.0
    %v4895 = vand.u32 %v4858, 4294901760
    %4896 = vmatpush1.msra.mxu0 %v4895
    %4897 = vmatprep.subr.mxu0 0.0
    %v4898 = vand.u32 %v4859, 4294901760
    %4899 = vmatpush1.msra.mxu0 %v4898
    %4900 = vmatprep.subr.mxu0 0.0
    %v4901 = vand.u32 %v4860, 4294901760
    %4902 = vmatpush1.msra.mxu0 %v4901
    %4903 = vmatprep.subr.mxu0 0.0
    %v4904 = vand.u32 %v4861, 4294901760
    %4905 = vmatpush1.msra.mxu0 %v4904
    %4906 = vmatprep.subr.mxu0 0.0
    %v4907 = vand.u32 %v4862, 4294901760
    %4908 = vmatpush1.msra.mxu0 %v4907
    %4909 = vmatprep.subr.mxu0 0.0
    %v4910 = vand.u32 %v4863, 4294901760
    %4911 = vmatpush1.msra.mxu0 %v4910
    %4912 = vmatprep.subr.mxu0 0.0
    %4913 = vmatpush1.msra.mxu0 0.0
    %4914 = vmatprep.subr.mxu0 0.0
    %4915 = vmatpush1.msra.mxu0 0.0
    %4916 = vmatprep.subr.mxu0 0.0
    %4917 = vmatpush1.msra.mxu0 0.0
    %4918 = vmatprep.subr.mxu0 0.0
    %4919 = vmatpush1.msra.mxu0 0.0
    %4920 = vmatprep.subr.mxu0 0.0
    %4921 = vmatpush1.msra.mxu0 0.0
    %4922 = vmatprep.subr.mxu0 0.0
    %4923 = vmatpush1.msra.mxu0 0.0
    %4924 = vmatprep.subr.mxu0 0.0
    %4925 = vmatpush1.msra.mxu0 0.0
    %4926 = vmatprep.subr.mxu0 0.0
    %4927 = vmatpush1.msra.mxu0 0.0
    %4928 = vmatprep.subr.mxu0 0.0
    %4929 = vmatpush1.msra.mxu0 0.0
    %4930 = vmatprep.subr.mxu0 0.0
    %4931 = vmatpush1.msra.mxu0 0.0
    %4932 = vmatprep.subr.mxu0 0.0
    %4933 = vmatpush1.msra.mxu0 0.0
    %4934 = vmatprep.subr.mxu0 0.0
    %4935 = vmatpush1.msra.mxu0 0.0
    %4936 = vmatprep.subr.mxu0 0.0
    %4937 = vmatpush1.msra.mxu0 0.0
    %4938 = vmatprep.subr.mxu0 0.0
    %4939 = vmatpush1.msra.mxu0 0.0
    %4940 = vmatprep.subr.mxu0 0.0
    %4941 = vmatpush1.msra.mxu0 0.0
    %4942 = vmatprep.subr.mxu0 0.0
    %4943 = vmatpush1.msra.mxu0 0.0
    %4944 = vmatprep.mubr.f32.mxu0 0.0
    %v4945 = vand.u32 %v4846, 4294901760
    %v4946 = vsub.f32 %v4846, %v4945
    %v4947 = vand.u32 %v4946, 4294901760
    %v4948 = vsub.f32 %v4946, %v4947
    %v4949 = vand.u32 %v4948, 4294901760
    %4950 = vmatmul.mubr.f32.gmra.mrb[0].mxu0 %v4949
    %v4951 = vpop.f32.mrb[0].mxu0
    %v4952 = vadd.f32 0.0, %v4951
    %v4953 = vpop.f32.mrb[0].mxu0
    %4954 = vdwg.mxu0
    %4955 = vmatprep.subr.mxu0 0.0
    %v4956 = vand.u32 %v4848, 4294901760
    %v4957 = vsub.f32 %v4848, %v4956
    %v4958 = vand.u32 %v4957, 4294901760
    %v4959 = vsub.f32 %v4957, %v4958
    %v4960 = vand.u32 %v4959, 4294901760
    %4961 = vmatpush1.msra.mxu0 %v4960
    %4962 = vmatprep.subr.mxu0 0.0
    %v4963 = vand.u32 %v4849, 4294901760
    %v4964 = vsub.f32 %v4849, %v4963
    %v4965 = vand.u32 %v4964, 4294901760
    %v4966 = vsub.f32 %v4964, %v4965
    %v4967 = vand.u32 %v4966, 4294901760
    %4968 = vmatpush1.msra.mxu0 %v4967
    %4969 = vmatprep.subr.mxu0 0.0
    %v4970 = vand.u32 %v4850, 4294901760
    %v4971 = vsub.f32 %v4850, %v4970
    %v4972 = vand.u32 %v4971, 4294901760
    %v4973 = vsub.f32 %v4971, %v4972
    %v4974 = vand.u32 %v4973, 4294901760
    %4975 = vmatpush1.msra.mxu0 %v4974
    %4976 = vmatprep.subr.mxu0 0.0
    %v4977 = vand.u32 %v4851, 4294901760
    %v4978 = vsub.f32 %v4851, %v4977
    %v4979 = vand.u32 %v4978, 4294901760
    %v4980 = vsub.f32 %v4978, %v4979
    %v4981 = vand.u32 %v4980, 4294901760
    %4982 = vmatpush1.msra.mxu0 %v4981
    %4983 = vmatprep.subr.mxu0 0.0
    %v4984 = vand.u32 %v4852, 4294901760
    %v4985 = vsub.f32 %v4852, %v4984
    %v4986 = vand.u32 %v4985, 4294901760
    %v4987 = vsub.f32 %v4985, %v4986
    %v4988 = vand.u32 %v4987, 4294901760
    %4989 = vmatpush1.msra.mxu0 %v4988
    %4990 = vmatprep.subr.mxu0 0.0
    %v4991 = vand.u32 %v4853, 4294901760
    %v4992 = vsub.f32 %v4853, %v4991
    %v4993 = vand.u32 %v4992, 4294901760
    %v4994 = vsub.f32 %v4992, %v4993
    %v4995 = vand.u32 %v4994, 4294901760
    %4996 = vmatpush1.msra.mxu0 %v4995
    %4997 = vmatprep.subr.mxu0 0.0
    %v4998 = vand.u32 %v4854, 4294901760
    %v4999 = vsub.f32 %v4854, %v4998
    %v5000 = vand.u32 %v4999, 4294901760
    %v5001 = vsub.f32 %v4999, %v5000
    %v5002 = vand.u32 %v5001, 4294901760
    %5003 = vmatpush1.msra.mxu0 %v5002
    %5004 = vmatprep.subr.mxu0 0.0
    %v5005 = vand.u32 %v4855, 4294901760
    %v5006 = vsub.f32 %v4855, %v5005
    %v5007 = vand.u32 %v5006, 4294901760
    %v5008 = vsub.f32 %v5006, %v5007
    %v5009 = vand.u32 %v5008, 4294901760
    %5010 = vmatpush1.msra.mxu0 %v5009
    %5011 = vmatprep.subr.mxu0 0.0
    %v5012 = vand.u32 %v4856, 4294901760
    %v5013 = vsub.f32 %v4856, %v5012
    %v5014 = vand.u32 %v5013, 4294901760
    %v5015 = vsub.f32 %v5013, %v5014
    %v5016 = vand.u32 %v5015, 4294901760
    %5017 = vmatpush1.msra.mxu0 %v5016
    %5018 = vmatprep.subr.mxu0 0.0
    %v5019 = vand.u32 %v4857, 4294901760
    %v5020 = vsub.f32 %v4857, %v5019
    %v5021 = vand.u32 %v5020, 4294901760
    %v5022 = vsub.f32 %v5020, %v5021
    %v5023 = vand.u32 %v5022, 4294901760
    %5024 = vmatpush1.msra.mxu0 %v5023
    %5025 = vmatprep.subr.mxu0 0.0
    %v5026 = vand.u32 %v4858, 4294901760
    %v5027 = vsub.f32 %v4858, %v5026
    %v5028 = vand.u32 %v5027, 4294901760
    %v5029 = vsub.f32 %v5027, %v5028
    %v5030 = vand.u32 %v5029, 4294901760
    %5031 = vmatpush1.msra.mxu0 %v5030
    %5032 = vmatprep.subr.mxu0 0.0
    %v5033 = vand.u32 %v4859, 4294901760
    %v5034 = vsub.f32 %v4859, %v5033
    %v5035 = vand.u32 %v5034, 4294901760
    %v5036 = vsub.f32 %v5034, %v5035
    %v5037 = vand.u32 %v5036, 4294901760
    %5038 = vmatpush1.msra.mxu0 %v5037
    %5039 = vmatprep.subr.mxu0 0.0
    %v5040 = vand.u32 %v4860, 4294901760
    %v5041 = vsub.f32 %v4860, %v5040
    %v5042 = vand.u32 %v5041, 4294901760
    %v5043 = vsub.f32 %v5041, %v5042
    %v5044 = vand.u32 %v5043, 4294901760
    %5045 = vmatpush1.msra.mxu0 %v5044
    %5046 = vmatprep.subr.mxu0 0.0
    %v5047 = vand.u32 %v4861, 4294901760
    %v5048 = vsub.f32 %v4861, %v5047
    %v5049 = vand.u32 %v5048, 4294901760
    %v5050 = vsub.f32 %v5048, %v5049
    %v5051 = vand.u32 %v5050, 4294901760
    %5052 = vmatpush1.msra.mxu0 %v5051
    %5053 = vmatprep.subr.mxu0 0.0
    %v5054 = vand.u32 %v4862, 4294901760
    %v5055 = vsub.f32 %v4862, %v5054
    %v5056 = vand.u32 %v5055, 4294901760
    %v5057 = vsub.f32 %v5055, %v5056
    %v5058 = vand.u32 %v5057, 4294901760
    %5059 = vmatpush1.msra.mxu0 %v5058
    %5060 = vmatprep.subr.mxu0 0.0
    %v5061 = vand.u32 %v4863, 4294901760
    %v5062 = vsub.f32 %v4863, %v5061
    %v5063 = vand.u32 %v5062, 4294901760
    %v5064 = vsub.f32 %v5062, %v5063
    %v5065 = vand.u32 %v5064, 4294901760
    %5066 = vmatpush1.msra.mxu0 %v5065
    %5067 = vmatprep.subr.mxu0 0.0
    %5068 = vmatpush1.msra.mxu0 0.0
    %5069 = vmatprep.subr.mxu0 0.0
    %5070 = vmatpush1.msra.mxu0 0.0
    %5071 = vmatprep.subr.mxu0 0.0
    %5072 = vmatpush1.msra.mxu0 0.0
    %5073 = vmatprep.subr.mxu0 0.0
    %5074 = vmatpush1.msra.mxu0 0.0
    %5075 = vmatprep.subr.mxu0 0.0
    %5076 = vmatpush1.msra.mxu0 0.0
    %5077 = vmatprep.subr.mxu0 0.0
    %5078 = vmatpush1.msra.mxu0 0.0
    %5079 = vmatprep.subr.mxu0 0.0
    %5080 = vmatpush1.msra.mxu0 0.0
    %5081 = vmatprep.subr.mxu0 0.0
    %5082 = vmatpush1.msra.mxu0 0.0
    %5083 = vmatprep.subr.mxu0 0.0
    %5084 = vmatpush1.msra.mxu0 0.0
    %5085 = vmatprep.subr.mxu0 0.0
    %5086 = vmatpush1.msra.mxu0 0.0
    %5087 = vmatprep.subr.mxu0 0.0
    %5088 = vmatpush1.msra.mxu0 0.0
    %5089 = vmatprep.subr.mxu0 0.0
    %5090 = vmatpush1.msra.mxu0 0.0
    %5091 = vmatprep.subr.mxu0 0.0
    %5092 = vmatpush1.msra.mxu0 0.0
    %5093 = vmatprep.subr.mxu0 0.0
    %5094 = vmatpush1.msra.mxu0 0.0
    %5095 = vmatprep.subr.mxu0 0.0
    %5096 = vmatpush1.msra.mxu0 0.0
    %5097 = vmatprep.subr.mxu0 0.0
    %5098 = vmatpush1.msra.mxu0 0.0
    %5099 = vmatprep.mubr.f32.mxu0 0.0
    %v5100 = vand.u32 %v4846, 4294901760
    %5101 = vmatmul.mubr.f32.gmra.mrb[0].mxu0 %v5100
    %v5102 = vpop.f32.mrb[0].mxu0
    %v5103 = vadd.f32 %v4952, %v5102
    %v5104 = vpop.f32.mrb[0].mxu0
    %5105 = vdwg.mxu0
    %5106 = vmatprep.subr.mxu0 0.0
    %v5107 = vand.u32 %v4848, 4294901760
    %v5108 = vsub.f32 %v4848, %v5107
    %5109 = vmatpush1.msra.mxu0 %v5108
    %5110 = vmatprep.subr.mxu0 0.0
    %v5111 = vand.u32 %v4849, 4294901760
    %v5112 = vsub.f32 %v4849, %v5111
    %5113 = vmatpush1.msra.mxu0 %v5112
    %5114 = vmatprep.subr.mxu0 0.0
    %v5115 = vand.u32 %v4850, 4294901760
    %v5116 = vsub.f32 %v4850, %v5115
    %5117 = vmatpush1.msra.mxu0 %v5116
    %5118 = vmatprep.subr.mxu0 0.0
    %v5119 = vand.u32 %v4851, 4294901760
    %v5120 = vsub.f32 %v4851, %v5119
    %5121 = vmatpush1.msra.mxu0 %v5120
    %5122 = vmatprep.subr.mxu0 0.0
    %v5123 = vand.u32 %v4852, 4294901760
    %v5124 = vsub.f32 %v4852, %v5123
    %5125 = vmatpush1.msra.mxu0 %v5124
    %5126 = vmatprep.subr.mxu0 0.0
    %v5127 = vand.u32 %v4853, 4294901760
    %v5128 = vsub.f32 %v4853, %v5127
    %5129 = vmatpush1.msra.mxu0 %v5128
    %5130 = vmatprep.subr.mxu0 0.0
    %v5131 = vand.u32 %v4854, 4294901760
    %v5132 = vsub.f32 %v4854, %v5131
    %5133 = vmatpush1.msra.mxu0 %v5132
    %5134 = vmatprep.subr.mxu0 0.0
    %v5135 = vand.u32 %v4855, 4294901760
    %v5136 = vsub.f32 %v4855, %v5135
    %5137 = vmatpush1.msra.mxu0 %v5136
    %5138 = vmatprep.subr.mxu0 0.0
    %v5139 = vand.u32 %v4856, 4294901760
    %v5140 = vsub.f32 %v4856, %v5139
    %5141 = vmatpush1.msra.mxu0 %v5140
    %5142 = vmatprep.subr.mxu0 0.0
    %v5143 = vand.u32 %v4857, 4294901760
    %v5144 = vsub.f32 %v4857, %v5143
    %5145 = vmatpush1.msra.mxu0 %v5144
    %5146 = vmatprep.subr.mxu0 0.0
    %v5147 = vand.u32 %v4858, 4294901760
    %v5148 = vsub.f32 %v4858, %v5147
    %5149 = vmatpush1.msra.mxu0 %v5148
    %5150 = vmatprep.subr.mxu0 0.0
    %v5151 = vand.u32 %v4859, 4294901760
    %v5152 = vsub.f32 %v4859, %v5151
    %5153 = vmatpush1.msra.mxu0 %v5152
    %5154 = vmatprep.subr.mxu0 0.0
    %v5155 = vand.u32 %v4860, 4294901760
    %v5156 = vsub.f32 %v4860, %v5155
    %5157 = vmatpush1.msra.mxu0 %v5156
    %5158 = vmatprep.subr.mxu0 0.0
    %v5159 = vand.u32 %v4861, 4294901760
    %v5160 = vsub.f32 %v4861, %v5159
    %5161 = vmatpush1.msra.mxu0 %v5160
    %5162 = vmatprep.subr.mxu0 0.0
    %v5163 = vand.u32 %v4862, 4294901760
    %v5164 = vsub.f32 %v4862, %v5163
    %5165 = vmatpush1.msra.mxu0 %v5164
    %5166 = vmatprep.subr.mxu0 0.0
    %v5167 = vand.u32 %v4863, 4294901760
    %v5168 = vsub.f32 %v4863, %v5167
    %5169 = vmatpush1.msra.mxu0 %v5168
    %5170 = vmatprep.subr.mxu0 0.0
    %5171 = vmatpush1.msra.mxu0 0.0
    %5172 = vmatprep.subr.mxu0 0.0
    %5173 = vmatpush1.msra.mxu0 0.0
    %5174 = vmatprep.subr.mxu0 0.0
    %5175 = vmatpush1.msra.mxu0 0.0
    %5176 = vmatprep.subr.mxu0 0.0
    %5177 = vmatpush1.msra.mxu0 0.0
    %5178 = vmatprep.subr.mxu0 0.0
    %5179 = vmatpush1.msra.mxu0 0.0
    %5180 = vmatprep.subr.mxu0 0.0
    %5181 = vmatpush1.msra.mxu0 0.0
    %5182 = vmatprep.subr.mxu0 0.0
    %5183 = vmatpush1.msra.mxu0 0.0
    %5184 = vmatprep.subr.mxu0 0.0
    %5185 = vmatpush1.msra.mxu0 0.0
    %5186 = vmatprep.subr.mxu0 0.0
    %5187 = vmatpush1.msra.mxu0 0.0
    %5188 = vmatprep.subr.mxu0 0.0
    %5189 = vmatpush1.msra.mxu0 0.0
    %5190 = vmatprep.subr.mxu0 0.0
    %5191 = vmatpush1.msra.mxu0 0.0
    %5192 = vmatprep.subr.mxu0 0.0
    %5193 = vmatpush1.msra.mxu0 0.0
    %5194 = vmatprep.subr.mxu0 0.0
    %5195 = vmatpush1.msra.mxu0 0.0
    %5196 = vmatprep.subr.mxu0 0.0
    %5197 = vmatpush1.msra.mxu0 0.0
    %5198 = vmatprep.subr.mxu0 0.0
    %5199 = vmatpush1.msra.mxu0 0.0
    %5200 = vmatprep.subr.mxu0 0.0
    %5201 = vmatpush1.msra.mxu0 0.0
    %5202 = vmatprep.mubr.f32.mxu0 0.0
    %v5203 = vand.u32 %v4846, 4294901760
    %v5204 = vsub.f32 %v4846, %v5203
    %5205 = vmatmul.mubr.f32.gmra.mrb[0].mxu0 %v5204
    %v5206 = vpop.f32.mrb[0].mxu0
    %v5207 = vadd.f32 %v5103, %v5206
    %v5208 = vpop.f32.mrb[0].mxu0
    %5209 = vdwg.mxu0
    %5210 = vmatprep.subr.mxu0 0.0
    %v5211 = vand.u32 %v4848, 4294901760
    %5212 = vmatpush1.msra.mxu0 %v5211
    %5213 = vmatprep.subr.mxu0 0.0
    %v5214 = vand.u32 %v4849, 4294901760
    %5215 = vmatpush1.msra.mxu0 %v5214
    %5216 = vmatprep.subr.mxu0 0.0
    %v5217 = vand.u32 %v4850, 4294901760
    %5218 = vmatpush1.msra.mxu0 %v5217
    %5219 = vmatprep.subr.mxu0 0.0
    %v5220 = vand.u32 %v4851, 4294901760
    %5221 = vmatpush1.msra.mxu0 %v5220
    %5222 = vmatprep.subr.mxu0 0.0
    %v5223 = vand.u32 %v4852, 4294901760
    %5224 = vmatpush1.msra.mxu0 %v5223
    %5225 = vmatprep.subr.mxu0 0.0
    %v5226 = vand.u32 %v4853, 4294901760
    %5227 = vmatpush1.msra.mxu0 %v5226
    %5228 = vmatprep.subr.mxu0 0.0
    %v5229 = vand.u32 %v4854, 4294901760
    %5230 = vmatpush1.msra.mxu0 %v5229
    %5231 = vmatprep.subr.mxu0 0.0
    %v5232 = vand.u32 %v4855, 4294901760
    %5233 = vmatpush1.msra.mxu0 %v5232
    %5234 = vmatprep.subr.mxu0 0.0
    %v5235 = vand.u32 %v4856, 4294901760
    %5236 = vmatpush1.msra.mxu0 %v5235
    %5237 = vmatprep.subr.mxu0 0.0
    %v5238 = vand.u32 %v4857, 4294901760
    %5239 = vmatpush1.msra.mxu0 %v5238
    %5240 = vmatprep.subr.mxu0 0.0
    %v5241 = vand.u32 %v4858, 4294901760
    %5242 = vmatpush1.msra.mxu0 %v5241
    %5243 = vmatprep.subr.mxu0 0.0
    %v5244 = vand.u32 %v4859, 4294901760
    %5245 = vmatpush1.msra.mxu0 %v5244
    %5246 = vmatprep.subr.mxu0 0.0
    %v5247 = vand.u32 %v4860, 4294901760
    %5248 = vmatpush1.msra.mxu0 %v5247
    %5249 = vmatprep.subr.mxu0 0.0
    %v5250 = vand.u32 %v4861, 4294901760
    %5251 = vmatpush1.msra.mxu0 %v5250
    %5252 = vmatprep.subr.mxu0 0.0
    %v5253 = vand.u32 %v4862, 4294901760
    %5254 = vmatpush1.msra.mxu0 %v5253
    %5255 = vmatprep.subr.mxu0 0.0
    %v5256 = vand.u32 %v4863, 4294901760
    %5257 = vmatpush1.msra.mxu0 %v5256
    %5258 = vmatprep.subr.mxu0 0.0
    %5259 = vmatpush1.msra.mxu0 0.0
    %5260 = vmatprep.subr.mxu0 0.0
    %5261 = vmatpush1.msra.mxu0 0.0
    %5262 = vmatprep.subr.mxu0 0.0
    %5263 = vmatpush1.msra.mxu0 0.0
    %5264 = vmatprep.subr.mxu0 0.0
    %5265 = vmatpush1.msra.mxu0 0.0
    %5266 = vmatprep.subr.mxu0 0.0
    %5267 = vmatpush1.msra.mxu0 0.0
    %5268 = vmatprep.subr.mxu0 0.0
    %5269 = vmatpush1.msra.mxu0 0.0
    %5270 = vmatprep.subr.mxu0 0.0
    %5271 = vmatpush1.msra.mxu0 0.0
    %5272 = vmatprep.subr.mxu0 0.0
    %5273 = vmatpush1.msra.mxu0 0.0
    %5274 = vmatprep.subr.mxu0 0.0
    %5275 = vmatpush1.msra.mxu0 0.0
    %5276 = vmatprep.subr.mxu0 0.0
    %5277 = vmatpush1.msra.mxu0 0.0
    %5278 = vmatprep.subr.mxu0 0.0
    %5279 = vmatpush1.msra.mxu0 0.0
    %5280 = vmatprep.subr.mxu0 0.0
    %5281 = vmatpush1.msra.mxu0 0.0
    %5282 = vmatprep.subr.mxu0 0.0
    %5283 = vmatpush1.msra.mxu0 0.0
    %5284 = vmatprep.subr.mxu0 0.0
    %5285 = vmatpush1.msra.mxu0 0.0
    %5286 = vmatprep.subr.mxu0 0.0
    %5287 = vmatpush1.msra.mxu0 0.0
    %5288 = vmatprep.subr.mxu0 0.0
    %5289 = vmatpush1.msra.mxu0 0.0
    %5290 = vmatprep.mubr.f32.mxu0 0.0
    %v5291 = vand.u32 %v4846, 4294901760
    %v5292 = vsub.f32 %v4846, %v5291
    %v5293 = vand.u32 %v5292, 4294901760
    %5294 = vmatmul.mubr.f32.gmra.mrb[0].mxu0 %v5293
    %v5295 = vpop.f32.mrb[0].mxu0
    %v5296 = vadd.f32 %v5207, %v5295
    %v5297 = vpop.f32.mrb[0].mxu0
    %5298 = vdwg.mxu0
    %5299 = vmatprep.subr.mxu0 0.0
    %v5300 = vand.u32 %v4848, 4294901760
    %v5301 = vsub.f32 %v4848, %v5300
    %v5302 = vand.u32 %v5301, 4294901760
    %5303 = vmatpush1.msra.mxu0 %v5302
    %5304 = vmatprep.subr.mxu0 0.0
    %v5305 = vand.u32 %v4849, 4294901760
    %v5306 = vsub.f32 %v4849, %v5305
    %v5307 = vand.u32 %v5306, 4294901760
    %5308 = vmatpush1.msra.mxu0 %v5307
    %5309 = vmatprep.subr.mxu0 0.0
    %v5310 = vand.u32 %v4850, 4294901760
    %v5311 = vsub.f32 %v4850, %v5310
    %v5312 = vand.u32 %v5311, 4294901760
    %5313 = vmatpush1.msra.mxu0 %v5312
    %5314 = vmatprep.subr.mxu0 0.0
    %v5315 = vand.u32 %v4851, 4294901760
    %v5316 = vsub.f32 %v4851, %v5315
    %v5317 = vand.u32 %v5316, 4294901760
    %5318 = vmatpush1.msra.mxu0 %v5317
    %5319 = vmatprep.subr.mxu0 0.0
    %v5320 = vand.u32 %v4852, 4294901760
    %v5321 = vsub.f32 %v4852, %v5320
    %v5322 = vand.u32 %v5321, 4294901760
    %5323 = vmatpush1.msra.mxu0 %v5322
    %5324 = vmatprep.subr.mxu0 0.0
    %v5325 = vand.u32 %v4853, 4294901760
    %v5326 = vsub.f32 %v4853, %v5325
    %v5327 = vand.u32 %v5326, 4294901760
    %5328 = vmatpush1.msra.mxu0 %v5327
    %5329 = vmatprep.subr.mxu0 0.0
    %v5330 = vand.u32 %v4854, 4294901760
    %v5331 = vsub.f32 %v4854, %v5330
    %v5332 = vand.u32 %v5331, 4294901760
    %5333 = vmatpush1.msra.mxu0 %v5332
    %5334 = vmatprep.subr.mxu0 0.0
    %v5335 = vand.u32 %v4855, 4294901760
    %v5336 = vsub.f32 %v4855, %v5335
    %v5337 = vand.u32 %v5336, 4294901760
    %5338 = vmatpush1.msra.mxu0 %v5337
    %5339 = vmatprep.subr.mxu0 0.0
    %v5340 = vand.u32 %v4856, 4294901760
    %v5341 = vsub.f32 %v4856, %v5340
    %v5342 = vand.u32 %v5341, 4294901760
    %5343 = vmatpush1.msra.mxu0 %v5342
    %5344 = vmatprep.subr.mxu0 0.0
    %v5345 = vand.u32 %v4857, 4294901760
    %v5346 = vsub.f32 %v4857, %v5345
    %v5347 = vand.u32 %v5346, 4294901760
    %5348 = vmatpush1.msra.mxu0 %v5347
    %5349 = vmatprep.subr.mxu0 0.0
    %v5350 = vand.u32 %v4858, 4294901760
    %v5351 = vsub.f32 %v4858, %v5350
    %v5352 = vand.u32 %v5351, 4294901760
    %5353 = vmatpush1.msra.mxu0 %v5352
    %5354 = vmatprep.subr.mxu0 0.0
    %v5355 = vand.u32 %v4859, 4294901760
    %v5356 = vsub.f32 %v4859, %v5355
    %v5357 = vand.u32 %v5356, 4294901760
    %5358 = vmatpush1.msra.mxu0 %v5357
    %5359 = vmatprep.subr.mxu0 0.0
    %v5360 = vand.u32 %v4860, 4294901760
    %v5361 = vsub.f32 %v4860, %v5360
    %v5362 = vand.u32 %v5361, 4294901760
    %5363 = vmatpush1.msra.mxu0 %v5362
    %5364 = vmatprep.subr.mxu0 0.0
    %v5365 = vand.u32 %v4861, 4294901760
    %v5366 = vsub.f32 %v4861, %v5365
    %v5367 = vand.u32 %v5366, 4294901760
    %5368 = vmatpush1.msra.mxu0 %v5367
    %5369 = vmatprep.subr.mxu0 0.0
    %v5370 = vand.u32 %v4862, 4294901760
    %v5371 = vsub.f32 %v4862, %v5370
    %v5372 = vand.u32 %v5371, 4294901760
    %5373 = vmatpush1.msra.mxu0 %v5372
    %5374 = vmatprep.subr.mxu0 0.0
    %v5375 = vand.u32 %v4863, 4294901760
    %v5376 = vsub.f32 %v4863, %v5375
    %v5377 = vand.u32 %v5376, 4294901760
    %5378 = vmatpush1.msra.mxu0 %v5377
    %5379 = vmatprep.subr.mxu0 0.0
    %5380 = vmatpush1.msra.mxu0 0.0
    %5381 = vmatprep.subr.mxu0 0.0
    %5382 = vmatpush1.msra.mxu0 0.0
    %5383 = vmatprep.subr.mxu0 0.0
    %5384 = vmatpush1.msra.mxu0 0.0
    %5385 = vmatprep.subr.mxu0 0.0
    %5386 = vmatpush1.msra.mxu0 0.0
    %5387 = vmatprep.subr.mxu0 0.0
    %5388 = vmatpush1.msra.mxu0 0.0
    %5389 = vmatprep.subr.mxu0 0.0
    %5390 = vmatpush1.msra.mxu0 0.0
    %5391 = vmatprep.subr.mxu0 0.0
    %5392 = vmatpush1.msra.mxu0 0.0
    %5393 = vmatprep.subr.mxu0 0.0
    %5394 = vmatpush1.msra.mxu0 0.0
    %5395 = vmatprep.subr.mxu0 0.0
    %5396 = vmatpush1.msra.mxu0 0.0
    %5397 = vmatprep.subr.mxu0 0.0
    %5398 = vmatpush1.msra.mxu0 0.0
    %5399 = vmatprep.subr.mxu0 0.0
    %5400 = vmatpush1.msra.mxu0 0.0
    %5401 = vmatprep.subr.mxu0 0.0
    %5402 = vmatpush1.msra.mxu0 0.0
    %5403 = vmatprep.subr.mxu0 0.0
    %5404 = vmatpush1.msra.mxu0 0.0
    %5405 = vmatprep.subr.mxu0 0.0
    %5406 = vmatpush1.msra.mxu0 0.0
    %5407 = vmatprep.subr.mxu0 0.0
    %5408 = vmatpush1.msra.mxu0 0.0
    %5409 = vmatprep.subr.mxu0 0.0
    %5410 = vmatpush1.msra.mxu0 0.0
    %5411 = vmatprep.mubr.f32.mxu0 0.0
    %v5412 = vand.u32 %v4846, 4294901760
    %5413 = vmatmul.mubr.f32.gmra.mrb[0].mxu0 %v5412
    %v5414 = vpop.f32.mrb[0].mxu0
    %v5415 = vadd.f32 %v5296, %v5414
    %v5416 = vpop.f32.mrb[0].mxu0
    %5417 = vdwg.mxu0
    %5418 = vmatprep.subr.mxu0 0.0
    %v5419 = vand.u32 %v4848, 4294901760
    %5420 = vmatpush1.msra.mxu0 %v5419
    %5421 = vmatprep.subr.mxu0 0.0
    %v5422 = vand.u32 %v4849, 4294901760
    %5423 = vmatpush1.msra.mxu0 %v5422
    %5424 = vmatprep.subr.mxu0 0.0
    %v5425 = vand.u32 %v4850, 4294901760
    %5426 = vmatpush1.msra.mxu0 %v5425
    %5427 = vmatprep.subr.mxu0 0.0
    %v5428 = vand.u32 %v4851, 4294901760
    %5429 = vmatpush1.msra.mxu0 %v5428
    %5430 = vmatprep.subr.mxu0 0.0
    %v5431 = vand.u32 %v4852, 4294901760
    %5432 = vmatpush1.msra.mxu0 %v5431
    %5433 = vmatprep.subr.mxu0 0.0
    %v5434 = vand.u32 %v4853, 4294901760
    %5435 = vmatpush1.msra.mxu0 %v5434
    %5436 = vmatprep.subr.mxu0 0.0
    %v5437 = vand.u32 %v4854, 4294901760
    %5438 = vmatpush1.msra.mxu0 %v5437
    %5439 = vmatprep.subr.mxu0 0.0
    %v5440 = vand.u32 %v4855, 4294901760
    %5441 = vmatpush1.msra.mxu0 %v5440
    %5442 = vmatprep.subr.mxu0 0.0
    %v5443 = vand.u32 %v4856, 4294901760
    %5444 = vmatpush1.msra.mxu0 %v5443
    %5445 = vmatprep.subr.mxu0 0.0
    %v5446 = vand.u32 %v4857, 4294901760
    %5447 = vmatpush1.msra.mxu0 %v5446
    %5448 = vmatprep.subr.mxu0 0.0
    %v5449 = vand.u32 %v4858, 4294901760
    %5450 = vmatpush1.msra.mxu0 %v5449
    %5451 = vmatprep.subr.mxu0 0.0
    %v5452 = vand.u32 %v4859, 4294901760
    %5453 = vmatpush1.msra.mxu0 %v5452
    %5454 = vmatprep.subr.mxu0 0.0
    %v5455 = vand.u32 %v4860, 4294901760
    %5456 = vmatpush1.msra.mxu0 %v5455
    %5457 = vmatprep.subr.mxu0 0.0
    %v5458 = vand.u32 %v4861, 4294901760
    %5459 = vmatpush1.msra.mxu0 %v5458
    %5460 = vmatprep.subr.mxu0 0.0
    %v5461 = vand.u32 %v4862, 4294901760
    %5462 = vmatpush1.msra.mxu0 %v5461
    %5463 = vmatprep.subr.mxu0 0.0
    %v5464 = vand.u32 %v4863, 4294901760
    %5465 = vmatpush1.msra.mxu0 %v5464
    %5466 = vmatprep.subr.mxu0 0.0
    %5467 = vmatpush1.msra.mxu0 0.0
    %5468 = vmatprep.subr.mxu0 0.0
    %5469 = vmatpush1.msra.mxu0 0.0
    %5470 = vmatprep.subr.mxu0 0.0
    %5471 = vmatpush1.msra.mxu0 0.0
    %5472 = vmatprep.subr.mxu0 0.0
    %5473 = vmatpush1.msra.mxu0 0.0
    %5474 = vmatprep.subr.mxu0 0.0
    %5475 = vmatpush1.msra.mxu0 0.0
    %5476 = vmatprep.subr.mxu0 0.0
    %5477 = vmatpush1.msra.mxu0 0.0
    %5478 = vmatprep.subr.mxu0 0.0
    %5479 = vmatpush1.msra.mxu0 0.0
    %5480 = vmatprep.subr.mxu0 0.0
    %5481 = vmatpush1.msra.mxu0 0.0
    %5482 = vmatprep.subr.mxu0 0.0
    %5483 = vmatpush1.msra.mxu0 0.0
    %5484 = vmatprep.subr.mxu0 0.0
    %5485 = vmatpush1.msra.mxu0 0.0
    %5486 = vmatprep.subr.mxu0 0.0
    %5487 = vmatpush1.msra.mxu0 0.0
    %5488 = vmatprep.subr.mxu0 0.0
    %5489 = vmatpush1.msra.mxu0 0.0
    %5490 = vmatprep.subr.mxu0 0.0
    %5491 = vmatpush1.msra.mxu0 0.0
    %5492 = vmatprep.subr.mxu0 0.0
    %5493 = vmatpush1.msra.mxu0 0.0
    %5494 = vmatprep.subr.mxu0 0.0
    %5495 = vmatpush1.msra.mxu0 0.0
    %5496 = vmatprep.subr.mxu0 0.0
    %5497 = vmatpush1.msra.mxu0 0.0
    %5498 = vmatprep.mubr.f32.mxu0 0.0
    %v5499 = vand.u32 %v4846, 4294901760
    %5500 = vmatmul.mubr.f32.gmra.mrb[0].mxu0 %v5499
    %v5501 = vpop.f32.mrb[0].mxu0
    %v5502 = vadd.f32 %v5415, %v5501
    %v5503 = vpop.f32.mrb[0].mxu0
    %5504 = vdwg.mxu0
    %v5505 = vtanh.pop %v5502
    %v5506 = vadd.f32 %v4844, %v5505
    %s5507 = sld [smem:[#allocation15]]
    %s5508 = scalar_lea.vmem [#allocation2], %s5507
    %v5509 = vld [vmem:[%s5508] sm:$0x1]
    %v5510 = vadd.f32 %v5509, 0.0
    %s5511 = sld [smem:[#allocation15 + $0x1]]
    %s5512 = scalar_lea.vmem [#allocation2], %s5511
    %v5513 = vld [vmem:[%s5512] sm:$0x1]
    %v5514 = vadd.f32 %v5510, %v5513
    %s5515 = sld [smem:[#allocation15 + $0x2]]
    %s5516 = scalar_lea.vmem [#allocation2], %s5515
    %v5517 = vld [vmem:[%s5516] sm:$0x1]
    %v5518 = vadd.f32 %v5514, %v5517
    %s5519 = sld [smem:[#allocation15 + $0x3]]
    %s5520 = scalar_lea.vmem [#allocation2], %s5519
    %v5521 = vld [vmem:[%s5520] sm:$0x1]
    %v5522 = vadd.f32 %v5518, %v5521
    %s5523 = sld [smem:[#allocation15 + $0x4]]
    %s5524 = scalar_lea.vmem [#allocation2], %s5523
    %v5525 = vld [vmem:[%s5524] sm:$0x1]
    %v5526 = vadd.f32 %v5522, %v5525
    %s5527 = sld [smem:[#allocation15 + $0x5]]
    %s5528 = scalar_lea.vmem [#allocation2], %s5527
    %v5529 = vld [vmem:[%s5528] sm:$0x1]
    %v5530 = vadd.f32 %v5526, %v5529
    %s5531 = sld [smem:[#allocation15 + $0x6]]
    %s5532 = scalar_lea.vmem [#allocation2], %s5531
    %v5533 = vld [vmem:[%s5532] sm:$0x1]
    %v5534 = vadd.f32 %v5530, %v5533
    %s5535 = sld [smem:[#allocation15 + $0x7]]
    %s5536 = scalar_lea.vmem [#allocation2], %s5535
    %v5537 = vld [vmem:[%s5536] sm:$0x1]
    %v5538 = vadd.f32 %v5534, %v5537
    %v5539 = vmul.f32 %v5538, 0.125
    %s5540 = sld [smem:[#allocation16]]
    %s5541 = sld [smem:[#allocation16 + $0x1]]
    %s5542 = sld [smem:[#allocation16 + $0x80]]
    %s5543 = sld [smem:[#allocation16 + $0x81]]
    %s5544 = sld [smem:[#allocation18]]
    %s5545 = sld [smem:[#allocation18 + $0x1]]
    %s5546 = sld [smem:[#allocation18 + $0x80]]
    %s5547 = sld [smem:[#allocation18 + $0x81]]
    %s5548 = sld [smem:[#allocation19]]
    %s5549 = sld [smem:[#allocation19 + $0x1]]
    %s5550 = sld [smem:[#allocation19 + $0x80]]
    %s5551 = sld [smem:[#allocation19 + $0x81]]
    %s5552 = sld [smem:[#allocation19 + $0x2]]
    %s5553 = sld [smem:[#allocation19 + $0x82]]
    %s5554 = scalar_lea.vmem [#allocation2], %s5541
    %v5555 = vld [vmem:[%s5554] sm:$0x1]
    %s5556 = smul.u32 %s5540, 128
    %s5557 = scalar_lea.vmem [#allocation6], %s5556
    %v5558 = vld [vmem:[%s5557] sm:$0xff]
    %v5559 = vld [vmem:[%s5557 + $0x8] sm:$0xff]
    %v5560 = vld [vmem:[%s5557 + $0x10] sm:$0xff]
    %v5561 = vld [vmem:[%s5557 + $0x18] sm:$0xff]
    %v5562 = vld [vmem:[%s5557 + $0x20] sm:$0xff]
    %v5563 = vld [vmem:[%s5557 + $0x28] sm:$0xff]
    %v5564 = vld [vmem:[%s5557 + $0x30] sm:$0xff]
    %v5565 = vld [vmem:[%s5557 + $0x38] sm:$0xff]
    %v5566 = vld [vmem:[%s5557 + $0x40] sm:$0xff]
    %v5567 = vld [vmem:[%s5557 + $0x48] sm:$0xff]
    %v5568 = vld [vmem:[%s5557 + $0x50] sm:$0xff]
    %v5569 = vld [vmem:[%s5557 + $0x58] sm:$0xff]
    %v5570 = vld [vmem:[%s5557 + $0x60] sm:$0xff]
    %v5571 = vld [vmem:[%s5557 + $0x68] sm:$0xff]
    %v5572 = vld [vmem:[%s5557 + $0x70] sm:$0xff]
    %v5573 = vld [vmem:[%s5557 + $0x78] sm:$0xff]
    %5574 = vmatprep.subr.mxu0 0.0
    %v5575 = vand.u32 %v5558, 4294901760
    %5576 = vmatpush1.msra.mxu0 %v5575
    %5577 = vmatprep.subr.mxu0 0.0
    %v5578 = vand.u32 %v5559, 4294901760
    %5579 = vmatpush1.msra.mxu0 %v5578
    %5580 = vmatprep.subr.mxu0 0.0
    %v5581 = vand.u32 %v5560, 4294901760
    %5582 = vmatpush1.msra.mxu0 %v5581
    %5583 = vmatprep.subr.mxu0 0.0
    %v5584 = vand.u32 %v5561, 4294901760
    %5585 = vmatpush1.msra.mxu0 %v5584
    %5586 = vmatprep.subr.mxu0 0.0
    %v5587 = vand.u32 %v5562, 4294901760
    %5588 = vmatpush1.msra.mxu0 %v5587
    %5589 = vmatprep.subr.mxu0 0.0
    %v5590 = vand.u32 %v5563, 4294901760
    %5591 = vmatpush1.msra.mxu0 %v5590
    %5592 = vmatprep.subr.mxu0 0.0
    %v5593 = vand.u32 %v5564, 4294901760
    %5594 = vmatpush1.msra.mxu0 %v5593
    %5595 = vmatprep.subr.mxu0 0.0
    %v5596 = vand.u32 %v5565, 4294901760
    %5597 = vmatpush1.msra.mxu0 %v5596
    %5598 = vmatprep.subr.mxu0 0.0
    %v5599 = vand.u32 %v5566, 4294901760
    %5600 = vmatpush1.msra.mxu0 %v5599
    %5601 = vmatprep.subr.mxu0 0.0
    %v5602 = vand.u32 %v5567, 4294901760
    %5603 = vmatpush1.msra.mxu0 %v5602
    %5604 = vmatprep.subr.mxu0 0.0
    %v5605 = vand.u32 %v5568, 4294901760
    %5606 = vmatpush1.msra.mxu0 %v5605
    %5607 = vmatprep.subr.mxu0 0.0
    %v5608 = vand.u32 %v5569, 4294901760
    %5609 = vmatpush1.msra.mxu0 %v5608
    %5610 = vmatprep.subr.mxu0 0.0
    %v5611 = vand.u32 %v5570, 4294901760
    %5612 = vmatpush1.msra.mxu0 %v5611
    %5613 = vmatprep.subr.mxu0 0.0
    %v5614 = vand.u32 %v5571, 4294901760
    %5615 = vmatpush1.msra.mxu0 %v5614
    %5616 = vmatprep.subr.mxu0 0.0
    %v5617 = vand.u32 %v5572, 4294901760
    %5618 = vmatpush1.msra.mxu0 %v5617
    %5619 = vmatprep.subr.mxu0 0.0
    %v5620 = vand.u32 %v5573, 4294901760
    %5621 = vmatpush1.msra.mxu0 %v5620
    %5622 = vmatprep.subr.mxu0 0.0
    %5623 = vmatpush1.msra.mxu0 0.0
    %5624 = vmatprep.subr.mxu0 0.0
    %5625 = vmatpush1.msra.mxu0 0.0
    %5626 = vmatprep.subr.mxu0 0.0
    %5627 = vmatpush1.msra.mxu0 0.0
    %5628 = vmatprep.subr.mxu0 0.0
    %5629 = vmatpush1.msra.mxu0 0.0
    %5630 = vmatprep.subr.mxu0 0.0
    %5631 = vmatpush1.msra.mxu0 0.0
    %5632 = vmatprep.subr.mxu0 0.0
    %5633 = vmatpush1.msra.mxu0 0.0
    %5634 = vmatprep.subr.mxu0 0.0
    %5635 = vmatpush1.msra.mxu0 0.0
    %5636 = vmatprep.subr.mxu0 0.0
    %5637 = vmatpush1.msra.mxu0 0.0
    %5638 = vmatprep.subr.mxu0 0.0
    %5639 = vmatpush1.msra.mxu0 0.0
    %5640 = vmatprep.subr.mxu0 0.0
    %5641 = vmatpush1.msra.mxu0 0.0
    %5642 = vmatprep.subr.mxu0 0.0
    %5643 = vmatpush1.msra.mxu0 0.0
    %5644 = vmatprep.subr.mxu0 0.0
    %5645 = vmatpush1.msra.mxu0 0.0
    %5646 = vmatprep.subr.mxu0 0.0
    %5647 = vmatpush1.msra.mxu0 0.0
    %5648 = vmatprep.subr.mxu0 0.0
    %5649 = vmatpush1.msra.mxu0 0.0
    %5650 = vmatprep.subr.mxu0 0.0
    %5651 = vmatpush1.msra.mxu0 0.0
    %5652 = vmatprep.subr.mxu0 0.0
    %5653 = vmatpush1.msra.mxu0 0.0
    %5654 = vmatprep.mubr.f32.mxu0 0.0
    %v5655 = vand.u32 %v5555, 4294901760
    %v5656 = vsub.f32 %v5555, %v5655
    %v5657 = vand.u32 %v5656, 4294901760
    %v5658 = vsub.f32 %v5656, %v5657
    %v5659 = vand.u32 %v5658, 4294901760
    %5660 = vmatmul.mubr.f32.gmra.mrb[0].mxu0 %v5659
    %v5661 = vpop.f32.mrb[0].mxu0
    %v5662 = vadd.f32 0.0, %v5661
    %v5663 = vpop.f32.mrb[0].mxu0
    %5664 = vdwg.mxu0
    %5665 = vmatprep.subr.mxu0 0.0
    %v5666 = vand.u32 %v5558, 4294901760
    %v5667 = vsub.f32 %v5558, %v5666
    %v5668 = vand.u32 %v5667, 4294901760
    %v5669 = vsub.f32 %v5667, %v5668
    %v5670 = vand.u32 %v5669, 4294901760
    %5671 = vmatpush1.msra.mxu0 %v5670
    %5672 = vmatprep.subr.mxu0 0.0
    %v5673 = vand.u32 %v5559, 4294901760
    %v5674 = vsub.f32 %v5559, %v5673
    %v5675 = vand.u32 %v5674, 4294901760
    %v5676 = vsub.f32 %v5674, %v5675
    %v5677 = vand.u32 %v5676, 4294901760
    %5678 = vmatpush1.msra.mxu0 %v5677
    %5679 = vmatprep.subr.mxu0 0.0
    %v5680 = vand.u32 %v5560, 4294901760
    %v5681 = vsub.f32 %v5560, %v5680
    %v5682 = vand.u32 %v5681, 4294901760
    %v5683 = vsub.f32 %v5681, %v5682
    %v5684 = vand.u32 %v5683, 4294901760
    %5685 = vmatpush1.msra.mxu0 %v5684
    %5686 = vmatprep.subr.mxu0 0.0
    %v5687 = vand.u32 %v5561, 4294901760
    %v5688 = vsub.f32 %v5561, %v5687
    %v5689 = vand.u32 %v5688, 4294901760
    %v5690 = vsub.f32 %v5688, %v5689
    %v5691 = vand.u32 %v5690, 4294901760
    %5692 = vmatpush1.msra.mxu0 %v5691
    %5693 = vmatprep.subr.mxu0 0.0
    %v5694 = vand.u32 %v5562, 4294901760
    %v5695 = vsub.f32 %v5562, %v5694
    %v5696 = vand.u32 %v5695, 4294901760
    %v5697 = vsub.f32 %v5695, %v5696
    %v5698 = vand.u32 %v5697, 4294901760
    %5699 = vmatpush1.msra.mxu0 %v5698
    %5700 = vmatprep.subr.mxu0 0.0
    %v5701 = vand.u32 %v5563, 4294901760
    %v5702 = vsub.f32 %v5563, %v5701
    %v5703 = vand.u32 %v5702, 4294901760
    %v5704 = vsub.f32 %v5702, %v5703
    %v5705 = vand.u32 %v5704, 4294901760
    %5706 = vmatpush1.msra.mxu0 %v5705
    %5707 = vmatprep.subr.mxu0 0.0
    %v5708 = vand.u32 %v5564, 4294901760
    %v5709 = vsub.f32 %v5564, %v5708
    %v5710 = vand.u32 %v5709, 4294901760
    %v5711 = vsub.f32 %v5709, %v5710
    %v5712 = vand.u32 %v5711, 4294901760
    %5713 = vmatpush1.msra.mxu0 %v5712
    %5714 = vmatprep.subr.mxu0 0.0
    %v5715 = vand.u32 %v5565, 4294901760
    %v5716 = vsub.f32 %v5565, %v5715
    %v5717 = vand.u32 %v5716, 4294901760
    %v5718 = vsub.f32 %v5716, %v5717
    %v5719 = vand.u32 %v5718, 4294901760
    %5720 = vmatpush1.msra.mxu0 %v5719
    %5721 = vmatprep.subr.mxu0 0.0
    %v5722 = vand.u32 %v5566, 4294901760
    %v5723 = vsub.f32 %v5566, %v5722
    %v5724 = vand.u32 %v5723, 4294901760
    %v5725 = vsub.f32 %v5723, %v5724
    %v5726 = vand.u32 %v5725, 4294901760
    %5727 = vmatpush1.msra.mxu0 %v5726
    %5728 = vmatprep.subr.mxu0 0.0
    %v5729 = vand.u32 %v5567, 4294901760
    %v5730 = vsub.f32 %v5567, %v5729
    %v5731 = vand.u32 %v5730, 4294901760
    %v5732 = vsub.f32 %v5730, %v5731
    %v5733 = vand.u32 %v5732, 4294901760
    %5734 = vmatpush1.msra.mxu0 %v5733
    %5735 = vmatprep.subr.mxu0 0.0
    %v5736 = vand.u32 %v5568, 4294901760
    %v5737 = vsub.f32 %v5568, %v5736
    %v5738 = vand.u32 %v5737, 4294901760
    %v5739 = vsub.f32 %v5737, %v5738
    %v5740 = vand.u32 %v5739, 4294901760
    %5741 = vmatpush1.msra.mxu0 %v5740
    %5742 = vmatprep.subr.mxu0 0.0
    %v5743 = vand.u32 %v5569, 4294901760
    %v5744 = vsub.f32 %v5569, %v5743
    %v5745 = vand.u32 %v5744, 4294901760
    %v5746 = vsub.f32 %v5744, %v5745
    %v5747 = vand.u32 %v5746, 4294901760
    %5748 = vmatpush1.msra.mxu0 %v5747
    %5749 = vmatprep.subr.mxu0 0.0
    %v5750 = vand.u32 %v5570, 4294901760
    %v5751 = vsub.f32 %v5570, %v5750
    %v5752 = vand.u32 %v5751, 4294901760
    %v5753 = vsub.f32 %v5751, %v5752
    %v5754 = vand.u32 %v5753, 4294901760
    %5755 = vmatpush1.msra.mxu0 %v5754
    %5756 = vmatprep.subr.mxu0 0.0
    %v5757 = vand.u32 %v5571, 4294901760
    %v5758 = vsub.f32 %v5571, %v5757
    %v5759 = vand.u32 %v5758, 4294901760
    %v5760 = vsub.f32 %v5758, %v5759
    %v5761 = vand.u32 %v5760, 4294901760
    %5762 = vmatpush1.msra.mxu0 %v5761
    %5763 = vmatprep.subr.mxu0 0.0
    %v5764 = vand.u32 %v5572, 4294901760
    %v5765 = vsub.f32 %v5572, %v5764
    %v5766 = vand.u32 %v5765, 4294901760
    %v5767 = vsub.f32 %v5765, %v5766
    %v5768 = vand.u32 %v5767, 4294901760
    %5769 = vmatpush1.msra.mxu0 %v5768
    %5770 = vmatprep.subr.mxu0 0.0
    %v5771 = vand.u32 %v5573, 4294901760
    %v5772 = vsub.f32 %v5573, %v5771
    %v5773 = vand.u32 %v5772, 4294901760
    %v5774 = vsub.f32 %v5772, %v5773
    %v5775 = vand.u32 %v5774, 4294901760
    %5776 = vmatpush1.msra.mxu0 %v5775
    %5777 = vmatprep.subr.mxu0 0.0
    %5778 = vmatpush1.msra.mxu0 0.0
    %5779 = vmatprep.subr.mxu0 0.0
    %5780 = vmatpush1.msra.mxu0 0.0
    %5781 = vmatprep.subr.mxu0 0.0
    %5782 = vmatpush1.msra.mxu0 0.0
    %5783 = vmatprep.subr.mxu0 0.0
    %5784 = vmatpush1.msra.mxu0 0.0
    %5785 = vmatprep.subr.mxu0 0.0
    %5786 = vmatpush1.msra.mxu0 0.0
    %5787 = vmatprep.subr.mxu0 0.0
    %5788 = vmatpush1.msra.mxu0 0.0
    %5789 = vmatprep.subr.mxu0 0.0
    %5790 = vmatpush1.msra.mxu0 0.0
    %5791 = vmatprep.subr.mxu0 0.0
    %5792 = vmatpush1.msra.mxu0 0.0
    %5793 = vmatprep.subr.mxu0 0.0
    %5794 = vmatpush1.msra.mxu0 0.0
    %5795 = vmatprep.subr.mxu0 0.0
    %5796 = vmatpush1.msra.mxu0 0.0
    %5797 = vmatprep.subr.mxu0 0.0
    %5798 = vmatpush1.msra.mxu0 0.0
    %5799 = vmatprep.subr.mxu0 0.0
    %5800 = vmatpush1.msra.mxu0 0.0
    %5801 = vmatprep.subr.mxu0 0.0
    %5802 = vmatpush1.msra.mxu0 0.0
    %5803 = vmatprep.subr.mxu0 0.0
    %5804 = vmatpush1.msra.mxu0 0.0
    %5805 = vmatprep.subr.mxu0 0.0
    %5806 = vmatpush1.msra.mxu0 0.0
    %5807 = vmatprep.subr.mxu0 0.0
    %5808 = vmatpush1.msra.mxu0 0.0
    %5809 = vmatprep.mubr.f32.mxu0 0.0
    %v5810 = vand.u32 %v5555, 4294901760
    %5811 = vmatmul.mubr.f32.gmra.mrb[0].mxu0 %v5810
    %v5812 = vpop.f32.mrb[0].mxu0
    %v5813 = vadd.f32 %v5662, %v5812
    %v5814 = vpop.f32.mrb[0].mxu0
    %5815 = vdwg.mxu0
    %5816 = vmatprep.subr.mxu0 0.0
    %v5817 = vand.u32 %v5558, 4294901760
    %v5818 = vsub.f32 %v5558, %v5817
    %5819 = vmatpush1.msra.mxu0 %v5818
    %5820 = vmatprep.subr.mxu0 0.0
    %v5821 = vand.u32 %v5559, 4294901760
    %v5822 = vsub.f32 %v5559, %v5821
    %5823 = vmatpush1.msra.mxu0 %v5822
    %5824 = vmatprep.subr.mxu0 0.0
    %v5825 = vand.u32 %v5560, 4294901760
    %v5826 = vsub.f32 %v5560, %v5825
    %5827 = vmatpush1.msra.mxu0 %v5826
    %5828 = vmatprep.subr.mxu0 0.0
    %v5829 = vand.u32 %v5561, 4294901760
    %v5830 = vsub.f32 %v5561, %v5829
    %5831 = vmatpush1.msra.mxu0 %v5830
    %5832 = vmatprep.subr.mxu0 0.0
    %v5833 = vand.u32 %v5562, 4294901760
    %v5834 = vsub.f32 %v5562, %v5833
    %5835 = vmatpush1.msra.mxu0 %v5834
    %5836 = vmatprep.subr.mxu0 0.0
    %v5837 = vand.u32 %v5563, 4294901760
    %v5838 = vsub.f32 %v5563, %v5837
    %5839 = vmatpush1.msra.mxu0 %v5838
    %5840 = vmatprep.subr.mxu0 0.0
    %v5841 = vand.u32 %v5564, 4294901760
    %v5842 = vsub.f32 %v5564, %v5841
    %5843 = vmatpush1.msra.mxu0 %v5842
    %5844 = vmatprep.subr.mxu0 0.0
    %v5845 = vand.u32 %v5565, 4294901760
    %v5846 = vsub.f32 %v5565, %v5845
    %5847 = vmatpush1.msra.mxu0 %v5846
    %5848 = vmatprep.subr.mxu0 0.0
    %v5849 = vand.u32 %v5566, 4294901760
    %v5850 = vsub.f32 %v5566, %v5849
    %5851 = vmatpush1.msra.mxu0 %v5850
    %5852 = vmatprep.subr.mxu0 0.0
    %v5853 = vand.u32 %v5567, 4294901760
    %v5854 = vsub.f32 %v5567, %v5853
    %5855 = vmatpush1.msra.mxu0 %v5854
    %5856 = vmatprep.subr.mxu0 0.0
    %v5857 = vand.u32 %v5568, 4294901760
    %v5858 = vsub.f32 %v5568, %v5857
    %5859 = vmatpush1.msra.mxu0 %v5858
    %5860 = vmatprep.subr.mxu0 0.0
    %v5861 = vand.u32 %v5569, 4294901760
    %v5862 = vsub.f32 %v5569, %v5861
    %5863 = vmatpush1.msra.mxu0 %v5862
    %5864 = vmatprep.subr.mxu0 0.0
    %v5865 = vand.u32 %v5570, 4294901760
    %v5866 = vsub.f32 %v5570, %v5865
    %5867 = vmatpush1.msra.mxu0 %v5866
    %5868 = vmatprep.subr.mxu0 0.0
    %v5869 = vand.u32 %v5571, 4294901760
    %v5870 = vsub.f32 %v5571, %v5869
    %5871 = vmatpush1.msra.mxu0 %v5870
    %5872 = vmatprep.subr.mxu0 0.0
    %v5873 = vand.u32 %v5572, 4294901760
    %v5874 = vsub.f32 %v5572, %v5873
    %5875 = vmatpush1.msra.mxu0 %v5874
    %5876 = vmatprep.subr.mxu0 0.0
    %v5877 = vand.u32 %v5573, 4294901760
    %v5878 = vsub.f32 %v5573, %v5877
    %5879 = vmatpush1.msra.mxu0 %v5878
    %5880 = vmatprep.subr.mxu0 0.0
    %5881 = vmatpush1.msra.mxu0 0.0
    %5882 = vmatprep.subr.mxu0 0.0
    %5883 = vmatpush1.msra.mxu0 0.0
    %5884 = vmatprep.subr.mxu0 0.0
    %5885 = vmatpush1.msra.mxu0 0.0
    %5886 = vmatprep.subr.mxu0 0.0
    %5887 = vmatpush1.msra.mxu0 0.0
    %5888 = vmatprep.subr.mxu0 0.0
    %5889 = vmatpush1.msra.mxu0 0.0
    %5890 = vmatprep.subr.mxu0 0.0
    %5891 = vmatpush1.msra.mxu0 0.0
    %5892 = vmatprep.subr.mxu0 0.0
    %5893 = vmatpush1.msra.mxu0 0.0
    %5894 = vmatprep.subr.mxu0 0.0
    %5895 = vmatpush1.msra.mxu0 0.0
    %5896 = vmatprep.subr.mxu0 0.0
    %5897 = vmatpush1.msra.mxu0 0.0
    %5898 = vmatprep.subr.mxu0 0.0
    %5899 = vmatpush1.msra.mxu0 0.0
    %5900 = vmatprep.subr.mxu0 0.0
    %5901 = vmatpush1.msra.mxu0 0.0
    %5902 = vmatprep.subr.mxu0 0.0
    %5903 = vmatpush1.msra.mxu0 0.0
    %5904 = vmatprep.subr.mxu0 0.0
    %5905 = vmatpush1.msra.mxu0 0.0
    %5906 = vmatprep.subr.mxu0 0.0
    %5907 = vmatpush1.msra.mxu0 0.0
    %5908 = vmatprep.subr.mxu0 0.0
    %5909 = vmatpush1.msra.mxu0 0.0
    %5910 = vmatprep.subr.mxu0 0.0
    %5911 = vmatpush1.msra.mxu0 0.0
    %5912 = vmatprep.mubr.f32.mxu0 0.0
    %v5913 = vand.u32 %v5555, 4294901760
    %v5914 = vsub.f32 %v5555, %v5913
    %5915 = vmatmul.mubr.f32.gmra.mrb[0].mxu0 %v5914
    %v5916 = vpop.f32.mrb[0].mxu0
    %v5917 = vadd.f32 %v5813, %v5916
    %v5918 = vpop.f32.mrb[0].mxu0
    %5919 = vdwg.mxu0
    %5920 = vmatprep.subr.mxu0 0.0
    %v5921 = vand.u32 %v5558, 4294901760
    %5922 = vmatpush1.msra.mxu0 %v5921
    %5923 = vmatprep.subr.mxu0 0.0
    %v5924 = vand.u32 %v5559, 4294901760
    %5925 = vmatpush1.msra.mxu0 %v5924
    %5926 = vmatprep.subr.mxu0 0.0
    %v5927 = vand.u32 %v5560, 4294901760
    %5928 = vmatpush1.msra.mxu0 %v5927
    %5929 = vmatprep.subr.mxu0 0.0
    %v5930 = vand.u32 %v5561, 4294901760
    %5931 = vmatpush1.msra.mxu0 %v5930
    %5932 = vmatprep.subr.mxu0 0.0
    %v5933 = vand.u32 %v5562, 4294901760
    %5934 = vmatpush1.msra.mxu0 %v5933
    %5935 = vmatprep.subr.mxu0 0.0
    %v5936 = vand.u32 %v5563, 4294901760
    %5937 = vmatpush1.msra.mxu0 %v5936
    %5938 = vmatprep.subr.mxu0 0.0
    %v5939 = vand.u32 %v5564, 4294901760
    %5940 = vmatpush1.msra.mxu0 %v5939
    %5941 = vmatprep.subr.mxu0 0.0
    %v5942 = vand.u32 %v5565, 4294901760
    %5943 = vmatpush1.msra.mxu0 %v5942
    %5944 = vmatprep.subr.mxu0 0.0
    %v5945 = vand.u32 %v5566, 4294901760
    %5946 = vmatpush1.msra.mxu0 %v5945
    %5947 = vmatprep.subr.mxu0 0.0
    %v5948 = vand.u32 %v5567, 4294901760
    %5949 = vmatpush1.msra.mxu0 %v5948
    %5950 = vmatprep.subr.mxu0 0.0
    %v5951 = vand.u32 %v5568, 4294901760
    %5952 = vmatpush1.msra.mxu0 %v5951
    %5953 = vmatprep.subr.mxu0 0.0
    %v5954 = vand.u32 %v5569, 4294901760
    %5955 = vmatpush1.msra.mxu0 %v5954
    %5956 = vmatprep.subr.mxu0 0.0
    %v5957 = vand.u32 %v5570, 4294901760
    %5958 = vmatpush1.msra.mxu0 %v5957
    %5959 = vmatprep.subr.mxu0 0.0
    %v5960 = vand.u32 %v5571, 4294901760
    %5961 = vmatpush1.msra.mxu0 %v5960
    %5962 = vmatprep.subr.mxu0 0.0
    %v5963 = vand.u32 %v5572, 4294901760
    %5964 = vmatpush1.msra.mxu0 %v5963
    %5965 = vmatprep.subr.mxu0 0.0
    %v5966 = vand.u32 %v5573, 4294901760
    %5967 = vmatpush1.msra.mxu0 %v5966
    %5968 = vmatprep.subr.mxu0 0.0
    %5969 = vmatpush1.msra.mxu0 0.0
    %5970 = vmatprep.subr.mxu0 0.0
    %5971 = vmatpush1.msra.mxu0 0.0
    %5972 = vmatprep.subr.mxu0 0.0
    %5973 = vmatpush1.msra.mxu0 0.0
    %5974 = vmatprep.subr.mxu0 0.0
    %5975 = vmatpush1.msra.mxu0 0.0
    %5976 = vmatprep.subr.mxu0 0.0
    %5977 = vmatpush1.msra.mxu0 0.0
    %5978 = vmatprep.subr.mxu0 0.0
    %5979 = vmatpush1.msra.mxu0 0.0
    %5980 = vmatprep.subr.mxu0 0.0
    %5981 = vmatpush1.msra.mxu0 0.0
    %5982 = vmatprep.subr.mxu0 0.0
    %5983 = vmatpush1.msra.mxu0 0.0
    %5984 = vmatprep.subr.mxu0 0.0
    %5985 = vmatpush1.msra.mxu0 0.0
    %5986 = vmatprep.subr.mxu0 0.0
    %5987 = vmatpush1.msra.mxu0 0.0
    %5988 = vmatprep.subr.mxu0 0.0
    %5989 = vmatpush1.msra.mxu0 0.0
    %5990 = vmatprep.subr.mxu0 0.0
    %5991 = vmatpush1.msra.mxu0 0.0
    %5992 = vmatprep.subr.mxu0 0.0
    %5993 = vmatpush1.msra.mxu0 0.0
    %5994 = vmatprep.subr.mxu0 0.0
    %5995 = vmatpush1.msra.mxu0 0.0
    %5996 = vmatprep.subr.mxu0 0.0
    %5997 = vmatpush1.msra.mxu0 0.0
    %5998 = vmatprep.subr.mxu0 0.0
    %5999 = vmatpush1.msra.mxu0 0.0
    %6000 = vmatprep.mubr.f32.mxu0 0.0
    %v6001 = vand.u32 %v5555, 4294901760
    %v6002 = vsub.f32 %v5555, %v6001
    %v6003 = vand.u32 %v6002, 4294901760
    %6004 = vmatmul.mubr.f32.gmra.mrb[0].mxu0 %v6003
    %v6005 = vpop.f32.mrb[0].mxu0
    %v6006 = vadd.f32 %v5917, %v6005
    %v6007 = vpop.f32.mrb[0].mxu0
    %6008 = vdwg.mxu0
    %6009 = vmatprep.subr.mxu0 0.0
    %v6010 = vand.u32 %v5558, 4294901760
    %v6011 = vsub.f32 %v5558, %v6010
    %v6012 = vand.u32 %v6011, 4294901760
    %6013 = vmatpush1.msra.mxu0 %v6012
    %6014 = vmatprep.subr.mxu0 0.0
    %v6015 = vand.u32 %v5559, 4294901760
    %v6016 = vsub.f32 %v5559, %v6015
    %v6017 = vand.u32 %v6016, 4294901760
    %6018 = vmatpush1.msra.mxu0 %v6017
    %6019 = vmatprep.subr.mxu0 0.0
    %v6020 = vand.u32 %v5560, 4294901760
    %v6021 = vsub.f32 %v5560, %v6020
    %v6022 = vand.u32 %v6021, 4294901760
    %6023 = vmatpush1.msra.mxu0 %v6022
    %6024 = vmatprep.subr.mxu0 0.0
    %v6025 = vand.u32 %v5561, 4294901760
    %v6026 = vsub.f32 %v5561, %v6025
    %v6027 = vand.u32 %v6026, 4294901760
    %6028 = vmatpush1.msra.mxu0 %v6027
    %6029 = vmatprep.subr.mxu0 0.0
    %v6030 = vand.u32 %v5562, 4294901760
    %v6031 = vsub.f32 %v5562, %v6030
    %v6032 = vand.u32 %v6031, 4294901760
    %6033 = vmatpush1.msra.mxu0 %v6032
    %6034 = vmatprep.subr.mxu0 0.0
    %v6035 = vand.u32 %v5563, 4294901760
    %v6036 = vsub.f32 %v5563, %v6035
    %v6037 = vand.u32 %v6036, 4294901760
    %6038 = vmatpush1.msra.mxu0 %v6037
    %6039 = vmatprep.subr.mxu0 0.0
    %v6040 = vand.u32 %v5564, 4294901760
    %v6041 = vsub.f32 %v5564, %v6040
    %v6042 = vand.u32 %v6041, 4294901760
    %6043 = vmatpush1.msra.mxu0 %v6042
    %6044 = vmatprep.subr.mxu0 0.0
    %v6045 = vand.u32 %v5565, 4294901760
    %v6046 = vsub.f32 %v5565, %v6045
    %v6047 = vand.u32 %v6046, 4294901760
    %6048 = vmatpush1.msra.mxu0 %v6047
    %6049 = vmatprep.subr.mxu0 0.0
    %v6050 = vand.u32 %v5566, 4294901760
    %v6051 = vsub.f32 %v5566, %v6050
    %v6052 = vand.u32 %v6051, 4294901760
    %6053 = vmatpush1.msra.mxu0 %v6052
    %6054 = vmatprep.subr.mxu0 0.0
    %v6055 = vand.u32 %v5567, 4294901760
    %v6056 = vsub.f32 %v5567, %v6055
    %v6057 = vand.u32 %v6056, 4294901760
    %6058 = vmatpush1.msra.mxu0 %v6057
    %6059 = vmatprep.subr.mxu0 0.0
    %v6060 = vand.u32 %v5568, 4294901760
    %v6061 = vsub.f32 %v5568, %v6060
    %v6062 = vand.u32 %v6061, 4294901760
    %6063 = vmatpush1.msra.mxu0 %v6062
    %6064 = vmatprep.subr.mxu0 0.0
    %v6065 = vand.u32 %v5569, 4294901760
    %v6066 = vsub.f32 %v5569, %v6065
    %v6067 = vand.u32 %v6066, 4294901760
    %6068 = vmatpush1.msra.mxu0 %v6067
    %6069 = vmatprep.subr.mxu0 0.0
    %v6070 = vand.u32 %v5570, 4294901760
    %v6071 = vsub.f32 %v5570, %v6070
    %v6072 = vand.u32 %v6071, 4294901760
    %6073 = vmatpush1.msra.mxu0 %v6072
    %6074 = vmatprep.subr.mxu0 0.0
    %v6075 = vand.u32 %v5571, 4294901760
    %v6076 = vsub.f32 %v5571, %v6075
    %v6077 = vand.u32 %v6076, 4294901760
    %6078 = vmatpush1.msra.mxu0 %v6077
    %6079 = vmatprep.subr.mxu0 0.0
    %v6080 = vand.u32 %v5572, 4294901760
    %v6081 = vsub.f32 %v5572, %v6080
    %v6082 = vand.u32 %v6081, 4294901760
    %6083 = vmatpush1.msra.mxu0 %v6082
    %6084 = vmatprep.subr.mxu0 0.0
    %v6085 = vand.u32 %v5573, 4294901760
    %v6086 = vsub.f32 %v5573, %v6085
    %v6087 = vand.u32 %v6086, 4294901760
    %6088 = vmatpush1.msra.mxu0 %v6087
    %6089 = vmatprep.subr.mxu0 0.0
    %6090 = vmatpush1.msra.mxu0 0.0
    %6091 = vmatprep.subr.mxu0 0.0
    %6092 = vmatpush1.msra.mxu0 0.0
    %6093 = vmatprep.subr.mxu0 0.0
    %6094 = vmatpush1.msra.mxu0 0.0
    %6095 = vmatprep.subr.mxu0 0.0
    %6096 = vmatpush1.msra.mxu0 0.0
    %6097 = vmatprep.subr.mxu0 0.0
    %6098 = vmatpush1.msra.mxu0 0.0
    %6099 = vmatprep.subr.mxu0 0.0
    %6100 = vmatpush1.msra.mxu0 0.0
    %6101 = vmatprep.subr.mxu0 0.0
    %6102 = vmatpush1.msra.mxu0 0.0
    %6103 = vmatprep.subr.mxu0 0.0
    %6104 = vmatpush1.msra.mxu0 0.0
    %6105 = vmatprep.subr.mxu0 0.0
    %6106 = vmatpush1.msra.mxu0 0.0
    %6107 = vmatprep.subr.mxu0 0.0
    %6108 = vmatpush1.msra.mxu0 0.0
    %6109 = vmatprep.subr.mxu0 0.0
    %6110 = vmatpush1.msra.mxu0 0.0
    %6111 = vmatprep.subr.mxu0 0.0
    %6112 = vmatpush1.msra.mxu0 0.0
    %6113 = vmatprep.subr.mxu0 0.0
    %6114 = vmatpush1.msra.mxu0 0.0
    %6115 = vmatprep.subr.mxu0 0.0
    %6116 = vmatpush1.msra.mxu0 0.0
    %6117 = vmatprep.subr.mxu0 0.0
    %6118 = vmatpush1.msra.mxu0 0.0
    %6119 = vmatprep.subr.mxu0 0.0
    %6120 = vmatpush1.msra.mxu0 0.0
    %6121 = vmatprep.mubr.f32.mxu0 0.0
    %v6122 = vand.u32 %v5555, 4294901760
    %6123 = vmatmul.mubr.f32.gmra.mrb[0].mxu0 %v6122
    %v6124 = vpop.f32.mrb[0].mxu0
    %v6125 = vadd.f32 %v6006, %v6124
    %v6126 = vpop.f32.mrb[0].mxu0
    %6127 = vdwg.mxu0
    %6128 = vmatprep.subr.mxu0 0.0
    %v6129 = vand.u32 %v5558, 4294901760
    %6130 = vmatpush1.msra.mxu0 %v6129
    %6131 = vmatprep.subr.mxu0 0.0
    %v6132 = vand.u32 %v5559, 4294901760
    %6133 = vmatpush1.msra.mxu0 %v6132
    %6134 = vmatprep.subr.mxu0 0.0
    %v6135 = vand.u32 %v5560, 4294901760
    %6136 = vmatpush1.msra.mxu0 %v6135
    %6137 = vmatprep.subr.mxu0 0.0
    %v6138 = vand.u32 %v5561, 4294901760
    %6139 = vmatpush1.msra.mxu0 %v6138
    %6140 = vmatprep.subr.mxu0 0.0
    %v6141 = vand.u32 %v5562, 4294901760
    %6142 = vmatpush1.msra.mxu0 %v6141
    %6143 = vmatprep.subr.mxu0 0.0
    %v6144 = vand.u32 %v5563, 4294901760
    %6145 = vmatpush1.msra.mxu0 %v6144
    %6146 = vmatprep.subr.mxu0 0.0
    %v6147 = vand.u32 %v5564, 4294901760
    %6148 = vmatpush1.msra.mxu0 %v6147
    %6149 = vmatprep.subr.mxu0 0.0
    %v6150 = vand.u32 %v5565, 4294901760
    %6151 = vmatpush1.msra.mxu0 %v6150
    %6152 = vmatprep.subr.mxu0 0.0
    %v6153 = vand.u32 %v5566, 4294901760
    %6154 = vmatpush1.msra.mxu0 %v6153
    %6155 = vmatprep.subr.mxu0 0.0
    %v6156 = vand.u32 %v5567, 4294901760
    %6157 = vmatpush1.msra.mxu0 %v6156
    %6158 = vmatprep.subr.mxu0 0.0
    %v6159 = vand.u32 %v5568, 4294901760
    %6160 = vmatpush1.msra.mxu0 %v6159
    %6161 = vmatprep.subr.mxu0 0.0
    %v6162 = vand.u32 %v5569, 4294901760
    %6163 = vmatpush1.msra.mxu0 %v6162
    %6164 = vmatprep.subr.mxu0 0.0
    %v6165 = vand.u32 %v5570, 4294901760
    %6166 = vmatpush1.msra.mxu0 %v6165
    %6167 = vmatprep.subr.mxu0 0.0
    %v6168 = vand.u32 %v5571, 4294901760
    %6169 = vmatpush1.msra.mxu0 %v6168
    %6170 = vmatprep.subr.mxu0 0.0
    %v6171 = vand.u32 %v5572, 4294901760
    %6172 = vmatpush1.msra.mxu0 %v6171
    %6173 = vmatprep.subr.mxu0 0.0
    %v6174 = vand.u32 %v5573, 4294901760
    %6175 = vmatpush1.msra.mxu0 %v6174
    %6176 = vmatprep.subr.mxu0 0.0
    %6177 = vmatpush1.msra.mxu0 0.0
    %6178 = vmatprep.subr.mxu0 0.0
    %6179 = vmatpush1.msra.mxu0 0.0
    %6180 = vmatprep.subr.mxu0 0.0
    %6181 = vmatpush1.msra.mxu0 0.0
    %6182 = vmatprep.subr.mxu0 0.0
    %6183 = vmatpush1.msra.mxu0 0.0
    %6184 = vmatprep.subr.mxu0 0.0
    %6185 = vmatpush1.msra.mxu0 0.0
    %6186 = vmatprep.subr.mxu0 0.0
    %6187 = vmatpush1.msra.mxu0 0.0
    %6188 = vmatprep.subr.mxu0 0.0
    %6189 = vmatpush1.msra.mxu0 0.0
    %6190 = vmatprep.subr.mxu0 0.0
    %6191 = vmatpush1.msra.mxu0 0.0
    %6192 = vmatprep.subr.mxu0 0.0
    %6193 = vmatpush1.msra.mxu0 0.0
    %6194 = vmatprep.subr.mxu0 0.0
    %6195 = vmatpush1.msra.mxu0 0.0
    %6196 = vmatprep.subr.mxu0 0.0
    %6197 = vmatpush1.msra.mxu0 0.0
    %6198 = vmatprep.subr.mxu0 0.0
    %6199 = vmatpush1.msra.mxu0 0.0
    %6200 = vmatprep.subr.mxu0 0.0
    %6201 = vmatpush1.msra.mxu0 0.0
    %6202 = vmatprep.subr.mxu0 0.0
    %6203 = vmatpush1.msra.mxu0 0.0
    %6204 = vmatprep.subr.mxu0 0.0
    %6205 = vmatpush1.msra.mxu0 0.0
    %6206 = vmatprep.subr.mxu0 0.0
    %6207 = vmatpush1.msra.mxu0 0.0
    %6208 = vmatprep.mubr.f32.mxu0 0.0
    %v6209 = vand.u32 %v5555, 4294901760
    %6210 = vmatmul.mubr.f32.gmra.mrb[0].mxu0 %v6209
    %v6211 = vpop.f32.mrb[0].mxu0
    %v6212 = vadd.f32 %v6125, %v6211
    %v6213 = vpop.f32.mrb[0].mxu0
    %6214 = vdwg.mxu0
    %v6215 = vtanh.pop %v6212
    %v6216 = vadd.f32 %v5539, %v6215
    %s6217 = scalar_lea.vmem [#allocation2], %s5543
    %v6218 = vld [vmem:[%s6217] sm:$0x1]
    %s6219 = smul.u32 %s5542, 128
    %s6220 = scalar_lea.vmem [#allocation6], %s6219
    %v6221 = vld [vmem:[%s6220] sm:$0xff]
    %v6222 = vld [vmem:[%s6220 + $0x8] sm:$0xff]
    %v6223 = vld [vmem:[%s6220 + $0x10] sm:$0xff]
    %v6224 = vld [vmem:[%s6220 + $0x18] sm:$0xff]
    %v6225 = vld [vmem:[%s6220 + $0x20] sm:$0xff]
    %v6226 = vld [vmem:[%s6220 + $0x28] sm:$0xff]
    %v6227 = vld [vmem:[%s6220 + $0x30] sm:$0xff]
    %v6228 = vld [vmem:[%s6220 + $0x38] sm:$0xff]
    %v6229 = vld [vmem:[%s6220 + $0x40] sm:$0xff]
    %v6230 = vld [vmem:[%s6220 + $0x48] sm:$0xff]
    %v6231 = vld [vmem:[%s6220 + $0x50] sm:$0xff]
    %v6232 = vld [vmem:[%s6220 + $0x58] sm:$0xff]
    %v6233 = vld [vmem:[%s6220 + $0x60] sm:$0xff]
    %v6234 = vld [vmem:[%s6220 + $0x68] sm:$0xff]
    %v6235 = vld [vmem:[%s6220 + $0x70] sm:$0xff]
    %v6236 = vld [vmem:[%s6220 + $0x78] sm:$0xff]
    %6237 = vmatprep.subr.mxu0 0.0
    %v6238 = vand.u32 %v6221, 4294901760
    %6239 = vmatpush1.msra.mxu0 %v6238
    %6240 = vmatprep.subr.mxu0 0.0
    %v6241 = vand.u32 %v6222, 4294901760
    %6242 = vmatpush1.msra.mxu0 %v6241
    %6243 = vmatprep.subr.mxu0 0.0
    %v6244 = vand.u32 %v6223, 4294901760
    %6245 = vmatpush1.msra.mxu0 %v6244
    %6246 = vmatprep.subr.mxu0 0.0
    %v6247 = vand.u32 %v6224, 4294901760
    %6248 = vmatpush1.msra.mxu0 %v6247
    %6249 = vmatprep.subr.mxu0 0.0
    %v6250 = vand.u32 %v6225, 4294901760
    %6251 = vmatpush1.msra.mxu0 %v6250
    %6252 = vmatprep.subr.mxu0 0.0
    %v6253 = vand.u32 %v6226, 4294901760
    %6254 = vmatpush1.msra.mxu0 %v6253
    %6255 = vmatprep.subr.mxu0 0.0
    %v6256 = vand.u32 %v6227, 4294901760
    %6257 = vmatpush1.msra.mxu0 %v6256
    %6258 = vmatprep.subr.mxu0 0.0
    %v6259 = vand.u32 %v6228, 4294901760
    %6260 = vmatpush1.msra.mxu0 %v6259
    %6261 = vmatprep.subr.mxu0 0.0
    %v6262 = vand.u32 %v6229, 4294901760
    %6263 = vmatpush1.msra.mxu0 %v6262
    %6264 = vmatprep.subr.mxu0 0.0
    %v6265 = vand.u32 %v6230, 4294901760
    %6266 = vmatpush1.msra.mxu0 %v6265
    %6267 = vmatprep.subr.mxu0 0.0
    %v6268 = vand.u32 %v6231, 4294901760
    %6269 = vmatpush1.msra.mxu0 %v6268
    %6270 = vmatprep.subr.mxu0 0.0
    %v6271 = vand.u32 %v6232, 4294901760
    %6272 = vmatpush1.msra.mxu0 %v6271
    %6273 = vmatprep.subr.mxu0 0.0
    %v6274 = vand.u32 %v6233, 4294901760
    %6275 = vmatpush1.msra.mxu0 %v6274
    %6276 = vmatprep.subr.mxu0 0.0
    %v6277 = vand.u32 %v6234, 4294901760
    %6278 = vmatpush1.msra.mxu0 %v6277
    %6279 = vmatprep.subr.mxu0 0.0
    %v6280 = vand.u32 %v6235, 4294901760
    %6281 = vmatpush1.msra.mxu0 %v6280
    %6282 = vmatprep.subr.mxu0 0.0
    %v6283 = vand.u32 %v6236, 4294901760
    %6284 = vmatpush1.msra.mxu0 %v6283
    %6285 = vmatprep.subr.mxu0 0.0
    %6286 = vmatpush1.msra.mxu0 0.0
    %6287 = vmatprep.subr.mxu0 0.0
    %6288 = vmatpush1.msra.mxu0 0.0
    %6289 = vmatprep.subr.mxu0 0.0
    %6290 = vmatpush1.msra.mxu0 0.0
    %6291 = vmatprep.subr.mxu0 0.0
    %6292 = vmatpush1.msra.mxu0 0.0
    %6293 = vmatprep.subr.mxu0 0.0
    %6294 = vmatpush1.msra.mxu0 0.0
    %6295 = vmatprep.subr.mxu0 0.0
    %6296 = vmatpush1.msra.mxu0 0.0
    %6297 = vmatprep.subr.mxu0 0.0
    %6298 = vmatpush1.msra.mxu0 0.0
    %6299 = vmatprep.subr.mxu0 0.0
    %6300 = vmatpush1.msra.mxu0 0.0
    %6301 = vmatprep.subr.mxu0 0.0
    %6302 = vmatpush1.msra.mxu0 0.0
    %6303 = vmatprep.subr.mxu0 0.0
    %6304 = vmatpush1.msra.mxu0 0.0
    %6305 = vmatprep.subr.mxu0 0.0
    %6306 = vmatpush1.msra.mxu0 0.0
    %6307 = vmatprep.subr.mxu0 0.0
    %6308 = vmatpush1.msra.mxu0 0.0
    %6309 = vmatprep.subr.mxu0 0.0
    %6310 = vmatpush1.msra.mxu0 0.0
    %6311 = vmatprep.subr.mxu0 0.0
    %6312 = vmatpush1.msra.mxu0 0.0
    %6313 = vmatprep.subr.mxu0 0.0
    %6314 = vmatpush1.msra.mxu0 0.0
    %6315 = vmatprep.subr.mxu0 0.0
    %6316 = vmatpush1.msra.mxu0 0.0
    %6317 = vmatprep.mubr.f32.mxu0 0.0
    %v6318 = vand.u32 %v6218, 4294901760
    %v6319 = vsub.f32 %v6218, %v6318
    %v6320 = vand.u32 %v6319, 4294901760
    %v6321 = vsub.f32 %v6319, %v6320
    %v6322 = vand.u32 %v6321, 4294901760
    %6323 = vmatmul.mubr.f32.gmra.mrb[0].mxu0 %v6322
    %v6324 = vpop.f32.mrb[0].mxu0
    %v6325 = vadd.f32 0.0, %v6324
    %v6326 = vpop.f32.mrb[0].mxu0
    %6327 = vdwg.mxu0
    %6328 = vmatprep.subr.mxu0 0.0
    %v6329 = vand.u32 %v6221, 4294901760
    %v6330 = vsub.f32 %v6221, %v6329
    %v6331 = vand.u32 %v6330, 4294901760
    %v6332 = vsub.f32 %v6330, %v6331
    %v6333 = vand.u32 %v6332, 4294901760
    %6334 = vmatpush1.msra.mxu0 %v6333
    %6335 = vmatprep.subr.mxu0 0.0
    %v6336 = vand.u32 %v6222, 4294901760
    %v6337 = vsub.f32 %v6222, %v6336
    %v6338 = vand.u32 %v6337, 4294901760
    %v6339 = vsub.f32 %v6337, %v6338
    %v6340 = vand.u32 %v6339, 4294901760
    %6341 = vmatpush1.msra.mxu0 %v6340
    %6342 = vmatprep.subr.mxu0 0.0
    %v6343 = vand.u32 %v6223, 4294901760
    %v6344 = vsub.f32 %v6223, %v6343
    %v6345 = vand.u32 %v6344, 4294901760
    %v6346 = vsub.f32 %v6344, %v6345
    %v6347 = vand.u32 %v6346, 4294901760
    %6348 = vmatpush1.msra.mxu0 %v6347
    %6349 = vmatprep.subr.mxu0 0.0
    %v6350 = vand.u32 %v6224, 4294901760
    %v6351 = vsub.f32 %v6224, %v6350
    %v6352 = vand.u32 %v6351, 4294901760
    %v6353 = vsub.f32 %v6351, %v6352
    %v6354 = vand.u32 %v6353, 4294901760
    %6355 = vmatpush1.msra.mxu0 %v6354
    %6356 = vmatprep.subr.mxu0 0.0
    %v6357 = vand.u32 %v6225, 4294901760
    %v6358 = vsub.f32 %v6225, %v6357
    %v6359 = vand.u32 %v6358, 4294901760
    %v6360 = vsub.f32 %v6358, %v6359
    %v6361 = vand.u32 %v6360, 4294901760
    %6362 = vmatpush1.msra.mxu0 %v6361
    %6363 = vmatprep.subr.mxu0 0.0
    %v6364 = vand.u32 %v6226, 4294901760
    %v6365 = vsub.f32 %v6226, %v6364
    %v6366 = vand.u32 %v6365, 4294901760
    %v6367 = vsub.f32 %v6365, %v6366
    %v6368 = vand.u32 %v6367, 4294901760
    %6369 = vmatpush1.msra.mxu0 %v6368
    %6370 = vmatprep.subr.mxu0 0.0
    %v6371 = vand.u32 %v6227, 4294901760
    %v6372 = vsub.f32 %v6227, %v6371
    %v6373 = vand.u32 %v6372, 4294901760
    %v6374 = vsub.f32 %v6372, %v6373
    %v6375 = vand.u32 %v6374, 4294901760
    %6376 = vmatpush1.msra.mxu0 %v6375
    %6377 = vmatprep.subr.mxu0 0.0
    %v6378 = vand.u32 %v6228, 4294901760
    %v6379 = vsub.f32 %v6228, %v6378
    %v6380 = vand.u32 %v6379, 4294901760
    %v6381 = vsub.f32 %v6379, %v6380
    %v6382 = vand.u32 %v6381, 4294901760
    %6383 = vmatpush1.msra.mxu0 %v6382
    %6384 = vmatprep.subr.mxu0 0.0
    %v6385 = vand.u32 %v6229, 4294901760
    %v6386 = vsub.f32 %v6229, %v6385
    %v6387 = vand.u32 %v6386, 4294901760
    %v6388 = vsub.f32 %v6386, %v6387
    %v6389 = vand.u32 %v6388, 4294901760
    %6390 = vmatpush1.msra.mxu0 %v6389
    %6391 = vmatprep.subr.mxu0 0.0
    %v6392 = vand.u32 %v6230, 4294901760
    %v6393 = vsub.f32 %v6230, %v6392
    %v6394 = vand.u32 %v6393, 4294901760
    %v6395 = vsub.f32 %v6393, %v6394
    %v6396 = vand.u32 %v6395, 4294901760
    %6397 = vmatpush1.msra.mxu0 %v6396
    %6398 = vmatprep.subr.mxu0 0.0
    %v6399 = vand.u32 %v6231, 4294901760
    %v6400 = vsub.f32 %v6231, %v6399
    %v6401 = vand.u32 %v6400, 4294901760
    %v6402 = vsub.f32 %v6400, %v6401
    %v6403 = vand.u32 %v6402, 4294901760
    %6404 = vmatpush1.msra.mxu0 %v6403
    %6405 = vmatprep.subr.mxu0 0.0
    %v6406 = vand.u32 %v6232, 4294901760
    %v6407 = vsub.f32 %v6232, %v6406
    %v6408 = vand.u32 %v6407, 4294901760
    %v6409 = vsub.f32 %v6407, %v6408
    %v6410 = vand.u32 %v6409, 4294901760
    %6411 = vmatpush1.msra.mxu0 %v6410
    %6412 = vmatprep.subr.mxu0 0.0
    %v6413 = vand.u32 %v6233, 4294901760
    %v6414 = vsub.f32 %v6233, %v6413
    %v6415 = vand.u32 %v6414, 4294901760
    %v6416 = vsub.f32 %v6414, %v6415
    %v6417 = vand.u32 %v6416, 4294901760
    %6418 = vmatpush1.msra.mxu0 %v6417
    %6419 = vmatprep.subr.mxu0 0.0
    %v6420 = vand.u32 %v6234, 4294901760
    %v6421 = vsub.f32 %v6234, %v6420
    %v6422 = vand.u32 %v6421, 4294901760
    %v6423 = vsub.f32 %v6421, %v6422
    %v6424 = vand.u32 %v6423, 4294901760
    %6425 = vmatpush1.msra.mxu0 %v6424
    %6426 = vmatprep.subr.mxu0 0.0
    %v6427 = vand.u32 %v6235, 4294901760
    %v6428 = vsub.f32 %v6235, %v6427
    %v6429 = vand.u32 %v6428, 4294901760
    %v6430 = vsub.f32 %v6428, %v6429
    %v6431 = vand.u32 %v6430, 4294901760
    %6432 = vmatpush1.msra.mxu0 %v6431
    %6433 = vmatprep.subr.mxu0 0.0
    %v6434 = vand.u32 %v6236, 4294901760
    %v6435 = vsub.f32 %v6236, %v6434
    %v6436 = vand.u32 %v6435, 4294901760
    %v6437 = vsub.f32 %v6435, %v6436
    %v6438 = vand.u32 %v6437, 4294901760
    %6439 = vmatpush1.msra.mxu0 %v6438
    %6440 = vmatprep.subr.mxu0 0.0
    %6441 = vmatpush1.msra.mxu0 0.0
    %6442 = vmatprep.subr.mxu0 0.0
    %6443 = vmatpush1.msra.mxu0 0.0
    %6444 = vmatprep.subr.mxu0 0.0
    %6445 = vmatpush1.msra.mxu0 0.0
    %6446 = vmatprep.subr.mxu0 0.0
    %6447 = vmatpush1.msra.mxu0 0.0
    %6448 = vmatprep.subr.mxu0 0.0
    %6449 = vmatpush1.msra.mxu0 0.0
    %6450 = vmatprep.subr.mxu0 0.0
    %6451 = vmatpush1.msra.mxu0 0.0
    %6452 = vmatprep.subr.mxu0 0.0
    %6453 = vmatpush1.msra.mxu0 0.0
    %6454 = vmatprep.subr.mxu0 0.0
    %6455 = vmatpush1.msra.mxu0 0.0
    %6456 = vmatprep.subr.mxu0 0.0
    %6457 = vmatpush1.msra.mxu0 0.0
    %6458 = vmatprep.subr.mxu0 0.0
    %6459 = vmatpush1.msra.mxu0 0.0
    %6460 = vmatprep.subr.mxu0 0.0
    %6461 = vmatpush1.msra.mxu0 0.0
    %6462 = vmatprep.subr.mxu0 0.0
    %6463 = vmatpush1.msra.mxu0 0.0
    %6464 = vmatprep.subr.mxu0 0.0
    %6465 = vmatpush1.msra.mxu0 0.0
    %6466 = vmatprep.subr.mxu0 0.0
    %6467 = vmatpush1.msra.mxu0 0.0
    %6468 = vmatprep.subr.mxu0 0.0
    %6469 = vmatpush1.msra.mxu0 0.0
    %6470 = vmatprep.subr.mxu0 0.0
    %6471 = vmatpush1.msra.mxu0 0.0
    %6472 = vmatprep.mubr.f32.mxu0 0.0
    %v6473 = vand.u32 %v6218, 4294901760
    %6474 = vmatmul.mubr.f32.gmra.mrb[0].mxu0 %v6473
    %v6475 = vpop.f32.mrb[0].mxu0
    %v6476 = vadd.f32 %v6325, %v6475
    %v6477 = vpop.f32.mrb[0].mxu0
    %6478 = vdwg.mxu0
    %6479 = vmatprep.subr.mxu0 0.0
    %v6480 = vand.u32 %v6221, 4294901760
    %v6481 = vsub.f32 %v6221, %v6480
    %6482 = vmatpush1.msra.mxu0 %v6481
    %6483 = vmatprep.subr.mxu0 0.0
    %v6484 = vand.u32 %v6222, 4294901760
    %v6485 = vsub.f32 %v6222, %v6484
    %6486 = vmatpush1.msra.mxu0 %v6485
    %6487 = vmatprep.subr.mxu0 0.0
    %v6488 = vand.u32 %v6223, 4294901760
    %v6489 = vsub.f32 %v6223, %v6488
    %6490 = vmatpush1.msra.mxu0 %v6489
    %6491 = vmatprep.subr.mxu0 0.0
    %v6492 = vand.u32 %v6224, 4294901760
    %v6493 = vsub.f32 %v6224, %v6492
    %6494 = vmatpush1.msra.mxu0 %v6493
    %6495 = vmatprep.subr.mxu0 0.0
    %v6496 = vand.u32 %v6225, 4294901760
    %v6497 = vsub.f32 %v6225, %v6496
    %6498 = vmatpush1.msra.mxu0 %v6497
    %6499 = vmatprep.subr.mxu0 0.0
    %v6500 = vand.u32 %v6226, 4294901760
    %v6501 = vsub.f32 %v6226, %v6500
    %6502 = vmatpush1.msra.mxu0 %v6501
    %6503 = vmatprep.subr.mxu0 0.0
    %v6504 = vand.u32 %v6227, 4294901760
    %v6505 = vsub.f32 %v6227, %v6504
    %6506 = vmatpush1.msra.mxu0 %v6505
    %6507 = vmatprep.subr.mxu0 0.0
    %v6508 = vand.u32 %v6228, 4294901760
    %v6509 = vsub.f32 %v6228, %v6508
    %6510 = vmatpush1.msra.mxu0 %v6509
    %6511 = vmatprep.subr.mxu0 0.0
    %v6512 = vand.u32 %v6229, 4294901760
    %v6513 = vsub.f32 %v6229, %v6512
    %6514 = vmatpush1.msra.mxu0 %v6513
    %6515 = vmatprep.subr.mxu0 0.0
    %v6516 = vand.u32 %v6230, 4294901760
    %v6517 = vsub.f32 %v6230, %v6516
    %6518 = vmatpush1.msra.mxu0 %v6517
    %6519 = vmatprep.subr.mxu0 0.0
    %v6520 = vand.u32 %v6231, 4294901760
    %v6521 = vsub.f32 %v6231, %v6520
    %6522 = vmatpush1.msra.mxu0 %v6521
    %6523 = vmatprep.subr.mxu0 0.0
    %v6524 = vand.u32 %v6232, 4294901760
    %v6525 = vsub.f32 %v6232, %v6524
    %6526 = vmatpush1.msra.mxu0 %v6525
    %6527 = vmatprep.subr.mxu0 0.0
    %v6528 = vand.u32 %v6233, 4294901760
    %v6529 = vsub.f32 %v6233, %v6528
    %6530 = vmatpush1.msra.mxu0 %v6529
    %6531 = vmatprep.subr.mxu0 0.0
    %v6532 = vand.u32 %v6234, 4294901760
    %v6533 = vsub.f32 %v6234, %v6532
    %6534 = vmatpush1.msra.mxu0 %v6533
    %6535 = vmatprep.subr.mxu0 0.0
    %v6536 = vand.u32 %v6235, 4294901760
    %v6537 = vsub.f32 %v6235, %v6536
    %6538 = vmatpush1.msra.mxu0 %v6537
    %6539 = vmatprep.subr.mxu0 0.0
    %v6540 = vand.u32 %v6236, 4294901760
    %v6541 = vsub.f32 %v6236, %v6540
    %6542 = vmatpush1.msra.mxu0 %v6541
    %6543 = vmatprep.subr.mxu0 0.0
    %6544 = vmatpush1.msra.mxu0 0.0
    %6545 = vmatprep.subr.mxu0 0.0
    %6546 = vmatpush1.msra.mxu0 0.0
    %6547 = vmatprep.subr.mxu0 0.0
    %6548 = vmatpush1.msra.mxu0 0.0
    %6549 = vmatprep.subr.mxu0 0.0
    %6550 = vmatpush1.msra.mxu0 0.0
    %6551 = vmatprep.subr.mxu0 0.0
    %6552 = vmatpush1.msra.mxu0 0.0
    %6553 = vmatprep.subr.mxu0 0.0
    %6554 = vmatpush1.msra.mxu0 0.0
    %6555 = vmatprep.subr.mxu0 0.0
    %6556 = vmatpush1.msra.mxu0 0.0
    %6557 = vmatprep.subr.mxu0 0.0
    %6558 = vmatpush1.msra.mxu0 0.0
    %6559 = vmatprep.subr.mxu0 0.0
    %6560 = vmatpush1.msra.mxu0 0.0
    %6561 = vmatprep.subr.mxu0 0.0
    %6562 = vmatpush1.msra.mxu0 0.0
    %6563 = vmatprep.subr.mxu0 0.0
    %6564 = vmatpush1.msra.mxu0 0.0
    %6565 = vmatprep.subr.mxu0 0.0
    %6566 = vmatpush1.msra.mxu0 0.0
    %6567 = vmatprep.subr.mxu0 0.0
    %6568 = vmatpush1.msra.mxu0 0.0
    %6569 = vmatprep.subr.mxu0 0.0
    %6570 = vmatpush1.msra.mxu0 0.0
    %6571 = vmatprep.subr.mxu0 0.0
    %6572 = vmatpush1.msra.mxu0 0.0
    %6573 = vmatprep.subr.mxu0 0.0
    %6574 = vmatpush1.msra.mxu0 0.0
    %6575 = vmatprep.mubr.f32.mxu0 0.0
    %v6576 = vand.u32 %v6218, 4294901760
    %v6577 = vsub.f32 %v6218, %v6576
    %6578 = vmatmul.mubr.f32.gmra.mrb[0].mxu0 %v6577
    %v6579 = vpop.f32.mrb[0].mxu0
    %v6580 = vadd.f32 %v6476, %v6579
    %v6581 = vpop.f32.mrb[0].mxu0
    %6582 = vdwg.mxu0
    %6583 = vmatprep.subr.mxu0 0.0
    %v6584 = vand.u32 %v6221, 4294901760
    %6585 = vmatpush1.msra.mxu0 %v6584
    %6586 = vmatprep.subr.mxu0 0.0
    %v6587 = vand.u32 %v6222, 4294901760
    %6588 = vmatpush1.msra.mxu0 %v6587
    %6589 = vmatprep.subr.mxu0 0.0
    %v6590 = vand.u32 %v6223, 4294901760
    %6591 = vmatpush1.msra.mxu0 %v6590
    %6592 = vmatprep.subr.mxu0 0.0
    %v6593 = vand.u32 %v6224, 4294901760
    %6594 = vmatpush1.msra.mxu0 %v6593
    %6595 = vmatprep.subr.mxu0 0.0
    %v6596 = vand.u32 %v6225, 4294901760
    %6597 = vmatpush1.msra.mxu0 %v6596
    %6598 = vmatprep.subr.mxu0 0.0
    %v6599 = vand.u32 %v6226, 4294901760
    %6600 = vmatpush1.msra.mxu0 %v6599
    %6601 = vmatprep.subr.mxu0 0.0
    %v6602 = vand.u32 %v6227, 4294901760
    %6603 = vmatpush1.msra.mxu0 %v6602
    %6604 = vmatprep.subr.mxu0 0.0
    %v6605 = vand.u32 %v6228, 4294901760
    %6606 = vmatpush1.msra.mxu0 %v6605
    %6607 = vmatprep.subr.mxu0 0.0
    %v6608 = vand.u32 %v6229, 4294901760
    %6609 = vmatpush1.msra.mxu0 %v6608
    %6610 = vmatprep.subr.mxu0 0.0
    %v6611 = vand.u32 %v6230, 4294901760
    %6612 = vmatpush1.msra.mxu0 %v6611
    %6613 = vmatprep.subr.mxu0 0.0
    %v6614 = vand.u32 %v6231, 4294901760
    %6615 = vmatpush1.msra.mxu0 %v6614
    %6616 = vmatprep.subr.mxu0 0.0
    %v6617 = vand.u32 %v6232, 4294901760
    %6618 = vmatpush1.msra.mxu0 %v6617
    %6619 = vmatprep.subr.mxu0 0.0
    %v6620 = vand.u32 %v6233, 4294901760
    %6621 = vmatpush1.msra.mxu0 %v6620
    %6622 = vmatprep.subr.mxu0 0.0
    %v6623 = vand.u32 %v6234, 4294901760
    %6624 = vmatpush1.msra.mxu0 %v6623
    %6625 = vmatprep.subr.mxu0 0.0
    %v6626 = vand.u32 %v6235, 4294901760
    %6627 = vmatpush1.msra.mxu0 %v6626
    %6628 = vmatprep.subr.mxu0 0.0
    %v6629 = vand.u32 %v6236, 4294901760
    %6630 = vmatpush1.msra.mxu0 %v6629
    %6631 = vmatprep.subr.mxu0 0.0
    %6632 = vmatpush1.msra.mxu0 0.0
    %6633 = vmatprep.subr.mxu0 0.0
    %6634 = vmatpush1.msra.mxu0 0.0
    %6635 = vmatprep.subr.mxu0 0.0
    %6636 = vmatpush1.msra.mxu0 0.0
    %6637 = vmatprep.subr.mxu0 0.0
    %6638 = vmatpush1.msra.mxu0 0.0
    %6639 = vmatprep.subr.mxu0 0.0
    %6640 = vmatpush1.msra.mxu0 0.0
    %6641 = vmatprep.subr.mxu0 0.0
    %6642 = vmatpush1.msra.mxu0 0.0
    %6643 = vmatprep.subr.mxu0 0.0
    %6644 = vmatpush1.msra.mxu0 0.0
    %6645 = vmatprep.subr.mxu0 0.0
    %6646 = vmatpush1.msra.mxu0 0.0
    %6647 = vmatprep.subr.mxu0 0.0
    %6648 = vmatpush1.msra.mxu0 0.0
    %6649 = vmatprep.subr.mxu0 0.0
    %6650 = vmatpush1.msra.mxu0 0.0
    %6651 = vmatprep.subr.mxu0 0.0
    %6652 = vmatpush1.msra.mxu0 0.0
    %6653 = vmatprep.subr.mxu0 0.0
    %6654 = vmatpush1.msra.mxu0 0.0
    %6655 = vmatprep.subr.mxu0 0.0
    %6656 = vmatpush1.msra.mxu0 0.0
    %6657 = vmatprep.subr.mxu0 0.0
    %6658 = vmatpush1.msra.mxu0 0.0
    %6659 = vmatprep.subr.mxu0 0.0
    %6660 = vmatpush1.msra.mxu0 0.0
    %6661 = vmatprep.subr.mxu0 0.0
    %6662 = vmatpush1.msra.mxu0 0.0
    %6663 = vmatprep.mubr.f32.mxu0 0.0
    %v6664 = vand.u32 %v6218, 4294901760
    %v6665 = vsub.f32 %v6218, %v6664
    %v6666 = vand.u32 %v6665, 4294901760
    %6667 = vmatmul.mubr.f32.gmra.mrb[0].mxu0 %v6666
    %v6668 = vpop.f32.mrb[0].mxu0
    %v6669 = vadd.f32 %v6580, %v6668
    %v6670 = vpop.f32.mrb[0].mxu0
    %6671 = vdwg.mxu0
    %6672 = vmatprep.subr.mxu0 0.0
    %v6673 = vand.u32 %v6221, 4294901760
    %v6674 = vsub.f32 %v6221, %v6673
    %v6675 = vand.u32 %v6674, 4294901760
    %6676 = vmatpush1.msra.mxu0 %v6675
    %6677 = vmatprep.subr.mxu0 0.0
    %v6678 = vand.u32 %v6222, 4294901760
    %v6679 = vsub.f32 %v6222, %v6678
    %v6680 = vand.u32 %v6679, 4294901760
    %6681 = vmatpush1.msra.mxu0 %v6680
    %6682 = vmatprep.subr.mxu0 0.0
    %v6683 = vand.u32 %v6223, 4294901760
    %v6684 = vsub.f32 %v6223, %v6683
    %v6685 = vand.u32 %v6684, 4294901760
    %6686 = vmatpush1.msra.mxu0 %v6685
    %6687 = vmatprep.subr.mxu0 0.0
    %v6688 = vand.u32 %v6224, 4294901760
    %v6689 = vsub.f32 %v6224, %v6688
    %v6690 = vand.u32 %v6689, 4294901760
    %6691 = vmatpush1.msra.mxu0 %v6690
    %6692 = vmatprep.subr.mxu0 0.0
    %v6693 = vand.u32 %v6225, 4294901760
    %v6694 = vsub.f32 %v6225, %v6693
    %v6695 = vand.u32 %v6694, 4294901760
    %6696 = vmatpush1.msra.mxu0 %v6695
    %6697 = vmatprep.subr.mxu0 0.0
    %v6698 = vand.u32 %v6226, 4294901760
    %v6699 = vsub.f32 %v6226, %v6698
    %v6700 = vand.u32 %v6699, 4294901760
    %6701 = vmatpush1.msra.mxu0 %v6700
    %6702 = vmatprep.subr.mxu0 0.0
    %v6703 = vand.u32 %v6227, 4294901760
    %v6704 = vsub.f32 %v6227, %v6703
    %v6705 = vand.u32 %v6704, 4294901760
    %6706 = vmatpush1.msra.mxu0 %v6705
    %6707 = vmatprep.subr.mxu0 0.0
    %v6708 = vand.u32 %v6228, 4294901760
    %v6709 = vsub.f32 %v6228, %v6708
    %v6710 = vand.u32 %v6709, 4294901760
    %6711 = vmatpush1.msra.mxu0 %v6710
    %6712 = vmatprep.subr.mxu0 0.0
    %v6713 = vand.u32 %v6229, 4294901760
    %v6714 = vsub.f32 %v6229, %v6713
    %v6715 = vand.u32 %v6714, 4294901760
    %6716 = vmatpush1.msra.mxu0 %v6715
    %6717 = vmatprep.subr.mxu0 0.0
    %v6718 = vand.u32 %v6230, 4294901760
    %v6719 = vsub.f32 %v6230, %v6718
    %v6720 = vand.u32 %v6719, 4294901760
    %6721 = vmatpush1.msra.mxu0 %v6720
    %6722 = vmatprep.subr.mxu0 0.0
    %v6723 = vand.u32 %v6231, 4294901760
    %v6724 = vsub.f32 %v6231, %v6723
    %v6725 = vand.u32 %v6724, 4294901760
    %6726 = vmatpush1.msra.mxu0 %v6725
    %6727 = vmatprep.subr.mxu0 0.0
    %v6728 = vand.u32 %v6232, 4294901760
    %v6729 = vsub.f32 %v6232, %v6728
    %v6730 = vand.u32 %v6729, 4294901760
    %6731 = vmatpush1.msra.mxu0 %v6730
    %6732 = vmatprep.subr.mxu0 0.0
    %v6733 = vand.u32 %v6233, 4294901760
    %v6734 = vsub.f32 %v6233, %v6733
    %v6735 = vand.u32 %v6734, 4294901760
    %6736 = vmatpush1.msra.mxu0 %v6735
    %6737 = vmatprep.subr.mxu0 0.0
    %v6738 = vand.u32 %v6234, 4294901760
    %v6739 = vsub.f32 %v6234, %v6738
    %v6740 = vand.u32 %v6739, 4294901760
    %6741 = vmatpush1.msra.mxu0 %v6740
    %6742 = vmatprep.subr.mxu0 0.0
    %v6743 = vand.u32 %v6235, 4294901760
    %v6744 = vsub.f32 %v6235, %v6743
    %v6745 = vand.u32 %v6744, 4294901760
    %6746 = vmatpush1.msra.mxu0 %v6745
    %6747 = vmatprep.subr.mxu0 0.0
    %v6748 = vand.u32 %v6236, 4294901760
    %v6749 = vsub.f32 %v6236, %v6748
    %v6750 = vand.u32 %v6749, 4294901760
    %6751 = vmatpush1.msra.mxu0 %v6750
    %6752 = vmatprep.subr.mxu0 0.0
    %6753 = vmatpush1.msra.mxu0 0.0
    %6754 = vmatprep.subr.mxu0 0.0
    %6755 = vmatpush1.msra.mxu0 0.0
    %6756 = vmatprep.subr.mxu0 0.0
    %6757 = vmatpush1.msra.mxu0 0.0
    %6758 = vmatprep.subr.mxu0 0.0
    %6759 = vmatpush1.msra.mxu0 0.0
    %6760 = vmatprep.subr.mxu0 0.0
    %6761 = vmatpush1.msra.mxu0 0.0
    %6762 = vmatprep.subr.mxu0 0.0
    %6763 = vmatpush1.msra.mxu0 0.0
    %6764 = vmatprep.subr.mxu0 0.0
    %6765 = vmatpush1.msra.mxu0 0.0
    %6766 = vmatprep.subr.mxu0 0.0
    %6767 = vmatpush1.msra.mxu0 0.0
    %6768 = vmatprep.subr.mxu0 0.0
    %6769 = vmatpush1.msra.mxu0 0.0
    %6770 = vmatprep.subr.mxu0 0.0
    %6771 = vmatpush1.msra.mxu0 0.0
    %6772 = vmatprep.subr.mxu0 0.0
    %6773 = vmatpush1.msra.mxu0 0.0
    %6774 = vmatprep.subr.mxu0 0.0
    %6775 = vmatpush1.msra.mxu0 0.0
    %6776 = vmatprep.subr.mxu0 0.0
    %6777 = vmatpush1.msra.mxu0 0.0
    %6778 = vmatprep.subr.mxu0 0.0
    %6779 = vmatpush1.msra.mxu0 0.0
    %6780 = vmatprep.subr.mxu0 0.0
    %6781 = vmatpush1.msra.mxu0 0.0
    %6782 = vmatprep.subr.mxu0 0.0
    %6783 = vmatpush1.msra.mxu0 0.0
    %6784 = vmatprep.mubr.f32.mxu0 0.0
    %v6785 = vand.u32 %v6218, 4294901760
    %6786 = vmatmul.mubr.f32.gmra.mrb[0].mxu0 %v6785
    %v6787 = vpop.f32.mrb[0].mxu0
    %v6788 = vadd.f32 %v6669, %v6787
    %v6789 = vpop.f32.mrb[0].mxu0
    %6790 = vdwg.mxu0
    %6791 = vmatprep.subr.mxu0 0.0
    %v6792 = vand.u32 %v6221, 4294901760
    %6793 = vmatpush1.msra.mxu0 %v6792
    %6794 = vmatprep.subr.mxu0 0.0
    %v6795 = vand.u32 %v6222, 4294901760
    %6796 = vmatpush1.msra.mxu0 %v6795
    %6797 = vmatprep.subr.mxu0 0.0
    %v6798 = vand.u32 %v6223, 4294901760
    %6799 = vmatpush1.msra.mxu0 %v6798
    %6800 = vmatprep.subr.mxu0 0.0
    %v6801 = vand.u32 %v6224, 4294901760
    %6802 = vmatpush1.msra.mxu0 %v6801
    %6803 = vmatprep.subr.mxu0 0.0
    %v6804 = vand.u32 %v6225, 4294901760
    %6805 = vmatpush1.msra.mxu0 %v6804
    %6806 = vmatprep.subr.mxu0 0.0
    %v6807 = vand.u32 %v6226, 4294901760
    %6808 = vmatpush1.msra.mxu0 %v6807
    %6809 = vmatprep.subr.mxu0 0.0
    %v6810 = vand.u32 %v6227, 4294901760
    %6811 = vmatpush1.msra.mxu0 %v6810
    %6812 = vmatprep.subr.mxu0 0.0
    %v6813 = vand.u32 %v6228, 4294901760
    %6814 = vmatpush1.msra.mxu0 %v6813
    %6815 = vmatprep.subr.mxu0 0.0
    %v6816 = vand.u32 %v6229, 4294901760
    %6817 = vmatpush1.msra.mxu0 %v6816
    %6818 = vmatprep.subr.mxu0 0.0
    %v6819 = vand.u32 %v6230, 4294901760
    %6820 = vmatpush1.msra.mxu0 %v6819
    %6821 = vmatprep.subr.mxu0 0.0
    %v6822 = vand.u32 %v6231, 4294901760
    %6823 = vmatpush1.msra.mxu0 %v6822
    %6824 = vmatprep.subr.mxu0 0.0
    %v6825 = vand.u32 %v6232, 4294901760
    %6826 = vmatpush1.msra.mxu0 %v6825
    %6827 = vmatprep.subr.mxu0 0.0
    %v6828 = vand.u32 %v6233, 4294901760
    %6829 = vmatpush1.msra.mxu0 %v6828
    %6830 = vmatprep.subr.mxu0 0.0
    %v6831 = vand.u32 %v6234, 4294901760
    %6832 = vmatpush1.msra.mxu0 %v6831
    %6833 = vmatprep.subr.mxu0 0.0
    %v6834 = vand.u32 %v6235, 4294901760
    %6835 = vmatpush1.msra.mxu0 %v6834
    %6836 = vmatprep.subr.mxu0 0.0
    %v6837 = vand.u32 %v6236, 4294901760
    %6838 = vmatpush1.msra.mxu0 %v6837
    %6839 = vmatprep.subr.mxu0 0.0
    %6840 = vmatpush1.msra.mxu0 0.0
    %6841 = vmatprep.subr.mxu0 0.0
    %6842 = vmatpush1.msra.mxu0 0.0
    %6843 = vmatprep.subr.mxu0 0.0
    %6844 = vmatpush1.msra.mxu0 0.0
    %6845 = vmatprep.subr.mxu0 0.0
    %6846 = vmatpush1.msra.mxu0 0.0
    %6847 = vmatprep.subr.mxu0 0.0
    %6848 = vmatpush1.msra.mxu0 0.0
    %6849 = vmatprep.subr.mxu0 0.0
    %6850 = vmatpush1.msra.mxu0 0.0
    %6851 = vmatprep.subr.mxu0 0.0
    %6852 = vmatpush1.msra.mxu0 0.0
    %6853 = vmatprep.subr.mxu0 0.0
    %6854 = vmatpush1.msra.mxu0 0.0
    %6855 = vmatprep.subr.mxu0 0.0
    %6856 = vmatpush1.msra.mxu0 0.0
    %6857 = vmatprep.subr.mxu0 0.0
    %6858 = vmatpush1.msra.mxu0 0.0
    %6859 = vmatprep.subr.mxu0 0.0
    %6860 = vmatpush1.msra.mxu0 0.0
    %6861 = vmatprep.subr.mxu0 0.0
    %6862 = vmatpush1.msra.mxu0 0.0
    %6863 = vmatprep.subr.mxu0 0.0
    %6864 = vmatpush1.msra.mxu0 0.0
    %6865 = vmatprep.subr.mxu0 0.0
    %6866 = vmatpush1.msra.mxu0 0.0
    %6867 = vmatprep.subr.mxu0 0.0
    %6868 = vmatpush1.msra.mxu0 0.0
    %6869 = vmatprep.subr.mxu0 0.0
    %6870 = vmatpush1.msra.mxu0 0.0
    %6871 = vmatprep.mubr.f32.mxu0 0.0
    %v6872 = vand.u32 %v6218, 4294901760
    %6873 = vmatmul.mubr.f32.gmra.mrb[0].mxu0 %v6872
    %v6874 = vpop.f32.mrb[0].mxu0
    %v6875 = vadd.f32 %v6788, %v6874
    %v6876 = vpop.f32.mrb[0].mxu0
    %6877 = vdwg.mxu0
    %v6878 = vtanh.pop %v6875
    %v6879 = vadd.f32 %v6216, %v6878
    %s6880 = scalar_lea.vmem [#allocation2], %s5545
    %v6881 = vld [vmem:[%s6880] sm:$0x1]
    %s6882 = smul.u32 %s5544, 128
    %s6883 = scalar_lea.vmem [#allocation8], %s6882
    %v6884 = vld [vmem:[%s6883] sm:$0xff]
    %v6885 = vld [vmem:[%s6883 + $0x8] sm:$0xff]
    %v6886 = vld [vmem:[%s6883 + $0x10] sm:$0xff]
    %v6887 = vld [vmem:[%s6883 + $0x18] sm:$0xff]
    %v6888 = vld [vmem:[%s6883 + $0x20] sm:$0xff]
    %v6889 = vld [vmem:[%s6883 + $0x28] sm:$0xff]
    %v6890 = vld [vmem:[%s6883 + $0x30] sm:$0xff]
    %v6891 = vld [vmem:[%s6883 + $0x38] sm:$0xff]
    %v6892 = vld [vmem:[%s6883 + $0x40] sm:$0xff]
    %v6893 = vld [vmem:[%s6883 + $0x48] sm:$0xff]
    %v6894 = vld [vmem:[%s6883 + $0x50] sm:$0xff]
    %v6895 = vld [vmem:[%s6883 + $0x58] sm:$0xff]
    %v6896 = vld [vmem:[%s6883 + $0x60] sm:$0xff]
    %v6897 = vld [vmem:[%s6883 + $0x68] sm:$0xff]
    %v6898 = vld [vmem:[%s6883 + $0x70] sm:$0xff]
    %v6899 = vld [vmem:[%s6883 + $0x78] sm:$0xff]
    %6900 = vmatprep.subr.mxu0 0.0
    %v6901 = vand.u32 %v6884, 4294901760
    %6902 = vmatpush1.msra.mxu0 %v6901
    %6903 = vmatprep.subr.mxu0 0.0
    %v6904 = vand.u32 %v6885, 4294901760
    %6905 = vmatpush1.msra.mxu0 %v6904
    %6906 = vmatprep.subr.mxu0 0.0
    %v6907 = vand.u32 %v6886, 4294901760
    %6908 = vmatpush1.msra.mxu0 %v6907
    %6909 = vmatprep.subr.mxu0 0.0
    %v6910 = vand.u32 %v6887, 4294901760
    %6911 = vmatpush1.msra.mxu0 %v6910
    %6912 = vmatprep.subr.mxu0 0.0
    %v6913 = vand.u32 %v6888, 4294901760
    %6914 = vmatpush1.msra.mxu0 %v6913
    %6915 = vmatprep.subr.mxu0 0.0
    %v6916 = vand.u32 %v6889, 4294901760
    %6917 = vmatpush1.msra.mxu0 %v6916
    %6918 = vmatprep.subr.mxu0 0.0
    %v6919 = vand.u32 %v6890, 4294901760
    %6920 = vmatpush1.msra.mxu0 %v6919
    %6921 = vmatprep.subr.mxu0 0.0
    %v6922 = vand.u32 %v6891, 4294901760
    %6923 = vmatpush1.msra.mxu0 %v6922
    %6924 = vmatprep.subr.mxu0 0.0
    %v6925 = vand.u32 %v6892, 4294901760
    %6926 = vmatpush1.msra.mxu0 %v6925
    %6927 = vmatprep.subr.mxu0 0.0
    %v6928 = vand.u32 %v6893, 4294901760
    %6929 = vmatpush1.msra.mxu0 %v6928
    %6930 = vmatprep.subr.mxu0 0.0
    %v6931 = vand.u32 %v6894, 4294901760
    %6932 = vmatpush1.msra.mxu0 %v6931
    %6933 = vmatprep.subr.mxu0 0.0
    %v6934 = vand.u32 %v6895, 4294901760
    %6935 = vmatpush1.msra.mxu0 %v6934
    %6936 = vmatprep.subr.mxu0 0.0
    %v6937 = vand.u32 %v6896, 4294901760
    %6938 = vmatpush1.msra.mxu0 %v6937
    %6939 = vmatprep.subr.mxu0 0.0
    %v6940 = vand.u32 %v6897, 4294901760
    %6941 = vmatpush1.msra.mxu0 %v6940
    %6942 = vmatprep.subr.mxu0 0.0
    %v6943 = vand.u32 %v6898, 4294901760
    %6944 = vmatpush1.msra.mxu0 %v6943
    %6945 = vmatprep.subr.mxu0 0.0
    %v6946 = vand.u32 %v6899, 4294901760
    %6947 = vmatpush1.msra.mxu0 %v6946
    %6948 = vmatprep.subr.mxu0 0.0
    %6949 = vmatpush1.msra.mxu0 0.0
    %6950 = vmatprep.subr.mxu0 0.0
    %6951 = vmatpush1.msra.mxu0 0.0
    %6952 = vmatprep.subr.mxu0 0.0
    %6953 = vmatpush1.msra.mxu0 0.0
    %6954 = vmatprep.subr.mxu0 0.0
    %6955 = vmatpush1.msra.mxu0 0.0
    %6956 = vmatprep.subr.mxu0 0.0
    %6957 = vmatpush1.msra.mxu0 0.0
    %6958 = vmatprep.subr.mxu0 0.0
    %6959 = vmatpush1.msra.mxu0 0.0
    %6960 = vmatprep.subr.mxu0 0.0
    %6961 = vmatpush1.msra.mxu0 0.0
    %6962 = vmatprep.subr.mxu0 0.0
    %6963 = vmatpush1.msra.mxu0 0.0
    %6964 = vmatprep.subr.mxu0 0.0
    %6965 = vmatpush1.msra.mxu0 0.0
    %6966 = vmatprep.subr.mxu0 0.0
    %6967 = vmatpush1.msra.mxu0 0.0
    %6968 = vmatprep.subr.mxu0 0.0
    %6969 = vmatpush1.msra.mxu0 0.0
    %6970 = vmatprep.subr.mxu0 0.0
    %6971 = vmatpush1.msra.mxu0 0.0
    %6972 = vmatprep.subr.mxu0 0.0
    %6973 = vmatpush1.msra.mxu0 0.0
    %6974 = vmatprep.subr.mxu0 0.0
    %6975 = vmatpush1.msra.mxu0 0.0
    %6976 = vmatprep.subr.mxu0 0.0
    %6977 = vmatpush1.msra.mxu0 0.0
    %6978 = vmatprep.subr.mxu0 0.0
    %6979 = vmatpush1.msra.mxu0 0.0
    %6980 = vmatprep.mubr.f32.mxu0 0.0
    %v6981 = vand.u32 %v6881, 4294901760
    %v6982 = vsub.f32 %v6881, %v6981
    %v6983 = vand.u32 %v6982, 4294901760
    %v6984 = vsub.f32 %v6982, %v6983
    %v6985 = vand.u32 %v6984, 4294901760
    %6986 = vmatmul.mubr.f32.gmra.mrb[0].mxu0 %v6985
    %v6987 = vpop.f32.mrb[0].mxu0
    %v6988 = vadd.f32 0.0, %v6987
    %v6989 = vpop.f32.mrb[0].mxu0
    %6990 = vdwg.mxu0
    %6991 = vmatprep.subr.mxu0 0.0
    %v6992 = vand.u32 %v6884, 4294901760
    %v6993 = vsub.f32 %v6884, %v6992
    %v6994 = vand.u32 %v6993, 4294901760
    %v6995 = vsub.f32 %v6993, %v6994
    %v6996 = vand.u32 %v6995, 4294901760
    %6997 = vmatpush1.msra.mxu0 %v6996
    %6998 = vmatprep.subr.mxu0 0.0
    %v6999 = vand.u32 %v6885, 4294901760
    %v7000 = vsub.f32 %v6885, %v6999
    %v7001 = vand.u32 %v7000, 4294901760
    %v7002 = vsub.f32 %v7000, %v7001
    %v7003 = vand.u32 %v7002, 4294901760
    %7004 = vmatpush1.msra.mxu0 %v7003
    %7005 = vmatprep.subr.mxu0 0.0
    %v7006 = vand.u32 %v6886, 4294901760
    %v7007 = vsub.f32 %v6886, %v7006
    %v7008 = vand.u32 %v7007, 4294901760
    %v7009 = vsub.f32 %v7007, %v7008
    %v7010 = vand.u32 %v7009, 4294901760
    %7011 = vmatpush1.msra.mxu0 %v7010
    %7012 = vmatprep.subr.mxu0 0.0
    %v7013 = vand.u32 %v6887, 4294901760
    %v7014 = vsub.f32 %v6887, %v7013
    %v7015 = vand.u32 %v7014, 4294901760
    %v7016 = vsub.f32 %v7014, %v7015
    %v7017 = vand.u32 %v7016, 4294901760
    %7018 = vmatpush1.msra.mxu0 %v7017
    %7019 = vmatprep.subr.mxu0 0.0
    %v7020 = vand.u32 %v6888, 4294901760
    %v7021 = vsub.f32 %v6888, %v7020
    %v7022 = vand.u32 %v7021, 4294901760
    %v7023 = vsub.f32 %v7021, %v7022
    %v7024 = vand.u32 %v7023, 4294901760
    %7025 = vmatpush1.msra.mxu0 %v7024
    %7026 = vmatprep.subr.mxu0 0.0
    %v7027 = vand.u32 %v6889, 4294901760
    %v7028 = vsub.f32 %v6889, %v7027
    %v7029 = vand.u32 %v7028, 4294901760
    %v7030 = vsub.f32 %v7028, %v7029
    %v7031 = vand.u32 %v7030, 4294901760
    %7032 = vmatpush1.msra.mxu0 %v7031
    %7033 = vmatprep.subr.mxu0 0.0
    %v7034 = vand.u32 %v6890, 4294901760
    %v7035 = vsub.f32 %v6890, %v7034
    %v7036 = vand.u32 %v7035, 4294901760
    %v7037 = vsub.f32 %v7035, %v7036
    %v7038 = vand.u32 %v7037, 4294901760
    %7039 = vmatpush1.msra.mxu0 %v7038
    %7040 = vmatprep.subr.mxu0 0.0
    %v7041 = vand.u32 %v6891, 4294901760
    %v7042 = vsub.f32 %v6891, %v7041
    %v7043 = vand.u32 %v7042, 4294901760
    %v7044 = vsub.f32 %v7042, %v7043
    %v7045 = vand.u32 %v7044, 4294901760
    %7046 = vmatpush1.msra.mxu0 %v7045
    %7047 = vmatprep.subr.mxu0 0.0
    %v7048 = vand.u32 %v6892, 4294901760
    %v7049 = vsub.f32 %v6892, %v7048
    %v7050 = vand.u32 %v7049, 4294901760
    %v7051 = vsub.f32 %v7049, %v7050
    %v7052 = vand.u32 %v7051, 4294901760
    %7053 = vmatpush1.msra.mxu0 %v7052
    %7054 = vmatprep.subr.mxu0 0.0
    %v7055 = vand.u32 %v6893, 4294901760
    %v7056 = vsub.f32 %v6893, %v7055
    %v7057 = vand.u32 %v7056, 4294901760
    %v7058 = vsub.f32 %v7056, %v7057
    %v7059 = vand.u32 %v7058, 4294901760
    %7060 = vmatpush1.msra.mxu0 %v7059
    %7061 = vmatprep.subr.mxu0 0.0
    %v7062 = vand.u32 %v6894, 4294901760
    %v7063 = vsub.f32 %v6894, %v7062
    %v7064 = vand.u32 %v7063, 4294901760
    %v7065 = vsub.f32 %v7063, %v7064
    %v7066 = vand.u32 %v7065, 4294901760
    %7067 = vmatpush1.msra.mxu0 %v7066
    %7068 = vmatprep.subr.mxu0 0.0
    %v7069 = vand.u32 %v6895, 4294901760
    %v7070 = vsub.f32 %v6895, %v7069
    %v7071 = vand.u32 %v7070, 4294901760
    %v7072 = vsub.f32 %v7070, %v7071
    %v7073 = vand.u32 %v7072, 4294901760
    %7074 = vmatpush1.msra.mxu0 %v7073
    %7075 = vmatprep.subr.mxu0 0.0
    %v7076 = vand.u32 %v6896, 4294901760
    %v7077 = vsub.f32 %v6896, %v7076
    %v7078 = vand.u32 %v7077, 4294901760
    %v7079 = vsub.f32 %v7077, %v7078
    %v7080 = vand.u32 %v7079, 4294901760
    %7081 = vmatpush1.msra.mxu0 %v7080
    %7082 = vmatprep.subr.mxu0 0.0
    %v7083 = vand.u32 %v6897, 4294901760
    %v7084 = vsub.f32 %v6897, %v7083
    %v7085 = vand.u32 %v7084, 4294901760
    %v7086 = vsub.f32 %v7084, %v7085
    %v7087 = vand.u32 %v7086, 4294901760
    %7088 = vmatpush1.msra.mxu0 %v7087
    %7089 = vmatprep.subr.mxu0 0.0
    %v7090 = vand.u32 %v6898, 4294901760
    %v7091 = vsub.f32 %v6898, %v7090
    %v7092 = vand.u32 %v7091, 4294901760
    %v7093 = vsub.f32 %v7091, %v7092
    %v7094 = vand.u32 %v7093, 4294901760
    %7095 = vmatpush1.msra.mxu0 %v7094
    %7096 = vmatprep.subr.mxu0 0.0
    %v7097 = vand.u32 %v6899, 4294901760
    %v7098 = vsub.f32 %v6899, %v7097
    %v7099 = vand.u32 %v7098, 4294901760
    %v7100 = vsub.f32 %v7098, %v7099
    %v7101 = vand.u32 %v7100, 4294901760
    %7102 = vmatpush1.msra.mxu0 %v7101
    %7103 = vmatprep.subr.mxu0 0.0
    %7104 = vmatpush1.msra.mxu0 0.0
    %7105 = vmatprep.subr.mxu0 0.0
    %7106 = vmatpush1.msra.mxu0 0.0
    %7107 = vmatprep.subr.mxu0 0.0
    %7108 = vmatpush1.msra.mxu0 0.0
    %7109 = vmatprep.subr.mxu0 0.0
    %7110 = vmatpush1.msra.mxu0 0.0
    %7111 = vmatprep.subr.mxu0 0.0
    %7112 = vmatpush1.msra.mxu0 0.0
    %7113 = vmatprep.subr.mxu0 0.0
    %7114 = vmatpush1.msra.mxu0 0.0
    %7115 = vmatprep.subr.mxu0 0.0
    %7116 = vmatpush1.msra.mxu0 0.0
    %7117 = vmatprep.subr.mxu0 0.0
    %7118 = vmatpush1.msra.mxu0 0.0
    %7119 = vmatprep.subr.mxu0 0.0
    %7120 = vmatpush1.msra.mxu0 0.0
    %7121 = vmatprep.subr.mxu0 0.0
    %7122 = vmatpush1.msra.mxu0 0.0
    %7123 = vmatprep.subr.mxu0 0.0
    %7124 = vmatpush1.msra.mxu0 0.0
    %7125 = vmatprep.subr.mxu0 0.0
    %7126 = vmatpush1.msra.mxu0 0.0
    %7127 = vmatprep.subr.mxu0 0.0
    %7128 = vmatpush1.msra.mxu0 0.0
    %7129 = vmatprep.subr.mxu0 0.0
    %7130 = vmatpush1.msra.mxu0 0.0
    %7131 = vmatprep.subr.mxu0 0.0
    %7132 = vmatpush1.msra.mxu0 0.0
    %7133 = vmatprep.subr.mxu0 0.0
    %7134 = vmatpush1.msra.mxu0 0.0
    %7135 = vmatprep.mubr.f32.mxu0 0.0
    %v7136 = vand.u32 %v6881, 4294901760
    %7137 = vmatmul.mubr.f32.gmra.mrb[0].mxu0 %v7136
    %v7138 = vpop.f32.mrb[0].mxu0
    %v7139 = vadd.f32 %v6988, %v7138
    %v7140 = vpop.f32.mrb[0].mxu0
    %7141 = vdwg.mxu0
    %7142 = vmatprep.subr.mxu0 0.0
    %v7143 = vand.u32 %v6884, 4294901760
    %v7144 = vsub.f32 %v6884, %v7143
    %7145 = vmatpush1.msra.mxu0 %v7144
    %7146 = vmatprep.subr.mxu0 0.0
    %v7147 = vand.u32 %v6885, 4294901760
    %v7148 = vsub.f32 %v6885, %v7147
    %7149 = vmatpush1.msra.mxu0 %v7148
    %7150 = vmatprep.subr.mxu0 0.0
    %v7151 = vand.u32 %v6886, 4294901760
    %v7152 = vsub.f32 %v6886, %v7151
    %7153 = vmatpush1.msra.mxu0 %v7152
    %7154 = vmatprep.subr.mxu0 0.0
    %v7155 = vand.u32 %v6887, 4294901760
    %v7156 = vsub.f32 %v6887, %v7155
    %7157 = vmatpush1.msra.mxu0 %v7156
    %7158 = vmatprep.subr.mxu0 0.0
    %v7159 = vand.u32 %v6888, 4294901760
    %v7160 = vsub.f32 %v6888, %v7159
    %7161 = vmatpush1.msra.mxu0 %v7160
    %7162 = vmatprep.subr.mxu0 0.0
    %v7163 = vand.u32 %v6889, 4294901760
    %v7164 = vsub.f32 %v6889, %v7163
    %7165 = vmatpush1.msra.mxu0 %v7164
    %7166 = vmatprep.subr.mxu0 0.0
    %v7167 = vand.u32 %v6890, 4294901760
    %v7168 = vsub.f32 %v6890, %v7167
    %7169 = vmatpush1.msra.mxu0 %v7168
    %7170 = vmatprep.subr.mxu0 0.0
    %v7171 = vand.u32 %v6891, 4294901760
    %v7172 = vsub.f32 %v6891, %v7171
    %7173 = vmatpush1.msra.mxu0 %v7172
    %7174 = vmatprep.subr.mxu0 0.0
    %v7175 = vand.u32 %v6892, 4294901760
    %v7176 = vsub.f32 %v6892, %v7175
    %7177 = vmatpush1.msra.mxu0 %v7176
    %7178 = vmatprep.subr.mxu0 0.0
    %v7179 = vand.u32 %v6893, 4294901760
    %v7180 = vsub.f32 %v6893, %v7179
    %7181 = vmatpush1.msra.mxu0 %v7180
    %7182 = vmatprep.subr.mxu0 0.0
    %v7183 = vand.u32 %v6894, 4294901760
    %v7184 = vsub.f32 %v6894, %v7183
    %7185 = vmatpush1.msra.mxu0 %v7184
    %7186 = vmatprep.subr.mxu0 0.0
    %v7187 = vand.u32 %v6895, 4294901760
    %v7188 = vsub.f32 %v6895, %v7187
    %7189 = vmatpush1.msra.mxu0 %v7188
    %7190 = vmatprep.subr.mxu0 0.0
    %v7191 = vand.u32 %v6896, 4294901760
    %v7192 = vsub.f32 %v6896, %v7191
    %7193 = vmatpush1.msra.mxu0 %v7192
    %7194 = vmatprep.subr.mxu0 0.0
    %v7195 = vand.u32 %v6897, 4294901760
    %v7196 = vsub.f32 %v6897, %v7195
    %7197 = vmatpush1.msra.mxu0 %v7196
    %7198 = vmatprep.subr.mxu0 0.0
    %v7199 = vand.u32 %v6898, 4294901760
    %v7200 = vsub.f32 %v6898, %v7199
    %7201 = vmatpush1.msra.mxu0 %v7200
    %7202 = vmatprep.subr.mxu0 0.0
    %v7203 = vand.u32 %v6899, 4294901760
    %v7204 = vsub.f32 %v6899, %v7203
    %7205 = vmatpush1.msra.mxu0 %v7204
    %7206 = vmatprep.subr.mxu0 0.0
    %7207 = vmatpush1.msra.mxu0 0.0
    %7208 = vmatprep.subr.mxu0 0.0
    %7209 = vmatpush1.msra.mxu0 0.0
    %7210 = vmatprep.subr.mxu0 0.0
    %7211 = vmatpush1.msra.mxu0 0.0
    %7212 = vmatprep.subr.mxu0 0.0
    %7213 = vmatpush1.msra.mxu0 0.0
    %7214 = vmatprep.subr.mxu0 0.0
    %7215 = vmatpush1.msra.mxu0 0.0
    %7216 = vmatprep.subr.mxu0 0.0
    %7217 = vmatpush1.msra.mxu0 0.0
    %7218 = vmatprep.subr.mxu0 0.0
    %7219 = vmatpush1.msra.mxu0 0.0
    %7220 = vmatprep.subr.mxu0 0.0
    %7221 = vmatpush1.msra.mxu0 0.0
    %7222 = vmatprep.subr.mxu0 0.0
    %7223 = vmatpush1.msra.mxu0 0.0
    %7224 = vmatprep.subr.mxu0 0.0
    %7225 = vmatpush1.msra.mxu0 0.0
    %7226 = vmatprep.subr.mxu0 0.0
    %7227 = vmatpush1.msra.mxu0 0.0
    %7228 = vmatprep.subr.mxu0 0.0
    %7229 = vmatpush1.msra.mxu0 0.0
    %7230 = vmatprep.subr.mxu0 0.0
    %7231 = vmatpush1.msra.mxu0 0.0
    %7232 = vmatprep.subr.mxu0 0.0
    %7233 = vmatpush1.msra.mxu0 0.0
    %7234 = vmatprep.subr.mxu0 0.0
    %7235 = vmatpush1.msra.mxu0 0.0
    %7236 = vmatprep.subr.mxu0 0.0
    %7237 = vmatpush1.msra.mxu0 0.0
    %7238 = vmatprep.mubr.f32.mxu0 0.0
    %v7239 = vand.u32 %v6881, 4294901760
    %v7240 = vsub.f32 %v6881, %v7239
    %7241 = vmatmul.mubr.f32.gmra.mrb[0].mxu0 %v7240
    %v7242 = vpop.f32.mrb[0].mxu0
    %v7243 = vadd.f32 %v7139, %v7242
    %v7244 = vpop.f32.mrb[0].mxu0
    %7245 = vdwg.mxu0
    %7246 = vmatprep.subr.mxu0 0.0
    %v7247 = vand.u32 %v6884, 4294901760
    %7248 = vmatpush1.msra.mxu0 %v7247
    %7249 = vmatprep.subr.mxu0 0.0
    %v7250 = vand.u32 %v6885, 4294901760
    %7251 = vmatpush1.msra.mxu0 %v7250
    %7252 = vmatprep.subr.mxu0 0.0
    %v7253 = vand.u32 %v6886, 4294901760
    %7254 = vmatpush1.msra.mxu0 %v7253
    %7255 = vmatprep.subr.mxu0 0.0
    %v7256 = vand.u32 %v6887, 4294901760
    %7257 = vmatpush1.msra.mxu0 %v7256
    %7258 = vmatprep.subr.mxu0 0.0
    %v7259 = vand.u32 %v6888, 4294901760
    %7260 = vmatpush1.msra.mxu0 %v7259
    %7261 = vmatprep.subr.mxu0 0.0
    %v7262 = vand.u32 %v6889, 4294901760
    %7263 = vmatpush1.msra.mxu0 %v7262
    %7264 = vmatprep.subr.mxu0 0.0
    %v7265 = vand.u32 %v6890, 4294901760
    %7266 = vmatpush1.msra.mxu0 %v7265
    %7267 = vmatprep.subr.mxu0 0.0
    %v7268 = vand.u32 %v6891, 4294901760
    %7269 = vmatpush1.msra.mxu0 %v7268
    %7270 = vmatprep.subr.mxu0 0.0
    %v7271 = vand.u32 %v6892, 4294901760
    %7272 = vmatpush1.msra.mxu0 %v7271
    %7273 = vmatprep.subr.mxu0 0.0
    %v7274 = vand.u32 %v6893, 4294901760
    %7275 = vmatpush1.msra.mxu0 %v7274
    %7276 = vmatprep.subr.mxu0 0.0
    %v7277 = vand.u32 %v6894, 4294901760
    %7278 = vmatpush1.msra.mxu0 %v7277
    %7279 = vmatprep.subr.mxu0 0.0
    %v7280 = vand.u32 %v6895, 4294901760
    %7281 = vmatpush1.msra.mxu0 %v7280
    %7282 = vmatprep.subr.mxu0 0.0
    %v7283 = vand.u32 %v6896, 4294901760
    %7284 = vmatpush1.msra.mxu0 %v7283
    %7285 = vmatprep.subr.mxu0 0.0
    %v7286 = vand.u32 %v6897, 4294901760
    %7287 = vmatpush1.msra.mxu0 %v7286
    %7288 = vmatprep.subr.mxu0 0.0
    %v7289 = vand.u32 %v6898, 4294901760
    %7290 = vmatpush1.msra.mxu0 %v7289
    %7291 = vmatprep.subr.mxu0 0.0
    %v7292 = vand.u32 %v6899, 4294901760
    %7293 = vmatpush1.msra.mxu0 %v7292
    %7294 = vmatprep.subr.mxu0 0.0
    %7295 = vmatpush1.msra.mxu0 0.0
    %7296 = vmatprep.subr.mxu0 0.0
    %7297 = vmatpush1.msra.mxu0 0.0
    %7298 = vmatprep.subr.mxu0 0.0
    %7299 = vmatpush1.msra.mxu0 0.0
    %7300 = vmatprep.subr.mxu0 0.0
    %7301 = vmatpush1.msra.mxu0 0.0
    %7302 = vmatprep.subr.mxu0 0.0
    %7303 = vmatpush1.msra.mxu0 0.0
    %7304 = vmatprep.subr.mxu0 0.0
    %7305 = vmatpush1.msra.mxu0 0.0
    %7306 = vmatprep.subr.mxu0 0.0
    %7307 = vmatpush1.msra.mxu0 0.0
    %7308 = vmatprep.subr.mxu0 0.0
    %7309 = vmatpush1.msra.mxu0 0.0
    %7310 = vmatprep.subr.mxu0 0.0
    %7311 = vmatpush1.msra.mxu0 0.0
    %7312 = vmatprep.subr.mxu0 0.0
    %7313 = vmatpush1.msra.mxu0 0.0
    %7314 = vmatprep.subr.mxu0 0.0
    %7315 = vmatpush1.msra.mxu0 0.0
    %7316 = vmatprep.subr.mxu0 0.0
    %7317 = vmatpush1.msra.mxu0 0.0
    %7318 = vmatprep.subr.mxu0 0.0
    %7319 = vmatpush1.msra.mxu0 0.0
    %7320 = vmatprep.subr.mxu0 0.0
    %7321 = vmatpush1.msra.mxu0 0.0
    %7322 = vmatprep.subr.mxu0 0.0
    %7323 = vmatpush1.msra.mxu0 0.0
    %7324 = vmatprep.subr.mxu0 0.0
    %7325 = vmatpush1.msra.mxu0 0.0
    %7326 = vmatprep.mubr.f32.mxu0 0.0
    %v7327 = vand.u32 %v6881, 4294901760
    %v7328 = vsub.f32 %v6881, %v7327
    %v7329 = vand.u32 %v7328, 4294901760
    %7330 = vmatmul.mubr.f32.gmra.mrb[0].mxu0 %v7329
    %v7331 = vpop.f32.mrb[0].mxu0
    %v7332 = vadd.f32 %v7243, %v7331
    %v7333 = vpop.f32.mrb[0].mxu0
    %7334 = vdwg.mxu0
    %7335 = vmatprep.subr.mxu0 0.0
    %v7336 = vand.u32 %v6884, 4294901760
    %v7337 = vsub.f32 %v6884, %v7336
    %v7338 = vand.u32 %v7337, 4294901760
    %7339 = vmatpush1.msra.mxu0 %v7338
    %7340 = vmatprep.subr.mxu0 0.0
    %v7341 = vand.u32 %v6885, 4294901760
    %v7342 = vsub.f32 %v6885, %v7341
    %v7343 = vand.u32 %v7342, 4294901760
    %7344 = vmatpush1.msra.mxu0 %v7343
    %7345 = vmatprep.subr.mxu0 0.0
    %v7346 = vand.u32 %v6886, 4294901760
    %v7347 = vsub.f32 %v6886, %v7346
    %v7348 = vand.u32 %v7347, 4294901760
    %7349 = vmatpush1.msra.mxu0 %v7348
    %7350 = vmatprep.subr.mxu0 0.0
    %v7351 = vand.u32 %v6887, 4294901760
    %v7352 = vsub.f32 %v6887, %v7351
    %v7353 = vand.u32 %v7352, 4294901760
    %7354 = vmatpush1.msra.mxu0 %v7353
    %7355 = vmatprep.subr.mxu0 0.0
    %v7356 = vand.u32 %v6888, 4294901760
    %v7357 = vsub.f32 %v6888, %v7356
    %v7358 = vand.u32 %v7357, 4294901760
    %7359 = vmatpush1.msra.mxu0 %v7358
    %7360 = vmatprep.subr.mxu0 0.0
    %v7361 = vand.u32 %v6889, 4294901760
    %v7362 = vsub.f32 %v6889, %v7361
    %v7363 = vand.u32 %v7362, 4294901760
    %7364 = vmatpush1.msra.mxu0 %v7363
    %7365 = vmatprep.subr.mxu0 0.0
    %v7366 = vand.u32 %v6890, 4294901760
    %v7367 = vsub.f32 %v6890, %v7366
    %v7368 = vand.u32 %v7367, 4294901760
    %7369 = vmatpush1.msra.mxu0 %v7368
    %7370 = vmatprep.subr.mxu0 0.0
    %v7371 = vand.u32 %v6891, 4294901760
    %v7372 = vsub.f32 %v6891, %v7371
    %v7373 = vand.u32 %v7372, 4294901760
    %7374 = vmatpush1.msra.mxu0 %v7373
    %7375 = vmatprep.subr.mxu0 0.0
    %v7376 = vand.u32 %v6892, 4294901760
    %v7377 = vsub.f32 %v6892, %v7376
    %v7378 = vand.u32 %v7377, 4294901760
    %7379 = vmatpush1.msra.mxu0 %v7378
    %7380 = vmatprep.subr.mxu0 0.0
    %v7381 = vand.u32 %v6893, 4294901760
    %v7382 = vsub.f32 %v6893, %v7381
    %v7383 = vand.u32 %v7382, 4294901760
    %7384 = vmatpush1.msra.mxu0 %v7383
    %7385 = vmatprep.subr.mxu0 0.0
    %v7386 = vand.u32 %v6894, 4294901760
    %v7387 = vsub.f32 %v6894, %v7386
    %v7388 = vand.u32 %v7387, 4294901760
    %7389 = vmatpush1.msra.mxu0 %v7388
    %7390 = vmatprep.subr.mxu0 0.0
    %v7391 = vand.u32 %v6895, 4294901760
    %v7392 = vsub.f32 %v6895, %v7391
    %v7393 = vand.u32 %v7392, 4294901760
    %7394 = vmatpush1.msra.mxu0 %v7393
    %7395 = vmatprep.subr.mxu0 0.0
    %v7396 = vand.u32 %v6896, 4294901760
    %v7397 = vsub.f32 %v6896, %v7396
    %v7398 = vand.u32 %v7397, 4294901760
    %7399 = vmatpush1.msra.mxu0 %v7398
    %7400 = vmatprep.subr.mxu0 0.0
    %v7401 = vand.u32 %v6897, 4294901760
    %v7402 = vsub.f32 %v6897, %v7401
    %v7403 = vand.u32 %v7402, 4294901760
    %7404 = vmatpush1.msra.mxu0 %v7403
    %7405 = vmatprep.subr.mxu0 0.0
    %v7406 = vand.u32 %v6898, 4294901760
    %v7407 = vsub.f32 %v6898, %v7406
    %v7408 = vand.u32 %v7407, 4294901760
    %7409 = vmatpush1.msra.mxu0 %v7408
    %7410 = vmatprep.subr.mxu0 0.0
    %v7411 = vand.u32 %v6899, 4294901760
    %v7412 = vsub.f32 %v6899, %v7411
    %v7413 = vand.u32 %v7412, 4294901760
    %7414 = vmatpush1.msra.mxu0 %v7413
    %7415 = vmatprep.subr.mxu0 0.0
    %7416 = vmatpush1.msra.mxu0 0.0
    %7417 = vmatprep.subr.mxu0 0.0
    %7418 = vmatpush1.msra.mxu0 0.0
    %7419 = vmatprep.subr.mxu0 0.0
    %7420 = vmatpush1.msra.mxu0 0.0
    %7421 = vmatprep.subr.mxu0 0.0
    %7422 = vmatpush1.msra.mxu0 0.0
    %7423 = vmatprep.subr.mxu0 0.0
    %7424 = vmatpush1.msra.mxu0 0.0
    %7425 = vmatprep.subr.mxu0 0.0
    %7426 = vmatpush1.msra.mxu0 0.0
    %7427 = vmatprep.subr.mxu0 0.0
    %7428 = vmatpush1.msra.mxu0 0.0
    %7429 = vmatprep.subr.mxu0 0.0
    %7430 = vmatpush1.msra.mxu0 0.0
    %7431 = vmatprep.subr.mxu0 0.0
    %7432 = vmatpush1.msra.mxu0 0.0
    %7433 = vmatprep.subr.mxu0 0.0
    %7434 = vmatpush1.msra.mxu0 0.0
    %7435 = vmatprep.subr.mxu0 0.0
    %7436 = vmatpush1.msra.mxu0 0.0
    %7437 = vmatprep.subr.mxu0 0.0
    %7438 = vmatpush1.msra.mxu0 0.0
    %7439 = vmatprep.subr.mxu0 0.0
    %7440 = vmatpush1.msra.mxu0 0.0
    %7441 = vmatprep.subr.mxu0 0.0
    %7442 = vmatpush1.msra.mxu0 0.0
    %7443 = vmatprep.subr.mxu0 0.0
    %7444 = vmatpush1.msra.mxu0 0.0
    %7445 = vmatprep.subr.mxu0 0.0
    %7446 = vmatpush1.msra.mxu0 0.0
    %7447 = vmatprep.mubr.f32.mxu0 0.0
    %v7448 = vand.u32 %v6881, 4294901760
    %7449 = vmatmul.mubr.f32.gmra.mrb[0].mxu0 %v7448
    %v7450 = vpop.f32.mrb[0].mxu0
    %v7451 = vadd.f32 %v7332, %v7450
    %v7452 = vpop.f32.mrb[0].mxu0
    %7453 = vdwg.mxu0
    %7454 = vmatprep.subr.mxu0 0.0
    %v7455 = vand.u32 %v6884, 4294901760
    %7456 = vmatpush1.msra.mxu0 %v7455
    %7457 = vmatprep.subr.mxu0 0.0
    %v7458 = vand.u32 %v6885, 4294901760
    %7459 = vmatpush1.msra.mxu0 %v7458
    %7460 = vmatprep.subr.mxu0 0.0
    %v7461 = vand.u32 %v6886, 4294901760
    %7462 = vmatpush1.msra.mxu0 %v7461
    %7463 = vmatprep.subr.mxu0 0.0
    %v7464 = vand.u32 %v6887, 4294901760
    %7465 = vmatpush1.msra.mxu0 %v7464
    %7466 = vmatprep.subr.mxu0 0.0
    %v7467 = vand.u32 %v6888, 4294901760
    %7468 = vmatpush1.msra.mxu0 %v7467
    %7469 = vmatprep.subr.mxu0 0.0
    %v7470 = vand.u32 %v6889, 4294901760
    %7471 = vmatpush1.msra.mxu0 %v7470
    %7472 = vmatprep.subr.mxu0 0.0
    %v7473 = vand.u32 %v6890, 4294901760
    %7474 = vmatpush1.msra.mxu0 %v7473
    %7475 = vmatprep.subr.mxu0 0.0
    %v7476 = vand.u32 %v6891, 4294901760
    %7477 = vmatpush1.msra.mxu0 %v7476
    %7478 = vmatprep.subr.mxu0 0.0
    %v7479 = vand.u32 %v6892, 4294901760
    %7480 = vmatpush1.msra.mxu0 %v7479
    %7481 = vmatprep.subr.mxu0 0.0
    %v7482 = vand.u32 %v6893, 4294901760
    %7483 = vmatpush1.msra.mxu0 %v7482
    %7484 = vmatprep.subr.mxu0 0.0
    %v7485 = vand.u32 %v6894, 4294901760
    %7486 = vmatpush1.msra.mxu0 %v7485
    %7487 = vmatprep.subr.mxu0 0.0
    %v7488 = vand.u32 %v6895, 4294901760
    %7489 = vmatpush1.msra.mxu0 %v7488
    %7490 = vmatprep.subr.mxu0 0.0
    %v7491 = vand.u32 %v6896, 4294901760
    %7492 = vmatpush1.msra.mxu0 %v7491
    %7493 = vmatprep.subr.mxu0 0.0
    %v7494 = vand.u32 %v6897, 4294901760
    %7495 = vmatpush1.msra.mxu0 %v7494
    %7496 = vmatprep.subr.mxu0 0.0
    %v7497 = vand.u32 %v6898, 4294901760
    %7498 = vmatpush1.msra.mxu0 %v7497
    %7499 = vmatprep.subr.mxu0 0.0
    %v7500 = vand.u32 %v6899, 4294901760
    %7501 = vmatpush1.msra.mxu0 %v7500
    %7502 = vmatprep.subr.mxu0 0.0
    %7503 = vmatpush1.msra.mxu0 0.0
    %7504 = vmatprep.subr.mxu0 0.0
    %7505 = vmatpush1.msra.mxu0 0.0
    %7506 = vmatprep.subr.mxu0 0.0
    %7507 = vmatpush1.msra.mxu0 0.0
    %7508 = vmatprep.subr.mxu0 0.0
    %7509 = vmatpush1.msra.mxu0 0.0
    %7510 = vmatprep.subr.mxu0 0.0
    %7511 = vmatpush1.msra.mxu0 0.0
    %7512 = vmatprep.subr.mxu0 0.0
    %7513 = vmatpush1.msra.mxu0 0.0
    %7514 = vmatprep.subr.mxu0 0.0
    %7515 = vmatpush1.msra.mxu0 0.0
    %7516 = vmatprep.subr.mxu0 0.0
    %7517 = vmatpush1.msra.mxu0 0.0
    %7518 = vmatprep.subr.mxu0 0.0
    %7519 = vmatpush1.msra.mxu0 0.0
    %7520 = vmatprep.subr.mxu0 0.0
    %7521 = vmatpush1.msra.mxu0 0.0
    %7522 = vmatprep.subr.mxu0 0.0
    %7523 = vmatpush1.msra.mxu0 0.0
    %7524 = vmatprep.subr.mxu0 0.0
    %7525 = vmatpush1.msra.mxu0 0.0
    %7526 = vmatprep.subr.mxu0 0.0
    %7527 = vmatpush1.msra.mxu0 0.0
    %7528 = vmatprep.subr.mxu0 0.0
    %7529 = vmatpush1.msra.mxu0 0.0
    %7530 = vmatprep.subr.mxu0 0.0
    %7531 = vmatpush1.msra.mxu0 0.0
    %7532 = vmatprep.subr.mxu0 0.0
    %7533 = vmatpush1.msra.mxu0 0.0
    %7534 = vmatprep.mubr.f32.mxu0 0.0
    %v7535 = vand.u32 %v6881, 4294901760
    %7536 = vmatmul.mubr.f32.gmra.mrb[0].mxu0 %v7535
    %v7537 = vpop.f32.mrb[0].mxu0
    %v7538 = vadd.f32 %v7451, %v7537
    %v7539 = vpop.f32.mrb[0].mxu0
    %7540 = vdwg.mxu0
    %v7541 = vtanh.pop %v7538
    %v7542 = vadd.f32 %v6879, %v7541
    %s7543 = scalar_lea.vmem [#allocation2], %s5547
    %v7544 = vld [vmem:[%s7543] sm:$0x1]
    %s7545 = smul.u32 %s5546, 128
    %s7546 = scalar_lea.vmem [#allocation8], %s7545
    %v7547 = vld [vmem:[%s7546] sm:$0xff]
    %v7548 = vld [vmem:[%s7546 + $0x8] sm:$0xff]
    %v7549 = vld [vmem:[%s7546 + $0x10] sm:$0xff]
    %v7550 = vld [vmem:[%s7546 + $0x18] sm:$0xff]
    %v7551 = vld [vmem:[%s7546 + $0x20] sm:$0xff]
    %v7552 = vld [vmem:[%s7546 + $0x28] sm:$0xff]
    %v7553 = vld [vmem:[%s7546 + $0x30] sm:$0xff]
    %v7554 = vld [vmem:[%s7546 + $0x38] sm:$0xff]
    %v7555 = vld [vmem:[%s7546 + $0x40] sm:$0xff]
    %v7556 = vld [vmem:[%s7546 + $0x48] sm:$0xff]
    %v7557 = vld [vmem:[%s7546 + $0x50] sm:$0xff]
    %v7558 = vld [vmem:[%s7546 + $0x58] sm:$0xff]
    %v7559 = vld [vmem:[%s7546 + $0x60] sm:$0xff]
    %v7560 = vld [vmem:[%s7546 + $0x68] sm:$0xff]
    %v7561 = vld [vmem:[%s7546 + $0x70] sm:$0xff]
    %v7562 = vld [vmem:[%s7546 + $0x78] sm:$0xff]
    %7563 = vmatprep.subr.mxu0 0.0
    %v7564 = vand.u32 %v7547, 4294901760
    %7565 = vmatpush1.msra.mxu0 %v7564
    %7566 = vmatprep.subr.mxu0 0.0
    %v7567 = vand.u32 %v7548, 4294901760
    %7568 = vmatpush1.msra.mxu0 %v7567
    %7569 = vmatprep.subr.mxu0 0.0
    %v7570 = vand.u32 %v7549, 4294901760
    %7571 = vmatpush1.msra.mxu0 %v7570
    %7572 = vmatprep.subr.mxu0 0.0
    %v7573 = vand.u32 %v7550, 4294901760
    %7574 = vmatpush1.msra.mxu0 %v7573
    %7575 = vmatprep.subr.mxu0 0.0
    %v7576 = vand.u32 %v7551, 4294901760
    %7577 = vmatpush1.msra.mxu0 %v7576
    %7578 = vmatprep.subr.mxu0 0.0
    %v7579 = vand.u32 %v7552, 4294901760
    %7580 = vmatpush1.msra.mxu0 %v7579
    %7581 = vmatprep.subr.mxu0 0.0
    %v7582 = vand.u32 %v7553, 4294901760
    %7583 = vmatpush1.msra.mxu0 %v7582
    %7584 = vmatprep.subr.mxu0 0.0
    %v7585 = vand.u32 %v7554, 4294901760
    %7586 = vmatpush1.msra.mxu0 %v7585
    %7587 = vmatprep.subr.mxu0 0.0
    %v7588 = vand.u32 %v7555, 4294901760
    %7589 = vmatpush1.msra.mxu0 %v7588
    %7590 = vmatprep.subr.mxu0 0.0
    %v7591 = vand.u32 %v7556, 4294901760
    %7592 = vmatpush1.msra.mxu0 %v7591
    %7593 = vmatprep.subr.mxu0 0.0
    %v7594 = vand.u32 %v7557, 4294901760
    %7595 = vmatpush1.msra.mxu0 %v7594
    %7596 = vmatprep.subr.mxu0 0.0
    %v7597 = vand.u32 %v7558, 4294901760
    %7598 = vmatpush1.msra.mxu0 %v7597
    %7599 = vmatprep.subr.mxu0 0.0
    %v7600 = vand.u32 %v7559, 4294901760
    %7601 = vmatpush1.msra.mxu0 %v7600
    %7602 = vmatprep.subr.mxu0 0.0
    %v7603 = vand.u32 %v7560, 4294901760
    %7604 = vmatpush1.msra.mxu0 %v7603
    %7605 = vmatprep.subr.mxu0 0.0
    %v7606 = vand.u32 %v7561, 4294901760
    %7607 = vmatpush1.msra.mxu0 %v7606
    %7608 = vmatprep.subr.mxu0 0.0
    %v7609 = vand.u32 %v7562, 4294901760
    %7610 = vmatpush1.msra.mxu0 %v7609
    %7611 = vmatprep.subr.mxu0 0.0
    %7612 = vmatpush1.msra.mxu0 0.0
    %7613 = vmatprep.subr.mxu0 0.0
    %7614 = vmatpush1.msra.mxu0 0.0
    %7615 = vmatprep.subr.mxu0 0.0
    %7616 = vmatpush1.msra.mxu0 0.0
    %7617 = vmatprep.subr.mxu0 0.0
    %7618 = vmatpush1.msra.mxu0 0.0
    %7619 = vmatprep.subr.mxu0 0.0
    %7620 = vmatpush1.msra.mxu0 0.0
    %7621 = vmatprep.subr.mxu0 0.0
    %7622 = vmatpush1.msra.mxu0 0.0
    %7623 = vmatprep.subr.mxu0 0.0
    %7624 = vmatpush1.msra.mxu0 0.0
    %7625 = vmatprep.subr.mxu0 0.0
    %7626 = vmatpush1.msra.mxu0 0.0
    %7627 = vmatprep.subr.mxu0 0.0
    %7628 = vmatpush1.msra.mxu0 0.0
    %7629 = vmatprep.subr.mxu0 0.0
    %7630 = vmatpush1.msra.mxu0 0.0
    %7631 = vmatprep.subr.mxu0 0.0
    %7632 = vmatpush1.msra.mxu0 0.0
    %7633 = vmatprep.subr.mxu0 0.0
    %7634 = vmatpush1.msra.mxu0 0.0
    %7635 = vmatprep.subr.mxu0 0.0
    %7636 = vmatpush1.msra.mxu0 0.0
    %7637 = vmatprep.subr.mxu0 0.0
    %7638 = vmatpush1.msra.mxu0 0.0
    %7639 = vmatprep.subr.mxu0 0.0
    %7640 = vmatpush1.msra.mxu0 0.0
    %7641 = vmatprep.subr.mxu0 0.0
    %7642 = vmatpush1.msra.mxu0 0.0
    %7643 = vmatprep.mubr.f32.mxu0 0.0
    %v7644 = vand.u32 %v7544, 4294901760
    %v7645 = vsub.f32 %v7544, %v7644
    %v7646 = vand.u32 %v7645, 4294901760
    %v7647 = vsub.f32 %v7645, %v7646
    %v7648 = vand.u32 %v7647, 4294901760
    %7649 = vmatmul.mubr.f32.gmra.mrb[0].mxu0 %v7648
    %v7650 = vpop.f32.mrb[0].mxu0
    %v7651 = vadd.f32 0.0, %v7650
    %v7652 = vpop.f32.mrb[0].mxu0
    %7653 = vdwg.mxu0
    %7654 = vmatprep.subr.mxu0 0.0
    %v7655 = vand.u32 %v7547, 4294901760
    %v7656 = vsub.f32 %v7547, %v7655
    %v7657 = vand.u32 %v7656, 4294901760
    %v7658 = vsub.f32 %v7656, %v7657
    %v7659 = vand.u32 %v7658, 4294901760
    %7660 = vmatpush1.msra.mxu0 %v7659
    %7661 = vmatprep.subr.mxu0 0.0
    %v7662 = vand.u32 %v7548, 4294901760
    %v7663 = vsub.f32 %v7548, %v7662
    %v7664 = vand.u32 %v7663, 4294901760
    %v7665 = vsub.f32 %v7663, %v7664
    %v7666 = vand.u32 %v7665, 4294901760
    %7667 = vmatpush1.msra.mxu0 %v7666
    %7668 = vmatprep.subr.mxu0 0.0
    %v7669 = vand.u32 %v7549, 4294901760
    %v7670 = vsub.f32 %v7549, %v7669
    %v7671 = vand.u32 %v7670, 4294901760
    %v7672 = vsub.f32 %v7670, %v7671
    %v7673 = vand.u32 %v7672, 4294901760
    %7674 = vmatpush1.msra.mxu0 %v7673
    %7675 = vmatprep.subr.mxu0 0.0
    %v7676 = vand.u32 %v7550, 4294901760
    %v7677 = vsub.f32 %v7550, %v7676
    %v7678 = vand.u32 %v7677, 4294901760
    %v7679 = vsub.f32 %v7677, %v7678
    %v7680 = vand.u32 %v7679, 4294901760
    %7681 = vmatpush1.msra.mxu0 %v7680
    %7682 = vmatprep.subr.mxu0 0.0
    %v7683 = vand.u32 %v7551, 4294901760
    %v7684 = vsub.f32 %v7551, %v7683
    %v7685 = vand.u32 %v7684, 4294901760
    %v7686 = vsub.f32 %v7684, %v7685
    %v7687 = vand.u32 %v7686, 4294901760
    %7688 = vmatpush1.msra.mxu0 %v7687
    %7689 = vmatprep.subr.mxu0 0.0
    %v7690 = vand.u32 %v7552, 4294901760
    %v7691 = vsub.f32 %v7552, %v7690
    %v7692 = vand.u32 %v7691, 4294901760
    %v7693 = vsub.f32 %v7691, %v7692
    %v7694 = vand.u32 %v7693, 4294901760
    %7695 = vmatpush1.msra.mxu0 %v7694
    %7696 = vmatprep.subr.mxu0 0.0
    %v7697 = vand.u32 %v7553, 4294901760
    %v7698 = vsub.f32 %v7553, %v7697
    %v7699 = vand.u32 %v7698, 4294901760
    %v7700 = vsub.f32 %v7698, %v7699
    %v7701 = vand.u32 %v7700, 4294901760
    %7702 = vmatpush1.msra.mxu0 %v7701
    %7703 = vmatprep.subr.mxu0 0.0
    %v7704 = vand.u32 %v7554, 4294901760
    %v7705 = vsub.f32 %v7554, %v7704
    %v7706 = vand.u32 %v7705, 4294901760
    %v7707 = vsub.f32 %v7705, %v7706
    %v7708 = vand.u32 %v7707, 4294901760
    %7709 = vmatpush1.msra.mxu0 %v7708
    %7710 = vmatprep.subr.mxu0 0.0
    %v7711 = vand.u32 %v7555, 4294901760
    %v7712 = vsub.f32 %v7555, %v7711
    %v7713 = vand.u32 %v7712, 4294901760
    %v7714 = vsub.f32 %v7712, %v7713
    %v7715 = vand.u32 %v7714, 4294901760
    %7716 = vmatpush1.msra.mxu0 %v7715
    %7717 = vmatprep.subr.mxu0 0.0
    %v7718 = vand.u32 %v7556, 4294901760
    %v7719 = vsub.f32 %v7556, %v7718
    %v7720 = vand.u32 %v7719, 4294901760
    %v7721 = vsub.f32 %v7719, %v7720
    %v7722 = vand.u32 %v7721, 4294901760
    %7723 = vmatpush1.msra.mxu0 %v7722
    %7724 = vmatprep.subr.mxu0 0.0
    %v7725 = vand.u32 %v7557, 4294901760
    %v7726 = vsub.f32 %v7557, %v7725
    %v7727 = vand.u32 %v7726, 4294901760
    %v7728 = vsub.f32 %v7726, %v7727
    %v7729 = vand.u32 %v7728, 4294901760
    %7730 = vmatpush1.msra.mxu0 %v7729
    %7731 = vmatprep.subr.mxu0 0.0
    %v7732 = vand.u32 %v7558, 4294901760
    %v7733 = vsub.f32 %v7558, %v7732
    %v7734 = vand.u32 %v7733, 4294901760
    %v7735 = vsub.f32 %v7733, %v7734
    %v7736 = vand.u32 %v7735, 4294901760
    %7737 = vmatpush1.msra.mxu0 %v7736
    %7738 = vmatprep.subr.mxu0 0.0
    %v7739 = vand.u32 %v7559, 4294901760
    %v7740 = vsub.f32 %v7559, %v7739
    %v7741 = vand.u32 %v7740, 4294901760
    %v7742 = vsub.f32 %v7740, %v7741
    %v7743 = vand.u32 %v7742, 4294901760
    %7744 = vmatpush1.msra.mxu0 %v7743
    %7745 = vmatprep.subr.mxu0 0.0
    %v7746 = vand.u32 %v7560, 4294901760
    %v7747 = vsub.f32 %v7560, %v7746
    %v7748 = vand.u32 %v7747, 4294901760
    %v7749 = vsub.f32 %v7747, %v7748
    %v7750 = vand.u32 %v7749, 4294901760
    %7751 = vmatpush1.msra.mxu0 %v7750
    %7752 = vmatprep.subr.mxu0 0.0
    %v7753 = vand.u32 %v7561, 4294901760
    %v7754 = vsub.f32 %v7561, %v7753
    %v7755 = vand.u32 %v7754, 4294901760
    %v7756 = vsub.f32 %v7754, %v7755
    %v7757 = vand.u32 %v7756, 4294901760
    %7758 = vmatpush1.msra.mxu0 %v7757
    %7759 = vmatprep.subr.mxu0 0.0
    %v7760 = vand.u32 %v7562, 4294901760
    %v7761 = vsub.f32 %v7562, %v7760
    %v7762 = vand.u32 %v7761, 4294901760
    %v7763 = vsub.f32 %v7761, %v7762
    %v7764 = vand.u32 %v7763, 4294901760
    %7765 = vmatpush1.msra.mxu0 %v7764
    %7766 = vmatprep.subr.mxu0 0.0
    %7767 = vmatpush1.msra.mxu0 0.0
    %7768 = vmatprep.subr.mxu0 0.0
    %7769 = vmatpush1.msra.mxu0 0.0
    %7770 = vmatprep.subr.mxu0 0.0
    %7771 = vmatpush1.msra.mxu0 0.0
    %7772 = vmatprep.subr.mxu0 0.0
    %7773 = vmatpush1.msra.mxu0 0.0
    %7774 = vmatprep.subr.mxu0 0.0
    %7775 = vmatpush1.msra.mxu0 0.0
    %7776 = vmatprep.subr.mxu0 0.0
    %7777 = vmatpush1.msra.mxu0 0.0
    %7778 = vmatprep.subr.mxu0 0.0
    %7779 = vmatpush1.msra.mxu0 0.0
    %7780 = vmatprep.subr.mxu0 0.0
    %7781 = vmatpush1.msra.mxu0 0.0
    %7782 = vmatprep.subr.mxu0 0.0
    %7783 = vmatpush1.msra.mxu0 0.0
    %7784 = vmatprep.subr.mxu0 0.0
    %7785 = vmatpush1.msra.mxu0 0.0
    %7786 = vmatprep.subr.mxu0 0.0
    %7787 = vmatpush1.msra.mxu0 0.0
    %7788 = vmatprep.subr.mxu0 0.0
    %7789 = vmatpush1.msra.mxu0 0.0
    %7790 = vmatprep.subr.mxu0 0.0
    %7791 = vmatpush1.msra.mxu0 0.0
    %7792 = vmatprep.subr.mxu0 0.0
    %7793 = vmatpush1.msra.mxu0 0.0
    %7794 = vmatprep.subr.mxu0 0.0
    %7795 = vmatpush1.msra.mxu0 0.0
    %7796 = vmatprep.subr.mxu0 0.0
    %7797 = vmatpush1.msra.mxu0 0.0
    %7798 = vmatprep.mubr.f32.mxu0 0.0
    %v7799 = vand.u32 %v7544, 4294901760
    %7800 = vmatmul.mubr.f32.gmra.mrb[0].mxu0 %v7799
    %v7801 = vpop.f32.mrb[0].mxu0
    %v7802 = vadd.f32 %v7651, %v7801
    %v7803 = vpop.f32.mrb[0].mxu0
    %7804 = vdwg.mxu0
    %7805 = vmatprep.subr.mxu0 0.0
    %v7806 = vand.u32 %v7547, 4294901760
    %v7807 = vsub.f32 %v7547, %v7806
    %7808 = vmatpush1.msra.mxu0 %v7807
    %7809 = vmatprep.subr.mxu0 0.0
    %v7810 = vand.u32 %v7548, 4294901760
    %v7811 = vsub.f32 %v7548, %v7810
    %7812 = vmatpush1.msra.mxu0 %v7811
    %7813 = vmatprep.subr.mxu0 0.0
    %v7814 = vand.u32 %v7549, 4294901760
    %v7815 = vsub.f32 %v7549, %v7814
    %7816 = vmatpush1.msra.mxu0 %v7815
    %7817 = vmatprep.subr.mxu0 0.0
    %v7818 = vand.u32 %v7550, 4294901760
    %v7819 = vsub.f32 %v7550, %v7818
    %7820 = vmatpush1.msra.mxu0 %v7819
    %7821 = vmatprep.subr.mxu0 0.0
    %v7822 = vand.u32 %v7551, 4294901760
    %v7823 = vsub.f32 %v7551, %v7822
    %7824 = vmatpush1.msra.mxu0 %v7823
    %7825 = vmatprep.subr.mxu0 0.0
    %v7826 = vand.u32 %v7552, 4294901760
    %v7827 = vsub.f32 %v7552, %v7826
    %7828 = vmatpush1.msra.mxu0 %v7827
    %7829 = vmatprep.subr.mxu0 0.0
    %v7830 = vand.u32 %v7553, 4294901760
    %v7831 = vsub.f32 %v7553, %v7830
    %7832 = vmatpush1.msra.mxu0 %v7831
    %7833 = vmatprep.subr.mxu0 0.0
    %v7834 = vand.u32 %v7554, 4294901760
    %v7835 = vsub.f32 %v7554, %v7834
    %7836 = vmatpush1.msra.mxu0 %v7835
    %7837 = vmatprep.subr.mxu0 0.0
    %v7838 = vand.u32 %v7555, 4294901760
    %v7839 = vsub.f32 %v7555, %v7838
    %7840 = vmatpush1.msra.mxu0 %v7839
    %7841 = vmatprep.subr.mxu0 0.0
    %v7842 = vand.u32 %v7556, 4294901760
    %v7843 = vsub.f32 %v7556, %v7842
    %7844 = vmatpush1.msra.mxu0 %v7843
    %7845 = vmatprep.subr.mxu0 0.0
    %v7846 = vand.u32 %v7557, 4294901760
    %v7847 = vsub.f32 %v7557, %v7846
    %7848 = vmatpush1.msra.mxu0 %v7847
    %7849 = vmatprep.subr.mxu0 0.0
    %v7850 = vand.u32 %v7558, 4294901760
    %v7851 = vsub.f32 %v7558, %v7850
    %7852 = vmatpush1.msra.mxu0 %v7851
    %7853 = vmatprep.subr.mxu0 0.0
    %v7854 = vand.u32 %v7559, 4294901760
    %v7855 = vsub.f32 %v7559, %v7854
    %7856 = vmatpush1.msra.mxu0 %v7855
    %7857 = vmatprep.subr.mxu0 0.0
    %v7858 = vand.u32 %v7560, 4294901760
    %v7859 = vsub.f32 %v7560, %v7858
    %7860 = vmatpush1.msra.mxu0 %v7859
    %7861 = vmatprep.subr.mxu0 0.0
    %v7862 = vand.u32 %v7561, 4294901760
    %v7863 = vsub.f32 %v7561, %v7862
    %7864 = vmatpush1.msra.mxu0 %v7863
    %7865 = vmatprep.subr.mxu0 0.0
    %v7866 = vand.u32 %v7562, 4294901760
    %v7867 = vsub.f32 %v7562, %v7866
    %7868 = vmatpush1.msra.mxu0 %v7867
    %7869 = vmatprep.subr.mxu0 0.0
    %7870 = vmatpush1.msra.mxu0 0.0
    %7871 = vmatprep.subr.mxu0 0.0
    %7872 = vmatpush1.msra.mxu0 0.0
    %7873 = vmatprep.subr.mxu0 0.0
    %7874 = vmatpush1.msra.mxu0 0.0
    %7875 = vmatprep.subr.mxu0 0.0
    %7876 = vmatpush1.msra.mxu0 0.0
    %7877 = vmatprep.subr.mxu0 0.0
    %7878 = vmatpush1.msra.mxu0 0.0
    %7879 = vmatprep.subr.mxu0 0.0
    %7880 = vmatpush1.msra.mxu0 0.0
    %7881 = vmatprep.subr.mxu0 0.0
    %7882 = vmatpush1.msra.mxu0 0.0
    %7883 = vmatprep.subr.mxu0 0.0
    %7884 = vmatpush1.msra.mxu0 0.0
    %7885 = vmatprep.subr.mxu0 0.0
    %7886 = vmatpush1.msra.mxu0 0.0
    %7887 = vmatprep.subr.mxu0 0.0
    %7888 = vmatpush1.msra.mxu0 0.0
    %7889 = vmatprep.subr.mxu0 0.0
    %7890 = vmatpush1.msra.mxu0 0.0
    %7891 = vmatprep.subr.mxu0 0.0
    %7892 = vmatpush1.msra.mxu0 0.0
    %7893 = vmatprep.subr.mxu0 0.0
    %7894 = vmatpush1.msra.mxu0 0.0
    %7895 = vmatprep.subr.mxu0 0.0
    %7896 = vmatpush1.msra.mxu0 0.0
    %7897 = vmatprep.subr.mxu0 0.0
    %7898 = vmatpush1.msra.mxu0 0.0
    %7899 = vmatprep.subr.mxu0 0.0
    %7900 = vmatpush1.msra.mxu0 0.0
    %7901 = vmatprep.mubr.f32.mxu0 0.0
    %v7902 = vand.u32 %v7544, 4294901760
    %v7903 = vsub.f32 %v7544, %v7902
    %7904 = vmatmul.mubr.f32.gmra.mrb[0].mxu0 %v7903
    %v7905 = vpop.f32.mrb[0].mxu0
    %v7906 = vadd.f32 %v7802, %v7905
    %v7907 = vpop.f32.mrb[0].mxu0
    %7908 = vdwg.mxu0
    %7909 = vmatprep.subr.mxu0 0.0
    %v7910 = vand.u32 %v7547, 4294901760
    %7911 = vmatpush1.msra.mxu0 %v7910
    %7912 = vmatprep.subr.mxu0 0.0
    %v7913 = vand.u32 %v7548, 4294901760
    %7914 = vmatpush1.msra.mxu0 %v7913
    %7915 = vmatprep.subr.mxu0 0.0
    %v7916 = vand.u32 %v7549, 4294901760
    %7917 = vmatpush1.msra.mxu0 %v7916
    %7918 = vmatprep.subr.mxu0 0.0
    %v7919 = vand.u32 %v7550, 4294901760
    %7920 = vmatpush1.msra.mxu0 %v7919
    %7921 = vmatprep.subr.mxu0 0.0
    %v7922 = vand.u32 %v7551, 4294901760
    %7923 = vmatpush1.msra.mxu0 %v7922
    %7924 = vmatprep.subr.mxu0 0.0
    %v7925 = vand.u32 %v7552, 4294901760
    %7926 = vmatpush1.msra.mxu0 %v7925
    %7927 = vmatprep.subr.mxu0 0.0
    %v7928 = vand.u32 %v7553, 4294901760
    %7929 = vmatpush1.msra.mxu0 %v7928
    %7930 = vmatprep.subr.mxu0 0.0
    %v7931 = vand.u32 %v7554, 4294901760
    %7932 = vmatpush1.msra.mxu0 %v7931
    %7933 = vmatprep.subr.mxu0 0.0
    %v7934 = vand.u32 %v7555, 4294901760
    %7935 = vmatpush1.msra.mxu0 %v7934
    %7936 = vmatprep.subr.mxu0 0.0
    %v7937 = vand.u32 %v7556, 4294901760
    %7938 = vmatpush1.msra.mxu0 %v7937
    %7939 = vmatprep.subr.mxu0 0.0
    %v7940 = vand.u32 %v7557, 4294901760
    %7941 = vmatpush1.msra.mxu0 %v7940
    %7942 = vmatprep.subr.mxu0 0.0
    %v7943 = vand.u32 %v7558, 4294901760
    %7944 = vmatpush1.msra.mxu0 %v7943
    %7945 = vmatprep.subr.mxu0 0.0
    %v7946 = vand.u32 %v7559, 4294901760
    %7947 = vmatpush1.msra.mxu0 %v7946
    %7948 = vmatprep.subr.mxu0 0.0
    %v7949 = vand.u32 %v7560, 4294901760
    %7950 = vmatpush1.msra.mxu0 %v7949
    %7951 = vmatprep.subr.mxu0 0.0
    %v7952 = vand.u32 %v7561, 4294901760
    %7953 = vmatpush1.msra.mxu0 %v7952
    %7954 = vmatprep.subr.mxu0 0.0
    %v7955 = vand.u32 %v7562, 4294901760
    %7956 = vmatpush1.msra.mxu0 %v7955
    %7957 = vmatprep.subr.mxu0 0.0
    %7958 = vmatpush1.msra.mxu0 0.0
    %7959 = vmatprep.subr.mxu0 0.0
    %7960 = vmatpush1.msra.mxu0 0.0
    %7961 = vmatprep.subr.mxu0 0.0
    %7962 = vmatpush1.msra.mxu0 0.0
    %7963 = vmatprep.subr.mxu0 0.0
    %7964 = vmatpush1.msra.mxu0 0.0
    %7965 = vmatprep.subr.mxu0 0.0
    %7966 = vmatpush1.msra.mxu0 0.0
    %7967 = vmatprep.subr.mxu0 0.0
    %7968 = vmatpush1.msra.mxu0 0.0
    %7969 = vmatprep.subr.mxu0 0.0
    %7970 = vmatpush1.msra.mxu0 0.0
    %7971 = vmatprep.subr.mxu0 0.0
    %7972 = vmatpush1.msra.mxu0 0.0
    %7973 = vmatprep.subr.mxu0 0.0
    %7974 = vmatpush1.msra.mxu0 0.0
    %7975 = vmatprep.subr.mxu0 0.0
    %7976 = vmatpush1.msra.mxu0 0.0
    %7977 = vmatprep.subr.mxu0 0.0
    %7978 = vmatpush1.msra.mxu0 0.0
    %7979 = vmatprep.subr.mxu0 0.0
    %7980 = vmatpush1.msra.mxu0 0.0
    %7981 = vmatprep.subr.mxu0 0.0
    %7982 = vmatpush1.msra.mxu0 0.0
    %7983 = vmatprep.subr.mxu0 0.0
    %7984 = vmatpush1.msra.mxu0 0.0
    %7985 = vmatprep.subr.mxu0 0.0
    %7986 = vmatpush1.msra.mxu0 0.0
    %7987 = vmatprep.subr.mxu0 0.0
    %7988 = vmatpush1.msra.mxu0 0.0
    %7989 = vmatprep.mubr.f32.mxu0 0.0
    %v7990 = vand.u32 %v7544, 4294901760
    %v7991 = vsub.f32 %v7544, %v7990
    %v7992 = vand.u32 %v7991, 4294901760
    %7993 = vmatmul.mubr.f32.gmra.mrb[0].mxu0 %v7992
    %v7994 = vpop.f32.mrb[0].mxu0
    %v7995 = vadd.f32 %v7906, %v7994
    %v7996 = vpop.f32.mrb[0].mxu0
    %7997 = vdwg.mxu0
    %7998 = vmatprep.subr.mxu0 0.0
    %v7999 = vand.u32 %v7547, 4294901760
    %v8000 = vsub.f32 %v7547, %v7999
    %v8001 = vand.u32 %v8000, 4294901760
    %8002 = vmatpush1.msra.mxu0 %v8001
    %8003 = vmatprep.subr.mxu0 0.0
    %v8004 = vand.u32 %v7548, 4294901760
    %v8005 = vsub.f32 %v7548, %v8004
    %v8006 = vand.u32 %v8005, 4294901760
    %8007 = vmatpush1.msra.mxu0 %v8006
    %8008 = vmatprep.subr.mxu0 0.0
    %v8009 = vand.u32 %v7549, 4294901760
    %v8010 = vsub.f32 %v7549, %v8009
    %v8011 = vand.u32 %v8010, 4294901760
    %8012 = vmatpush1.msra.mxu0 %v8011
    %8013 = vmatprep.subr.mxu0 0.0
    %v8014 = vand.u32 %v7550, 4294901760
    %v8015 = vsub.f32 %v7550, %v8014
    %v8016 = vand.u32 %v8015, 4294901760
    %8017 = vmatpush1.msra.mxu0 %v8016
    %8018 = vmatprep.subr.mxu0 0.0
    %v8019 = vand.u32 %v7551, 4294901760
    %v8020 = vsub.f32 %v7551, %v8019
    %v8021 = vand.u32 %v8020, 4294901760
    %8022 = vmatpush1.msra.mxu0 %v8021
    %8023 = vmatprep.subr.mxu0 0.0
    %v8024 = vand.u32 %v7552, 4294901760
    %v8025 = vsub.f32 %v7552, %v8024
    %v8026 = vand.u32 %v8025, 4294901760
    %8027 = vmatpush1.msra.mxu0 %v8026
    %8028 = vmatprep.subr.mxu0 0.0
    %v8029 = vand.u32 %v7553, 4294901760
    %v8030 = vsub.f32 %v7553, %v8029
    %v8031 = vand.u32 %v8030, 4294901760
    %8032 = vmatpush1.msra.mxu0 %v8031
    %8033 = vmatprep.subr.mxu0 0.0
    %v8034 = vand.u32 %v7554, 4294901760
    %v8035 = vsub.f32 %v7554, %v8034
    %v8036 = vand.u32 %v8035, 4294901760
    %8037 = vmatpush1.msra.mxu0 %v8036
    %8038 = vmatprep.subr.mxu0 0.0
    %v8039 = vand.u32 %v7555, 4294901760
    %v8040 = vsub.f32 %v7555, %v8039
    %v8041 = vand.u32 %v8040, 4294901760
    %8042 = vmatpush1.msra.mxu0 %v8041
    %8043 = vmatprep.subr.mxu0 0.0
    %v8044 = vand.u32 %v7556, 4294901760
    %v8045 = vsub.f32 %v7556, %v8044
    %v8046 = vand.u32 %v8045, 4294901760
    %8047 = vmatpush1.msra.mxu0 %v8046
    %8048 = vmatprep.subr.mxu0 0.0
    %v8049 = vand.u32 %v7557, 4294901760
    %v8050 = vsub.f32 %v7557, %v8049
    %v8051 = vand.u32 %v8050, 4294901760
    %8052 = vmatpush1.msra.mxu0 %v8051
    %8053 = vmatprep.subr.mxu0 0.0
    %v8054 = vand.u32 %v7558, 4294901760
    %v8055 = vsub.f32 %v7558, %v8054
    %v8056 = vand.u32 %v8055, 4294901760
    %8057 = vmatpush1.msra.mxu0 %v8056
    %8058 = vmatprep.subr.mxu0 0.0
    %v8059 = vand.u32 %v7559, 4294901760
    %v8060 = vsub.f32 %v7559, %v8059
    %v8061 = vand.u32 %v8060, 4294901760
    %8062 = vmatpush1.msra.mxu0 %v8061
    %8063 = vmatprep.subr.mxu0 0.0
    %v8064 = vand.u32 %v7560, 4294901760
    %v8065 = vsub.f32 %v7560, %v8064
    %v8066 = vand.u32 %v8065, 4294901760
    %8067 = vmatpush1.msra.mxu0 %v8066
    %8068 = vmatprep.subr.mxu0 0.0
    %v8069 = vand.u32 %v7561, 4294901760
    %v8070 = vsub.f32 %v7561, %v8069
    %v8071 = vand.u32 %v8070, 4294901760
    %8072 = vmatpush1.msra.mxu0 %v8071
    %8073 = vmatprep.subr.mxu0 0.0
    %v8074 = vand.u32 %v7562, 4294901760
    %v8075 = vsub.f32 %v7562, %v8074
    %v8076 = vand.u32 %v8075, 4294901760
    %8077 = vmatpush1.msra.mxu0 %v8076
    %8078 = vmatprep.subr.mxu0 0.0
    %8079 = vmatpush1.msra.mxu0 0.0
    %8080 = vmatprep.subr.mxu0 0.0
    %8081 = vmatpush1.msra.mxu0 0.0
    %8082 = vmatprep.subr.mxu0 0.0
    %8083 = vmatpush1.msra.mxu0 0.0
    %8084 = vmatprep.subr.mxu0 0.0
    %8085 = vmatpush1.msra.mxu0 0.0
    %8086 = vmatprep.subr.mxu0 0.0
    %8087 = vmatpush1.msra.mxu0 0.0
    %8088 = vmatprep.subr.mxu0 0.0
    %8089 = vmatpush1.msra.mxu0 0.0
    %8090 = vmatprep.subr.mxu0 0.0
    %8091 = vmatpush1.msra.mxu0 0.0
    %8092 = vmatprep.subr.mxu0 0.0
    %8093 = vmatpush1.msra.mxu0 0.0
    %8094 = vmatprep.subr.mxu0 0.0
    %8095 = vmatpush1.msra.mxu0 0.0
    %8096 = vmatprep.subr.mxu0 0.0
    %8097 = vmatpush1.msra.mxu0 0.0
    %8098 = vmatprep.subr.mxu0 0.0
    %8099 = vmatpush1.msra.mxu0 0.0
    %8100 = vmatprep.subr.mxu0 0.0
    %8101 = vmatpush1.msra.mxu0 0.0
    %8102 = vmatprep.subr.mxu0 0.0
    %8103 = vmatpush1.msra.mxu0 0.0
    %8104 = vmatprep.subr.mxu0 0.0
    %8105 = vmatpush1.msra.mxu0 0.0
    %8106 = vmatprep.subr.mxu0 0.0
    %8107 = vmatpush1.msra.mxu0 0.0
    %8108 = vmatprep.subr.mxu0 0.0
    %8109 = vmatpush1.msra.mxu0 0.0
    %8110 = vmatprep.mubr.f32.mxu0 0.0
    %v8111 = vand.u32 %v7544, 4294901760
    %8112 = vmatmul.mubr.f32.gmra.mrb[0].mxu0 %v8111
    %v8113 = vpop.f32.mrb[0].mxu0
    %v8114 = vadd.f32 %v7995, %v8113
    %v8115 = vpop.f32.mrb[0].mxu0
    %8116 = vdwg.mxu0
    %8117 = vmatprep.subr.mxu0 0.0
    %v8118 = vand.u32 %v7547, 4294901760
    %8119 = vmatpush1.msra.mxu0 %v8118
    %8120 = vmatprep.subr.mxu0 0.0
    %v8121 = vand.u32 %v7548, 4294901760
    %8122 = vmatpush1.msra.mxu0 %v8121
    %8123 = vmatprep.subr.mxu0 0.0
    %v8124 = vand.u32 %v7549, 4294901760
    %8125 = vmatpush1.msra.mxu0 %v8124
    %8126 = vmatprep.subr.mxu0 0.0
    %v8127 = vand.u32 %v7550, 4294901760
    %8128 = vmatpush1.msra.mxu0 %v8127
    %8129 = vmatprep.subr.mxu0 0.0
    %v8130 = vand.u32 %v7551, 4294901760
    %8131 = vmatpush1.msra.mxu0 %v8130
    %8132 = vmatprep.subr.mxu0 0.0
    %v8133 = vand.u32 %v7552, 4294901760
    %8134 = vmatpush1.msra.mxu0 %v8133
    %8135 = vmatprep.subr.mxu0 0.0
    %v8136 = vand.u32 %v7553, 4294901760
    %8137 = vmatpush1.msra.mxu0 %v8136
    %8138 = vmatprep.subr.mxu0 0.0
    %v8139 = vand.u32 %v7554, 4294901760
    %8140 = vmatpush1.msra.mxu0 %v8139
    %8141 = vmatprep.subr.mxu0 0.0
    %v8142 = vand.u32 %v7555, 4294901760
    %8143 = vmatpush1.msra.mxu0 %v8142
    %8144 = vmatprep.subr.mxu0 0.0
    %v8145 = vand.u32 %v7556, 4294901760
    %8146 = vmatpush1.msra.mxu0 %v8145
    %8147 = vmatprep.subr.mxu0 0.0
    %v8148 = vand.u32 %v7557, 4294901760
    %8149 = vmatpush1.msra.mxu0 %v8148
    %8150 = vmatprep.subr.mxu0 0.0
    %v8151 = vand.u32 %v7558, 4294901760
    %8152 = vmatpush1.msra.mxu0 %v8151
    %8153 = vmatprep.subr.mxu0 0.0
    %v8154 = vand.u32 %v7559, 4294901760
    %8155 = vmatpush1.msra.mxu0 %v8154
    %8156 = vmatprep.subr.mxu0 0.0
    %v8157 = vand.u32 %v7560, 4294901760
    %8158 = vmatpush1.msra.mxu0 %v8157
    %8159 = vmatprep.subr.mxu0 0.0
    %v8160 = vand.u32 %v7561, 4294901760
    %8161 = vmatpush1.msra.mxu0 %v8160
    %8162 = vmatprep.subr.mxu0 0.0
    %v8163 = vand.u32 %v7562, 4294901760
    %8164 = vmatpush1.msra.mxu0 %v8163
    %8165 = vmatprep.subr.mxu0 0.0
    %8166 = vmatpush1.msra.mxu0 0.0
    %8167 = vmatprep.subr.mxu0 0.0
    %8168 = vmatpush1.msra.mxu0 0.0
    %8169 = vmatprep.subr.mxu0 0.0
    %8170 = vmatpush1.msra.mxu0 0.0
    %8171 = vmatprep.subr.mxu0 0.0
    %8172 = vmatpush1.msra.mxu0 0.0
    %8173 = vmatprep.subr.mxu0 0.0
    %8174 = vmatpush1.msra.mxu0 0.0
    %8175 = vmatprep.subr.mxu0 0.0
    %8176 = vmatpush1.msra.mxu0 0.0
    %8177 = vmatprep.subr.mxu0 0.0
    %8178 = vmatpush1.msra.mxu0 0.0
    %8179 = vmatprep.subr.mxu0 0.0
    %8180 = vmatpush1.msra.mxu0 0.0
    %8181 = vmatprep.subr.mxu0 0.0
    %8182 = vmatpush1.msra.mxu0 0.0
    %8183 = vmatprep.subr.mxu0 0.0
    %8184 = vmatpush1.msra.mxu0 0.0
    %8185 = vmatprep.subr.mxu0 0.0
    %8186 = vmatpush1.msra.mxu0 0.0
    %8187 = vmatprep.subr.mxu0 0.0
    %8188 = vmatpush1.msra.mxu0 0.0
    %8189 = vmatprep.subr.mxu0 0.0
    %8190 = vmatpush1.msra.mxu0 0.0
    %8191 = vmatprep.subr.mxu0 0.0
    %8192 = vmatpush1.msra.mxu0 0.0
    %8193 = vmatprep.subr.mxu0 0.0
    %8194 = vmatpush1.msra.mxu0 0.0
    %8195 = vmatprep.subr.mxu0 0.0
    %8196 = vmatpush1.msra.mxu0 0.0
    %8197 = vmatprep.mubr.f32.mxu0 0.0
    %v8198 = vand.u32 %v7544, 4294901760
    %8199 = vmatmul.mubr.f32.gmra.mrb[0].mxu0 %v8198
    %v8200 = vpop.f32.mrb[0].mxu0
    %v8201 = vadd.f32 %v8114, %v8200
    %v8202 = vpop.f32.mrb[0].mxu0
    %8203 = vdwg.mxu0
    %v8204 = vtanh.pop %v8201
    %v8205 = vadd.f32 %v7542, %v8204
    %s8206 = scalar_lea.vmem [#allocation2], %s5549
    %v8207 = vld [vmem:[%s8206] sm:$0x1]
    %s8208 = smul.u32 %s5548, 128
    %s8209 = scalar_lea.vmem [#allocation6], %s8208
    %v8210 = vld [vmem:[%s8209] sm:$0xff]
    %v8211 = vld [vmem:[%s8209 + $0x8] sm:$0xff]
    %v8212 = vld [vmem:[%s8209 + $0x10] sm:$0xff]
    %v8213 = vld [vmem:[%s8209 + $0x18] sm:$0xff]
    %v8214 = vld [vmem:[%s8209 + $0x20] sm:$0xff]
    %v8215 = vld [vmem:[%s8209 + $0x28] sm:$0xff]
    %v8216 = vld [vmem:[%s8209 + $0x30] sm:$0xff]
    %v8217 = vld [vmem:[%s8209 + $0x38] sm:$0xff]
    %v8218 = vld [vmem:[%s8209 + $0x40] sm:$0xff]
    %v8219 = vld [vmem:[%s8209 + $0x48] sm:$0xff]
    %v8220 = vld [vmem:[%s8209 + $0x50] sm:$0xff]
    %v8221 = vld [vmem:[%s8209 + $0x58] sm:$0xff]
    %v8222 = vld [vmem:[%s8209 + $0x60] sm:$0xff]
    %v8223 = vld [vmem:[%s8209 + $0x68] sm:$0xff]
    %v8224 = vld [vmem:[%s8209 + $0x70] sm:$0xff]
    %v8225 = vld [vmem:[%s8209 + $0x78] sm:$0xff]
    %8226 = vmatprep.subr.mxu0 0.0
    %v8227 = vand.u32 %v8210, 4294901760
    %8228 = vmatpush1.msra.mxu0 %v8227
    %8229 = vmatprep.subr.mxu0 0.0
    %v8230 = vand.u32 %v8211, 4294901760
    %8231 = vmatpush1.msra.mxu0 %v8230
    %8232 = vmatprep.subr.mxu0 0.0
    %v8233 = vand.u32 %v8212, 4294901760
    %8234 = vmatpush1.msra.mxu0 %v8233
    %8235 = vmatprep.subr.mxu0 0.0
    %v8236 = vand.u32 %v8213, 4294901760
    %8237 = vmatpush1.msra.mxu0 %v8236
    %8238 = vmatprep.subr.mxu0 0.0
    %v8239 = vand.u32 %v8214, 4294901760
    %8240 = vmatpush1.msra.mxu0 %v8239
    %8241 = vmatprep.subr.mxu0 0.0
    %v8242 = vand.u32 %v8215, 4294901760
    %8243 = vmatpush1.msra.mxu0 %v8242
    %8244 = vmatprep.subr.mxu0 0.0
    %v8245 = vand.u32 %v8216, 4294901760
    %8246 = vmatpush1.msra.mxu0 %v8245
    %8247 = vmatprep.subr.mxu0 0.0
    %v8248 = vand.u32 %v8217, 4294901760
    %8249 = vmatpush1.msra.mxu0 %v8248
    %8250 = vmatprep.subr.mxu0 0.0
    %v8251 = vand.u32 %v8218, 4294901760
    %8252 = vmatpush1.msra.mxu0 %v8251
    %8253 = vmatprep.subr.mxu0 0.0
    %v8254 = vand.u32 %v8219, 4294901760
    %8255 = vmatpush1.msra.mxu0 %v8254
    %8256 = vmatprep.subr.mxu0 0.0
    %v8257 = vand.u32 %v8220, 4294901760
    %8258 = vmatpush1.msra.mxu0 %v8257
    %8259 = vmatprep.subr.mxu0 0.0
    %v8260 = vand.u32 %v8221, 4294901760
    %8261 = vmatpush1.msra.mxu0 %v8260
    %8262 = vmatprep.subr.mxu0 0.0
    %v8263 = vand.u32 %v8222, 4294901760
    %8264 = vmatpush1.msra.mxu0 %v8263
    %8265 = vmatprep.subr.mxu0 0.0
    %v8266 = vand.u32 %v8223, 4294901760
    %8267 = vmatpush1.msra.mxu0 %v8266
    %8268 = vmatprep.subr.mxu0 0.0
    %v8269 = vand.u32 %v8224, 4294901760
    %8270 = vmatpush1.msra.mxu0 %v8269
    %8271 = vmatprep.subr.mxu0 0.0
    %v8272 = vand.u32 %v8225, 4294901760
    %8273 = vmatpush1.msra.mxu0 %v8272
    %8274 = vmatprep.subr.mxu0 0.0
    %8275 = vmatpush1.msra.mxu0 0.0
    %8276 = vmatprep.subr.mxu0 0.0
    %8277 = vmatpush1.msra.mxu0 0.0
    %8278 = vmatprep.subr.mxu0 0.0
    %8279 = vmatpush1.msra.mxu0 0.0
    %8280 = vmatprep.subr.mxu0 0.0
    %8281 = vmatpush1.msra.mxu0 0.0
    %8282 = vmatprep.subr.mxu0 0.0
    %8283 = vmatpush1.msra.mxu0 0.0
    %8284 = vmatprep.subr.mxu0 0.0
    %8285 = vmatpush1.msra.mxu0 0.0
    %8286 = vmatprep.subr.mxu0 0.0
    %8287 = vmatpush1.msra.mxu0 0.0
    %8288 = vmatprep.subr.mxu0 0.0
    %8289 = vmatpush1.msra.mxu0 0.0
    %8290 = vmatprep.subr.mxu0 0.0
    %8291 = vmatpush1.msra.mxu0 0.0
    %8292 = vmatprep.subr.mxu0 0.0
    %8293 = vmatpush1.msra.mxu0 0.0
    %8294 = vmatprep.subr.mxu0 0.0
    %8295 = vmatpush1.msra.mxu0 0.0
    %8296 = vmatprep.subr.mxu0 0.0
    %8297 = vmatpush1.msra.mxu0 0.0
    %8298 = vmatprep.subr.mxu0 0.0
    %8299 = vmatpush1.msra.mxu0 0.0
    %8300 = vmatprep.subr.mxu0 0.0
    %8301 = vmatpush1.msra.mxu0 0.0
    %8302 = vmatprep.subr.mxu0 0.0
    %8303 = vmatpush1.msra.mxu0 0.0
    %8304 = vmatprep.subr.mxu0 0.0
    %8305 = vmatpush1.msra.mxu0 0.0
    %8306 = vmatprep.mubr.f32.mxu0 0.0
    %v8307 = vand.u32 %v8207, 4294901760
    %v8308 = vsub.f32 %v8207, %v8307
    %v8309 = vand.u32 %v8308, 4294901760
    %v8310 = vsub.f32 %v8308, %v8309
    %v8311 = vand.u32 %v8310, 4294901760
    %8312 = vmatmul.mubr.f32.gmra.mrb[0].mxu0 %v8311
    %v8313 = vpop.f32.mrb[0].mxu0
    %v8314 = vadd.f32 0.0, %v8313
    %v8315 = vpop.f32.mrb[0].mxu0
    %8316 = vdwg.mxu0
    %8317 = vmatprep.subr.mxu0 0.0
    %v8318 = vand.u32 %v8210, 4294901760
    %v8319 = vsub.f32 %v8210, %v8318
    %v8320 = vand.u32 %v8319, 4294901760
    %v8321 = vsub.f32 %v8319, %v8320
    %v8322 = vand.u32 %v8321, 4294901760
    %8323 = vmatpush1.msra.mxu0 %v8322
    %8324 = vmatprep.subr.mxu0 0.0
    %v8325 = vand.u32 %v8211, 4294901760
    %v8326 = vsub.f32 %v8211, %v8325
    %v8327 = vand.u32 %v8326, 4294901760
    %v8328 = vsub.f32 %v8326, %v8327
    %v8329 = vand.u32 %v8328, 4294901760
    %8330 = vmatpush1.msra.mxu0 %v8329
    %8331 = vmatprep.subr.mxu0 0.0
    %v8332 = vand.u32 %v8212, 4294901760
    %v8333 = vsub.f32 %v8212, %v8332
    %v8334 = vand.u32 %v8333, 4294901760
    %v8335 = vsub.f32 %v8333, %v8334
    %v8336 = vand.u32 %v8335, 4294901760
    %8337 = vmatpush1.msra.mxu0 %v8336
    %8338 = vmatprep.subr.mxu0 0.0
    %v8339 = vand.u32 %v8213, 4294901760
    %v8340 = vsub.f32 %v8213, %v8339
    %v8341 = vand.u32 %v8340, 4294901760
    %v8342 = vsub.f32 %v8340, %v8341
    %v8343 = vand.u32 %v8342, 4294901760
    %8344 = vmatpush1.msra.mxu0 %v8343
    %8345 = vmatprep.subr.mxu0 0.0
    %v8346 = vand.u32 %v8214, 4294901760
    %v8347 = vsub.f32 %v8214, %v8346
    %v8348 = vand.u32 %v8347, 4294901760
    %v8349 = vsub.f32 %v8347, %v8348
    %v8350 = vand.u32 %v8349, 4294901760
    %8351 = vmatpush1.msra.mxu0 %v8350
    %8352 = vmatprep.subr.mxu0 0.0
    %v8353 = vand.u32 %v8215, 4294901760
    %v8354 = vsub.f32 %v8215, %v8353
    %v8355 = vand.u32 %v8354, 4294901760
    %v8356 = vsub.f32 %v8354, %v8355
    %v8357 = vand.u32 %v8356, 4294901760
    %8358 = vmatpush1.msra.mxu0 %v8357
    %8359 = vmatprep.subr.mxu0 0.0
    %v8360 = vand.u32 %v8216, 4294901760
    %v8361 = vsub.f32 %v8216, %v8360
    %v8362 = vand.u32 %v8361, 4294901760
    %v8363 = vsub.f32 %v8361, %v8362
    %v8364 = vand.u32 %v8363, 4294901760
    %8365 = vmatpush1.msra.mxu0 %v8364
    %8366 = vmatprep.subr.mxu0 0.0
    %v8367 = vand.u32 %v8217, 4294901760
    %v8368 = vsub.f32 %v8217, %v8367
    %v8369 = vand.u32 %v8368, 4294901760
    %v8370 = vsub.f32 %v8368, %v8369
    %v8371 = vand.u32 %v8370, 4294901760
    %8372 = vmatpush1.msra.mxu0 %v8371
    %8373 = vmatprep.subr.mxu0 0.0
    %v8374 = vand.u32 %v8218, 4294901760
    %v8375 = vsub.f32 %v8218, %v8374
    %v8376 = vand.u32 %v8375, 4294901760
    %v8377 = vsub.f32 %v8375, %v8376
    %v8378 = vand.u32 %v8377, 4294901760
    %8379 = vmatpush1.msra.mxu0 %v8378
    %8380 = vmatprep.subr.mxu0 0.0
    %v8381 = vand.u32 %v8219, 4294901760
    %v8382 = vsub.f32 %v8219, %v8381
    %v8383 = vand.u32 %v8382, 4294901760
    %v8384 = vsub.f32 %v8382, %v8383
    %v8385 = vand.u32 %v8384, 4294901760
    %8386 = vmatpush1.msra.mxu0 %v8385
    %8387 = vmatprep.subr.mxu0 0.0
    %v8388 = vand.u32 %v8220, 4294901760
    %v8389 = vsub.f32 %v8220, %v8388
    %v8390 = vand.u32 %v8389, 4294901760
    %v8391 = vsub.f32 %v8389, %v8390
    %v8392 = vand.u32 %v8391, 4294901760
    %8393 = vmatpush1.msra.mxu0 %v8392
    %8394 = vmatprep.subr.mxu0 0.0
    %v8395 = vand.u32 %v8221, 4294901760
    %v8396 = vsub.f32 %v8221, %v8395
    %v8397 = vand.u32 %v8396, 4294901760
    %v8398 = vsub.f32 %v8396, %v8397
    %v8399 = vand.u32 %v8398, 4294901760
    %8400 = vmatpush1.msra.mxu0 %v8399
    %8401 = vmatprep.subr.mxu0 0.0
    %v8402 = vand.u32 %v8222, 4294901760
    %v8403 = vsub.f32 %v8222, %v8402
    %v8404 = vand.u32 %v8403, 4294901760
    %v8405 = vsub.f32 %v8403, %v8404
    %v8406 = vand.u32 %v8405, 4294901760
    %8407 = vmatpush1.msra.mxu0 %v8406
    %8408 = vmatprep.subr.mxu0 0.0
    %v8409 = vand.u32 %v8223, 4294901760
    %v8410 = vsub.f32 %v8223, %v8409
    %v8411 = vand.u32 %v8410, 4294901760
    %v8412 = vsub.f32 %v8410, %v8411
    %v8413 = vand.u32 %v8412, 4294901760
    %8414 = vmatpush1.msra.mxu0 %v8413
    %8415 = vmatprep.subr.mxu0 0.0
    %v8416 = vand.u32 %v8224, 4294901760
    %v8417 = vsub.f32 %v8224, %v8416
    %v8418 = vand.u32 %v8417, 4294901760
    %v8419 = vsub.f32 %v8417, %v8418
    %v8420 = vand.u32 %v8419, 4294901760
    %8421 = vmatpush1.msra.mxu0 %v8420
    %8422 = vmatprep.subr.mxu0 0.0
    %v8423 = vand.u32 %v8225, 4294901760
    %v8424 = vsub.f32 %v8225, %v8423
    %v8425 = vand.u32 %v8424, 4294901760
    %v8426 = vsub.f32 %v8424, %v8425
    %v8427 = vand.u32 %v8426, 4294901760
    %8428 = vmatpush1.msra.mxu0 %v8427
    %8429 = vmatprep.subr.mxu0 0.0
    %8430 = vmatpush1.msra.mxu0 0.0
    %8431 = vmatprep.subr.mxu0 0.0
    %8432 = vmatpush1.msra.mxu0 0.0
    %8433 = vmatprep.subr.mxu0 0.0
    %8434 = vmatpush1.msra.mxu0 0.0
    %8435 = vmatprep.subr.mxu0 0.0
    %8436 = vmatpush1.msra.mxu0 0.0
    %8437 = vmatprep.subr.mxu0 0.0
    %8438 = vmatpush1.msra.mxu0 0.0
    %8439 = vmatprep.subr.mxu0 0.0
    %8440 = vmatpush1.msra.mxu0 0.0
    %8441 = vmatprep.subr.mxu0 0.0
    %8442 = vmatpush1.msra.mxu0 0.0
    %8443 = vmatprep.subr.mxu0 0.0
    %8444 = vmatpush1.msra.mxu0 0.0
    %8445 = vmatprep.subr.mxu0 0.0
    %8446 = vmatpush1.msra.mxu0 0.0
    %8447 = vmatprep.subr.mxu0 0.0
    %8448 = vmatpush1.msra.mxu0 0.0
    %8449 = vmatprep.subr.mxu0 0.0
    %8450 = vmatpush1.msra.mxu0 0.0
    %8451 = vmatprep.subr.mxu0 0.0
    %8452 = vmatpush1.msra.mxu0 0.0
    %8453 = vmatprep.subr.mxu0 0.0
    %8454 = vmatpush1.msra.mxu0 0.0
    %8455 = vmatprep.subr.mxu0 0.0
    %8456 = vmatpush1.msra.mxu0 0.0
    %8457 = vmatprep.subr.mxu0 0.0
    %8458 = vmatpush1.msra.mxu0 0.0
    %8459 = vmatprep.subr.mxu0 0.0
    %8460 = vmatpush1.msra.mxu0 0.0
    %8461 = vmatprep.mubr.f32.mxu0 0.0
    %v8462 = vand.u32 %v8207, 4294901760
    %8463 = vmatmul.mubr.f32.gmra.mrb[0].mxu0 %v8462
    %v8464 = vpop.f32.mrb[0].mxu0
    %v8465 = vadd.f32 %v8314, %v8464
    %v8466 = vpop.f32.mrb[0].mxu0
    %8467 = vdwg.mxu0
    %8468 = vmatprep.subr.mxu0 0.0
    %v8469 = vand.u32 %v8210, 4294901760
    %v8470 = vsub.f32 %v8210, %v8469
    %8471 = vmatpush1.msra.mxu0 %v8470
    %8472 = vmatprep.subr.mxu0 0.0
    %v8473 = vand.u32 %v8211, 4294901760
    %v8474 = vsub.f32 %v8211, %v8473
    %8475 = vmatpush1.msra.mxu0 %v8474
    %8476 = vmatprep.subr.mxu0 0.0
    %v8477 = vand.u32 %v8212, 4294901760
    %v8478 = vsub.f32 %v8212, %v8477
    %8479 = vmatpush1.msra.mxu0 %v8478
    %8480 = vmatprep.subr.mxu0 0.0
    %v8481 = vand.u32 %v8213, 4294901760
    %v8482 = vsub.f32 %v8213, %v8481
    %8483 = vmatpush1.msra.mxu0 %v8482
    %8484 = vmatprep.subr.mxu0 0.0
    %v8485 = vand.u32 %v8214, 4294901760
    %v8486 = vsub.f32 %v8214, %v8485
    %8487 = vmatpush1.msra.mxu0 %v8486
    %8488 = vmatprep.subr.mxu0 0.0
    %v8489 = vand.u32 %v8215, 4294901760
    %v8490 = vsub.f32 %v8215, %v8489
    %8491 = vmatpush1.msra.mxu0 %v8490
    %8492 = vmatprep.subr.mxu0 0.0
    %v8493 = vand.u32 %v8216, 4294901760
    %v8494 = vsub.f32 %v8216, %v8493
    %8495 = vmatpush1.msra.mxu0 %v8494
    %8496 = vmatprep.subr.mxu0 0.0
    %v8497 = vand.u32 %v8217, 4294901760
    %v8498 = vsub.f32 %v8217, %v8497
    %8499 = vmatpush1.msra.mxu0 %v8498
    %8500 = vmatprep.subr.mxu0 0.0
    %v8501 = vand.u32 %v8218, 4294901760
    %v8502 = vsub.f32 %v8218, %v8501
    %8503 = vmatpush1.msra.mxu0 %v8502
    %8504 = vmatprep.subr.mxu0 0.0
    %v8505 = vand.u32 %v8219, 4294901760
    %v8506 = vsub.f32 %v8219, %v8505
    %8507 = vmatpush1.msra.mxu0 %v8506
    %8508 = vmatprep.subr.mxu0 0.0
    %v8509 = vand.u32 %v8220, 4294901760
    %v8510 = vsub.f32 %v8220, %v8509
    %8511 = vmatpush1.msra.mxu0 %v8510
    %8512 = vmatprep.subr.mxu0 0.0
    %v8513 = vand.u32 %v8221, 4294901760
    %v8514 = vsub.f32 %v8221, %v8513
    %8515 = vmatpush1.msra.mxu0 %v8514
    %8516 = vmatprep.subr.mxu0 0.0
    %v8517 = vand.u32 %v8222, 4294901760
    %v8518 = vsub.f32 %v8222, %v8517
    %8519 = vmatpush1.msra.mxu0 %v8518
    %8520 = vmatprep.subr.mxu0 0.0
    %v8521 = vand.u32 %v8223, 4294901760
    %v8522 = vsub.f32 %v8223, %v8521
    %8523 = vmatpush1.msra.mxu0 %v8522
    %8524 = vmatprep.subr.mxu0 0.0
    %v8525 = vand.u32 %v8224, 4294901760
    %v8526 = vsub.f32 %v8224, %v8525
    %8527 = vmatpush1.msra.mxu0 %v8526
    %8528 = vmatprep.subr.mxu0 0.0
    %v8529 = vand.u32 %v8225, 4294901760
    %v8530 = vsub.f32 %v8225, %v8529
    %8531 = vmatpush1.msra.mxu0 %v8530
    %8532 = vmatprep.subr.mxu0 0.0
    %8533 = vmatpush1.msra.mxu0 0.0
    %8534 = vmatprep.subr.mxu0 0.0
    %8535 = vmatpush1.msra.mxu0 0.0
    %8536 = vmatprep.subr.mxu0 0.0
    %8537 = vmatpush1.msra.mxu0 0.0
    %8538 = vmatprep.subr.mxu0 0.0
    %8539 = vmatpush1.msra.mxu0 0.0
    %8540 = vmatprep.subr.mxu0 0.0
    %8541 = vmatpush1.msra.mxu0 0.0
    %8542 = vmatprep.subr.mxu0 0.0
    %8543 = vmatpush1.msra.mxu0 0.0
    %8544 = vmatprep.subr.mxu0 0.0
    %8545 = vmatpush1.msra.mxu0 0.0
    %8546 = vmatprep.subr.mxu0 0.0
    %8547 = vmatpush1.msra.mxu0 0.0
    %8548 = vmatprep.subr.mxu0 0.0
    %8549 = vmatpush1.msra.mxu0 0.0
    %8550 = vmatprep.subr.mxu0 0.0
    %8551 = vmatpush1.msra.mxu0 0.0
    %8552 = vmatprep.subr.mxu0 0.0
    %8553 = vmatpush1.msra.mxu0 0.0
    %8554 = vmatprep.subr.mxu0 0.0
    %8555 = vmatpush1.msra.mxu0 0.0
    %8556 = vmatprep.subr.mxu0 0.0
    %8557 = vmatpush1.msra.mxu0 0.0
    %8558 = vmatprep.subr.mxu0 0.0
    %8559 = vmatpush1.msra.mxu0 0.0
    %8560 = vmatprep.subr.mxu0 0.0
    %8561 = vmatpush1.msra.mxu0 0.0
    %8562 = vmatprep.subr.mxu0 0.0
    %8563 = vmatpush1.msra.mxu0 0.0
    %8564 = vmatprep.mubr.f32.mxu0 0.0
    %v8565 = vand.u32 %v8207, 4294901760
    %v8566 = vsub.f32 %v8207, %v8565
    %8567 = vmatmul.mubr.f32.gmra.mrb[0].mxu0 %v8566
    %v8568 = vpop.f32.mrb[0].mxu0
    %v8569 = vadd.f32 %v8465, %v8568
    %v8570 = vpop.f32.mrb[0].mxu0
    %8571 = vdwg.mxu0
    %8572 = vmatprep.subr.mxu0 0.0
    %v8573 = vand.u32 %v8210, 4294901760
    %8574 = vmatpush1.msra.mxu0 %v8573
    %8575 = vmatprep.subr.mxu0 0.0
    %v8576 = vand.u32 %v8211, 4294901760
    %8577 = vmatpush1.msra.mxu0 %v8576
    %8578 = vmatprep.subr.mxu0 0.0
    %v8579 = vand.u32 %v8212, 4294901760
    %8580 = vmatpush1.msra.mxu0 %v8579
    %8581 = vmatprep.subr.mxu0 0.0
    %v8582 = vand.u32 %v8213, 4294901760
    %8583 = vmatpush1.msra.mxu0 %v8582
    %8584 = vmatprep.subr.mxu0 0.0
    %v8585 = vand.u32 %v8214, 4294901760
    %8586 = vmatpush1.msra.mxu0 %v8585
    %8587 = vmatprep.subr.mxu0 0.0
    %v8588 = vand.u32 %v8215, 4294901760
    %8589 = vmatpush1.msra.mxu0 %v8588
    %8590 = vmatprep.subr.mxu0 0.0
    %v8591 = vand.u32 %v8216, 4294901760
    %8592 = vmatpush1.msra.mxu0 %v8591
    %8593 = vmatprep.subr.mxu0 0.0
    %v8594 = vand.u32 %v8217, 4294901760
    %8595 = vmatpush1.msra.mxu0 %v8594
    %8596 = vmatprep.subr.mxu0 0.0
    %v8597 = vand.u32 %v8218, 4294901760
    %8598 = vmatpush1.msra.mxu0 %v8597
    %8599 = vmatprep.subr.mxu0 0.0
    %v8600 = vand.u32 %v8219, 4294901760
    %8601 = vmatpush1.msra.mxu0 %v8600
    %8602 = vmatprep.subr.mxu0 0.0
    %v8603 = vand.u32 %v8220, 4294901760
    %8604 = vmatpush1.msra.mxu0 %v8603
    %8605 = vmatprep.subr.mxu0 0.0
    %v8606 = vand.u32 %v8221, 4294901760
    %8607 = vmatpush1.msra.mxu0 %v8606
    %8608 = vmatprep.subr.mxu0 0.0
    %v8609 = vand.u32 %v8222, 4294901760
    %8610 = vmatpush1.msra.mxu0 %v8609
    %8611 = vmatprep.subr.mxu0 0.0
    %v8612 = vand.u32 %v8223, 4294901760
    %8613 = vmatpush1.msra.mxu0 %v8612
    %8614 = vmatprep.subr.mxu0 0.0
    %v8615 = vand.u32 %v8224, 4294901760
    %8616 = vmatpush1.msra.mxu0 %v8615
    %8617 = vmatprep.subr.mxu0 0.0
    %v8618 = vand.u32 %v8225, 4294901760
    %8619 = vmatpush1.msra.mxu0 %v8618
    %8620 = vmatprep.subr.mxu0 0.0
    %8621 = vmatpush1.msra.mxu0 0.0
    %8622 = vmatprep.subr.mxu0 0.0
    %8623 = vmatpush1.msra.mxu0 0.0
    %8624 = vmatprep.subr.mxu0 0.0
    %8625 = vmatpush1.msra.mxu0 0.0
    %8626 = vmatprep.subr.mxu0 0.0
    %8627 = vmatpush1.msra.mxu0 0.0
    %8628 = vmatprep.subr.mxu0 0.0
    %8629 = vmatpush1.msra.mxu0 0.0
    %8630 = vmatprep.subr.mxu0 0.0
    %8631 = vmatpush1.msra.mxu0 0.0
    %8632 = vmatprep.subr.mxu0 0.0
    %8633 = vmatpush1.msra.mxu0 0.0
    %8634 = vmatprep.subr.mxu0 0.0
    %8635 = vmatpush1.msra.mxu0 0.0
    %8636 = vmatprep.subr.mxu0 0.0
    %8637 = vmatpush1.msra.mxu0 0.0
    %8638 = vmatprep.subr.mxu0 0.0
    %8639 = vmatpush1.msra.mxu0 0.0
    %8640 = vmatprep.subr.mxu0 0.0
    %8641 = vmatpush1.msra.mxu0 0.0
    %8642 = vmatprep.subr.mxu0 0.0
    %8643 = vmatpush1.msra.mxu0 0.0
    %8644 = vmatprep.subr.mxu0 0.0
    %8645 = vmatpush1.msra.mxu0 0.0
    %8646 = vmatprep.subr.mxu0 0.0
    %8647 = vmatpush1.msra.mxu0 0.0
    %8648 = vmatprep.subr.mxu0 0.0
    %8649 = vmatpush1.msra.mxu0 0.0
    %8650 = vmatprep.subr.mxu0 0.0
    %8651 = vmatpush1.msra.mxu0 0.0
    %8652 = vmatprep.mubr.f32.mxu0 0.0
    %v8653 = vand.u32 %v8207, 4294901760
    %v8654 = vsub.f32 %v8207, %v8653
    %v8655 = vand.u32 %v8654, 4294901760
    %8656 = vmatmul.mubr.f32.gmra.mrb[0].mxu0 %v8655
    %v8657 = vpop.f32.mrb[0].mxu0
    %v8658 = vadd.f32 %v8569, %v8657
    %v8659 = vpop.f32.mrb[0].mxu0
    %8660 = vdwg.mxu0
    %8661 = vmatprep.subr.mxu0 0.0
    %v8662 = vand.u32 %v8210, 4294901760
    %v8663 = vsub.f32 %v8210, %v8662
    %v8664 = vand.u32 %v8663, 4294901760
    %8665 = vmatpush1.msra.mxu0 %v8664
    %8666 = vmatprep.subr.mxu0 0.0
    %v8667 = vand.u32 %v8211, 4294901760
    %v8668 = vsub.f32 %v8211, %v8667
    %v8669 = vand.u32 %v8668, 4294901760
    %8670 = vmatpush1.msra.mxu0 %v8669
    %8671 = vmatprep.subr.mxu0 0.0
    %v8672 = vand.u32 %v8212, 4294901760
    %v8673 = vsub.f32 %v8212, %v8672
    %v8674 = vand.u32 %v8673, 4294901760
    %8675 = vmatpush1.msra.mxu0 %v8674
    %8676 = vmatprep.subr.mxu0 0.0
    %v8677 = vand.u32 %v8213, 4294901760
    %v8678 = vsub.f32 %v8213, %v8677
    %v8679 = vand.u32 %v8678, 4294901760
    %8680 = vmatpush1.msra.mxu0 %v8679
    %8681 = vmatprep.subr.mxu0 0.0
    %v8682 = vand.u32 %v8214, 4294901760
    %v8683 = vsub.f32 %v8214, %v8682
    %v8684 = vand.u32 %v8683, 4294901760
    %8685 = vmatpush1.msra.mxu0 %v8684
    %8686 = vmatprep.subr.mxu0 0.0
    %v8687 = vand.u32 %v8215, 4294901760
    %v8688 = vsub.f32 %v8215, %v8687
    %v8689 = vand.u32 %v8688, 4294901760
    %8690 = vmatpush1.msra.mxu0 %v8689
    %8691 = vmatprep.subr.mxu0 0.0
    %v8692 = vand.u32 %v8216, 4294901760
    %v8693 = vsub.f32 %v8216, %v8692
    %v8694 = vand.u32 %v8693, 4294901760
    %8695 = vmatpush1.msra.mxu0 %v8694
    %8696 = vmatprep.subr.mxu0 0.0
    %v8697 = vand.u32 %v8217, 4294901760
    %v8698 = vsub.f32 %v8217, %v8697
    %v8699 = vand.u32 %v8698, 4294901760
    %8700 = vmatpush1.msra.mxu0 %v8699
    %8701 = vmatprep.subr.mxu0 0.0
    %v8702 = vand.u32 %v8218, 4294901760
    %v8703 = vsub.f32 %v8218, %v8702
    %v8704 = vand.u32 %v8703, 4294901760
    %8705 = vmatpush1.msra.mxu0 %v8704
    %8706 = vmatprep.subr.mxu0 0.0
    %v8707 = vand.u32 %v8219, 4294901760
    %v8708 = vsub.f32 %v8219, %v8707
    %v8709 = vand.u32 %v8708, 4294901760
    %8710 = vmatpush1.msra.mxu0 %v8709
    %8711 = vmatprep.subr.mxu0 0.0
    %v8712 = vand.u32 %v8220, 4294901760
    %v8713 = vsub.f32 %v8220, %v8712
    %v8714 = vand.u32 %v8713, 4294901760
    %8715 = vmatpush1.msra.mxu0 %v8714
    %8716 = vmatprep.subr.mxu0 0.0
    %v8717 = vand.u32 %v8221, 4294901760
    %v8718 = vsub.f32 %v8221, %v8717
    %v8719 = vand.u32 %v8718, 4294901760
    %8720 = vmatpush1.msra.mxu0 %v8719
    %8721 = vmatprep.subr.mxu0 0.0
    %v8722 = vand.u32 %v8222, 4294901760
    %v8723 = vsub.f32 %v8222, %v8722
    %v8724 = vand.u32 %v8723, 4294901760
    %8725 = vmatpush1.msra.mxu0 %v8724
    %8726 = vmatprep.subr.mxu0 0.0
    %v8727 = vand.u32 %v8223, 4294901760
    %v8728 = vsub.f32 %v8223, %v8727
    %v8729 = vand.u32 %v8728, 4294901760
    %8730 = vmatpush1.msra.mxu0 %v8729
    %8731 = vmatprep.subr.mxu0 0.0
    %v8732 = vand.u32 %v8224, 4294901760
    %v8733 = vsub.f32 %v8224, %v8732
    %v8734 = vand.u32 %v8733, 4294901760
    %8735 = vmatpush1.msra.mxu0 %v8734
    %8736 = vmatprep.subr.mxu0 0.0
    %v8737 = vand.u32 %v8225, 4294901760
    %v8738 = vsub.f32 %v8225, %v8737
    %v8739 = vand.u32 %v8738, 4294901760
    %8740 = vmatpush1.msra.mxu0 %v8739
    %8741 = vmatprep.subr.mxu0 0.0
    %8742 = vmatpush1.msra.mxu0 0.0
    %8743 = vmatprep.subr.mxu0 0.0
    %8744 = vmatpush1.msra.mxu0 0.0
    %8745 = vmatprep.subr.mxu0 0.0
    %8746 = vmatpush1.msra.mxu0 0.0
    %8747 = vmatprep.subr.mxu0 0.0
    %8748 = vmatpush1.msra.mxu0 0.0
    %8749 = vmatprep.subr.mxu0 0.0
    %8750 = vmatpush1.msra.mxu0 0.0
    %8751 = vmatprep.subr.mxu0 0.0
    %8752 = vmatpush1.msra.mxu0 0.0
    %8753 = vmatprep.subr.mxu0 0.0
    %8754 = vmatpush1.msra.mxu0 0.0
    %8755 = vmatprep.subr.mxu0 0.0
    %8756 = vmatpush1.msra.mxu0 0.0
    %8757 = vmatprep.subr.mxu0 0.0
    %8758 = vmatpush1.msra.mxu0 0.0
    %8759 = vmatprep.subr.mxu0 0.0
    %8760 = vmatpush1.msra.mxu0 0.0
    %8761 = vmatprep.subr.mxu0 0.0
    %8762 = vmatpush1.msra.mxu0 0.0
    %8763 = vmatprep.subr.mxu0 0.0
    %8764 = vmatpush1.msra.mxu0 0.0
    %8765 = vmatprep.subr.mxu0 0.0
    %8766 = vmatpush1.msra.mxu0 0.0
    %8767 = vmatprep.subr.mxu0 0.0
    %8768 = vmatpush1.msra.mxu0 0.0
    %8769 = vmatprep.subr.mxu0 0.0
    %8770 = vmatpush1.msra.mxu0 0.0
    %8771 = vmatprep.subr.mxu0 0.0
    %8772 = vmatpush1.msra.mxu0 0.0
    %8773 = vmatprep.mubr.f32.mxu0 0.0
    %v8774 = vand.u32 %v8207, 4294901760
    %8775 = vmatmul.mubr.f32.gmra.mrb[0].mxu0 %v8774
    %v8776 = vpop.f32.mrb[0].mxu0
    %v8777 = vadd.f32 %v8658, %v8776
    %v8778 = vpop.f32.mrb[0].mxu0
    %8779 = vdwg.mxu0
    %8780 = vmatprep.subr.mxu0 0.0
    %v8781 = vand.u32 %v8210, 4294901760
    %8782 = vmatpush1.msra.mxu0 %v8781
    %8783 = vmatprep.subr.mxu0 0.0
    %v8784 = vand.u32 %v8211, 4294901760
    %8785 = vmatpush1.msra.mxu0 %v8784
    %8786 = vmatprep.subr.mxu0 0.0
    %v8787 = vand.u32 %v8212, 4294901760
    %8788 = vmatpush1.msra.mxu0 %v8787
    %8789 = vmatprep.subr.mxu0 0.0
    %v8790 = vand.u32 %v8213, 4294901760
    %8791 = vmatpush1.msra.mxu0 %v8790
    %8792 = vmatprep.subr.mxu0 0.0
    %v8793 = vand.u32 %v8214, 4294901760
    %8794 = vmatpush1.msra.mxu0 %v8793
    %8795 = vmatprep.subr.mxu0 0.0
    %v8796 = vand.u32 %v8215, 4294901760
    %8797 = vmatpush1.msra.mxu0 %v8796
    %8798 = vmatprep.subr.mxu0 0.0
    %v8799 = vand.u32 %v8216, 4294901760
    %8800 = vmatpush1.msra.mxu0 %v8799
    %8801 = vmatprep.subr.mxu0 0.0
    %v8802 = vand.u32 %v8217, 4294901760
    %8803 = vmatpush1.msra.mxu0 %v8802
    %8804 = vmatprep.subr.mxu0 0.0
    %v8805 = vand.u32 %v8218, 4294901760
    %8806 = vmatpush1.msra.mxu0 %v8805
    %8807 = vmatprep.subr.mxu0 0.0
    %v8808 = vand.u32 %v8219, 4294901760
    %8809 = vmatpush1.msra.mxu0 %v8808
    %8810 = vmatprep.subr.mxu0 0.0
    %v8811 = vand.u32 %v8220, 4294901760
    %8812 = vmatpush1.msra.mxu0 %v8811
    %8813 = vmatprep.subr.mxu0 0.0
    %v8814 = vand.u32 %v8221, 4294901760
    %8815 = vmatpush1.msra.mxu0 %v8814
    %8816 = vmatprep.subr.mxu0 0.0
    %v8817 = vand.u32 %v8222, 4294901760
    %8818 = vmatpush1.msra.mxu0 %v8817
    %8819 = vmatprep.subr.mxu0 0.0
    %v8820 = vand.u32 %v8223, 4294901760
    %8821 = vmatpush1.msra.mxu0 %v8820
    %8822 = vmatprep.subr.mxu0 0.0
    %v8823 = vand.u32 %v8224, 4294901760
    %8824 = vmatpush1.msra.mxu0 %v8823
    %8825 = vmatprep.subr.mxu0 0.0
    %v8826 = vand.u32 %v8225, 4294901760
    %8827 = vmatpush1.msra.mxu0 %v8826
    %8828 = vmatprep.subr.mxu0 0.0
    %8829 = vmatpush1.msra.mxu0 0.0
    %8830 = vmatprep.subr.mxu0 0.0
    %8831 = vmatpush1.msra.mxu0 0.0
    %8832 = vmatprep.subr.mxu0 0.0
    %8833 = vmatpush1.msra.mxu0 0.0
    %8834 = vmatprep.subr.mxu0 0.0
    %8835 = vmatpush1.msra.mxu0 0.0
    %8836 = vmatprep.subr.mxu0 0.0
    %8837 = vmatpush1.msra.mxu0 0.0
    %8838 = vmatprep.subr.mxu0 0.0
    %8839 = vmatpush1.msra.mxu0 0.0
    %8840 = vmatprep.subr.mxu0 0.0
    %8841 = vmatpush1.msra.mxu0 0.0
    %8842 = vmatprep.subr.mxu0 0.0
    %8843 = vmatpush1.msra.mxu0 0.0
    %8844 = vmatprep.subr.mxu0 0.0
    %8845 = vmatpush1.msra.mxu0 0.0
    %8846 = vmatprep.subr.mxu0 0.0
    %8847 = vmatpush1.msra.mxu0 0.0
    %8848 = vmatprep.subr.mxu0 0.0
    %8849 = vmatpush1.msra.mxu0 0.0
    %8850 = vmatprep.subr.mxu0 0.0
    %8851 = vmatpush1.msra.mxu0 0.0
    %8852 = vmatprep.subr.mxu0 0.0
    %8853 = vmatpush1.msra.mxu0 0.0
    %8854 = vmatprep.subr.mxu0 0.0
    %8855 = vmatpush1.msra.mxu0 0.0
    %8856 = vmatprep.subr.mxu0 0.0
    %8857 = vmatpush1.msra.mxu0 0.0
    %8858 = vmatprep.subr.mxu0 0.0
    %8859 = vmatpush1.msra.mxu0 0.0
    %8860 = vmatprep.mubr.f32.mxu0 0.0
    %v8861 = vand.u32 %v8207, 4294901760
    %8862 = vmatmul.mubr.f32.gmra.mrb[0].mxu0 %v8861
    %v8863 = vpop.f32.mrb[0].mxu0
    %v8864 = vadd.f32 %v8777, %v8863
    %v8865 = vpop.f32.mrb[0].mxu0
    %8866 = vdwg.mxu0
    %v8867 = vtanh.pop %v8864
    %v8868 = vadd.f32 %v8205, %v8867
    %s8869 = scalar_lea.vmem [#allocation2], %s5551
    %v8870 = vld [vmem:[%s8869] sm:$0x1]
    %s8871 = smul.u32 %s5550, 128
    %s8872 = scalar_lea.vmem [#allocation6], %s8871
    %v8873 = vld [vmem:[%s8872] sm:$0xff]
    %v8874 = vld [vmem:[%s8872 + $0x8] sm:$0xff]
    %v8875 = vld [vmem:[%s8872 + $0x10] sm:$0xff]
    %v8876 = vld [vmem:[%s8872 + $0x18] sm:$0xff]
    %v8877 = vld [vmem:[%s8872 + $0x20] sm:$0xff]
    %v8878 = vld [vmem:[%s8872 + $0x28] sm:$0xff]
    %v8879 = vld [vmem:[%s8872 + $0x30] sm:$0xff]
    %v8880 = vld [vmem:[%s8872 + $0x38] sm:$0xff]
    %v8881 = vld [vmem:[%s8872 + $0x40] sm:$0xff]
    %v8882 = vld [vmem:[%s8872 + $0x48] sm:$0xff]
    %v8883 = vld [vmem:[%s8872 + $0x50] sm:$0xff]
    %v8884 = vld [vmem:[%s8872 + $0x58] sm:$0xff]
    %v8885 = vld [vmem:[%s8872 + $0x60] sm:$0xff]
    %v8886 = vld [vmem:[%s8872 + $0x68] sm:$0xff]
    %v8887 = vld [vmem:[%s8872 + $0x70] sm:$0xff]
    %v8888 = vld [vmem:[%s8872 + $0x78] sm:$0xff]
    %8889 = vmatprep.subr.mxu0 0.0
    %v8890 = vand.u32 %v8873, 4294901760
    %8891 = vmatpush1.msra.mxu0 %v8890
    %8892 = vmatprep.subr.mxu0 0.0
    %v8893 = vand.u32 %v8874, 4294901760
    %8894 = vmatpush1.msra.mxu0 %v8893
    %8895 = vmatprep.subr.mxu0 0.0
    %v8896 = vand.u32 %v8875, 4294901760
    %8897 = vmatpush1.msra.mxu0 %v8896
    %8898 = vmatprep.subr.mxu0 0.0
    %v8899 = vand.u32 %v8876, 4294901760
    %8900 = vmatpush1.msra.mxu0 %v8899
    %8901 = vmatprep.subr.mxu0 0.0
    %v8902 = vand.u32 %v8877, 4294901760
    %8903 = vmatpush1.msra.mxu0 %v8902
    %8904 = vmatprep.subr.mxu0 0.0
    %v8905 = vand.u32 %v8878, 4294901760
    %8906 = vmatpush1.msra.mxu0 %v8905
    %8907 = vmatprep.subr.mxu0 0.0
    %v8908 = vand.u32 %v8879, 4294901760
    %8909 = vmatpush1.msra.mxu0 %v8908
    %8910 = vmatprep.subr.mxu0 0.0
    %v8911 = vand.u32 %v8880, 4294901760
    %8912 = vmatpush1.msra.mxu0 %v8911
    %8913 = vmatprep.subr.mxu0 0.0
    %v8914 = vand.u32 %v8881, 4294901760
    %8915 = vmatpush1.msra.mxu0 %v8914
    %8916 = vmatprep.subr.mxu0 0.0
    %v8917 = vand.u32 %v8882, 4294901760
    %8918 = vmatpush1.msra.mxu0 %v8917
    %8919 = vmatprep.subr.mxu0 0.0
    %v8920 = vand.u32 %v8883, 4294901760
    %8921 = vmatpush1.msra.mxu0 %v8920
    %8922 = vmatprep.subr.mxu0 0.0
    %v8923 = vand.u32 %v8884, 4294901760
    %8924 = vmatpush1.msra.mxu0 %v8923
    %8925 = vmatprep.subr.mxu0 0.0
    %v8926 = vand.u32 %v8885, 4294901760
    %8927 = vmatpush1.msra.mxu0 %v8926
    %8928 = vmatprep.subr.mxu0 0.0
    %v8929 = vand.u32 %v8886, 4294901760
    %8930 = vmatpush1.msra.mxu0 %v8929
    %8931 = vmatprep.subr.mxu0 0.0
    %v8932 = vand.u32 %v8887, 4294901760
    %8933 = vmatpush1.msra.mxu0 %v8932
    %8934 = vmatprep.subr.mxu0 0.0
    %v8935 = vand.u32 %v8888, 4294901760
    %8936 = vmatpush1.msra.mxu0 %v8935
    %8937 = vmatprep.subr.mxu0 0.0
    %8938 = vmatpush1.msra.mxu0 0.0
    %8939 = vmatprep.subr.mxu0 0.0
    %8940 = vmatpush1.msra.mxu0 0.0
    %8941 = vmatprep.subr.mxu0 0.0
    %8942 = vmatpush1.msra.mxu0 0.0
    %8943 = vmatprep.subr.mxu0 0.0
    %8944 = vmatpush1.msra.mxu0 0.0
    %8945 = vmatprep.subr.mxu0 0.0
    %8946 = vmatpush1.msra.mxu0 0.0
    %8947 = vmatprep.subr.mxu0 0.0
    %8948 = vmatpush1.msra.mxu0 0.0
    %8949 = vmatprep.subr.mxu0 0.0
    %8950 = vmatpush1.msra.mxu0 0.0
    %8951 = vmatprep.subr.mxu0 0.0
    %8952 = vmatpush1.msra.mxu0 0.0
    %8953 = vmatprep.subr.mxu0 0.0
    %8954 = vmatpush1.msra.mxu0 0.0
    %8955 = vmatprep.subr.mxu0 0.0
    %8956 = vmatpush1.msra.mxu0 0.0
    %8957 = vmatprep.subr.mxu0 0.0
    %8958 = vmatpush1.msra.mxu0 0.0
    %8959 = vmatprep.subr.mxu0 0.0
    %8960 = vmatpush1.msra.mxu0 0.0
    %8961 = vmatprep.subr.mxu0 0.0
    %8962 = vmatpush1.msra.mxu0 0.0
    %8963 = vmatprep.subr.mxu0 0.0
    %8964 = vmatpush1.msra.mxu0 0.0
    %8965 = vmatprep.subr.mxu0 0.0
    %8966 = vmatpush1.msra.mxu0 0.0
    %8967 = vmatprep.subr.mxu0 0.0
    %8968 = vmatpush1.msra.mxu0 0.0
    %8969 = vmatprep.mubr.f32.mxu0 0.0
    %v8970 = vand.u32 %v8870, 4294901760
    %v8971 = vsub.f32 %v8870, %v8970
    %v8972 = vand.u32 %v8971, 4294901760
    %v8973 = vsub.f32 %v8971, %v8972
    %v8974 = vand.u32 %v8973, 4294901760
    %8975 = vmatmul.mubr.f32.gmra.mrb[0].mxu0 %v8974
    %v8976 = vpop.f32.mrb[0].mxu0
    %v8977 = vadd.f32 0.0, %v8976
    %v8978 = vpop.f32.mrb[0].mxu0
    %8979 = vdwg.mxu0
    %8980 = vmatprep.subr.mxu0 0.0
    %v8981 = vand.u32 %v8873, 4294901760
    %v8982 = vsub.f32 %v8873, %v8981
    %v8983 = vand.u32 %v8982, 4294901760
    %v8984 = vsub.f32 %v8982, %v8983
    %v8985 = vand.u32 %v8984, 4294901760
    %8986 = vmatpush1.msra.mxu0 %v8985
    %8987 = vmatprep.subr.mxu0 0.0
    %v8988 = vand.u32 %v8874, 4294901760
    %v8989 = vsub.f32 %v8874, %v8988
    %v8990 = vand.u32 %v8989, 4294901760
    %v8991 = vsub.f32 %v8989, %v8990
    %v8992 = vand.u32 %v8991, 4294901760
    %8993 = vmatpush1.msra.mxu0 %v8992
    %8994 = vmatprep.subr.mxu0 0.0
    %v8995 = vand.u32 %v8875, 4294901760
    %v8996 = vsub.f32 %v8875, %v8995
    %v8997 = vand.u32 %v8996, 4294901760
    %v8998 = vsub.f32 %v8996, %v8997
    %v8999 = vand.u32 %v8998, 4294901760
    %9000 = vmatpush1.msra.mxu0 %v8999
    %9001 = vmatprep.subr.mxu0 0.0
    %v9002 = vand.u32 %v8876, 4294901760
    %v9003 = vsub.f32 %v8876, %v9002
    %v9004 = vand.u32 %v9003, 4294901760
    %v9005 = vsub.f32 %v9003, %v9004
    %v9006 = vand.u32 %v9005, 4294901760
    %9007 = vmatpush1.msra.mxu0 %v9006
    %9008 = vmatprep.subr.mxu0 0.0
    %v9009 = vand.u32 %v8877, 4294901760
    %v9010 = vsub.f32 %v8877, %v9009
    %v9011 = vand.u32 %v9010, 4294901760
    %v9012 = vsub.f32 %v9010, %v9011
    %v9013 = vand.u32 %v9012, 4294901760
    %9014 = vmatpush1.msra.mxu0 %v9013
    %9015 = vmatprep.subr.mxu0 0.0
    %v9016 = vand.u32 %v8878, 4294901760
    %v9017 = vsub.f32 %v8878, %v9016
    %v9018 = vand.u32 %v9017, 4294901760
    %v9019 = vsub.f32 %v9017, %v9018
    %v9020 = vand.u32 %v9019, 4294901760
    %9021 = vmatpush1.msra.mxu0 %v9020
    %9022 = vmatprep.subr.mxu0 0.0
    %v9023 = vand.u32 %v8879, 4294901760
    %v9024 = vsub.f32 %v8879, %v9023
    %v9025 = vand.u32 %v9024, 4294901760
    %v9026 = vsub.f32 %v9024, %v9025
    %v9027 = vand.u32 %v9026, 4294901760
    %9028 = vmatpush1.msra.mxu0 %v9027
    %9029 = vmatprep.subr.mxu0 0.0
    %v9030 = vand.u32 %v8880, 4294901760
    %v9031 = vsub.f32 %v8880, %v9030
    %v9032 = vand.u32 %v9031, 4294901760
    %v9033 = vsub.f32 %v9031, %v9032
    %v9034 = vand.u32 %v9033, 4294901760
    %9035 = vmatpush1.msra.mxu0 %v9034
    %9036 = vmatprep.subr.mxu0 0.0
    %v9037 = vand.u32 %v8881, 4294901760
    %v9038 = vsub.f32 %v8881, %v9037
    %v9039 = vand.u32 %v9038, 4294901760
    %v9040 = vsub.f32 %v9038, %v9039
    %v9041 = vand.u32 %v9040, 4294901760
    %9042 = vmatpush1.msra.mxu0 %v9041
    %9043 = vmatprep.subr.mxu0 0.0
    %v9044 = vand.u32 %v8882, 4294901760
    %v9045 = vsub.f32 %v8882, %v9044
    %v9046 = vand.u32 %v9045, 4294901760
    %v9047 = vsub.f32 %v9045, %v9046
    %v9048 = vand.u32 %v9047, 4294901760
    %9049 = vmatpush1.msra.mxu0 %v9048
    %9050 = vmatprep.subr.mxu0 0.0
    %v9051 = vand.u32 %v8883, 4294901760
    %v9052 = vsub.f32 %v8883, %v9051
    %v9053 = vand.u32 %v9052, 4294901760
    %v9054 = vsub.f32 %v9052, %v9053
    %v9055 = vand.u32 %v9054, 4294901760
    %9056 = vmatpush1.msra.mxu0 %v9055
    %9057 = vmatprep.subr.mxu0 0.0
    %v9058 = vand.u32 %v8884, 4294901760
    %v9059 = vsub.f32 %v8884, %v9058
    %v9060 = vand.u32 %v9059, 4294901760
    %v9061 = vsub.f32 %v9059, %v9060
    %v9062 = vand.u32 %v9061, 4294901760
    %9063 = vmatpush1.msra.mxu0 %v9062
    %9064 = vmatprep.subr.mxu0 0.0
    %v9065 = vand.u32 %v8885, 4294901760
    %v9066 = vsub.f32 %v8885, %v9065
    %v9067 = vand.u32 %v9066, 4294901760
    %v9068 = vsub.f32 %v9066, %v9067
    %v9069 = vand.u32 %v9068, 4294901760
    %9070 = vmatpush1.msra.mxu0 %v9069
    %9071 = vmatprep.subr.mxu0 0.0
    %v9072 = vand.u32 %v8886, 4294901760
    %v9073 = vsub.f32 %v8886, %v9072
    %v9074 = vand.u32 %v9073, 4294901760
    %v9075 = vsub.f32 %v9073, %v9074
    %v9076 = vand.u32 %v9075, 4294901760
    %9077 = vmatpush1.msra.mxu0 %v9076
    %9078 = vmatprep.subr.mxu0 0.0
    %v9079 = vand.u32 %v8887, 4294901760
    %v9080 = vsub.f32 %v8887, %v9079
    %v9081 = vand.u32 %v9080, 4294901760
    %v9082 = vsub.f32 %v9080, %v9081
    %v9083 = vand.u32 %v9082, 4294901760
    %9084 = vmatpush1.msra.mxu0 %v9083
    %9085 = vmatprep.subr.mxu0 0.0
    %v9086 = vand.u32 %v8888, 4294901760
    %v9087 = vsub.f32 %v8888, %v9086
    %v9088 = vand.u32 %v9087, 4294901760
    %v9089 = vsub.f32 %v9087, %v9088
    %v9090 = vand.u32 %v9089, 4294901760
    %9091 = vmatpush1.msra.mxu0 %v9090
    %9092 = vmatprep.subr.mxu0 0.0
    %9093 = vmatpush1.msra.mxu0 0.0
    %9094 = vmatprep.subr.mxu0 0.0
    %9095 = vmatpush1.msra.mxu0 0.0
    %9096 = vmatprep.subr.mxu0 0.0
    %9097 = vmatpush1.msra.mxu0 0.0
    %9098 = vmatprep.subr.mxu0 0.0
    %9099 = vmatpush1.msra.mxu0 0.0
    %9100 = vmatprep.subr.mxu0 0.0
    %9101 = vmatpush1.msra.mxu0 0.0
    %9102 = vmatprep.subr.mxu0 0.0
    %9103 = vmatpush1.msra.mxu0 0.0
    %9104 = vmatprep.subr.mxu0 0.0
    %9105 = vmatpush1.msra.mxu0 0.0
    %9106 = vmatprep.subr.mxu0 0.0
    %9107 = vmatpush1.msra.mxu0 0.0
    %9108 = vmatprep.subr.mxu0 0.0
    %9109 = vmatpush1.msra.mxu0 0.0
    %9110 = vmatprep.subr.mxu0 0.0
    %9111 = vmatpush1.msra.mxu0 0.0
    %9112 = vmatprep.subr.mxu0 0.0
    %9113 = vmatpush1.msra.mxu0 0.0
    %9114 = vmatprep.subr.mxu0 0.0
    %9115 = vmatpush1.msra.mxu0 0.0
    %9116 = vmatprep.subr.mxu0 0.0
    %9117 = vmatpush1.msra.mxu0 0.0
    %9118 = vmatprep.subr.mxu0 0.0
    %9119 = vmatpush1.msra.mxu0 0.0
    %9120 = vmatprep.subr.mxu0 0.0
    %9121 = vmatpush1.msra.mxu0 0.0
    %9122 = vmatprep.subr.mxu0 0.0
    %9123 = vmatpush1.msra.mxu0 0.0
    %9124 = vmatprep.mubr.f32.mxu0 0.0
    %v9125 = vand.u32 %v8870, 4294901760
    %9126 = vmatmul.mubr.f32.gmra.mrb[0].mxu0 %v9125
    %v9127 = vpop.f32.mrb[0].mxu0
    %v9128 = vadd.f32 %v8977, %v9127
    %v9129 = vpop.f32.mrb[0].mxu0
    %9130 = vdwg.mxu0
    %9131 = vmatprep.subr.mxu0 0.0
    %v9132 = vand.u32 %v8873, 4294901760
    %v9133 = vsub.f32 %v8873, %v9132
    %9134 = vmatpush1.msra.mxu0 %v9133
    %9135 = vmatprep.subr.mxu0 0.0
    %v9136 = vand.u32 %v8874, 4294901760
    %v9137 = vsub.f32 %v8874, %v9136
    %9138 = vmatpush1.msra.mxu0 %v9137
    %9139 = vmatprep.subr.mxu0 0.0
    %v9140 = vand.u32 %v8875, 4294901760
    %v9141 = vsub.f32 %v8875, %v9140
    %9142 = vmatpush1.msra.mxu0 %v9141
    %9143 = vmatprep.subr.mxu0 0.0
    %v9144 = vand.u32 %v8876, 4294901760
    %v9145 = vsub.f32 %v8876, %v9144
    %9146 = vmatpush1.msra.mxu0 %v9145
    %9147 = vmatprep.subr.mxu0 0.0
    %v9148 = vand.u32 %v8877, 4294901760
    %v9149 = vsub.f32 %v8877, %v9148
    %9150 = vmatpush1.msra.mxu0 %v9149
    %9151 = vmatprep.subr.mxu0 0.0
    %v9152 = vand.u32 %v8878, 4294901760
    %v9153 = vsub.f32 %v8878, %v9152
    %9154 = vmatpush1.msra.mxu0 %v9153
    %9155 = vmatprep.subr.mxu0 0.0
    %v9156 = vand.u32 %v8879, 4294901760
    %v9157 = vsub.f32 %v8879, %v9156
    %9158 = vmatpush1.msra.mxu0 %v9157
    %9159 = vmatprep.subr.mxu0 0.0
    %v9160 = vand.u32 %v8880, 4294901760
    %v9161 = vsub.f32 %v8880, %v9160
    %9162 = vmatpush1.msra.mxu0 %v9161
    %9163 = vmatprep.subr.mxu0 0.0
    %v9164 = vand.u32 %v8881, 4294901760
    %v9165 = vsub.f32 %v8881, %v9164
    %9166 = vmatpush1.msra.mxu0 %v9165
    %9167 = vmatprep.subr.mxu0 0.0
    %v9168 = vand.u32 %v8882, 4294901760
    %v9169 = vsub.f32 %v8882, %v9168
    %9170 = vmatpush1.msra.mxu0 %v9169
    %9171 = vmatprep.subr.mxu0 0.0
    %v9172 = vand.u32 %v8883, 4294901760
    %v9173 = vsub.f32 %v8883, %v9172
    %9174 = vmatpush1.msra.mxu0 %v9173
    %9175 = vmatprep.subr.mxu0 0.0
    %v9176 = vand.u32 %v8884, 4294901760
    %v9177 = vsub.f32 %v8884, %v9176
    %9178 = vmatpush1.msra.mxu0 %v9177
    %9179 = vmatprep.subr.mxu0 0.0
    %v9180 = vand.u32 %v8885, 4294901760
    %v9181 = vsub.f32 %v8885, %v9180
    %9182 = vmatpush1.msra.mxu0 %v9181
    %9183 = vmatprep.subr.mxu0 0.0
    %v9184 = vand.u32 %v8886, 4294901760
    %v9185 = vsub.f32 %v8886, %v9184
    %9186 = vmatpush1.msra.mxu0 %v9185
    %9187 = vmatprep.subr.mxu0 0.0
    %v9188 = vand.u32 %v8887, 4294901760
    %v9189 = vsub.f32 %v8887, %v9188
    %9190 = vmatpush1.msra.mxu0 %v9189
    %9191 = vmatprep.subr.mxu0 0.0
    %v9192 = vand.u32 %v8888, 4294901760
    %v9193 = vsub.f32 %v8888, %v9192
    %9194 = vmatpush1.msra.mxu0 %v9193
    %9195 = vmatprep.subr.mxu0 0.0
    %9196 = vmatpush1.msra.mxu0 0.0
    %9197 = vmatprep.subr.mxu0 0.0
    %9198 = vmatpush1.msra.mxu0 0.0
    %9199 = vmatprep.subr.mxu0 0.0
    %9200 = vmatpush1.msra.mxu0 0.0
    %9201 = vmatprep.subr.mxu0 0.0
    %9202 = vmatpush1.msra.mxu0 0.0
    %9203 = vmatprep.subr.mxu0 0.0
    %9204 = vmatpush1.msra.mxu0 0.0
    %9205 = vmatprep.subr.mxu0 0.0
    %9206 = vmatpush1.msra.mxu0 0.0
    %9207 = vmatprep.subr.mxu0 0.0
    %9208 = vmatpush1.msra.mxu0 0.0
    %9209 = vmatprep.subr.mxu0 0.0
    %9210 = vmatpush1.msra.mxu0 0.0
    %9211 = vmatprep.subr.mxu0 0.0
    %9212 = vmatpush1.msra.mxu0 0.0
    %9213 = vmatprep.subr.mxu0 0.0
    %9214 = vmatpush1.msra.mxu0 0.0
    %9215 = vmatprep.subr.mxu0 0.0
    %9216 = vmatpush1.msra.mxu0 0.0
    %9217 = vmatprep.subr.mxu0 0.0
    %9218 = vmatpush1.msra.mxu0 0.0
    %9219 = vmatprep.subr.mxu0 0.0
    %9220 = vmatpush1.msra.mxu0 0.0
    %9221 = vmatprep.subr.mxu0 0.0
    %9222 = vmatpush1.msra.mxu0 0.0
    %9223 = vmatprep.subr.mxu0 0.0
    %9224 = vmatpush1.msra.mxu0 0.0
    %9225 = vmatprep.subr.mxu0 0.0
    %9226 = vmatpush1.msra.mxu0 0.0
    %9227 = vmatprep.mubr.f32.mxu0 0.0
    %v9228 = vand.u32 %v8870, 4294901760
    %v9229 = vsub.f32 %v8870, %v9228
    %9230 = vmatmul.mubr.f32.gmra.mrb[0].mxu0 %v9229
    %v9231 = vpop.f32.mrb[0].mxu0
    %v9232 = vadd.f32 %v9128, %v9231
    %v9233 = vpop.f32.mrb[0].mxu0
    %9234 = vdwg.mxu0
    %9235 = vmatprep.subr.mxu0 0.0
    %v9236 = vand.u32 %v8873, 4294901760
    %9237 = vmatpush1.msra.mxu0 %v9236
    %9238 = vmatprep.subr.mxu0 0.0
    %v9239 = vand.u32 %v8874, 4294901760
    %9240 = vmatpush1.msra.mxu0 %v9239
    %9241 = vmatprep.subr.mxu0 0.0
    %v9242 = vand.u32 %v8875, 4294901760
    %9243 = vmatpush1.msra.mxu0 %v9242
    %9244 = vmatprep.subr.mxu0 0.0
    %v9245 = vand.u32 %v8876, 4294901760
    %9246 = vmatpush1.msra.mxu0 %v9245
    %9247 = vmatprep.subr.mxu0 0.0
    %v9248 = vand.u32 %v8877, 4294901760
    %9249 = vmatpush1.msra.mxu0 %v9248
    %9250 = vmatprep.subr.mxu0 0.0
    %v9251 = vand.u32 %v8878, 4294901760
    %9252 = vmatpush1.msra.mxu0 %v9251
    %9253 = vmatprep.subr.mxu0 0.0
    %v9254 = vand.u32 %v8879, 4294901760
    %9255 = vmatpush1.msra.mxu0 %v9254
    %9256 = vmatprep.subr.mxu0 0.0
    %v9257 = vand.u32 %v8880, 4294901760
    %9258 = vmatpush1.msra.mxu0 %v9257
    %9259 = vmatprep.subr.mxu0 0.0
    %v9260 = vand.u32 %v8881, 4294901760
    %9261 = vmatpush1.msra.mxu0 %v9260
    %9262 = vmatprep.subr.mxu0 0.0
    %v9263 = vand.u32 %v8882, 4294901760
    %9264 = vmatpush1.msra.mxu0 %v9263
    %9265 = vmatprep.subr.mxu0 0.0
    %v9266 = vand.u32 %v8883, 4294901760
    %9267 = vmatpush1.msra.mxu0 %v9266
    %9268 = vmatprep.subr.mxu0 0.0
    %v9269 = vand.u32 %v8884, 4294901760
    %9270 = vmatpush1.msra.mxu0 %v9269
    %9271 = vmatprep.subr.mxu0 0.0
    %v9272 = vand.u32 %v8885, 4294901760
    %9273 = vmatpush1.msra.mxu0 %v9272
    %9274 = vmatprep.subr.mxu0 0.0
    %v9275 = vand.u32 %v8886, 4294901760
    %9276 = vmatpush1.msra.mxu0 %v9275
    %9277 = vmatprep.subr.mxu0 0.0
    %v9278 = vand.u32 %v8887, 4294901760
    %9279 = vmatpush1.msra.mxu0 %v9278
    %9280 = vmatprep.subr.mxu0 0.0
    %v9281 = vand.u32 %v8888, 4294901760
    %9282 = vmatpush1.msra.mxu0 %v9281
    %9283 = vmatprep.subr.mxu0 0.0
    %9284 = vmatpush1.msra.mxu0 0.0
    %9285 = vmatprep.subr.mxu0 0.0
    %9286 = vmatpush1.msra.mxu0 0.0
    %9287 = vmatprep.subr.mxu0 0.0
    %9288 = vmatpush1.msra.mxu0 0.0
    %9289 = vmatprep.subr.mxu0 0.0
    %9290 = vmatpush1.msra.mxu0 0.0
    %9291 = vmatprep.subr.mxu0 0.0
    %9292 = vmatpush1.msra.mxu0 0.0
    %9293 = vmatprep.subr.mxu0 0.0
    %9294 = vmatpush1.msra.mxu0 0.0
    %9295 = vmatprep.subr.mxu0 0.0
    %9296 = vmatpush1.msra.mxu0 0.0
    %9297 = vmatprep.subr.mxu0 0.0
    %9298 = vmatpush1.msra.mxu0 0.0
    %9299 = vmatprep.subr.mxu0 0.0
    %9300 = vmatpush1.msra.mxu0 0.0
    %9301 = vmatprep.subr.mxu0 0.0
    %9302 = vmatpush1.msra.mxu0 0.0
    %9303 = vmatprep.subr.mxu0 0.0
    %9304 = vmatpush1.msra.mxu0 0.0
    %9305 = vmatprep.subr.mxu0 0.0
    %9306 = vmatpush1.msra.mxu0 0.0
    %9307 = vmatprep.subr.mxu0 0.0
    %9308 = vmatpush1.msra.mxu0 0.0
    %9309 = vmatprep.subr.mxu0 0.0
    %9310 = vmatpush1.msra.mxu0 0.0
    %9311 = vmatprep.subr.mxu0 0.0
    %9312 = vmatpush1.msra.mxu0 0.0
    %9313 = vmatprep.subr.mxu0 0.0
    %9314 = vmatpush1.msra.mxu0 0.0
    %9315 = vmatprep.mubr.f32.mxu0 0.0
    %v9316 = vand.u32 %v8870, 4294901760
    %v9317 = vsub.f32 %v8870, %v9316
    %v9318 = vand.u32 %v9317, 4294901760
    %9319 = vmatmul.mubr.f32.gmra.mrb[0].mxu0 %v9318
    %v9320 = vpop.f32.mrb[0].mxu0
    %v9321 = vadd.f32 %v9232, %v9320
    %v9322 = vpop.f32.mrb[0].mxu0
    %9323 = vdwg.mxu0
    %9324 = vmatprep.subr.mxu0 0.0
    %v9325 = vand.u32 %v8873, 4294901760
    %v9326 = vsub.f32 %v8873, %v9325
    %v9327 = vand.u32 %v9326, 4294901760
    %9328 = vmatpush1.msra.mxu0 %v9327
    %9329 = vmatprep.subr.mxu0 0.0
    %v9330 = vand.u32 %v8874, 4294901760
    %v9331 = vsub.f32 %v8874, %v9330
    %v9332 = vand.u32 %v9331, 4294901760
    %9333 = vmatpush1.msra.mxu0 %v9332
    %9334 = vmatprep.subr.mxu0 0.0
    %v9335 = vand.u32 %v8875, 4294901760
    %v9336 = vsub.f32 %v8875, %v9335
    %v9337 = vand.u32 %v9336, 4294901760
    %9338 = vmatpush1.msra.mxu0 %v9337
    %9339 = vmatprep.subr.mxu0 0.0
    %v9340 = vand.u32 %v8876, 4294901760
    %v9341 = vsub.f32 %v8876, %v9340
    %v9342 = vand.u32 %v9341, 4294901760
    %9343 = vmatpush1.msra.mxu0 %v9342
    %9344 = vmatprep.subr.mxu0 0.0
    %v9345 = vand.u32 %v8877, 4294901760
    %v9346 = vsub.f32 %v8877, %v9345
    %v9347 = vand.u32 %v9346, 4294901760
    %9348 = vmatpush1.msra.mxu0 %v9347
    %9349 = vmatprep.subr.mxu0 0.0
    %v9350 = vand.u32 %v8878, 4294901760
    %v9351 = vsub.f32 %v8878, %v9350
    %v9352 = vand.u32 %v9351, 4294901760
    %9353 = vmatpush1.msra.mxu0 %v9352
    %9354 = vmatprep.subr.mxu0 0.0
    %v9355 = vand.u32 %v8879, 4294901760
    %v9356 = vsub.f32 %v8879, %v9355
    %v9357 = vand.u32 %v9356, 4294901760
    %9358 = vmatpush1.msra.mxu0 %v9357
    %9359 = vmatprep.subr.mxu0 0.0
    %v9360 = vand.u32 %v8880, 4294901760
    %v9361 = vsub.f32 %v8880, %v9360
    %v9362 = vand.u32 %v9361, 4294901760
    %9363 = vmatpush1.msra.mxu0 %v9362
    %9364 = vmatprep.subr.mxu0 0.0
    %v9365 = vand.u32 %v8881, 4294901760
    %v9366 = vsub.f32 %v8881, %v9365
    %v9367 = vand.u32 %v9366, 4294901760
    %9368 = vmatpush1.msra.mxu0 %v9367
    %9369 = vmatprep.subr.mxu0 0.0
    %v9370 = vand.u32 %v8882, 4294901760
    %v9371 = vsub.f32 %v8882, %v9370
    %v9372 = vand.u32 %v9371, 4294901760
    %9373 = vmatpush1.msra.mxu0 %v9372
    %9374 = vmatprep.subr.mxu0 0.0
    %v9375 = vand.u32 %v8883, 4294901760
    %v9376 = vsub.f32 %v8883, %v9375
    %v9377 = vand.u32 %v9376, 4294901760
    %9378 = vmatpush1.msra.mxu0 %v9377
    %9379 = vmatprep.subr.mxu0 0.0
    %v9380 = vand.u32 %v8884, 4294901760
    %v9381 = vsub.f32 %v8884, %v9380
    %v9382 = vand.u32 %v9381, 4294901760
    %9383 = vmatpush1.msra.mxu0 %v9382
    %9384 = vmatprep.subr.mxu0 0.0
    %v9385 = vand.u32 %v8885, 4294901760
    %v9386 = vsub.f32 %v8885, %v9385
    %v9387 = vand.u32 %v9386, 4294901760
    %9388 = vmatpush1.msra.mxu0 %v9387
    %9389 = vmatprep.subr.mxu0 0.0
    %v9390 = vand.u32 %v8886, 4294901760
    %v9391 = vsub.f32 %v8886, %v9390
    %v9392 = vand.u32 %v9391, 4294901760
    %9393 = vmatpush1.msra.mxu0 %v9392
    %9394 = vmatprep.subr.mxu0 0.0
    %v9395 = vand.u32 %v8887, 4294901760
    %v9396 = vsub.f32 %v8887, %v9395
    %v9397 = vand.u32 %v9396, 4294901760
    %9398 = vmatpush1.msra.mxu0 %v9397
    %9399 = vmatprep.subr.mxu0 0.0
    %v9400 = vand.u32 %v8888, 4294901760
    %v9401 = vsub.f32 %v8888, %v9400
    %v9402 = vand.u32 %v9401, 4294901760
    %9403 = vmatpush1.msra.mxu0 %v9402
    %9404 = vmatprep.subr.mxu0 0.0
    %9405 = vmatpush1.msra.mxu0 0.0
    %9406 = vmatprep.subr.mxu0 0.0
    %9407 = vmatpush1.msra.mxu0 0.0
    %9408 = vmatprep.subr.mxu0 0.0
    %9409 = vmatpush1.msra.mxu0 0.0
    %9410 = vmatprep.subr.mxu0 0.0
    %9411 = vmatpush1.msra.mxu0 0.0
    %9412 = vmatprep.subr.mxu0 0.0
    %9413 = vmatpush1.msra.mxu0 0.0
    %9414 = vmatprep.subr.mxu0 0.0
    %9415 = vmatpush1.msra.mxu0 0.0
    %9416 = vmatprep.subr.mxu0 0.0
    %9417 = vmatpush1.msra.mxu0 0.0
    %9418 = vmatprep.subr.mxu0 0.0
    %9419 = vmatpush1.msra.mxu0 0.0
    %9420 = vmatprep.subr.mxu0 0.0
    %9421 = vmatpush1.msra.mxu0 0.0
    %9422 = vmatprep.subr.mxu0 0.0
    %9423 = vmatpush1.msra.mxu0 0.0
    %9424 = vmatprep.subr.mxu0 0.0
    %9425 = vmatpush1.msra.mxu0 0.0
    %9426 = vmatprep.subr.mxu0 0.0
    %9427 = vmatpush1.msra.mxu0 0.0
    %9428 = vmatprep.subr.mxu0 0.0
    %9429 = vmatpush1.msra.mxu0 0.0
    %9430 = vmatprep.subr.mxu0 0.0
    %9431 = vmatpush1.msra.mxu0 0.0
    %9432 = vmatprep.subr.mxu0 0.0
    %9433 = vmatpush1.msra.mxu0 0.0
    %9434 = vmatprep.subr.mxu0 0.0
    %9435 = vmatpush1.msra.mxu0 0.0
    %9436 = vmatprep.mubr.f32.mxu0 0.0
    %v9437 = vand.u32 %v8870, 4294901760
    %9438 = vmatmul.mubr.f32.gmra.mrb[0].mxu0 %v9437
    %v9439 = vpop.f32.mrb[0].mxu0
    %v9440 = vadd.f32 %v9321, %v9439
    %v9441 = vpop.f32.mrb[0].mxu0
    %9442 = vdwg.mxu0
    %9443 = vmatprep.subr.mxu0 0.0
    %v9444 = vand.u32 %v8873, 4294901760
    %9445 = vmatpush1.msra.mxu0 %v9444
    %9446 = vmatprep.subr.mxu0 0.0
    %v9447 = vand.u32 %v8874, 4294901760
    %9448 = vmatpush1.msra.mxu0 %v9447
    %9449 = vmatprep.subr.mxu0 0.0
    %v9450 = vand.u32 %v8875, 4294901760
    %9451 = vmatpush1.msra.mxu0 %v9450
    %9452 = vmatprep.subr.mxu0 0.0
    %v9453 = vand.u32 %v8876, 4294901760
    %9454 = vmatpush1.msra.mxu0 %v9453
    %9455 = vmatprep.subr.mxu0 0.0
    %v9456 = vand.u32 %v8877, 4294901760
    %9457 = vmatpush1.msra.mxu0 %v9456
    %9458 = vmatprep.subr.mxu0 0.0
    %v9459 = vand.u32 %v8878, 4294901760
    %9460 = vmatpush1.msra.mxu0 %v9459
    %9461 = vmatprep.subr.mxu0 0.0
    %v9462 = vand.u32 %v8879, 4294901760
    %9463 = vmatpush1.msra.mxu0 %v9462
    %9464 = vmatprep.subr.mxu0 0.0
    %v9465 = vand.u32 %v8880, 4294901760
    %9466 = vmatpush1.msra.mxu0 %v9465
    %9467 = vmatprep.subr.mxu0 0.0
    %v9468 = vand.u32 %v8881, 4294901760
    %9469 = vmatpush1.msra.mxu0 %v9468
    %9470 = vmatprep.subr.mxu0 0.0
    %v9471 = vand.u32 %v8882, 4294901760
    %9472 = vmatpush1.msra.mxu0 %v9471
    %9473 = vmatprep.subr.mxu0 0.0
    %v9474 = vand.u32 %v8883, 4294901760
    %9475 = vmatpush1.msra.mxu0 %v9474
    %9476 = vmatprep.subr.mxu0 0.0
    %v9477 = vand.u32 %v8884, 4294901760
    %9478 = vmatpush1.msra.mxu0 %v9477
    %9479 = vmatprep.subr.mxu0 0.0
    %v9480 = vand.u32 %v8885, 4294901760
    %9481 = vmatpush1.msra.mxu0 %v9480
    %9482 = vmatprep.subr.mxu0 0.0
    %v9483 = vand.u32 %v8886, 4294901760
    %9484 = vmatpush1.msra.mxu0 %v9483
    %9485 = vmatprep.subr.mxu0 0.0
    %v9486 = vand.u32 %v8887, 4294901760
    %9487 = vmatpush1.msra.mxu0 %v9486
    %9488 = vmatprep.subr.mxu0 0.0
    %v9489 = vand.u32 %v8888, 4294901760
    %9490 = vmatpush1.msra.mxu0 %v9489
    %9491 = vmatprep.subr.mxu0 0.0
    %9492 = vmatpush1.msra.mxu0 0.0
    %9493 = vmatprep.subr.mxu0 0.0
    %9494 = vmatpush1.msra.mxu0 0.0
    %9495 = vmatprep.subr.mxu0 0.0
    %9496 = vmatpush1.msra.mxu0 0.0
    %9497 = vmatprep.subr.mxu0 0.0
    %9498 = vmatpush1.msra.mxu0 0.0
    %9499 = vmatprep.subr.mxu0 0.0
    %9500 = vmatpush1.msra.mxu0 0.0
    %9501 = vmatprep.subr.mxu0 0.0
    %9502 = vmatpush1.msra.mxu0 0.0
    %9503 = vmatprep.subr.mxu0 0.0
    %9504 = vmatpush1.msra.mxu0 0.0
    %9505 = vmatprep.subr.mxu0 0.0
    %9506 = vmatpush1.msra.mxu0 0.0
    %9507 = vmatprep.subr.mxu0 0.0
    %9508 = vmatpush1.msra.mxu0 0.0
    %9509 = vmatprep.subr.mxu0 0.0
    %9510 = vmatpush1.msra.mxu0 0.0
    %9511 = vmatprep.subr.mxu0 0.0
    %9512 = vmatpush1.msra.mxu0 0.0
    %9513 = vmatprep.subr.mxu0 0.0
    %9514 = vmatpush1.msra.mxu0 0.0
    %9515 = vmatprep.subr.mxu0 0.0
    %9516 = vmatpush1.msra.mxu0 0.0
    %9517 = vmatprep.subr.mxu0 0.0
    %9518 = vmatpush1.msra.mxu0 0.0
    %9519 = vmatprep.subr.mxu0 0.0
    %9520 = vmatpush1.msra.mxu0 0.0
    %9521 = vmatprep.subr.mxu0 0.0
    %9522 = vmatpush1.msra.mxu0 0.0
    %9523 = vmatprep.mubr.f32.mxu0 0.0
    %v9524 = vand.u32 %v8870, 4294901760
    %9525 = vmatmul.mubr.f32.gmra.mrb[0].mxu0 %v9524
    %v9526 = vpop.f32.mrb[0].mxu0
    %v9527 = vadd.f32 %v9440, %v9526
    %v9528 = vpop.f32.mrb[0].mxu0
    %9529 = vdwg.mxu0
    %v9530 = vtanh.pop %v9527
    %v9531 = vadd.f32 %v8868, %v9530
    %s9532 = scalar_lea.vmem [#allocation2], %s5552
    %v9533 = vld [vmem:[%s9532] sm:$0x1]
    %s9534 = scalar_lea.vmem [#allocation8], %s8208
    %v9535 = vld [vmem:[%s9534] sm:$0xff]
    %v9536 = vld [vmem:[%s9534 + $0x8] sm:$0xff]
    %v9537 = vld [vmem:[%s9534 + $0x10] sm:$0xff]
    %v9538 = vld [vmem:[%s9534 + $0x18] sm:$0xff]
    %v9539 = vld [vmem:[%s9534 + $0x20] sm:$0xff]
    %v9540 = vld [vmem:[%s9534 + $0x28] sm:$0xff]
    %v9541 = vld [vmem:[%s9534 + $0x30] sm:$0xff]
    %v9542 = vld [vmem:[%s9534 + $0x38] sm:$0xff]
    %v9543 = vld [vmem:[%s9534 + $0x40] sm:$0xff]
    %v9544 = vld [vmem:[%s9534 + $0x48] sm:$0xff]
    %v9545 = vld [vmem:[%s9534 + $0x50] sm:$0xff]
    %v9546 = vld [vmem:[%s9534 + $0x58] sm:$0xff]
    %v9547 = vld [vmem:[%s9534 + $0x60] sm:$0xff]
    %v9548 = vld [vmem:[%s9534 + $0x68] sm:$0xff]
    %v9549 = vld [vmem:[%s9534 + $0x70] sm:$0xff]
    %v9550 = vld [vmem:[%s9534 + $0x78] sm:$0xff]
    %9551 = vmatprep.subr.mxu0 0.0
    %v9552 = vand.u32 %v9535, 4294901760
    %9553 = vmatpush1.msra.mxu0 %v9552
    %9554 = vmatprep.subr.mxu0 0.0
    %v9555 = vand.u32 %v9536, 4294901760
    %9556 = vmatpush1.msra.mxu0 %v9555
    %9557 = vmatprep.subr.mxu0 0.0
    %v9558 = vand.u32 %v9537, 4294901760
    %9559 = vmatpush1.msra.mxu0 %v9558
    %9560 = vmatprep.subr.mxu0 0.0
    %v9561 = vand.u32 %v9538, 4294901760
    %9562 = vmatpush1.msra.mxu0 %v9561
    %9563 = vmatprep.subr.mxu0 0.0
    %v9564 = vand.u32 %v9539, 4294901760
    %9565 = vmatpush1.msra.mxu0 %v9564
    %9566 = vmatprep.subr.mxu0 0.0
    %v9567 = vand.u32 %v9540, 4294901760
    %9568 = vmatpush1.msra.mxu0 %v9567
    %9569 = vmatprep.subr.mxu0 0.0
    %v9570 = vand.u32 %v9541, 4294901760
    %9571 = vmatpush1.msra.mxu0 %v9570
    %9572 = vmatprep.subr.mxu0 0.0
    %v9573 = vand.u32 %v9542, 4294901760
    %9574 = vmatpush1.msra.mxu0 %v9573
    %9575 = vmatprep.subr.mxu0 0.0
    %v9576 = vand.u32 %v9543, 4294901760
    %9577 = vmatpush1.msra.mxu0 %v9576
    %9578 = vmatprep.subr.mxu0 0.0
    %v9579 = vand.u32 %v9544, 4294901760
    %9580 = vmatpush1.msra.mxu0 %v9579
    %9581 = vmatprep.subr.mxu0 0.0
    %v9582 = vand.u32 %v9545, 4294901760
    %9583 = vmatpush1.msra.mxu0 %v9582
    %9584 = vmatprep.subr.mxu0 0.0
    %v9585 = vand.u32 %v9546, 4294901760
    %9586 = vmatpush1.msra.mxu0 %v9585
    %9587 = vmatprep.subr.mxu0 0.0
    %v9588 = vand.u32 %v9547, 4294901760
    %9589 = vmatpush1.msra.mxu0 %v9588
    %9590 = vmatprep.subr.mxu0 0.0
    %v9591 = vand.u32 %v9548, 4294901760
    %9592 = vmatpush1.msra.mxu0 %v9591
    %9593 = vmatprep.subr.mxu0 0.0
    %v9594 = vand.u32 %v9549, 4294901760
    %9595 = vmatpush1.msra.mxu0 %v9594
    %9596 = vmatprep.subr.mxu0 0.0
    %v9597 = vand.u32 %v9550, 4294901760
    %9598 = vmatpush1.msra.mxu0 %v9597
    %9599 = vmatprep.subr.mxu0 0.0
    %9600 = vmatpush1.msra.mxu0 0.0
    %9601 = vmatprep.subr.mxu0 0.0
    %9602 = vmatpush1.msra.mxu0 0.0
    %9603 = vmatprep.subr.mxu0 0.0
    %9604 = vmatpush1.msra.mxu0 0.0
    %9605 = vmatprep.subr.mxu0 0.0
    %9606 = vmatpush1.msra.mxu0 0.0
    %9607 = vmatprep.subr.mxu0 0.0
    %9608 = vmatpush1.msra.mxu0 0.0
    %9609 = vmatprep.subr.mxu0 0.0
    %9610 = vmatpush1.msra.mxu0 0.0
    %9611 = vmatprep.subr.mxu0 0.0
    %9612 = vmatpush1.msra.mxu0 0.0
    %9613 = vmatprep.subr.mxu0 0.0
    %9614 = vmatpush1.msra.mxu0 0.0
    %9615 = vmatprep.subr.mxu0 0.0
    %9616 = vmatpush1.msra.mxu0 0.0
    %9617 = vmatprep.subr.mxu0 0.0
    %9618 = vmatpush1.msra.mxu0 0.0
    %9619 = vmatprep.subr.mxu0 0.0
    %9620 = vmatpush1.msra.mxu0 0.0
    %9621 = vmatprep.subr.mxu0 0.0
    %9622 = vmatpush1.msra.mxu0 0.0
    %9623 = vmatprep.subr.mxu0 0.0
    %9624 = vmatpush1.msra.mxu0 0.0
    %9625 = vmatprep.subr.mxu0 0.0
    %9626 = vmatpush1.msra.mxu0 0.0
    %9627 = vmatprep.subr.mxu0 0.0
    %9628 = vmatpush1.msra.mxu0 0.0
    %9629 = vmatprep.subr.mxu0 0.0
    %9630 = vmatpush1.msra.mxu0 0.0
    %9631 = vmatprep.mubr.f32.mxu0 0.0
    %v9632 = vand.u32 %v9533, 4294901760
    %v9633 = vsub.f32 %v9533, %v9632
    %v9634 = vand.u32 %v9633, 4294901760
    %v9635 = vsub.f32 %v9633, %v9634
    %v9636 = vand.u32 %v9635, 4294901760
    %9637 = vmatmul.mubr.f32.gmra.mrb[0].mxu0 %v9636
    %v9638 = vpop.f32.mrb[0].mxu0
    %v9639 = vadd.f32 0.0, %v9638
    %v9640 = vpop.f32.mrb[0].mxu0
    %9641 = vdwg.mxu0
    %9642 = vmatprep.subr.mxu0 0.0
    %v9643 = vand.u32 %v9535, 4294901760
    %v9644 = vsub.f32 %v9535, %v9643
    %v9645 = vand.u32 %v9644, 4294901760
    %v9646 = vsub.f32 %v9644, %v9645
    %v9647 = vand.u32 %v9646, 4294901760
    %9648 = vmatpush1.msra.mxu0 %v9647
    %9649 = vmatprep.subr.mxu0 0.0
    %v9650 = vand.u32 %v9536, 4294901760
    %v9651 = vsub.f32 %v9536, %v9650
    %v9652 = vand.u32 %v9651, 4294901760
    %v9653 = vsub.f32 %v9651, %v9652
    %v9654 = vand.u32 %v9653, 4294901760
    %9655 = vmatpush1.msra.mxu0 %v9654
    %9656 = vmatprep.subr.mxu0 0.0
    %v9657 = vand.u32 %v9537, 4294901760
    %v9658 = vsub.f32 %v9537, %v9657
    %v9659 = vand.u32 %v9658, 4294901760
    %v9660 = vsub.f32 %v9658, %v9659
    %v9661 = vand.u32 %v9660, 4294901760
    %9662 = vmatpush1.msra.mxu0 %v9661
    %9663 = vmatprep.subr.mxu0 0.0
    %v9664 = vand.u32 %v9538, 4294901760
    %v9665 = vsub.f32 %v9538, %v9664
    %v9666 = vand.u32 %v9665, 4294901760
    %v9667 = vsub.f32 %v9665, %v9666
    %v9668 = vand.u32 %v9667, 4294901760
    %9669 = vmatpush1.msra.mxu0 %v9668
    %9670 = vmatprep.subr.mxu0 0.0
    %v9671 = vand.u32 %v9539, 4294901760
    %v9672 = vsub.f32 %v9539, %v9671
    %v9673 = vand.u32 %v9672, 4294901760
    %v9674 = vsub.f32 %v9672, %v9673
    %v9675 = vand.u32 %v9674, 4294901760
    %9676 = vmatpush1.msra.mxu0 %v9675
    %9677 = vmatprep.subr.mxu0 0.0
    %v9678 = vand.u32 %v9540, 4294901760
    %v9679 = vsub.f32 %v9540, %v9678
    %v9680 = vand.u32 %v9679, 4294901760
    %v9681 = vsub.f32 %v9679, %v9680
    %v9682 = vand.u32 %v9681, 4294901760
    %9683 = vmatpush1.msra.mxu0 %v9682
    %9684 = vmatprep.subr.mxu0 0.0
    %v9685 = vand.u32 %v9541, 4294901760
    %v9686 = vsub.f32 %v9541, %v9685
    %v9687 = vand.u32 %v9686, 4294901760
    %v9688 = vsub.f32 %v9686, %v9687
    %v9689 = vand.u32 %v9688, 4294901760
    %9690 = vmatpush1.msra.mxu0 %v9689
    %9691 = vmatprep.subr.mxu0 0.0
    %v9692 = vand.u32 %v9542, 4294901760
    %v9693 = vsub.f32 %v9542, %v9692
    %v9694 = vand.u32 %v9693, 4294901760
    %v9695 = vsub.f32 %v9693, %v9694
    %v9696 = vand.u32 %v9695, 4294901760
    %9697 = vmatpush1.msra.mxu0 %v9696
    %9698 = vmatprep.subr.mxu0 0.0
    %v9699 = vand.u32 %v9543, 4294901760
    %v9700 = vsub.f32 %v9543, %v9699
    %v9701 = vand.u32 %v9700, 4294901760
    %v9702 = vsub.f32 %v9700, %v9701
    %v9703 = vand.u32 %v9702, 4294901760
    %9704 = vmatpush1.msra.mxu0 %v9703
    %9705 = vmatprep.subr.mxu0 0.0
    %v9706 = vand.u32 %v9544, 4294901760
    %v9707 = vsub.f32 %v9544, %v9706
    %v9708 = vand.u32 %v9707, 4294901760
    %v9709 = vsub.f32 %v9707, %v9708
    %v9710 = vand.u32 %v9709, 4294901760
    %9711 = vmatpush1.msra.mxu0 %v9710
    %9712 = vmatprep.subr.mxu0 0.0
    %v9713 = vand.u32 %v9545, 4294901760
    %v9714 = vsub.f32 %v9545, %v9713
    %v9715 = vand.u32 %v9714, 4294901760
    %v9716 = vsub.f32 %v9714, %v9715
    %v9717 = vand.u32 %v9716, 4294901760
    %9718 = vmatpush1.msra.mxu0 %v9717
    %9719 = vmatprep.subr.mxu0 0.0
    %v9720 = vand.u32 %v9546, 4294901760
    %v9721 = vsub.f32 %v9546, %v9720
    %v9722 = vand.u32 %v9721, 4294901760
    %v9723 = vsub.f32 %v9721, %v9722
    %v9724 = vand.u32 %v9723, 4294901760
    %9725 = vmatpush1.msra.mxu0 %v9724
    %9726 = vmatprep.subr.mxu0 0.0
    %v9727 = vand.u32 %v9547, 4294901760
    %v9728 = vsub.f32 %v9547, %v9727
    %v9729 = vand.u32 %v9728, 4294901760
    %v9730 = vsub.f32 %v9728, %v9729
    %v9731 = vand.u32 %v9730, 4294901760
    %9732 = vmatpush1.msra.mxu0 %v9731
    %9733 = vmatprep.subr.mxu0 0.0
    %v9734 = vand.u32 %v9548, 4294901760
    %v9735 = vsub.f32 %v9548, %v9734
    %v9736 = vand.u32 %v9735, 4294901760
    %v9737 = vsub.f32 %v9735, %v9736
    %v9738 = vand.u32 %v9737, 4294901760
    %9739 = vmatpush1.msra.mxu0 %v9738
    %9740 = vmatprep.subr.mxu0 0.0
    %v9741 = vand.u32 %v9549, 4294901760
    %v9742 = vsub.f32 %v9549, %v9741
    %v9743 = vand.u32 %v9742, 4294901760
    %v9744 = vsub.f32 %v9742, %v9743
    %v9745 = vand.u32 %v9744, 4294901760
    %9746 = vmatpush1.msra.mxu0 %v9745
    %9747 = vmatprep.subr.mxu0 0.0
    %v9748 = vand.u32 %v9550, 4294901760
    %v9749 = vsub.f32 %v9550, %v9748
    %v9750 = vand.u32 %v9749, 4294901760
    %v9751 = vsub.f32 %v9749, %v9750
    %v9752 = vand.u32 %v9751, 4294901760
    %9753 = vmatpush1.msra.mxu0 %v9752
    %9754 = vmatprep.subr.mxu0 0.0
    %9755 = vmatpush1.msra.mxu0 0.0
    %9756 = vmatprep.subr.mxu0 0.0
    %9757 = vmatpush1.msra.mxu0 0.0
    %9758 = vmatprep.subr.mxu0 0.0
    %9759 = vmatpush1.msra.mxu0 0.0
    %9760 = vmatprep.subr.mxu0 0.0
    %9761 = vmatpush1.msra.mxu0 0.0
    %9762 = vmatprep.subr.mxu0 0.0
    %9763 = vmatpush1.msra.mxu0 0.0
    %9764 = vmatprep.subr.mxu0 0.0
    %9765 = vmatpush1.msra.mxu0 0.0
    %9766 = vmatprep.subr.mxu0 0.0
    %9767 = vmatpush1.msra.mxu0 0.0
    %9768 = vmatprep.subr.mxu0 0.0
    %9769 = vmatpush1.msra.mxu0 0.0
    %9770 = vmatprep.subr.mxu0 0.0
    %9771 = vmatpush1.msra.mxu0 0.0
    %9772 = vmatprep.subr.mxu0 0.0
    %9773 = vmatpush1.msra.mxu0 0.0
    %9774 = vmatprep.subr.mxu0 0.0
    %9775 = vmatpush1.msra.mxu0 0.0
    %9776 = vmatprep.subr.mxu0 0.0
    %9777 = vmatpush1.msra.mxu0 0.0
    %9778 = vmatprep.subr.mxu0 0.0
    %9779 = vmatpush1.msra.mxu0 0.0
    %9780 = vmatprep.subr.mxu0 0.0
    %9781 = vmatpush1.msra.mxu0 0.0
    %9782 = vmatprep.subr.mxu0 0.0
    %9783 = vmatpush1.msra.mxu0 0.0
    %9784 = vmatprep.subr.mxu0 0.0
    %9785 = vmatpush1.msra.mxu0 0.0
    %9786 = vmatprep.mubr.f32.mxu0 0.0
    %v9787 = vand.u32 %v9533, 4294901760
    %9788 = vmatmul.mubr.f32.gmra.mrb[0].mxu0 %v9787
    %v9789 = vpop.f32.mrb[0].mxu0
    %v9790 = vadd.f32 %v9639, %v9789
    %v9791 = vpop.f32.mrb[0].mxu0
    %9792 = vdwg.mxu0
    %9793 = vmatprep.subr.mxu0 0.0
    %v9794 = vand.u32 %v9535, 4294901760
    %v9795 = vsub.f32 %v9535, %v9794
    %9796 = vmatpush1.msra.mxu0 %v9795
    %9797 = vmatprep.subr.mxu0 0.0
    %v9798 = vand.u32 %v9536, 4294901760
    %v9799 = vsub.f32 %v9536, %v9798
    %9800 = vmatpush1.msra.mxu0 %v9799
    %9801 = vmatprep.subr.mxu0 0.0
    %v9802 = vand.u32 %v9537, 4294901760
    %v9803 = vsub.f32 %v9537, %v9802
    %9804 = vmatpush1.msra.mxu0 %v9803
    %9805 = vmatprep.subr.mxu0 0.0
    %v9806 = vand.u32 %v9538, 4294901760
    %v9807 = vsub.f32 %v9538, %v9806
    %9808 = vmatpush1.msra.mxu0 %v9807
    %9809 = vmatprep.subr.mxu0 0.0
    %v9810 = vand.u32 %v9539, 4294901760
    %v9811 = vsub.f32 %v9539, %v9810
    %9812 = vmatpush1.msra.mxu0 %v9811
    %9813 = vmatprep.subr.mxu0 0.0
    %v9814 = vand.u32 %v9540, 4294901760
    %v9815 = vsub.f32 %v9540, %v9814
    %9816 = vmatpush1.msra.mxu0 %v9815
    %9817 = vmatprep.subr.mxu0 0.0
    %v9818 = vand.u32 %v9541, 4294901760
    %v9819 = vsub.f32 %v9541, %v9818
    %9820 = vmatpush1.msra.mxu0 %v9819
    %9821 = vmatprep.subr.mxu0 0.0
    %v9822 = vand.u32 %v9542, 4294901760
    %v9823 = vsub.f32 %v9542, %v9822
    %9824 = vmatpush1.msra.mxu0 %v9823
    %9825 = vmatprep.subr.mxu0 0.0
    %v9826 = vand.u32 %v9543, 4294901760
    %v9827 = vsub.f32 %v9543, %v9826
    %9828 = vmatpush1.msra.mxu0 %v9827
    %9829 = vmatprep.subr.mxu0 0.0
    %v9830 = vand.u32 %v9544, 4294901760
    %v9831 = vsub.f32 %v9544, %v9830
    %9832 = vmatpush1.msra.mxu0 %v9831
    %9833 = vmatprep.subr.mxu0 0.0
    %v9834 = vand.u32 %v9545, 4294901760
    %v9835 = vsub.f32 %v9545, %v9834
    %9836 = vmatpush1.msra.mxu0 %v9835
    %9837 = vmatprep.subr.mxu0 0.0
    %v9838 = vand.u32 %v9546, 4294901760
    %v9839 = vsub.f32 %v9546, %v9838
    %9840 = vmatpush1.msra.mxu0 %v9839
    %9841 = vmatprep.subr.mxu0 0.0
    %v9842 = vand.u32 %v9547, 4294901760
    %v9843 = vsub.f32 %v9547, %v9842
    %9844 = vmatpush1.msra.mxu0 %v9843
    %9845 = vmatprep.subr.mxu0 0.0
    %v9846 = vand.u32 %v9548, 4294901760
    %v9847 = vsub.f32 %v9548, %v9846
    %9848 = vmatpush1.msra.mxu0 %v9847
    %9849 = vmatprep.subr.mxu0 0.0
    %v9850 = vand.u32 %v9549, 4294901760
    %v9851 = vsub.f32 %v9549, %v9850
    %9852 = vmatpush1.msra.mxu0 %v9851
    %9853 = vmatprep.subr.mxu0 0.0
    %v9854 = vand.u32 %v9550, 4294901760
    %v9855 = vsub.f32 %v9550, %v9854
    %9856 = vmatpush1.msra.mxu0 %v9855
    %9857 = vmatprep.subr.mxu0 0.0
    %9858 = vmatpush1.msra.mxu0 0.0
    %9859 = vmatprep.subr.mxu0 0.0
    %9860 = vmatpush1.msra.mxu0 0.0
    %9861 = vmatprep.subr.mxu0 0.0
    %9862 = vmatpush1.msra.mxu0 0.0
    %9863 = vmatprep.subr.mxu0 0.0
    %9864 = vmatpush1.msra.mxu0 0.0
    %9865 = vmatprep.subr.mxu0 0.0
    %9866 = vmatpush1.msra.mxu0 0.0
    %9867 = vmatprep.subr.mxu0 0.0
    %9868 = vmatpush1.msra.mxu0 0.0
    %9869 = vmatprep.subr.mxu0 0.0
    %9870 = vmatpush1.msra.mxu0 0.0
    %9871 = vmatprep.subr.mxu0 0.0
    %9872 = vmatpush1.msra.mxu0 0.0
    %9873 = vmatprep.subr.mxu0 0.0
    %9874 = vmatpush1.msra.mxu0 0.0
    %9875 = vmatprep.subr.mxu0 0.0
    %9876 = vmatpush1.msra.mxu0 0.0
    %9877 = vmatprep.subr.mxu0 0.0
    %9878 = vmatpush1.msra.mxu0 0.0
    %9879 = vmatprep.subr.mxu0 0.0
    %9880 = vmatpush1.msra.mxu0 0.0
    %9881 = vmatprep.subr.mxu0 0.0
    %9882 = vmatpush1.msra.mxu0 0.0
    %9883 = vmatprep.subr.mxu0 0.0
    %9884 = vmatpush1.msra.mxu0 0.0
    %9885 = vmatprep.subr.mxu0 0.0
    %9886 = vmatpush1.msra.mxu0 0.0
    %9887 = vmatprep.subr.mxu0 0.0
    %9888 = vmatpush1.msra.mxu0 0.0
    %9889 = vmatprep.mubr.f32.mxu0 0.0
    %v9890 = vand.u32 %v9533, 4294901760
    %v9891 = vsub.f32 %v9533, %v9890
    %9892 = vmatmul.mubr.f32.gmra.mrb[0].mxu0 %v9891
    %v9893 = vpop.f32.mrb[0].mxu0
    %v9894 = vadd.f32 %v9790, %v9893
    %v9895 = vpop.f32.mrb[0].mxu0
    %9896 = vdwg.mxu0
    %9897 = vmatprep.subr.mxu0 0.0
    %v9898 = vand.u32 %v9535, 4294901760
    %9899 = vmatpush1.msra.mxu0 %v9898
    %9900 = vmatprep.subr.mxu0 0.0
    %v9901 = vand.u32 %v9536, 4294901760
    %9902 = vmatpush1.msra.mxu0 %v9901
    %9903 = vmatprep.subr.mxu0 0.0
    %v9904 = vand.u32 %v9537, 4294901760
    %9905 = vmatpush1.msra.mxu0 %v9904
    %9906 = vmatprep.subr.mxu0 0.0
    %v9907 = vand.u32 %v9538, 4294901760
    %9908 = vmatpush1.msra.mxu0 %v9907
    %9909 = vmatprep.subr.mxu0 0.0
    %v9910 = vand.u32 %v9539, 4294901760
    %9911 = vmatpush1.msra.mxu0 %v9910
    %9912 = vmatprep.subr.mxu0 0.0
    %v9913 = vand.u32 %v9540, 4294901760
    %9914 = vmatpush1.msra.mxu0 %v9913
    %9915 = vmatprep.subr.mxu0 0.0
    %v9916 = vand.u32 %v9541, 4294901760
    %9917 = vmatpush1.msra.mxu0 %v9916
    %9918 = vmatprep.subr.mxu0 0.0
    %v9919 = vand.u32 %v9542, 4294901760
    %9920 = vmatpush1.msra.mxu0 %v9919
    %9921 = vmatprep.subr.mxu0 0.0
    %v9922 = vand.u32 %v9543, 4294901760
    %9923 = vmatpush1.msra.mxu0 %v9922
    %9924 = vmatprep.subr.mxu0 0.0
    %v9925 = vand.u32 %v9544, 4294901760
    %9926 = vmatpush1.msra.mxu0 %v9925
    %9927 = vmatprep.subr.mxu0 0.0
    %v9928 = vand.u32 %v9545, 4294901760
    %9929 = vmatpush1.msra.mxu0 %v9928
    %9930 = vmatprep.subr.mxu0 0.0
    %v9931 = vand.u32 %v9546, 4294901760
    %9932 = vmatpush1.msra.mxu0 %v9931
    %9933 = vmatprep.subr.mxu0 0.0
    %v9934 = vand.u32 %v9547, 4294901760
    %9935 = vmatpush1.msra.mxu0 %v9934
    %9936 = vmatprep.subr.mxu0 0.0
    %v9937 = vand.u32 %v9548, 4294901760
    %9938 = vmatpush1.msra.mxu0 %v9937
    %9939 = vmatprep.subr.mxu0 0.0
    %v9940 = vand.u32 %v9549, 4294901760
    %9941 = vmatpush1.msra.mxu0 %v9940
    %9942 = vmatprep.subr.mxu0 0.0
    %v9943 = vand.u32 %v9550, 4294901760
    %9944 = vmatpush1.msra.mxu0 %v9943
    %9945 = vmatprep.subr.mxu0 0.0
    %9946 = vmatpush1.msra.mxu0 0.0
    %9947 = vmatprep.subr.mxu0 0.0
    %9948 = vmatpush1.msra.mxu0 0.0
    %9949 = vmatprep.subr.mxu0 0.0
    %9950 = vmatpush1.msra.mxu0 0.0
    %9951 = vmatprep.subr.mxu0 0.0
    %9952 = vmatpush1.msra.mxu0 0.0
    %9953 = vmatprep.subr.mxu0 0.0
    %9954 = vmatpush1.msra.mxu0 0.0
    %9955 = vmatprep.subr.mxu0 0.0
    %9956 = vmatpush1.msra.mxu0 0.0
    %9957 = vmatprep.subr.mxu0 0.0
    %9958 = vmatpush1.msra.mxu0 0.0
    %9959 = vmatprep.subr.mxu0 0.0
    %9960 = vmatpush1.msra.mxu0 0.0
    %9961 = vmatprep.subr.mxu0 0.0
    %9962 = vmatpush1.msra.mxu0 0.0
    %9963 = vmatprep.subr.mxu0 0.0
    %9964 = vmatpush1.msra.mxu0 0.0
    %9965 = vmatprep.subr.mxu0 0.0
    %9966 = vmatpush1.msra.mxu0 0.0
    %9967 = vmatprep.subr.mxu0 0.0
    %9968 = vmatpush1.msra.mxu0 0.0
    %9969 = vmatprep.subr.mxu0 0.0
    %9970 = vmatpush1.msra.mxu0 0.0
    %9971 = vmatprep.subr.mxu0 0.0
    %9972 = vmatpush1.msra.mxu0 0.0
    %9973 = vmatprep.subr.mxu0 0.0
    %9974 = vmatpush1.msra.mxu0 0.0
    %9975 = vmatprep.subr.mxu0 0.0
    %9976 = vmatpush1.msra.mxu0 0.0
    %9977 = vmatprep.mubr.f32.mxu0 0.0
    %v9978 = vand.u32 %v9533, 4294901760
    %v9979 = vsub.f32 %v9533, %v9978
    %v9980 = vand.u32 %v9979, 4294901760
    %9981 = vmatmul.mubr.f32.gmra.mrb[0].mxu0 %v9980
    %v9982 = vpop.f32.mrb[0].mxu0
    %v9983 = vadd.f32 %v9894, %v9982
    %v9984 = vpop.f32.mrb[0].mxu0
    %9985 = vdwg.mxu0
    %9986 = vmatprep.subr.mxu0 0.0
    %v9987 = vand.u32 %v9535, 4294901760
    %v9988 = vsub.f32 %v9535, %v9987
    %v9989 = vand.u32 %v9988, 4294901760
    %9990 = vmatpush1.msra.mxu0 %v9989
    %9991 = vmatprep.subr.mxu0 0.0
    %v9992 = vand.u32 %v9536, 4294901760
    %v9993 = vsub.f32 %v9536, %v9992
    %v9994 = vand.u32 %v9993, 4294901760
    %9995 = vmatpush1.msra.mxu0 %v9994
    %9996 = vmatprep.subr.mxu0 0.0
    %v9997 = vand.u32 %v9537, 4294901760
    %v9998 = vsub.f32 %v9537, %v9997
    %v9999 = vand.u32 %v9998, 4294901760
    %10000 = vmatpush1.msra.mxu0 %v9999
    %10001 = vmatprep.subr.mxu0 0.0
    %v10002 = vand.u32 %v9538, 4294901760
    %v10003 = vsub.f32 %v9538, %v10002
    %v10004 = vand.u32 %v10003, 4294901760
    %10005 = vmatpush1.msra.mxu0 %v10004
    %10006 = vmatprep.subr.mxu0 0.0
    %v10007 = vand.u32 %v9539, 4294901760
    %v10008 = vsub.f32 %v9539, %v10007
    %v10009 = vand.u32 %v10008, 4294901760
    %10010 = vmatpush1.msra.mxu0 %v10009
    %10011 = vmatprep.subr.mxu0 0.0
    %v10012 = vand.u32 %v9540, 4294901760
    %v10013 = vsub.f32 %v9540, %v10012
    %v10014 = vand.u32 %v10013, 4294901760
    %10015 = vmatpush1.msra.mxu0 %v10014
    %10016 = vmatprep.subr.mxu0 0.0
    %v10017 = vand.u32 %v9541, 4294901760
    %v10018 = vsub.f32 %v9541, %v10017
    %v10019 = vand.u32 %v10018, 4294901760
    %10020 = vmatpush1.msra.mxu0 %v10019
    %10021 = vmatprep.subr.mxu0 0.0
    %v10022 = vand.u32 %v9542, 4294901760
    %v10023 = vsub.f32 %v9542, %v10022
    %v10024 = vand.u32 %v10023, 4294901760
    %10025 = vmatpush1.msra.mxu0 %v10024
    %10026 = vmatprep.subr.mxu0 0.0
    %v10027 = vand.u32 %v9543, 4294901760
    %v10028 = vsub.f32 %v9543, %v10027
    %v10029 = vand.u32 %v10028, 4294901760
    %10030 = vmatpush1.msra.mxu0 %v10029
    %10031 = vmatprep.subr.mxu0 0.0
    %v10032 = vand.u32 %v9544, 4294901760
    %v10033 = vsub.f32 %v9544, %v10032
    %v10034 = vand.u32 %v10033, 4294901760
    %10035 = vmatpush1.msra.mxu0 %v10034
    %10036 = vmatprep.subr.mxu0 0.0
    %v10037 = vand.u32 %v9545, 4294901760
    %v10038 = vsub.f32 %v9545, %v10037
    %v10039 = vand.u32 %v10038, 4294901760
    %10040 = vmatpush1.msra.mxu0 %v10039
    %10041 = vmatprep.subr.mxu0 0.0
    %v10042 = vand.u32 %v9546, 4294901760
    %v10043 = vsub.f32 %v9546, %v10042
    %v10044 = vand.u32 %v10043, 4294901760
    %10045 = vmatpush1.msra.mxu0 %v10044
    %10046 = vmatprep.subr.mxu0 0.0
    %v10047 = vand.u32 %v9547, 4294901760
    %v10048 = vsub.f32 %v9547, %v10047
    %v10049 = vand.u32 %v10048, 4294901760
    %10050 = vmatpush1.msra.mxu0 %v10049
    %10051 = vmatprep.subr.mxu0 0.0
    %v10052 = vand.u32 %v9548, 4294901760
    %v10053 = vsub.f32 %v9548, %v10052
    %v10054 = vand.u32 %v10053, 4294901760
    %10055 = vmatpush1.msra.mxu0 %v10054
    %10056 = vmatprep.subr.mxu0 0.0
    %v10057 = vand.u32 %v9549, 4294901760
    %v10058 = vsub.f32 %v9549, %v10057
    %v10059 = vand.u32 %v10058, 4294901760
    %10060 = vmatpush1.msra.mxu0 %v10059
    %10061 = vmatprep.subr.mxu0 0.0
    %v10062 = vand.u32 %v9550, 4294901760
    %v10063 = vsub.f32 %v9550, %v10062
    %v10064 = vand.u32 %v10063, 4294901760
    %10065 = vmatpush1.msra.mxu0 %v10064
    %10066 = vmatprep.subr.mxu0 0.0
    %10067 = vmatpush1.msra.mxu0 0.0
    %10068 = vmatprep.subr.mxu0 0.0
    %10069 = vmatpush1.msra.mxu0 0.0
    %10070 = vmatprep.subr.mxu0 0.0
    %10071 = vmatpush1.msra.mxu0 0.0
    %10072 = vmatprep.subr.mxu0 0.0
    %10073 = vmatpush1.msra.mxu0 0.0
    %10074 = vmatprep.subr.mxu0 0.0
    %10075 = vmatpush1.msra.mxu0 0.0
    %10076 = vmatprep.subr.mxu0 0.0
    %10077 = vmatpush1.msra.mxu0 0.0
    %10078 = vmatprep.subr.mxu0 0.0
    %10079 = vmatpush1.msra.mxu0 0.0
    %10080 = vmatprep.subr.mxu0 0.0
    %10081 = vmatpush1.msra.mxu0 0.0
    %10082 = vmatprep.subr.mxu0 0.0
    %10083 = vmatpush1.msra.mxu0 0.0
    %10084 = vmatprep.subr.mxu0 0.0
    %10085 = vmatpush1.msra.mxu0 0.0
    %10086 = vmatprep.subr.mxu0 0.0
    %10087 = vmatpush1.msra.mxu0 0.0
    %10088 = vmatprep.subr.mxu0 0.0
    %10089 = vmatpush1.msra.mxu0 0.0
    %10090 = vmatprep.subr.mxu0 0.0
    %10091 = vmatpush1.msra.mxu0 0.0
    %10092 = vmatprep.subr.mxu0 0.0
    %10093 = vmatpush1.msra.mxu0 0.0
    %10094 = vmatprep.subr.mxu0 0.0
    %10095 = vmatpush1.msra.mxu0 0.0
    %10096 = vmatprep.subr.mxu0 0.0
    %10097 = vmatpush1.msra.mxu0 0.0
    %10098 = vmatprep.mubr.f32.mxu0 0.0
    %v10099 = vand.u32 %v9533, 4294901760
    %10100 = vmatmul.mubr.f32.gmra.mrb[0].mxu0 %v10099
    %v10101 = vpop.f32.mrb[0].mxu0
    %v10102 = vadd.f32 %v9983, %v10101
    %v10103 = vpop.f32.mrb[0].mxu0
    %10104 = vdwg.mxu0
    %10105 = vmatprep.subr.mxu0 0.0
    %v10106 = vand.u32 %v9535, 4294901760
    %10107 = vmatpush1.msra.mxu0 %v10106
    %10108 = vmatprep.subr.mxu0 0.0
    %v10109 = vand.u32 %v9536, 4294901760
    %10110 = vmatpush1.msra.mxu0 %v10109
    %10111 = vmatprep.subr.mxu0 0.0
    %v10112 = vand.u32 %v9537, 4294901760
    %10113 = vmatpush1.msra.mxu0 %v10112
    %10114 = vmatprep.subr.mxu0 0.0
    %v10115 = vand.u32 %v9538, 4294901760
    %10116 = vmatpush1.msra.mxu0 %v10115
    %10117 = vmatprep.subr.mxu0 0.0
    %v10118 = vand.u32 %v9539, 4294901760
    %10119 = vmatpush1.msra.mxu0 %v10118
    %10120 = vmatprep.subr.mxu0 0.0
    %v10121 = vand.u32 %v9540, 4294901760
    %10122 = vmatpush1.msra.mxu0 %v10121
    %10123 = vmatprep.subr.mxu0 0.0
    %v10124 = vand.u32 %v9541, 4294901760
    %10125 = vmatpush1.msra.mxu0 %v10124
    %10126 = vmatprep.subr.mxu0 0.0
    %v10127 = vand.u32 %v9542, 4294901760
    %10128 = vmatpush1.msra.mxu0 %v10127
    %10129 = vmatprep.subr.mxu0 0.0
    %v10130 = vand.u32 %v9543, 4294901760
    %10131 = vmatpush1.msra.mxu0 %v10130
    %10132 = vmatprep.subr.mxu0 0.0
    %v10133 = vand.u32 %v9544, 4294901760
    %10134 = vmatpush1.msra.mxu0 %v10133
    %10135 = vmatprep.subr.mxu0 0.0
    %v10136 = vand.u32 %v9545, 4294901760
    %10137 = vmatpush1.msra.mxu0 %v10136
    %10138 = vmatprep.subr.mxu0 0.0
    %v10139 = vand.u32 %v9546, 4294901760
    %10140 = vmatpush1.msra.mxu0 %v10139
    %10141 = vmatprep.subr.mxu0 0.0
    %v10142 = vand.u32 %v9547, 4294901760
    %10143 = vmatpush1.msra.mxu0 %v10142
    %10144 = vmatprep.subr.mxu0 0.0
    %v10145 = vand.u32 %v9548, 4294901760
    %10146 = vmatpush1.msra.mxu0 %v10145
    %10147 = vmatprep.subr.mxu0 0.0
    %v10148 = vand.u32 %v9549, 4294901760
    %10149 = vmatpush1.msra.mxu0 %v10148
    %10150 = vmatprep.subr.mxu0 0.0
    %v10151 = vand.u32 %v9550, 4294901760
    %10152 = vmatpush1.msra.mxu0 %v10151
    %10153 = vmatprep.subr.mxu0 0.0
    %10154 = vmatpush1.msra.mxu0 0.0
    %10155 = vmatprep.subr.mxu0 0.0
    %10156 = vmatpush1.msra.mxu0 0.0
    %10157 = vmatprep.subr.mxu0 0.0
    %10158 = vmatpush1.msra.mxu0 0.0
    %10159 = vmatprep.subr.mxu0 0.0
    %10160 = vmatpush1.msra.mxu0 0.0
    %10161 = vmatprep.subr.mxu0 0.0
    %10162 = vmatpush1.msra.mxu0 0.0
    %10163 = vmatprep.subr.mxu0 0.0
    %10164 = vmatpush1.msra.mxu0 0.0
    %10165 = vmatprep.subr.mxu0 0.0
    %10166 = vmatpush1.msra.mxu0 0.0
    %10167 = vmatprep.subr.mxu0 0.0
    %10168 = vmatpush1.msra.mxu0 0.0
    %10169 = vmatprep.subr.mxu0 0.0
    %10170 = vmatpush1.msra.mxu0 0.0
    %10171 = vmatprep.subr.mxu0 0.0
    %10172 = vmatpush1.msra.mxu0 0.0
    %10173 = vmatprep.subr.mxu0 0.0
    %10174 = vmatpush1.msra.mxu0 0.0
    %10175 = vmatprep.subr.mxu0 0.0
    %10176 = vmatpush1.msra.mxu0 0.0
    %10177 = vmatprep.subr.mxu0 0.0
    %10178 = vmatpush1.msra.mxu0 0.0
    %10179 = vmatprep.subr.mxu0 0.0
    %10180 = vmatpush1.msra.mxu0 0.0
    %10181 = vmatprep.subr.mxu0 0.0
    %10182 = vmatpush1.msra.mxu0 0.0
    %10183 = vmatprep.subr.mxu0 0.0
    %10184 = vmatpush1.msra.mxu0 0.0
    %10185 = vmatprep.mubr.f32.mxu0 0.0
    %v10186 = vand.u32 %v9533, 4294901760
    %10187 = vmatmul.mubr.f32.gmra.mrb[0].mxu0 %v10186
    %v10188 = vpop.f32.mrb[0].mxu0
    %v10189 = vadd.f32 %v10102, %v10188
    %v10190 = vpop.f32.mrb[0].mxu0
    %10191 = vdwg.mxu0
    %v10192 = vtanh.pop %v10189
    %v10193 = vadd.f32 %v9531, %v10192
    %s10194 = scalar_lea.vmem [#allocation2], %s5553
    %v10195 = vld [vmem:[%s10194] sm:$0x1]
    %s10196 = scalar_lea.vmem [#allocation8], %s8871
    %v10197 = vld [vmem:[%s10196] sm:$0xff]
    %v10198 = vld [vmem:[%s10196 + $0x8] sm:$0xff]
    %v10199 = vld [vmem:[%s10196 + $0x10] sm:$0xff]
    %v10200 = vld [vmem:[%s10196 + $0x18] sm:$0xff]
    %v10201 = vld [vmem:[%s10196 + $0x20] sm:$0xff]
    %v10202 = vld [vmem:[%s10196 + $0x28] sm:$0xff]
    %v10203 = vld [vmem:[%s10196 + $0x30] sm:$0xff]
    %v10204 = vld [vmem:[%s10196 + $0x38] sm:$0xff]
    %v10205 = vld [vmem:[%s10196 + $0x40] sm:$0xff]
    %v10206 = vld [vmem:[%s10196 + $0x48] sm:$0xff]
    %v10207 = vld [vmem:[%s10196 + $0x50] sm:$0xff]
    %v10208 = vld [vmem:[%s10196 + $0x58] sm:$0xff]
    %v10209 = vld [vmem:[%s10196 + $0x60] sm:$0xff]
    %v10210 = vld [vmem:[%s10196 + $0x68] sm:$0xff]
    %v10211 = vld [vmem:[%s10196 + $0x70] sm:$0xff]
    %v10212 = vld [vmem:[%s10196 + $0x78] sm:$0xff]
    %10213 = vmatprep.subr.mxu0 0.0
    %v10214 = vand.u32 %v10197, 4294901760
    %10215 = vmatpush1.msra.mxu0 %v10214
    %10216 = vmatprep.subr.mxu0 0.0
    %v10217 = vand.u32 %v10198, 4294901760
    %10218 = vmatpush1.msra.mxu0 %v10217
    %10219 = vmatprep.subr.mxu0 0.0
    %v10220 = vand.u32 %v10199, 4294901760
    %10221 = vmatpush1.msra.mxu0 %v10220
    %10222 = vmatprep.subr.mxu0 0.0
    %v10223 = vand.u32 %v10200, 4294901760
    %10224 = vmatpush1.msra.mxu0 %v10223
    %10225 = vmatprep.subr.mxu0 0.0
    %v10226 = vand.u32 %v10201, 4294901760
    %10227 = vmatpush1.msra.mxu0 %v10226
    %10228 = vmatprep.subr.mxu0 0.0
    %v10229 = vand.u32 %v10202, 4294901760
    %10230 = vmatpush1.msra.mxu0 %v10229
    %10231 = vmatprep.subr.mxu0 0.0
    %v10232 = vand.u32 %v10203, 4294901760
    %10233 = vmatpush1.msra.mxu0 %v10232
    %10234 = vmatprep.subr.mxu0 0.0
    %v10235 = vand.u32 %v10204, 4294901760
    %10236 = vmatpush1.msra.mxu0 %v10235
    %10237 = vmatprep.subr.mxu0 0.0
    %v10238 = vand.u32 %v10205, 4294901760
    %10239 = vmatpush1.msra.mxu0 %v10238
    %10240 = vmatprep.subr.mxu0 0.0
    %v10241 = vand.u32 %v10206, 4294901760
    %10242 = vmatpush1.msra.mxu0 %v10241
    %10243 = vmatprep.subr.mxu0 0.0
    %v10244 = vand.u32 %v10207, 4294901760
    %10245 = vmatpush1.msra.mxu0 %v10244
    %10246 = vmatprep.subr.mxu0 0.0
    %v10247 = vand.u32 %v10208, 4294901760
    %10248 = vmatpush1.msra.mxu0 %v10247
    %10249 = vmatprep.subr.mxu0 0.0
    %v10250 = vand.u32 %v10209, 4294901760
    %10251 = vmatpush1.msra.mxu0 %v10250
    %10252 = vmatprep.subr.mxu0 0.0
    %v10253 = vand.u32 %v10210, 4294901760
    %10254 = vmatpush1.msra.mxu0 %v10253
    %10255 = vmatprep.subr.mxu0 0.0
    %v10256 = vand.u32 %v10211, 4294901760
    %10257 = vmatpush1.msra.mxu0 %v10256
    %10258 = vmatprep.subr.mxu0 0.0
    %v10259 = vand.u32 %v10212, 4294901760
    %10260 = vmatpush1.msra.mxu0 %v10259
    %10261 = vmatprep.subr.mxu0 0.0
    %10262 = vmatpush1.msra.mxu0 0.0
    %10263 = vmatprep.subr.mxu0 0.0
    %10264 = vmatpush1.msra.mxu0 0.0
    %10265 = vmatprep.subr.mxu0 0.0
    %10266 = vmatpush1.msra.mxu0 0.0
    %10267 = vmatprep.subr.mxu0 0.0
    %10268 = vmatpush1.msra.mxu0 0.0
    %10269 = vmatprep.subr.mxu0 0.0
    %10270 = vmatpush1.msra.mxu0 0.0
    %10271 = vmatprep.subr.mxu0 0.0
    %10272 = vmatpush1.msra.mxu0 0.0
    %10273 = vmatprep.subr.mxu0 0.0
    %10274 = vmatpush1.msra.mxu0 0.0
    %10275 = vmatprep.subr.mxu0 0.0
    %10276 = vmatpush1.msra.mxu0 0.0
    %10277 = vmatprep.subr.mxu0 0.0
    %10278 = vmatpush1.msra.mxu0 0.0
    %10279 = vmatprep.subr.mxu0 0.0
    %10280 = vmatpush1.msra.mxu0 0.0
    %10281 = vmatprep.subr.mxu0 0.0
    %10282 = vmatpush1.msra.mxu0 0.0
    %10283 = vmatprep.subr.mxu0 0.0
    %10284 = vmatpush1.msra.mxu0 0.0
    %10285 = vmatprep.subr.mxu0 0.0
    %10286 = vmatpush1.msra.mxu0 0.0
    %10287 = vmatprep.subr.mxu0 0.0
    %10288 = vmatpush1.msra.mxu0 0.0
    %10289 = vmatprep.subr.mxu0 0.0
    %10290 = vmatpush1.msra.mxu0 0.0
    %10291 = vmatprep.subr.mxu0 0.0
    %10292 = vmatpush1.msra.mxu0 0.0
    %10293 = vmatprep.mubr.f32.mxu0 0.0
    %v10294 = vand.u32 %v10195, 4294901760
    %v10295 = vsub.f32 %v10195, %v10294
    %v10296 = vand.u32 %v10295, 4294901760
    %v10297 = vsub.f32 %v10295, %v10296
    %v10298 = vand.u32 %v10297, 4294901760
    %10299 = vmatmul.mubr.f32.gmra.mrb[0].mxu0 %v10298
    %v10300 = vpop.f32.mrb[0].mxu0
    %v10301 = vadd.f32 0.0, %v10300
    %v10302 = vpop.f32.mrb[0].mxu0
    %10303 = vdwg.mxu0
    %10304 = vmatprep.subr.mxu0 0.0
    %v10305 = vand.u32 %v10197, 4294901760
    %v10306 = vsub.f32 %v10197, %v10305
    %v10307 = vand.u32 %v10306, 4294901760
    %v10308 = vsub.f32 %v10306, %v10307
    %v10309 = vand.u32 %v10308, 4294901760
    %10310 = vmatpush1.msra.mxu0 %v10309
    %10311 = vmatprep.subr.mxu0 0.0
    %v10312 = vand.u32 %v10198, 4294901760
    %v10313 = vsub.f32 %v10198, %v10312
    %v10314 = vand.u32 %v10313, 4294901760
    %v10315 = vsub.f32 %v10313, %v10314
    %v10316 = vand.u32 %v10315, 4294901760
    %10317 = vmatpush1.msra.mxu0 %v10316
    %10318 = vmatprep.subr.mxu0 0.0
    %v10319 = vand.u32 %v10199, 4294901760
    %v10320 = vsub.f32 %v10199, %v10319
    %v10321 = vand.u32 %v10320, 4294901760
    %v10322 = vsub.f32 %v10320, %v10321
    %v10323 = vand.u32 %v10322, 4294901760
    %10324 = vmatpush1.msra.mxu0 %v10323
    %10325 = vmatprep.subr.mxu0 0.0
    %v10326 = vand.u32 %v10200, 4294901760
    %v10327 = vsub.f32 %v10200, %v10326
    %v10328 = vand.u32 %v10327, 4294901760
    %v10329 = vsub.f32 %v10327, %v10328
    %v10330 = vand.u32 %v10329, 4294901760
    %10331 = vmatpush1.msra.mxu0 %v10330
    %10332 = vmatprep.subr.mxu0 0.0
    %v10333 = vand.u32 %v10201, 4294901760
    %v10334 = vsub.f32 %v10201, %v10333
    %v10335 = vand.u32 %v10334, 4294901760
    %v10336 = vsub.f32 %v10334, %v10335
    %v10337 = vand.u32 %v10336, 4294901760
    %10338 = vmatpush1.msra.mxu0 %v10337
    %10339 = vmatprep.subr.mxu0 0.0
    %v10340 = vand.u32 %v10202, 4294901760
    %v10341 = vsub.f32 %v10202, %v10340
    %v10342 = vand.u32 %v10341, 4294901760
    %v10343 = vsub.f32 %v10341, %v10342
    %v10344 = vand.u32 %v10343, 4294901760
    %10345 = vmatpush1.msra.mxu0 %v10344
    %10346 = vmatprep.subr.mxu0 0.0
    %v10347 = vand.u32 %v10203, 4294901760
    %v10348 = vsub.f32 %v10203, %v10347
    %v10349 = vand.u32 %v10348, 4294901760
    %v10350 = vsub.f32 %v10348, %v10349
    %v10351 = vand.u32 %v10350, 4294901760
    %10352 = vmatpush1.msra.mxu0 %v10351
    %10353 = vmatprep.subr.mxu0 0.0
    %v10354 = vand.u32 %v10204, 4294901760
    %v10355 = vsub.f32 %v10204, %v10354
    %v10356 = vand.u32 %v10355, 4294901760
    %v10357 = vsub.f32 %v10355, %v10356
    %v10358 = vand.u32 %v10357, 4294901760
    %10359 = vmatpush1.msra.mxu0 %v10358
    %10360 = vmatprep.subr.mxu0 0.0
    %v10361 = vand.u32 %v10205, 4294901760
    %v10362 = vsub.f32 %v10205, %v10361
    %v10363 = vand.u32 %v10362, 4294901760
    %v10364 = vsub.f32 %v10362, %v10363
    %v10365 = vand.u32 %v10364, 4294901760
    %10366 = vmatpush1.msra.mxu0 %v10365
    %10367 = vmatprep.subr.mxu0 0.0
    %v10368 = vand.u32 %v10206, 4294901760
    %v10369 = vsub.f32 %v10206, %v10368
    %v10370 = vand.u32 %v10369, 4294901760
    %v10371 = vsub.f32 %v10369, %v10370
    %v10372 = vand.u32 %v10371, 4294901760
    %10373 = vmatpush1.msra.mxu0 %v10372
    %10374 = vmatprep.subr.mxu0 0.0
    %v10375 = vand.u32 %v10207, 4294901760
    %v10376 = vsub.f32 %v10207, %v10375
    %v10377 = vand.u32 %v10376, 4294901760
    %v10378 = vsub.f32 %v10376, %v10377
    %v10379 = vand.u32 %v10378, 4294901760
    %10380 = vmatpush1.msra.mxu0 %v10379
    %10381 = vmatprep.subr.mxu0 0.0
    %v10382 = vand.u32 %v10208, 4294901760
    %v10383 = vsub.f32 %v10208, %v10382
    %v10384 = vand.u32 %v10383, 4294901760
    %v10385 = vsub.f32 %v10383, %v10384
    %v10386 = vand.u32 %v10385, 4294901760
    %10387 = vmatpush1.msra.mxu0 %v10386
    %10388 = vmatprep.subr.mxu0 0.0
    %v10389 = vand.u32 %v10209, 4294901760
    %v10390 = vsub.f32 %v10209, %v10389
    %v10391 = vand.u32 %v10390, 4294901760
    %v10392 = vsub.f32 %v10390, %v10391
    %v10393 = vand.u32 %v10392, 4294901760
    %10394 = vmatpush1.msra.mxu0 %v10393
    %10395 = vmatprep.subr.mxu0 0.0
    %v10396 = vand.u32 %v10210, 4294901760
    %v10397 = vsub.f32 %v10210, %v10396
    %v10398 = vand.u32 %v10397, 4294901760
    %v10399 = vsub.f32 %v10397, %v10398
    %v10400 = vand.u32 %v10399, 4294901760
    %10401 = vmatpush1.msra.mxu0 %v10400
    %10402 = vmatprep.subr.mxu0 0.0
    %v10403 = vand.u32 %v10211, 4294901760
    %v10404 = vsub.f32 %v10211, %v10403
    %v10405 = vand.u32 %v10404, 4294901760
    %v10406 = vsub.f32 %v10404, %v10405
    %v10407 = vand.u32 %v10406, 4294901760
    %10408 = vmatpush1.msra.mxu0 %v10407
    %10409 = vmatprep.subr.mxu0 0.0
    %v10410 = vand.u32 %v10212, 4294901760
    %v10411 = vsub.f32 %v10212, %v10410
    %v10412 = vand.u32 %v10411, 4294901760
    %v10413 = vsub.f32 %v10411, %v10412
    %v10414 = vand.u32 %v10413, 4294901760
    %10415 = vmatpush1.msra.mxu0 %v10414
    %10416 = vmatprep.subr.mxu0 0.0
    %10417 = vmatpush1.msra.mxu0 0.0
    %10418 = vmatprep.subr.mxu0 0.0
    %10419 = vmatpush1.msra.mxu0 0.0
    %10420 = vmatprep.subr.mxu0 0.0
    %10421 = vmatpush1.msra.mxu0 0.0
    %10422 = vmatprep.subr.mxu0 0.0
    %10423 = vmatpush1.msra.mxu0 0.0
    %10424 = vmatprep.subr.mxu0 0.0
    %10425 = vmatpush1.msra.mxu0 0.0
    %10426 = vmatprep.subr.mxu0 0.0
    %10427 = vmatpush1.msra.mxu0 0.0
    %10428 = vmatprep.subr.mxu0 0.0
    %10429 = vmatpush1.msra.mxu0 0.0
    %10430 = vmatprep.subr.mxu0 0.0
    %10431 = vmatpush1.msra.mxu0 0.0
    %10432 = vmatprep.subr.mxu0 0.0
    %10433 = vmatpush1.msra.mxu0 0.0
    %10434 = vmatprep.subr.mxu0 0.0
    %10435 = vmatpush1.msra.mxu0 0.0
    %10436 = vmatprep.subr.mxu0 0.0
    %10437 = vmatpush1.msra.mxu0 0.0
    %10438 = vmatprep.subr.mxu0 0.0
    %10439 = vmatpush1.msra.mxu0 0.0
    %10440 = vmatprep.subr.mxu0 0.0
    %10441 = vmatpush1.msra.mxu0 0.0
    %10442 = vmatprep.subr.mxu0 0.0
    %10443 = vmatpush1.msra.mxu0 0.0
    %10444 = vmatprep.subr.mxu0 0.0
    %10445 = vmatpush1.msra.mxu0 0.0
    %10446 = vmatprep.subr.mxu0 0.0
    %10447 = vmatpush1.msra.mxu0 0.0
    %10448 = vmatprep.mubr.f32.mxu0 0.0
    %v10449 = vand.u32 %v10195, 4294901760
    %10450 = vmatmul.mubr.f32.gmra.mrb[0].mxu0 %v10449
    %v10451 = vpop.f32.mrb[0].mxu0
    %v10452 = vadd.f32 %v10301, %v10451
    %v10453 = vpop.f32.mrb[0].mxu0
    %10454 = vdwg.mxu0
    %10455 = vmatprep.subr.mxu0 0.0
    %v10456 = vand.u32 %v10197, 4294901760
    %v10457 = vsub.f32 %v10197, %v10456
    %10458 = vmatpush1.msra.mxu0 %v10457
    %10459 = vmatprep.subr.mxu0 0.0
    %v10460 = vand.u32 %v10198, 4294901760
    %v10461 = vsub.f32 %v10198, %v10460
    %10462 = vmatpush1.msra.mxu0 %v10461
    %10463 = vmatprep.subr.mxu0 0.0
    %v10464 = vand.u32 %v10199, 4294901760
    %v10465 = vsub.f32 %v10199, %v10464
    %10466 = vmatpush1.msra.mxu0 %v10465
    %10467 = vmatprep.subr.mxu0 0.0
    %v10468 = vand.u32 %v10200, 4294901760
    %v10469 = vsub.f32 %v10200, %v10468
    %10470 = vmatpush1.msra.mxu0 %v10469
    %10471 = vmatprep.subr.mxu0 0.0
    %v10472 = vand.u32 %v10201, 4294901760
    %v10473 = vsub.f32 %v10201, %v10472
    %10474 = vmatpush1.msra.mxu0 %v10473
    %10475 = vmatprep.subr.mxu0 0.0
    %v10476 = vand.u32 %v10202, 4294901760
    %v10477 = vsub.f32 %v10202, %v10476
    %10478 = vmatpush1.msra.mxu0 %v10477
    %10479 = vmatprep.subr.mxu0 0.0
    %v10480 = vand.u32 %v10203, 4294901760
    %v10481 = vsub.f32 %v10203, %v10480
    %10482 = vmatpush1.msra.mxu0 %v10481
    %10483 = vmatprep.subr.mxu0 0.0
    %v10484 = vand.u32 %v10204, 4294901760
    %v10485 = vsub.f32 %v10204, %v10484
    %10486 = vmatpush1.msra.mxu0 %v10485
    %10487 = vmatprep.subr.mxu0 0.0
    %v10488 = vand.u32 %v10205, 4294901760
    %v10489 = vsub.f32 %v10205, %v10488
    %10490 = vmatpush1.msra.mxu0 %v10489
    %10491 = vmatprep.subr.mxu0 0.0
    %v10492 = vand.u32 %v10206, 4294901760
    %v10493 = vsub.f32 %v10206, %v10492
    %10494 = vmatpush1.msra.mxu0 %v10493
    %10495 = vmatprep.subr.mxu0 0.0
    %v10496 = vand.u32 %v10207, 4294901760
    %v10497 = vsub.f32 %v10207, %v10496
    %10498 = vmatpush1.msra.mxu0 %v10497
    %10499 = vmatprep.subr.mxu0 0.0
    %v10500 = vand.u32 %v10208, 4294901760
    %v10501 = vsub.f32 %v10208, %v10500
    %10502 = vmatpush1.msra.mxu0 %v10501
    %10503 = vmatprep.subr.mxu0 0.0
    %v10504 = vand.u32 %v10209, 4294901760
    %v10505 = vsub.f32 %v10209, %v10504
    %10506 = vmatpush1.msra.mxu0 %v10505
    %10507 = vmatprep.subr.mxu0 0.0
    %v10508 = vand.u32 %v10210, 4294901760
    %v10509 = vsub.f32 %v10210, %v10508
    %10510 = vmatpush1.msra.mxu0 %v10509
    %10511 = vmatprep.subr.mxu0 0.0
    %v10512 = vand.u32 %v10211, 4294901760
    %v10513 = vsub.f32 %v10211, %v10512
    %10514 = vmatpush1.msra.mxu0 %v10513
    %10515 = vmatprep.subr.mxu0 0.0
    %v10516 = vand.u32 %v10212, 4294901760
    %v10517 = vsub.f32 %v10212, %v10516
    %10518 = vmatpush1.msra.mxu0 %v10517
    %10519 = vmatprep.subr.mxu0 0.0
    %10520 = vmatpush1.msra.mxu0 0.0
    %10521 = vmatprep.subr.mxu0 0.0
    %10522 = vmatpush1.msra.mxu0 0.0
    %10523 = vmatprep.subr.mxu0 0.0
    %10524 = vmatpush1.msra.mxu0 0.0
    %10525 = vmatprep.subr.mxu0 0.0
    %10526 = vmatpush1.msra.mxu0 0.0
    %10527 = vmatprep.subr.mxu0 0.0
    %10528 = vmatpush1.msra.mxu0 0.0
    %10529 = vmatprep.subr.mxu0 0.0
    %10530 = vmatpush1.msra.mxu0 0.0
    %10531 = vmatprep.subr.mxu0 0.0
    %10532 = vmatpush1.msra.mxu0 0.0
    %10533 = vmatprep.subr.mxu0 0.0
    %10534 = vmatpush1.msra.mxu0 0.0
    %10535 = vmatprep.subr.mxu0 0.0
    %10536 = vmatpush1.msra.mxu0 0.0
    %10537 = vmatprep.subr.mxu0 0.0
    %10538 = vmatpush1.msra.mxu0 0.0
    %10539 = vmatprep.subr.mxu0 0.0
    %10540 = vmatpush1.msra.mxu0 0.0
    %10541 = vmatprep.subr.mxu0 0.0
    %10542 = vmatpush1.msra.mxu0 0.0
    %10543 = vmatprep.subr.mxu0 0.0
    %10544 = vmatpush1.msra.mxu0 0.0
    %10545 = vmatprep.subr.mxu0 0.0
    %10546 = vmatpush1.msra.mxu0 0.0
    %10547 = vmatprep.subr.mxu0 0.0
    %10548 = vmatpush1.msra.mxu0 0.0
    %10549 = vmatprep.subr.mxu0 0.0
    %10550 = vmatpush1.msra.mxu0 0.0
    %10551 = vmatprep.mubr.f32.mxu0 0.0
    %v10552 = vand.u32 %v10195, 4294901760
    %v10553 = vsub.f32 %v10195, %v10552
    %10554 = vmatmul.mubr.f32.gmra.mrb[0].mxu0 %v10553
    %v10555 = vpop.f32.mrb[0].mxu0
    %v10556 = vadd.f32 %v10452, %v10555
    %v10557 = vpop.f32.mrb[0].mxu0
    %10558 = vdwg.mxu0
    %10559 = vmatprep.subr.mxu0 0.0
    %v10560 = vand.u32 %v10197, 4294901760
    %10561 = vmatpush1.msra.mxu0 %v10560
    %10562 = vmatprep.subr.mxu0 0.0
    %v10563 = vand.u32 %v10198, 4294901760
    %10564 = vmatpush1.msra.mxu0 %v10563
    %10565 = vmatprep.subr.mxu0 0.0
    %v10566 = vand.u32 %v10199, 4294901760
    %10567 = vmatpush1.msra.mxu0 %v10566
    %10568 = vmatprep.subr.mxu0 0.0
    %v10569 = vand.u32 %v10200, 4294901760
    %10570 = vmatpush1.msra.mxu0 %v10569
    %10571 = vmatprep.subr.mxu0 0.0
    %v10572 = vand.u32 %v10201, 4294901760
    %10573 = vmatpush1.msra.mxu0 %v10572
    %10574 = vmatprep.subr.mxu0 0.0
    %v10575 = vand.u32 %v10202, 4294901760
    %10576 = vmatpush1.msra.mxu0 %v10575
    %10577 = vmatprep.subr.mxu0 0.0
    %v10578 = vand.u32 %v10203, 4294901760
    %10579 = vmatpush1.msra.mxu0 %v10578
    %10580 = vmatprep.subr.mxu0 0.0
    %v10581 = vand.u32 %v10204, 4294901760
    %10582 = vmatpush1.msra.mxu0 %v10581
    %10583 = vmatprep.subr.mxu0 0.0
    %v10584 = vand.u32 %v10205, 4294901760
    %10585 = vmatpush1.msra.mxu0 %v10584
    %10586 = vmatprep.subr.mxu0 0.0
    %v10587 = vand.u32 %v10206, 4294901760
    %10588 = vmatpush1.msra.mxu0 %v10587
    %10589 = vmatprep.subr.mxu0 0.0
    %v10590 = vand.u32 %v10207, 4294901760
    %10591 = vmatpush1.msra.mxu0 %v10590
    %10592 = vmatprep.subr.mxu0 0.0
    %v10593 = vand.u32 %v10208, 4294901760
    %10594 = vmatpush1.msra.mxu0 %v10593
    %10595 = vmatprep.subr.mxu0 0.0
    %v10596 = vand.u32 %v10209, 4294901760
    %10597 = vmatpush1.msra.mxu0 %v10596
    %10598 = vmatprep.subr.mxu0 0.0
    %v10599 = vand.u32 %v10210, 4294901760
    %10600 = vmatpush1.msra.mxu0 %v10599
    %10601 = vmatprep.subr.mxu0 0.0
    %v10602 = vand.u32 %v10211, 4294901760
    %10603 = vmatpush1.msra.mxu0 %v10602
    %10604 = vmatprep.subr.mxu0 0.0
    %v10605 = vand.u32 %v10212, 4294901760
    %10606 = vmatpush1.msra.mxu0 %v10605
    %10607 = vmatprep.subr.mxu0 0.0
    %10608 = vmatpush1.msra.mxu0 0.0
    %10609 = vmatprep.subr.mxu0 0.0
    %10610 = vmatpush1.msra.mxu0 0.0
    %10611 = vmatprep.subr.mxu0 0.0
    %10612 = vmatpush1.msra.mxu0 0.0
    %10613 = vmatprep.subr.mxu0 0.0
    %10614 = vmatpush1.msra.mxu0 0.0
    %10615 = vmatprep.subr.mxu0 0.0
    %10616 = vmatpush1.msra.mxu0 0.0
    %10617 = vmatprep.subr.mxu0 0.0
    %10618 = vmatpush1.msra.mxu0 0.0
    %10619 = vmatprep.subr.mxu0 0.0
    %10620 = vmatpush1.msra.mxu0 0.0
    %10621 = vmatprep.subr.mxu0 0.0
    %10622 = vmatpush1.msra.mxu0 0.0
    %10623 = vmatprep.subr.mxu0 0.0
    %10624 = vmatpush1.msra.mxu0 0.0
    %10625 = vmatprep.subr.mxu0 0.0
    %10626 = vmatpush1.msra.mxu0 0.0
    %10627 = vmatprep.subr.mxu0 0.0
    %10628 = vmatpush1.msra.mxu0 0.0
    %10629 = vmatprep.subr.mxu0 0.0
    %10630 = vmatpush1.msra.mxu0 0.0
    %10631 = vmatprep.subr.mxu0 0.0
    %10632 = vmatpush1.msra.mxu0 0.0
    %10633 = vmatprep.subr.mxu0 0.0
    %10634 = vmatpush1.msra.mxu0 0.0
    %10635 = vmatprep.subr.mxu0 0.0
    %10636 = vmatpush1.msra.mxu0 0.0
    %10637 = vmatprep.subr.mxu0 0.0
    %10638 = vmatpush1.msra.mxu0 0.0
    %10639 = vmatprep.mubr.f32.mxu0 0.0
    %v10640 = vand.u32 %v10195, 4294901760
    %v10641 = vsub.f32 %v10195, %v10640
    %v10642 = vand.u32 %v10641, 4294901760
    %10643 = vmatmul.mubr.f32.gmra.mrb[0].mxu0 %v10642
    %v10644 = vpop.f32.mrb[0].mxu0
    %v10645 = vadd.f32 %v10556, %v10644
    %v10646 = vpop.f32.mrb[0].mxu0
    %10647 = vdwg.mxu0
    %10648 = vmatprep.subr.mxu0 0.0
    %v10649 = vand.u32 %v10197, 4294901760
    %v10650 = vsub.f32 %v10197, %v10649
    %v10651 = vand.u32 %v10650, 4294901760
    %10652 = vmatpush1.msra.mxu0 %v10651
    %10653 = vmatprep.subr.mxu0 0.0
    %v10654 = vand.u32 %v10198, 4294901760
    %v10655 = vsub.f32 %v10198, %v10654
    %v10656 = vand.u32 %v10655, 4294901760
    %10657 = vmatpush1.msra.mxu0 %v10656
    %10658 = vmatprep.subr.mxu0 0.0
    %v10659 = vand.u32 %v10199, 4294901760
    %v10660 = vsub.f32 %v10199, %v10659
    %v10661 = vand.u32 %v10660, 4294901760
    %10662 = vmatpush1.msra.mxu0 %v10661
    %10663 = vmatprep.subr.mxu0 0.0
    %v10664 = vand.u32 %v10200, 4294901760
    %v10665 = vsub.f32 %v10200, %v10664
    %v10666 = vand.u32 %v10665, 4294901760
    %10667 = vmatpush1.msra.mxu0 %v10666
    %10668 = vmatprep.subr.mxu0 0.0
    %v10669 = vand.u32 %v10201, 4294901760
    %v10670 = vsub.f32 %v10201, %v10669
    %v10671 = vand.u32 %v10670, 4294901760
    %10672 = vmatpush1.msra.mxu0 %v10671
    %10673 = vmatprep.subr.mxu0 0.0
    %v10674 = vand.u32 %v10202, 4294901760
    %v10675 = vsub.f32 %v10202, %v10674
    %v10676 = vand.u32 %v10675, 4294901760
    %10677 = vmatpush1.msra.mxu0 %v10676
    %10678 = vmatprep.subr.mxu0 0.0
    %v10679 = vand.u32 %v10203, 4294901760
    %v10680 = vsub.f32 %v10203, %v10679
    %v10681 = vand.u32 %v10680, 4294901760
    %10682 = vmatpush1.msra.mxu0 %v10681
    %10683 = vmatprep.subr.mxu0 0.0
    %v10684 = vand.u32 %v10204, 4294901760
    %v10685 = vsub.f32 %v10204, %v10684
    %v10686 = vand.u32 %v10685, 4294901760
    %10687 = vmatpush1.msra.mxu0 %v10686
    %10688 = vmatprep.subr.mxu0 0.0
    %v10689 = vand.u32 %v10205, 4294901760
    %v10690 = vsub.f32 %v10205, %v10689
    %v10691 = vand.u32 %v10690, 4294901760
    %10692 = vmatpush1.msra.mxu0 %v10691
    %10693 = vmatprep.subr.mxu0 0.0
    %v10694 = vand.u32 %v10206, 4294901760
    %v10695 = vsub.f32 %v10206, %v10694
    %v10696 = vand.u32 %v10695, 4294901760
    %10697 = vmatpush1.msra.mxu0 %v10696
    %10698 = vmatprep.subr.mxu0 0.0
    %v10699 = vand.u32 %v10207, 4294901760
    %v10700 = vsub.f32 %v10207, %v10699
    %v10701 = vand.u32 %v10700, 4294901760
    %10702 = vmatpush1.msra.mxu0 %v10701
    %10703 = vmatprep.subr.mxu0 0.0
    %v10704 = vand.u32 %v10208, 4294901760
    %v10705 = vsub.f32 %v10208, %v10704
    %v10706 = vand.u32 %v10705, 4294901760
    %10707 = vmatpush1.msra.mxu0 %v10706
    %10708 = vmatprep.subr.mxu0 0.0
    %v10709 = vand.u32 %v10209, 4294901760
    %v10710 = vsub.f32 %v10209, %v10709
    %v10711 = vand.u32 %v10710, 4294901760
    %10712 = vmatpush1.msra.mxu0 %v10711
    %10713 = vmatprep.subr.mxu0 0.0
    %v10714 = vand.u32 %v10210, 4294901760
    %v10715 = vsub.f32 %v10210, %v10714
    %v10716 = vand.u32 %v10715, 4294901760
    %10717 = vmatpush1.msra.mxu0 %v10716
    %10718 = vmatprep.subr.mxu0 0.0
    %v10719 = vand.u32 %v10211, 4294901760
    %v10720 = vsub.f32 %v10211, %v10719
    %v10721 = vand.u32 %v10720, 4294901760
    %10722 = vmatpush1.msra.mxu0 %v10721
    %10723 = vmatprep.subr.mxu0 0.0
    %v10724 = vand.u32 %v10212, 4294901760
    %v10725 = vsub.f32 %v10212, %v10724
    %v10726 = vand.u32 %v10725, 4294901760
    %10727 = vmatpush1.msra.mxu0 %v10726
    %10728 = vmatprep.subr.mxu0 0.0
    %10729 = vmatpush1.msra.mxu0 0.0
    %10730 = vmatprep.subr.mxu0 0.0
    %10731 = vmatpush1.msra.mxu0 0.0
    %10732 = vmatprep.subr.mxu0 0.0
    %10733 = vmatpush1.msra.mxu0 0.0
    %10734 = vmatprep.subr.mxu0 0.0
    %10735 = vmatpush1.msra.mxu0 0.0
    %10736 = vmatprep.subr.mxu0 0.0
    %10737 = vmatpush1.msra.mxu0 0.0
    %10738 = vmatprep.subr.mxu0 0.0
    %10739 = vmatpush1.msra.mxu0 0.0
    %10740 = vmatprep.subr.mxu0 0.0
    %10741 = vmatpush1.msra.mxu0 0.0
    %10742 = vmatprep.subr.mxu0 0.0
    %10743 = vmatpush1.msra.mxu0 0.0
    %10744 = vmatprep.subr.mxu0 0.0
    %10745 = vmatpush1.msra.mxu0 0.0
    %10746 = vmatprep.subr.mxu0 0.0
    %10747 = vmatpush1.msra.mxu0 0.0
    %10748 = vmatprep.subr.mxu0 0.0
    %10749 = vmatpush1.msra.mxu0 0.0
    %10750 = vmatprep.subr.mxu0 0.0
    %10751 = vmatpush1.msra.mxu0 0.0
    %10752 = vmatprep.subr.mxu0 0.0
    %10753 = vmatpush1.msra.mxu0 0.0
    %10754 = vmatprep.subr.mxu0 0.0
    %10755 = vmatpush1.msra.mxu0 0.0
    %10756 = vmatprep.subr.mxu0 0.0
    %10757 = vmatpush1.msra.mxu0 0.0
    %10758 = vmatprep.subr.mxu0 0.0
    %10759 = vmatpush1.msra.mxu0 0.0
    %10760 = vmatprep.mubr.f32.mxu0 0.0
    %v10761 = vand.u32 %v10195, 4294901760
    %10762 = vmatmul.mubr.f32.gmra.mrb[0].mxu0 %v10761
    %v10763 = vpop.f32.mrb[0].mxu0
    %v10764 = vadd.f32 %v10645, %v10763
    %v10765 = vpop.f32.mrb[0].mxu0
    %10766 = vdwg.mxu0
    %10767 = vmatprep.subr.mxu0 0.0
    %v10768 = vand.u32 %v10197, 4294901760
    %10769 = vmatpush1.msra.mxu0 %v10768
    %10770 = vmatprep.subr.mxu0 0.0
    %v10771 = vand.u32 %v10198, 4294901760
    %10772 = vmatpush1.msra.mxu0 %v10771
    %10773 = vmatprep.subr.mxu0 0.0
    %v10774 = vand.u32 %v10199, 4294901760
    %10775 = vmatpush1.msra.mxu0 %v10774
    %10776 = vmatprep.subr.mxu0 0.0
    %v10777 = vand.u32 %v10200, 4294901760
    %10778 = vmatpush1.msra.mxu0 %v10777
    %10779 = vmatprep.subr.mxu0 0.0
    %v10780 = vand.u32 %v10201, 4294901760
    %10781 = vmatpush1.msra.mxu0 %v10780
    %10782 = vmatprep.subr.mxu0 0.0
    %v10783 = vand.u32 %v10202, 4294901760
    %10784 = vmatpush1.msra.mxu0 %v10783
    %10785 = vmatprep.subr.mxu0 0.0
    %v10786 = vand.u32 %v10203, 4294901760
    %10787 = vmatpush1.msra.mxu0 %v10786
    %10788 = vmatprep.subr.mxu0 0.0
    %v10789 = vand.u32 %v10204, 4294901760
    %10790 = vmatpush1.msra.mxu0 %v10789
    %10791 = vmatprep.subr.mxu0 0.0
    %v10792 = vand.u32 %v10205, 4294901760
    %10793 = vmatpush1.msra.mxu0 %v10792
    %10794 = vmatprep.subr.mxu0 0.0
    %v10795 = vand.u32 %v10206, 4294901760
    %10796 = vmatpush1.msra.mxu0 %v10795
    %10797 = vmatprep.subr.mxu0 0.0
    %v10798 = vand.u32 %v10207, 4294901760
    %10799 = vmatpush1.msra.mxu0 %v10798
    %10800 = vmatprep.subr.mxu0 0.0
    %v10801 = vand.u32 %v10208, 4294901760
    %10802 = vmatpush1.msra.mxu0 %v10801
    %10803 = vmatprep.subr.mxu0 0.0
    %v10804 = vand.u32 %v10209, 4294901760
    %10805 = vmatpush1.msra.mxu0 %v10804
    %10806 = vmatprep.subr.mxu0 0.0
    %v10807 = vand.u32 %v10210, 4294901760
    %10808 = vmatpush1.msra.mxu0 %v10807
    %10809 = vmatprep.subr.mxu0 0.0
    %v10810 = vand.u32 %v10211, 4294901760
    %10811 = vmatpush1.msra.mxu0 %v10810
    %10812 = vmatprep.subr.mxu0 0.0
    %v10813 = vand.u32 %v10212, 4294901760
    %10814 = vmatpush1.msra.mxu0 %v10813
    %10815 = vmatprep.subr.mxu0 0.0
    %10816 = vmatpush1.msra.mxu0 0.0
    %10817 = vmatprep.subr.mxu0 0.0
    %10818 = vmatpush1.msra.mxu0 0.0
    %10819 = vmatprep.subr.mxu0 0.0
    %10820 = vmatpush1.msra.mxu0 0.0
    %10821 = vmatprep.subr.mxu0 0.0
    %10822 = vmatpush1.msra.mxu0 0.0
    %10823 = vmatprep.subr.mxu0 0.0
    %10824 = vmatpush1.msra.mxu0 0.0
    %10825 = vmatprep.subr.mxu0 0.0
    %10826 = vmatpush1.msra.mxu0 0.0
    %10827 = vmatprep.subr.mxu0 0.0
    %10828 = vmatpush1.msra.mxu0 0.0
    %10829 = vmatprep.subr.mxu0 0.0
    %10830 = vmatpush1.msra.mxu0 0.0
    %10831 = vmatprep.subr.mxu0 0.0
    %10832 = vmatpush1.msra.mxu0 0.0
    %10833 = vmatprep.subr.mxu0 0.0
    %10834 = vmatpush1.msra.mxu0 0.0
    %10835 = vmatprep.subr.mxu0 0.0
    %10836 = vmatpush1.msra.mxu0 0.0
    %10837 = vmatprep.subr.mxu0 0.0
    %10838 = vmatpush1.msra.mxu0 0.0
    %10839 = vmatprep.subr.mxu0 0.0
    %10840 = vmatpush1.msra.mxu0 0.0
    %10841 = vmatprep.subr.mxu0 0.0
    %10842 = vmatpush1.msra.mxu0 0.0
    %10843 = vmatprep.subr.mxu0 0.0
    %10844 = vmatpush1.msra.mxu0 0.0
    %10845 = vmatprep.subr.mxu0 0.0
    %10846 = vmatpush1.msra.mxu0 0.0
    %10847 = vmatprep.mubr.f32.mxu0 0.0
    %v10848 = vand.u32 %v10195, 4294901760
    %10849 = vmatmul.mubr.f32.gmra.mrb[0].mxu0 %v10848
    %v10850 = vpop.f32.mrb[0].mxu0
    %v10851 = vadd.f32 %v10764, %v10850
    %v10852 = vpop.f32.mrb[0].mxu0
    %10853 = vdwg.mxu0
    %v10854 = vtanh.pop %v10851
    %v10855 = vadd.f32 %v10193, %v10854
    %v10856 = vmul.f32 %v5506, %v10855
    %vm10857 = vcmask 1040384
    %v10858 = vsel %vm10857, %v10856, 0.0
    %10859 = vadd.xlane.f32.xlu0 %v10858
    %v10860 = vpop.xlane.xlu0 %10859
    %v10861 = vrot.slane %v10860, 4
    %v10862 = vadd.f32 %v10860, %v10861
    %v10863 = vrot.slane %v10862, 2
    %v10864 = vadd.f32 %v10862, %v10863
    %v10865 = vrot.slane %v10864, 1
    %v10866 = vadd.f32 %v10864, %v10865
    %s10867 = vtos %v10866
    %v10868 = vstv %s10867
    %v10869 = vmul.f32 %v5506, %v5506
    %v10870 = vsel %vm10857, %v10869, 0.0
    %10871 = vadd.xlane.f32.xlu0 %v10870
    %v10872 = vpop.xlane.xlu0 %10871
    %v10873 = vrot.slane %v10872, 4
    %v10874 = vadd.f32 %v10872, %v10873
    %v10875 = vrot.slane %v10874, 2
    %v10876 = vadd.f32 %v10874, %v10875
    %v10877 = vrot.slane %v10876, 1
    %v10878 = vadd.f32 %v10876, %v10877
    %s10879 = vtos %v10878
    %v10880 = vstv %s10879
    %v10881 = vmul.f32 %v10855, %v10855
    %v10882 = vsel %vm10857, %v10881, 0.0
    %10883 = vadd.xlane.f32.xlu0 %v10882
    %v10884 = vpop.xlane.xlu0 %10883
    %v10885 = vrot.slane %v10884, 4
    %v10886 = vadd.f32 %v10884, %v10885
    %v10887 = vrot.slane %v10886, 2
    %v10888 = vadd.f32 %v10886, %v10887
    %v10889 = vrot.slane %v10888, 1
    %v10890 = vadd.f32 %v10888, %v10889
    %s10891 = vtos %v10890
    %v10892 = vstv %s10891
    %v10893 = vmul.f32 %v10880, %v10892
    %v10894 = vrsqrt.pop %v10893
    %v10895 = vmul.f32 %v10868, %v10894
    %v10897 = vrot.slane %v10855, 7
    %v10899 = vsel %vm10857, %v5506, %v10897
    %vm10900 = vcmask 1041408
    %v10901 = vsel %vm10900, %v10899, %v10895
    %10902 = vst [vmem:[#allocation21] sm:$0xff] %v10901
    // Predicated region
    $region90: #{tpu_custom_call.1} parent=1 // pred_check
      _
    $region91: #{tpu_custom_call.1} parent=1 // pred_check_branch
      %10904 = sbr.rel (0) target = $region93
    $region92: #{tpu_custom_call.1} parent=1 // pred_region
      %s10906 = ssub.s32 128, 128
      %10907 = vsyncadd [#allocation4], %s10906
      %s10909 = sshll.u32 [#allocation21], 4
      %s10910 = int_to_ptr.vmem [resolvable:$true] %s10909
      %10912 = dma.vmem_to_hbm [thread:$0]  %s10910, 128, %s11, [#allocation4]
    $region93: #{tpu_custom_call.1} parent=1 // pred_fallthru
      _
    // Predicated region
    $region94: #{tpu_custom_call.1} parent=1 // pred_check
      _
    $region95: #{tpu_custom_call.1} parent=1 // pred_check_branch
      %10914 = sbr.rel (0) target = $region97
    $region96: #{tpu_custom_call.1} parent=1 // pred_region
      %10915 = dma.done [#allocation4], 128
    $region97: #{tpu_custom_call.1} parent=1 // pred_fallthru
      _
    %10916 = vsyncpa [#allocation3], 1
    %10917 = vsyncpa [#allocation7], 1
    %10918 = vsyncpa [#allocation4], 1
    %10919 = vsyncpa [#allocation5], 1
    %10920 = vsyncpa [#allocation11], 1
    %10921 = vsyncpa [#allocation14], 1
    %10922 = vsyncpa [#allocation17], 1
    %10923 = vsyncpa [#allocation20], 1

</llo_original>
